<compile_context>
chip_gen: v6e
topology: v6e:2x2x1
jax: 0.10.0
libtpu: 0.0.40
codegen_flags: <defaults>
</compile_context>

<pallas_src>
import functools

import jax
import jax.numpy as jnp
from jax import lax
from jax.experimental import pallas as pl

BN_EPS = 1e-5


# ---------------------------------------------------------------------------
# Parameter slabs: one f32 vector column + one bf16 weight matrix per kernel
# ---------------------------------------------------------------------------

class _SlabBuilder:
    """Accumulates params into one f32 vector slab + one bf16 weight slab."""

    def __init__(self):
        self._vecs = []
        self._vlen = 0
        self._ws = []
        self._wrows = 0
        self._wcols = 0

    def add_vec(self, v):
        v = jnp.asarray(v, jnp.float32).reshape(-1)
        off, n = self._vlen, int(v.shape[0])
        pad = (-n) % 8                       # keep f32 sublane-aligned offsets
        self._vecs.append(jnp.pad(v, (0, pad)))
        self._vlen += n + pad
        return (off, n)

    def add_w(self, w):
        w = jnp.asarray(w, jnp.bfloat16)
        co, ci = int(w.shape[0]), int(w.shape[1])
        off = self._wrows
        padr = (-co) % 16                    # keep bf16 sublane-aligned offsets
        self._ws.append((w, padr))
        self._wrows += co + padr
        self._wcols = max(self._wcols, ci)
        return (off, co, ci)

    def finalize(self):
        vec = jnp.concatenate(self._vecs).reshape(-1, 1)
        cmax = max(128, -(-self._wcols // 128) * 128)        # lane-dense slab
        rows = [jnp.pad(w, ((0, pr), (0, cmax - w.shape[1])))
                for w, pr in self._ws]
        wmat = jnp.concatenate(rows, axis=0)
        return vec, wmat


# ---------------------------------------------------------------------------
# In-kernel building blocks (activations are (C, B*N): batch folded on lanes)
# ---------------------------------------------------------------------------

def _vload(vec_ref, ent):
    off, n = ent
    return vec_ref[off:off + n, :]             # (n, 1) f32 column


def _wload(w_ref, ent):
    off, co, ci = ent
    return w_ref[off:off + co, :ci]            # (co, ci) bf16


def _bn_relu_mm(x, w, b, sc, sh):
    """point_block(norm=True, act=ReLU): folded BN -> ReLU -> Conv1d(k=1)."""
    h = jnp.maximum(x.astype(jnp.float32) * sc + sh, 0.0)
    return jnp.dot(w, h.astype(w.dtype), preferred_element_type=jnp.float32) + b


def _expand_cols(colmat, B, N):
    """(C, B) -> (C, B*N): column b broadcast over that batch's N lanes."""
    C = colmat.shape[0]
    lane = lax.broadcasted_iota(jnp.int32, (C, B * N), 1)
    out = jnp.zeros((C, B * N), jnp.float32)
    for b in range(B):
        out = jnp.where((lane >= b * N) & (lane < (b + 1) * N),
                        colmat[:, b:b + 1], out)
    return out


def _batch_max(t, B, N):
    """(C, B*N) -> (C, B): per-batch max over the point (lane) axis."""
    C = t.shape[0]
    lane = lax.broadcasted_iota(jnp.int32, (C, B), 1)
    out = jnp.zeros((C, B), jnp.float32)
    for b in range(B):
        m = jnp.max(t[:, b * N:(b + 1) * N], axis=1, keepdims=True)
        out = jnp.where(lane == b, m, out)
    return out


def _attention(x, vec_ref, w_ref, d, B, N):
    """Attention module; value/out weights stacked into one (2Co, Ci) matmul."""
    t = _bn_relu_mm(x, _wload(w_ref, d['pb_w']), _vload(vec_ref, d['pb_b']),
                    _vload(vec_ref, d['pb_sc']), _vload(vec_ref, d['pb_sh']))
    tmax = _batch_max(t, B, N)                                    # (H, B)
    q = _bn_relu_mm(tmax, _wload(w_ref, d['q_w']), _vload(vec_ref, d['q_b']),
                    _vload(vec_ref, d['q_sc']), _vload(vec_ref, d['q_sh']))
    gate = jax.nn.sigmoid(q)                                      # (Co, B)
    wvo = _wload(w_ref, d['vo_w'])                                # (2Co, Ci)
    vo = jnp.dot(wvo, x.astype(wvo.dtype),
                 preferred_element_type=jnp.float32) + _vload(vec_ref, d['vo_b'])
    co = gate.shape[0]
    return _expand_cols(gate, B, N) * vo[:co] + vo[co:]


def _up_attention(gm, skip, vec_ref, w_ref, d, B, Ns):
    """Attention over MergePoint output without materializing the concat.

    merged = [broadcast(gm); skip]; weights/BN vectors were split at pack time
    into a gm half (rank-1 per batch -> per-batch bias column) and a skip half.
    """
    gm_act = jnp.maximum(gm * _vload(vec_ref, d['pb_sc_g'])
                         + _vload(vec_ref, d['pb_sh_g']), 0.0)         # (Cs, B)
    skip_act = jnp.maximum(
        skip.astype(jnp.float32) * _vload(vec_ref, d['pb_sc_s'])
        + _vload(vec_ref, d['pb_sh_s']), 0.0)                          # (Cs, B*Ns)
    w_g = _wload(w_ref, d['pb_w_g'])
    w_s = _wload(w_ref, d['pb_w_s'])
    t_bias = jnp.dot(w_g, gm_act.astype(w_g.dtype),
                     preferred_element_type=jnp.float32) + _vload(vec_ref, d['pb_b'])
    t_skip = jnp.dot(w_s, skip_act.astype(w_s.dtype),
                     preferred_element_type=jnp.float32)               # (H, B*Ns)
    tmax = t_bias + _batch_max(t_skip, B, Ns)                          # (H, B)
    q = _bn_relu_mm(tmax, _wload(w_ref, d['q_w']), _vload(vec_ref, d['q_b']),
                    _vload(vec_ref, d['q_sc']), _vload(vec_ref, d['q_sh']))
    gate = jax.nn.sigmoid(q)                                           # (Co, B)
    wvo_g = _wload(w_ref, d['vo_w_g'])
    wvo_s = _wload(w_ref, d['vo_w_s'])
    vo_bias = jnp.dot(wvo_g, gm.astype(wvo_g.dtype),
                      preferred_element_type=jnp.float32) + _vload(vec_ref, d['vo_b'])
    vo_skip = jnp.dot(wvo_s, skip.astype(wvo_s.dtype),
                      preferred_element_type=jnp.float32)              # (2Co, B*Ns)
    vo = vo_skip + _expand_cols(vo_bias, B, Ns)
    co = gate.shape[0]
    return _expand_cols(gate, B, Ns) * vo[:co] + vo[co:]


# ---------------------------------------------------------------------------
# Fused kernels (one program each; activations (C, B*N))
# ---------------------------------------------------------------------------

def _down_kernel(x_ref, vec_ref, w_ref, y_ref, split_ref, *, lay, B, N):
    """[Attention -> point_block] of one down block + next SplitPoint's MLP."""
    x = x_ref[...]
    a = _attention(x, vec_ref, w_ref, lay['att'], B, N)
    y = _bn_relu_mm(a, _wload(w_ref, lay['pb_w']), _vload(vec_ref, lay['pb_b']),
                    _vload(vec_ref, lay['pb_sc']), _vload(vec_ref, lay['pb_sh']))
    y_ref[...] = y.astype(y_ref.dtype)
    # SplitPoint mlp on the VPU: BN -> ReLU -> (1, Co) conv == channel-weighted sum.
    s = jnp.maximum(y * _vload(vec_ref, lay['sp_sc'])
                    + _vload(vec_ref, lay['sp_sh']), 0.0)
    score = jnp.sum(s * _vload(vec_ref, lay['sp_w']), axis=0, keepdims=True) \
        + _vload(vec_ref, lay['sp_b'])
    split_ref[...] = jax.nn.sigmoid(score).astype(split_ref.dtype)


def _cross_kernel(x_ref, vec_ref, w_ref, y_ref, *, lay, B, N):
    """Cross block: Attention -> pb -> pb -> SelfAttention (q/k folded into M)."""
    x = x_ref[...]
    a = _attention(x, vec_ref, w_ref, lay['att'], B, N)
    c = _bn_relu_mm(a, _wload(w_ref, lay['pb1_w']), _vload(vec_ref, lay['pb1_b']),
                    _vload(vec_ref, lay['pb1_sc']), _vload(vec_ref, lay['pb1_sh']))
    c = _bn_relu_mm(c, _wload(w_ref, lay['pb2_w']), _vload(vec_ref, lay['pb2_b']),
                    _vload(vec_ref, lay['pb2_sc']), _vload(vec_ref, lay['pb2_sh']))
    w_m = _wload(w_ref, lay['sa_m'])     # (C, C) = Wq^T @ Wk, folded at pack time
    w_v = _wload(w_ref, lay['sa_v'])     # (C, C)
    gamma = _vload(vec_ref, lay['sa_gamma'])                     # (1, 1)
    cb = c.astype(w_m.dtype)
    u = jnp.dot(w_m, cb, preferred_element_type=jnp.float32)     # (C, B*N)
    h = jnp.dot(w_v, cb, preferred_element_type=jnp.float32)     # (C, B*N)
    # TODO(synk): for realistic point counts the per-batch (Nc, Nc) softmax
    # below must be tiled over key columns with an online softmax.
    for b in range(B):
        sl = slice(b * N, (b + 1) * N)
        # energy[i, j] = f[:, i] . g[:, j] = c[:, i]^T (Wq^T Wk) c[:, j];
        # torch softmax(dim=1) of the (B, N, N) energy is our axis 0.
        e = lax.dot_general(cb[:, sl], u[:, sl].astype(cb.dtype),
                            (((0,), (0,)), ((), ())),
                            preferred_element_type=jnp.float32)  # (N, N)
        e = e - jnp.max(e, axis=0, keepdims=True)
        ee = jnp.exp(e)
        # approx reciprocal (EUP) -> tiny deviation vs exact divide, accepted.
        beta = ee * pl.reciprocal(jnp.sum(ee, axis=0, keepdims=True), approx=True)
        o = jnp.dot(h[:, sl].astype(cb.dtype), beta.astype(cb.dtype),
                    preferred_element_type=jnp.float32)          # (C, N)
        y_ref[:, sl] = (gamma * o + c[:, sl]).astype(y_ref.dtype)


def _up_kernel(x_ref, skip_ref, vec_ref, w_ref, y_ref, *, lay, B, Nx, Ns, has_out):
    """MergePoint -> Attention -> point_block (-> final 'out' pb for up4)."""
    x = x_ref[...]
    skip = skip_ref[...]
    wg = _wload(w_ref, lay['gf_w'])
    g = jnp.dot(wg, x.astype(wg.dtype), preferred_element_type=jnp.float32) \
        + _vload(vec_ref, lay['gf_b'])                           # (Cs, B*Nx)
    gm = _batch_max(g, B, Nx)                                    # (Cs, B)
    a = _up_attention(gm, skip, vec_ref, w_ref, lay['att'], B, Ns)
    y = _bn_relu_mm(a, _wload(w_ref, lay['pb_w']), _vload(vec_ref, lay['pb_b']),
                    _vload(vec_ref, lay['pb_sc']), _vload(vec_ref, lay['pb_sh']))
    if has_out:
        y = _bn_relu_mm(y, _wload(w_ref, lay['out_w']), _vload(vec_ref, lay['out_b']),
                        _vload(vec_ref, lay['out_sc']), _vload(vec_ref, lay['out_sh']))
    y_ref[...] = y.astype(y_ref.dtype)


# ---------------------------------------------------------------------------
# pallas_call wrappers (no grid: whole (C, B*N) slab + 2 param slabs in VMEM)
# ---------------------------------------------------------------------------

def _call_down(x, arrs, meta, B):
    N = x.shape[1] // B
    kern = functools.partial(_down_kernel, lay=meta['lay'], B=B, N=N)
    return pl.pallas_call(
        kern,
        out_shape=(jax.ShapeDtypeStruct((meta['co'], B * N), jnp.bfloat16),
                   jax.ShapeDtypeStruct((1, B * N), jnp.float32)),
    )(x, arrs['vec'], arrs['wmat'])


def _call_cross(x, arrs, meta, B):
    N = x.shape[1] // B
    kern = functools.partial(_cross_kernel, lay=meta['lay'], B=B, N=N)
    return pl.pallas_call(
        kern,
        out_shape=jax.ShapeDtypeStruct((meta['co'], B * N), jnp.bfloat16),
    )(x, arrs['vec'], arrs['wmat'])


def _call_up(x, skip, arrs, meta, B, out_dtype=jnp.bfloat16):
    Nx = x.shape[1] // B
    Ns = skip.shape[1] // B
    kern = functools.partial(_up_kernel, lay=meta['lay'], B=B, Nx=Nx, Ns=Ns,
                             has_out=meta['has_out'])
    return pl.pallas_call(
        kern,
        out_shape=jax.ShapeDtypeStruct((meta['co'], B * Ns), out_dtype),
    )(x, skip, arrs['vec'], arrs['wmat'])


# ---------------------------------------------------------------------------
# Parameter init (raw, PyTorch-like)
# ---------------------------------------------------------------------------

class KeyGen:
    def __init__(self, key):
        self.key = key

    def __call__(self):
        self.key, sub = jax.random.split(self.key)
        return sub


def init_point_block(kg, ci, co, *, norm):
    p = {"norm": norm,
         "w": (jax.random.normal(kg(), (co, ci), jnp.float32)
               / jnp.sqrt(jnp.float32(ci))),
         "b": 0.01 * jax.random.normal(kg(), (co,), jnp.float32)}
    if norm:
        # BatchNorm1d in eval mode with default running stats (deterministic).
        p["bn"] = dict(gamma=jnp.ones((ci,), jnp.float32),
                       beta=jnp.zeros((ci,), jnp.float32),
                       mean=jnp.zeros((ci,), jnp.float32),
                       var=jnp.ones((ci,), jnp.float32))
    return p


def init_attention(kg, ci, co, hidden=None):
    if hidden is None:
        hidden = co
    # All Attention instances in UPointAttSeg have out_channel != in_channel,
    # so the value/out conv branches always exist.
    assert co != ci, "identity value/out path not used in this configuration"
    return dict(pb=init_point_block(kg, ci, hidden, norm=True),
                query=init_point_block(kg, hidden, co, norm=True),
                value=init_point_block(kg, ci, co, norm=False),
                out=init_point_block(kg, ci, co, norm=False))


def _spectral_normalize(w, iters=30):
    # TODO(synk): torch.nn.utils.spectral_norm runs one power iteration per
    # forward with a persistent random u; we use a converged deterministic
    # estimate at init, so sigma (and outputs) differ slightly from PyTorch.
    u = jnp.ones((w.shape[0],), jnp.float32) / jnp.sqrt(jnp.float32(w.shape[0]))
    v = None
    for _ in range(iters):
        v = w.T @ u
        v = v / (jnp.linalg.norm(v) + 1e-12)
        u = w @ v
        u = u / (jnp.linalg.norm(u) + 1e-12)
    sigma = u @ (w @ v)
    return w / sigma


def init_selfattn(kg, c):
    def sn_w(ci, co):
        w = jax.random.normal(kg(), (co, ci), jnp.float32) * jnp.sqrt(2.0 / ci)
        return _spectral_normalize(w)

    return dict(q=sn_w(c, c // 8), k=sn_w(c, c // 8), v=sn_w(c, c),
                gamma=jnp.zeros((1,), jnp.float32))


def init_model(kg, input_nc, n_classes, hd):
    p = {}
    p["b1_att"] = init_attention(kg, input_nc, hd[0])
    p["b1_pb"] = init_point_block(kg, hd[0], hd[0], norm=True)
    p["b2_split"] = dict(mlp=init_point_block(kg, hd[0], 1, norm=True))
    p["b2_att"] = init_attention(kg, hd[0] + 1, hd[1])
    p["b2_pb"] = init_point_block(kg, hd[1], hd[1], norm=True)
    p["b3_split"] = dict(mlp=init_point_block(kg, hd[1], 1, norm=True))
    p["b3_att"] = init_attention(kg, hd[1] + 1, hd[2])
    p["b3_pb"] = init_point_block(kg, hd[2], hd[2], norm=True)
    p["b4_split"] = dict(mlp=init_point_block(kg, hd[2], 1, norm=True))
    p["b4_att"] = init_attention(kg, hd[2] + 1, hd[3])
    p["b4_pb"] = init_point_block(kg, hd[3], hd[3], norm=True)
    p["cr_split"] = dict(mlp=init_point_block(kg, hd[3], 1, norm=True))
    p["cr_att"] = init_attention(kg, hd[3] + 1, hd[4])
    p["cr_pb1"] = init_point_block(kg, hd[4], hd[4], norm=True)
    p["cr_pb2"] = init_point_block(kg, hd[4], hd[4], norm=True)
    p["cr_sa"] = init_selfattn(kg, hd[4])
    p["up1_gf"] = init_point_block(kg, hd[4], hd[3], norm=False)
    p["up1_att"] = init_attention(kg, hd[3] * 2, hd[3])
    p["up1_pb"] = init_point_block(kg, hd[3], hd[3], norm=True)
    p["up2_gf"] = init_point_block(kg, hd[3], hd[2], norm=False)
    p["up2_att"] = init_attention(kg, hd[2] * 2, hd[2])
    p["up2_pb"] = init_point_block(kg, hd[2], hd[2], norm=True)
    p["up3_gf"] = init_point_block(kg, hd[2], hd[1], norm=False)
    p["up3_att"] = init_attention(kg, hd[1] * 2, hd[1])
    p["up3_pb"] = init_point_block(kg, hd[1], hd[1], norm=True)
    p["up4_gf"] = init_point_block(kg, hd[1], hd[0], norm=False)
    p["up4_att"] = init_attention(kg, hd[0] * 2, hd[0])
    p["up4_pb"] = init_point_block(kg, hd[0], hd[0], norm=True)
    p["out"] = init_point_block(kg, hd[0], n_classes, norm=True)
    return p


# ---------------------------------------------------------------------------
# One-time packing: fold BN, stack value/out, fold Wq^T Wk, build slabs
# ---------------------------------------------------------------------------

def _fold_bn(p):
    bn = p["bn"]
    scale = bn["gamma"] / jnp.sqrt(bn["var"] + BN_EPS)
    shift = bn["beta"] - bn["mean"] * scale
    return scale, shift


def _pack_pb_norm(sb, p, pre, d):
    sc, sh = _fold_bn(p)
    d[pre + '_sc'] = sb.add_vec(sc)
    d[pre + '_sh'] = sb.add_vec(sh)
    d[pre + '_w'] = sb.add_w(p["w"])
    d[pre + '_b'] = sb.add_vec(p["b"])


def _pack_attention(sb, att):
    d = {}
    _pack_pb_norm(sb, att["pb"], 'pb', d)
    _pack_pb_norm(sb, att["query"], 'q', d)
    # Stack value & out convs: one (2Co, Ci) matmul instead of two tiny ones.
    d['vo_w'] = sb.add_w(jnp.concatenate([att["value"]["w"], att["out"]["w"]], 0))
    d['vo_b'] = sb.add_vec(jnp.concatenate([att["value"]["b"], att["out"]["b"]], 0))
    return d


def _pack_attention_split(sb, att, cs):
    """Attention over merged [gm(Cs); skip(Cs)]: split every K dim at cs."""
    d = {}
    sc, sh = _fold_bn(att["pb"])
    d['pb_sc_g'] = sb.add_vec(sc[:cs])
    d['pb_sh_g'] = sb.add_vec(sh[:cs])
    d['pb_sc_s'] = sb.add_vec(sc[cs:])
    d['pb_sh_s'] = sb.add_vec(sh[cs:])
    d['pb_w_g'] = sb.add_w(att["pb"]["w"][:, :cs])
    d['pb_w_s'] = sb.add_w(att["pb"]["w"][:, cs:])
    d['pb_b'] = sb.add_vec(att["pb"]["b"])
    _pack_pb_norm(sb, att["query"], 'q', d)
    w_vo = jnp.concatenate([att["value"]["w"], att["out"]["w"]], 0)
    d['vo_w_g'] = sb.add_w(w_vo[:, :cs])
    d['vo_w_s'] = sb.add_w(w_vo[:, cs:])
    d['vo_b'] = sb.add_vec(jnp.concatenate([att["value"]["b"], att["out"]["b"]], 0))
    return d


def _pack_split(sb, sp, d):
    m = sp["mlp"]
    sc, sh = _fold_bn(m)
    d['sp_sc'] = sb.add_vec(sc)
    d['sp_sh'] = sb.add_vec(sh)
    d['sp_w'] = sb.add_vec(m["w"].reshape(-1))   # (1, Ci) conv -> VPU weighted sum
    d['sp_b'] = sb.add_vec(m["b"])


def pack_down_block(att, pb, split):
    sb = _SlabBuilder()
    lay = {'att': _pack_attention(sb, att)}
    _pack_pb_norm(sb, pb, 'pb', lay)
    _pack_split(sb, split, lay)
    vec, wmat = sb.finalize()
    return dict(vec=vec, wmat=wmat), dict(lay=lay, co=int(pb["w"].shape[0]))


def pack_cross_block(att, pb1, pb2, sa):
    sb = _SlabBuilder()
    lay = {'att': _pack_attention(sb, att)}
    _pack_pb_norm(sb, pb1, 'pb1', lay)
    _pack_pb_norm(sb, pb2, 'pb2', lay)
    lay['sa_m'] = sb.add_w(sa["q"].T @ sa["k"])   # fold q/k projections: Wq^T Wk
    lay['sa_v'] = sb.add_w(sa["v"])
    lay['sa_gamma'] = sb.add_vec(sa["gamma"])
    vec, wmat = sb.finalize()
    return dict(vec=vec, wmat=wmat), dict(lay=lay, co=int(pb2["w"].shape[0]))


def pack_up_block(gf, att, pb, out=None):
    sb = _SlabBuilder()
    lay = {}
    lay['gf_w'] = sb.add_w(gf["w"])
    lay['gf_b'] = sb.add_vec(gf["b"])
    lay['att'] = _pack_attention_split(sb, att, int(gf["w"].shape[0]))
    _pack_pb_norm(sb, pb, 'pb', lay)
    if out is not None:
        _pack_pb_norm(sb, out, 'out', lay)
    vec, wmat = sb.finalize()
    co = int((out if out is not None else pb)["w"].shape[0])
    return dict(vec=vec, wmat=wmat), dict(lay=lay, co=co, has_out=out is not None)


def pack_params(raw):
    arrs, meta = {}, {}

    def put(k, pair):
        arrs[k], meta[k] = pair

    put('b1', pack_down_block(raw['b1_att'], raw['b1_pb'], raw['b2_split']))
    put('b2', pack_down_block(raw['b2_att'], raw['b2_pb'], raw['b3_split']))
    put('b3', pack_down_block(raw['b3_att'], raw['b3_pb'], raw['b4_split']))
    put('b4', pack_down_block(raw['b4_att'], raw['b4_pb'], raw['cr_split']))
    put('cross', pack_cross_block(raw['cr_att'], raw['cr_pb1'], raw['cr_pb2'],
                                  raw['cr_sa']))
    for i in (1, 2, 3):
        put(f'up{i}', pack_up_block(raw[f'up{i}_gf'], raw[f'up{i}_att'],
                                    raw[f'up{i}_pb']))
    put('up4', pack_up_block(raw['up4_gf'], raw['up4_att'], raw['up4_pb'],
                             raw['out']))
    return meta, arrs


# ---------------------------------------------------------------------------
# Forward pass (activations carried as (C, B*N) slabs between kernels)
# ---------------------------------------------------------------------------

def _split_gather(x, split, B, N):
    """SplitPoint reorder in the (C, B*N) layout: keep top-N/2 points per batch."""
    # TODO(synk): data-dependent argsort + gather has no clean Pallas
    # equivalent; the point reordering stays in plain JAX/XLA.
    half = N // 2
    idx = jnp.argsort(-split.reshape(B, N), axis=1)[:, :half]         # (B, half)
    flat = (idx + (jnp.arange(B) * N)[:, None]).reshape(-1)           # (B*half,)
    xc = jnp.concatenate([x.astype(jnp.float32), split], axis=0)      # (C+1, B*N)
    return jnp.take(xc, flat, axis=1).astype(jnp.bfloat16)


def forward(meta, arrs, x):
    B, Ci, N0 = x.shape
    assert N0 % 16 == 0, "N must be divisible by 2**4 (four SplitPoint halvings)"
    xf = jnp.transpose(x, (1, 0, 2)).reshape(Ci, B * N0)    # fold batch on lanes

    n = N0
    x1, s2 = _call_down(xf, arrs['b1'], meta['b1'], B)
    h = _split_gather(x1, s2, B, n)
    n //= 2
    x2, s3 = _call_down(h, arrs['b2'], meta['b2'], B)
    h = _split_gather(x2, s3, B, n)
    n //= 2
    x3, s4 = _call_down(h, arrs['b3'], meta['b3'], B)
    h = _split_gather(x3, s4, B, n)
    n //= 2
    x4, s5 = _call_down(h, arrs['b4'], meta['b4'], B)
    h = _split_gather(x4, s5, B, n)
    cr = _call_cross(h, arrs['cross'], meta['cross'], B)
    u = _call_up(cr, x4, arrs['up1'], meta['up1'], B)
    u = _call_up(u, x3, arrs['up2'], meta['up2'], B)
    u = _call_up(u, x2, arrs['up3'], meta['up3'], B)
    y = _call_up(u, x1, arrs['up4'], meta['up4'], B, out_dtype=jnp.float32)
    return y.reshape(y.shape[0], B, N0).transpose(1, 0, 2)   # (B, n_classes, N)


# ---------------------------------------------------------------------------

if __name__ == "__main__":
    input_nc = 4
    n_classes = 2
    hidden_dims = [8, 16, 16, 16, 16]
    B, N = 2, 128           # N divisible by 2**4 (four SplitPoint halvings)

    kg = KeyGen(jax.random.PRNGKey(0))
    raw_params = init_model(kg, input_nc, n_classes, hidden_dims)
    meta, arrs = pack_params(raw_params)      # one-time parameter preprocessing

    x = jax.random.normal(jax.random.PRNGKey(0), (B, input_nc, N), jnp.float32)

    fwd = jax.jit(functools.partial(forward, meta))
    y = jax.block_until_ready(fwd(arrs, x))
    assert y.shape == (B, n_classes, N), y.shape
    assert bool(jnp.all(jnp.isfinite(y)))
    print("KERNEL_OK")
</pallas_src>

<mosaic_0001>
module attributes {stable_mosaic.version = 11 : i64} {
  func.func @_down_kernel(%arg0: memref<4x256xf32, #tpu.memory_space<vmem>>, %arg1: memref<120x1xf32, #tpu.memory_space<vmem>>, %arg2: memref<64x128xbf16, #tpu.memory_space<vmem>>, %arg3: memref<8x256xbf16, #tpu.memory_space<vmem>>, %arg4: memref<1x256xf32, #tpu.memory_space<vmem>>) attributes {dimension_semantics = [], scalar_prefetch = 0 : i64, scratch_operands = 0 : i64, tpu.core_type = #tpu.core_type<tc>} {
    %c0 = arith.constant 0 : index
    %c0_0 = arith.constant 0 : index
    %0 = vector.load %arg0[%c0, %c0_0] : memref<4x256xf32, #tpu.memory_space<vmem>>, vector<4x256xf32>
    %c0_1 = arith.constant 0 : index
    %c0_2 = arith.constant 0 : index
    %1 = vector.load %arg2[%c0_1, %c0_2] : memref<64x128xbf16, #tpu.memory_space<vmem>>, vector<8x4xbf16>
    %c16 = arith.constant 16 : index
    %c0_3 = arith.constant 0 : index
    %2 = vector.load %arg1[%c16, %c0_3] : memref<120x1xf32, #tpu.memory_space<vmem>>, vector<8x1xf32>
    %c0_4 = arith.constant 0 : index
    %c0_5 = arith.constant 0 : index
    %3 = vector.load %arg1[%c0_4, %c0_5] : memref<120x1xf32, #tpu.memory_space<vmem>>, vector<4x1xf32>
    %c8 = arith.constant 8 : index
    %c0_6 = arith.constant 0 : index
    %4 = vector.load %arg1[%c8, %c0_6] : memref<120x1xf32, #tpu.memory_space<vmem>>, vector<4x1xf32>
    %5 = vector.broadcast %3 : vector<4x1xf32> to vector<4x256xf32>
    %6 = arith.mulf %0, %5 : vector<4x256xf32>
    %7 = vector.broadcast %4 : vector<4x1xf32> to vector<4x256xf32>
    %8 = arith.addf %6, %7 : vector<4x256xf32>
    %cst = arith.constant 0.000000e+00 : f32
    %9 = vector.broadcast %cst : f32 to vector<4x256xf32>
    %10 = arith.maximumf %8, %9 : vector<4x256xf32>
    %11 = arith.truncf %10 : vector<4x256xf32> to vector<4x256xbf16>
    %cst_7 = arith.constant dense<0.000000e+00> : vector<8x256xf32>
    %12 = tpu.matmul %1, %11, %cst_7 {dimension_numbers = #tpu.dot_dimension_numbers<[1], [0], [0], [1], [0, 0, 1, 1], [], []>} : vector<8x4xbf16>, vector<4x256xbf16>, vector<8x256xf32> -> vector<8x256xf32>
    %13 = vector.broadcast %2 : vector<8x1xf32> to vector<8x256xf32>
    %14 = arith.addf %12, %13 : vector<8x256xf32>
    %15 = tpu.iota {dimensions = array<i32: 1>} : vector<8x2xi32>
    %cst_8 = arith.constant 0.000000e+00 : f32
    %16 = vector.broadcast %cst_8 : f32 to vector<8x2xf32>
    %17 = vector.extract_strided_slice %14 {offsets = [0, 0], sizes = [8, 128], strides = [1, 1]} : vector<8x256xf32> to vector<8x128xf32>
    %cst_9 = arith.constant dense<0xFF800000> : vector<8xf32>
    %18 = vector.multi_reduction <maximumf>, %17, %cst_9 [1] : vector<8x128xf32> to vector<8xf32>
    %19 = vector.shape_cast %18 : vector<8xf32> to vector<8x1xf32>
    %c0_i32 = arith.constant 0 : i32
    %20 = vector.broadcast %c0_i32 : i32 to vector<8x2xi32>
    %21 = arith.cmpi eq, %15, %20 : vector<8x2xi32>
    %22 = vector.shape_cast %19 : vector<8x1xf32> to vector<8x1xf32>
    %23 = vector.broadcast %22 : vector<8x1xf32> to vector<8x2xf32>
    %24 = arith.select %21, %23, %16 : vector<8x2xi1>, vector<8x2xf32>
    %25 = vector.extract_strided_slice %14 {offsets = [0, 128], sizes = [8, 128], strides = [1, 1]} : vector<8x256xf32> to vector<8x128xf32>
    %cst_10 = arith.constant dense<0xFF800000> : vector<8xf32>
    %26 = vector.multi_reduction <maximumf>, %25, %cst_10 [1] : vector<8x128xf32> to vector<8xf32>
    %27 = vector.shape_cast %26 : vector<8xf32> to vector<8x1xf32>
    %c1_i32 = arith.constant 1 : i32
    %28 = vector.broadcast %c1_i32 : i32 to vector<8x2xi32>
    %29 = arith.cmpi eq, %15, %28 : vector<8x2xi32>
    %30 = vector.shape_cast %27 : vector<8x1xf32> to vector<8x1xf32>
    %31 = vector.broadcast %30 : vector<8x1xf32> to vector<8x2xf32>
    %32 = arith.select %29, %31, %24 : vector<8x2xi1>, vector<8x2xf32>
    %c16_11 = arith.constant 16 : index
    %c0_12 = arith.constant 0 : index
    %33 = vector.load %arg2[%c16_11, %c0_12] : memref<64x128xbf16, #tpu.memory_space<vmem>>, vector<8x8xbf16>
    %c40 = arith.constant 40 : index
    %c0_13 = arith.constant 0 : index
    %34 = vector.load %arg1[%c40, %c0_13] : memref<120x1xf32, #tpu.memory_space<vmem>>, vector<8x1xf32>
    %c24 = arith.constant 24 : index
    %c0_14 = arith.constant 0 : index
    %35 = vector.load %arg1[%c24, %c0_14] : memref<120x1xf32, #tpu.memory_space<vmem>>, vector<8x1xf32>
    %c32 = arith.constant 32 : index
    %c0_15 = arith.constant 0 : index
    %36 = vector.load %arg1[%c32, %c0_15] : memref<120x1xf32, #tpu.memory_space<vmem>>, vector<8x1xf32>
    %37 = vector.broadcast %35 : vector<8x1xf32> to vector<8x2xf32>
    %38 = arith.mulf %32, %37 : vector<8x2xf32>
    %39 = vector.broadcast %36 : vector<8x1xf32> to vector<8x2xf32>
    %40 = arith.addf %38, %39 : vector<8x2xf32>
    %cst_16 = arith.constant 0.000000e+00 : f32
    %41 = vector.broadcast %cst_16 : f32 to vector<8x2xf32>
    %42 = arith.maximumf %40, %41 : vector<8x2xf32>
    %43 = arith.truncf %42 : vector<8x2xf32> to vector<8x2xbf16>
    %cst_17 = arith.constant dense<0.000000e+00> : vector<8x2xf32>
    %44 = tpu.matmul %33, %43, %cst_17 {dimension_numbers = #tpu.dot_dimension_numbers<[1], [0], [0], [1], [0, 0, 1, 1], [], []>} : vector<8x8xbf16>, vector<8x2xbf16>, vector<8x2xf32> -> vector<8x2xf32>
    %45 = vector.broadcast %34 : vector<8x1xf32> to vector<8x2xf32>
    %46 = arith.addf %44, %45 : vector<8x2xf32>
    %47 = arith.negf %46 : vector<8x2xf32>
    %48 = math.exp %47 : vector<8x2xf32>
    %cst_18 = arith.constant 1.000000e+00 : f32
    %49 = vector.broadcast %cst_18 : f32 to vector<8x2xf32>
    %50 = arith.addf %49, %48 : vector<8x2xf32>
    %51 = arith.divf %49, %50 : vector<8x2xf32>
    %c32_19 = arith.constant 32 : index
    %c0_20 = arith.constant 0 : index
    %52 = vector.load %arg2[%c32_19, %c0_20] : memref<64x128xbf16, #tpu.memory_space<vmem>>, vector<16x4xbf16>
    %53 = arith.truncf %0 : vector<4x256xf32> to vector<4x256xbf16>
    %cst_21 = arith.constant dense<0.000000e+00> : vector<16x256xf32>
    %54 = tpu.matmul %52, %53, %cst_21 {dimension_numbers = #tpu.dot_dimension_numbers<[1], [0], [0], [1], [0, 0, 1, 1], [], []>} : vector<16x4xbf16>, vector<4x256xbf16>, vector<16x256xf32> -> vector<16x256xf32>
    %c48 = arith.constant 48 : index
    %c0_22 = arith.constant 0 : index
    %55 = vector.load %arg1[%c48, %c0_22] : memref<120x1xf32, #tpu.memory_space<vmem>>, vector<16x1xf32>
    %56 = vector.broadcast %55 : vector<16x1xf32> to vector<16x256xf32>
    %57 = arith.addf %54, %56 : vector<16x256xf32>
    %58 = tpu.iota {dimensions = array<i32: 1>} : vector<8x256xi32>
    %cst_23 = arith.constant 0.000000e+00 : f32
    %59 = vector.broadcast %cst_23 : f32 to vector<8x256xf32>
    %c0_i32_24 = arith.constant 0 : i32
    %60 = vector.broadcast %c0_i32_24 : i32 to vector<8x256xi32>
    %61 = arith.cmpi sge, %58, %60 : vector<8x256xi32>
    %c128_i32 = arith.constant 128 : i32
    %62 = vector.broadcast %c128_i32 : i32 to vector<8x256xi32>
    %63 = arith.cmpi slt, %58, %62 : vector<8x256xi32>
    %64 = arith.andi %61, %63 : vector<8x256xi1>
    %65 = vector.extract_strided_slice %51 {offsets = [0, 0], sizes = [8, 1], strides = [1, 1]} : vector<8x2xf32> to vector<8x1xf32>
    %66 = vector.shape_cast %65 : vector<8x1xf32> to vector<8x1xf32>
    %67 = vector.broadcast %66 : vector<8x1xf32> to vector<8x256xf32>
    %68 = arith.select %64, %67, %59 : vector<8x256xi1>, vector<8x256xf32>
    %c128_i32_25 = arith.constant 128 : i32
    %69 = vector.broadcast %c128_i32_25 : i32 to vector<8x256xi32>
    %70 = arith.cmpi sge, %58, %69 : vector<8x256xi32>
    %c256_i32 = arith.constant 256 : i32
    %71 = vector.broadcast %c256_i32 : i32 to vector<8x256xi32>
    %72 = arith.cmpi slt, %58, %71 : vector<8x256xi32>
    %73 = arith.andi %70, %72 : vector<8x256xi1>
    %74 = vector.extract_strided_slice %51 {offsets = [0, 1], sizes = [8, 1], strides = [1, 1]} : vector<8x2xf32> to vector<8x1xf32>
    %75 = vector.shape_cast %74 : vector<8x1xf32> to vector<8x1xf32>
    %76 = vector.broadcast %75 : vector<8x1xf32> to vector<8x256xf32>
    %77 = arith.select %73, %76, %68 : vector<8x256xi1>, vector<8x256xf32>
    %78 = vector.extract_strided_slice %57 {offsets = [0, 0], sizes = [8, 256], strides = [1, 1]} : vector<16x256xf32> to vector<8x256xf32>
    %79 = arith.mulf %77, %78 : vector<8x256xf32>
    %80 = vector.extract_strided_slice %57 {offsets = [8, 0], sizes = [8, 256], strides = [1, 1]} : vector<16x256xf32> to vector<8x256xf32>
    %81 = arith.addf %79, %80 : vector<8x256xf32>
    %c48_26 = arith.constant 48 : index
    %c0_27 = arith.constant 0 : index
    %82 = vector.load %arg2[%c48_26, %c0_27] : memref<64x128xbf16, #tpu.memory_space<vmem>>, vector<8x8xbf16>
    %c80 = arith.constant 80 : index
    %c0_28 = arith.constant 0 : index
    %83 = vector.load %arg1[%c80, %c0_28] : memref<120x1xf32, #tpu.memory_space<vmem>>, vector<8x1xf32>
    %c64 = arith.constant 64 : index
    %c0_29 = arith.constant 0 : index
    %84 = vector.load %arg1[%c64, %c0_29] : memref<120x1xf32, #tpu.memory_space<vmem>>, vector<8x1xf32>
    %c72 = arith.constant 72 : index
    %c0_30 = arith.constant 0 : index
    %85 = vector.load %arg1[%c72, %c0_30] : memref<120x1xf32, #tpu.memory_space<vmem>>, vector<8x1xf32>
    %86 = vector.broadcast %84 : vector<8x1xf32> to vector<8x256xf32>
    %87 = arith.mulf %81, %86 : vector<8x256xf32>
    %88 = vector.broadcast %85 : vector<8x1xf32> to vector<8x256xf32>
    %89 = arith.addf %87, %88 : vector<8x256xf32>
    %cst_31 = arith.constant 0.000000e+00 : f32
    %90 = vector.broadcast %cst_31 : f32 to vector<8x256xf32>
    %91 = arith.maximumf %89, %90 : vector<8x256xf32>
    %92 = arith.truncf %91 : vector<8x256xf32> to vector<8x256xbf16>
    %cst_32 = arith.constant dense<0.000000e+00> : vector<8x256xf32>
    %93 = tpu.matmul %82, %92, %cst_32 {dimension_numbers = #tpu.dot_dimension_numbers<[1], [0], [0], [1], [0, 0, 1, 1], [], []>} : vector<8x8xbf16>, vector<8x256xbf16>, vector<8x256xf32> -> vector<8x256xf32>
    %94 = vector.broadcast %83 : vector<8x1xf32> to vector<8x256xf32>
    %95 = arith.addf %93, %94 : vector<8x256xf32>
    %96 = arith.truncf %95 : vector<8x256xf32> to vector<8x256xbf16>
    %c0_33 = arith.constant 0 : index
    %c0_34 = arith.constant 0 : index
    %97 = vector.load %arg3[%c0_33, %c0_34] : memref<8x256xbf16, #tpu.memory_space<vmem>>, vector<8x256xbf16>
    tpu.vector_store %arg3[%c0_33, %c0_34], %96 {strides = array<i32>} : memref<8x256xbf16, #tpu.memory_space<vmem>>, vector<8x256xbf16>,
    %c88 = arith.constant 88 : index
    %c0_35 = arith.constant 0 : index
    %98 = vector.load %arg1[%c88, %c0_35] : memref<120x1xf32, #tpu.memory_space<vmem>>, vector<8x1xf32>
    %99 = vector.broadcast %98 : vector<8x1xf32> to vector<8x256xf32>
    %100 = arith.mulf %95, %99 : vector<8x256xf32>
    %c96 = arith.constant 96 : index
    %c0_36 = arith.constant 0 : index
    %101 = vector.load %arg1[%c96, %c0_36] : memref<120x1xf32, #tpu.memory_space<vmem>>, vector<8x1xf32>
    %102 = vector.broadcast %101 : vector<8x1xf32> to vector<8x256xf32>
    %103 = arith.addf %100, %102 : vector<8x256xf32>
    %cst_37 = arith.constant 0.000000e+00 : f32
    %104 = vector.broadcast %cst_37 : f32 to vector<8x256xf32>
    %105 = arith.maximumf %103, %104 : vector<8x256xf32>
    %c104 = arith.constant 104 : index
    %c0_38 = arith.constant 0 : index
    %106 = vector.load %arg1[%c104, %c0_38] : memref<120x1xf32, #tpu.memory_space<vmem>>, vector<8x1xf32>
    %107 = vector.broadcast %106 : vector<8x1xf32> to vector<8x256xf32>
    %108 = arith.mulf %105, %107 : vector<8x256xf32>
    %cst_39 = arith.constant dense<0.000000e+00> : vector<256xf32>
    %109 = vector.multi_reduction <add>, %108, %cst_39 [0] : vector<8x256xf32> to vector<256xf32>
    %110 = vector.shape_cast %109 : vector<256xf32> to vector<1x256xf32>
    %c112 = arith.constant 112 : index
    %c0_40 = arith.constant 0 : index
    %111 = vector.load %arg1[%c112, %c0_40] : memref<120x1xf32, #tpu.memory_space<vmem>>, vector<1x1xf32>
    %112 = vector.broadcast %111 : vector<1x1xf32> to vector<1x256xf32>
    %113 = arith.addf %110, %112 : vector<1x256xf32>
    %114 = arith.negf %113 : vector<1x256xf32>
    %115 = math.exp %114 : vector<1x256xf32>
    %cst_41 = arith.constant 1.000000e+00 : f32
    %116 = vector.broadcast %cst_41 : f32 to vector<1x256xf32>
    %117 = arith.addf %116, %115 : vector<1x256xf32>
    %118 = arith.divf %116, %117 : vector<1x256xf32>
    %c0_42 = arith.constant 0 : index
    %c0_43 = arith.constant 0 : index
    %119 = vector.load %arg4[%c0_42, %c0_43] : memref<1x256xf32, #tpu.memory_space<vmem>>, vector<1x256xf32>
    tpu.vector_store %arg4[%c0_42, %c0_43], %118 {strides = array<i32>} : memref<1x256xf32, #tpu.memory_space<vmem>>, vector<1x256xf32>,
    return
  }
}

module attributes {stable_mosaic.version = 11 : i64} {
  func.func @_down_kernel(%arg0: memref<9x128xbf16, #tpu.memory_space<vmem>>, %arg1: memref<232x1xf32, #tpu.memory_space<vmem>>, %arg2: memref<80x128xbf16, #tpu.memory_space<vmem>>, %arg3: memref<16x128xbf16, #tpu.memory_space<vmem>>, %arg4: memref<1x128xf32, #tpu.memory_space<vmem>>) attributes {dimension_semantics = [], scalar_prefetch = 0 : i64, scratch_operands = 0 : i64, tpu.core_type = #tpu.core_type<tc>} {
    %c0 = arith.constant 0 : index
    %c0_0 = arith.constant 0 : index
    %0 = vector.load %arg0[%c0, %c0_0] : memref<9x128xbf16, #tpu.memory_space<vmem>>, vector<9x128xbf16>
    %c0_1 = arith.constant 0 : index
    %c0_2 = arith.constant 0 : index
    %1 = vector.load %arg2[%c0_1, %c0_2] : memref<80x128xbf16, #tpu.memory_space<vmem>>, vector<16x9xbf16>
    %c32 = arith.constant 32 : index
    %c0_3 = arith.constant 0 : index
    %2 = vector.load %arg1[%c32, %c0_3] : memref<232x1xf32, #tpu.memory_space<vmem>>, vector<16x1xf32>
    %c0_4 = arith.constant 0 : index
    %c0_5 = arith.constant 0 : index
    %3 = vector.load %arg1[%c0_4, %c0_5] : memref<232x1xf32, #tpu.memory_space<vmem>>, vector<9x1xf32>
    %c16 = arith.constant 16 : index
    %c0_6 = arith.constant 0 : index
    %4 = vector.load %arg1[%c16, %c0_6] : memref<232x1xf32, #tpu.memory_space<vmem>>, vector<9x1xf32>
    %5 = arith.extf %0 : vector<9x128xbf16> to vector<9x128xf32>
    %6 = vector.broadcast %3 : vector<9x1xf32> to vector<9x128xf32>
    %7 = arith.mulf %5, %6 : vector<9x128xf32>
    %8 = vector.broadcast %4 : vector<9x1xf32> to vector<9x128xf32>
    %9 = arith.addf %7, %8 : vector<9x128xf32>
    %cst = arith.constant 0.000000e+00 : f32
    %10 = vector.broadcast %cst : f32 to vector<9x128xf32>
    %11 = arith.maximumf %9, %10 : vector<9x128xf32>
    %12 = arith.truncf %11 : vector<9x128xf32> to vector<9x128xbf16>
    %cst_7 = arith.constant dense<0.000000e+00> : vector<16x128xf32>
    %13 = tpu.matmul %1, %12, %cst_7 {dimension_numbers = #tpu.dot_dimension_numbers<[1], [0], [0], [1], [0, 0, 1, 1], [], []>} : vector<16x9xbf16>, vector<9x128xbf16>, vector<16x128xf32> -> vector<16x128xf32>
    %14 = vector.broadcast %2 : vector<16x1xf32> to vector<16x128xf32>
    %15 = arith.addf %13, %14 : vector<16x128xf32>
    %16 = tpu.iota {dimensions = array<i32: 1>} : vector<16x2xi32>
    %cst_8 = arith.constant 0.000000e+00 : f32
    %17 = vector.broadcast %cst_8 : f32 to vector<16x2xf32>
    %18 = vector.extract_strided_slice %15 {offsets = [0, 0], sizes = [16, 64], strides = [1, 1]} : vector<16x128xf32> to vector<16x64xf32>
    %cst_9 = arith.constant dense<0xFF800000> : vector<16xf32>
    %19 = vector.multi_reduction <maximumf>, %18, %cst_9 [1] : vector<16x64xf32> to vector<16xf32>
    %20 = vector.shape_cast %19 : vector<16xf32> to vector<16x1xf32>
    %c0_i32 = arith.constant 0 : i32
    %21 = vector.broadcast %c0_i32 : i32 to vector<16x2xi32>
    %22 = arith.cmpi eq, %16, %21 : vector<16x2xi32>
    %23 = vector.shape_cast %20 : vector<16x1xf32> to vector<16x1xf32>
    %24 = vector.broadcast %23 : vector<16x1xf32> to vector<16x2xf32>
    %25 = arith.select %22, %24, %17 : vector<16x2xi1>, vector<16x2xf32>
    %26 = vector.extract_strided_slice %15 {offsets = [0, 64], sizes = [16, 64], strides = [1, 1]} : vector<16x128xf32> to vector<16x64xf32>
    %cst_10 = arith.constant dense<0xFF800000> : vector<16xf32>
    %27 = vector.multi_reduction <maximumf>, %26, %cst_10 [1] : vector<16x64xf32> to vector<16xf32>
    %28 = vector.shape_cast %27 : vector<16xf32> to vector<16x1xf32>
    %c1_i32 = arith.constant 1 : i32
    %29 = vector.broadcast %c1_i32 : i32 to vector<16x2xi32>
    %30 = arith.cmpi eq, %16, %29 : vector<16x2xi32>
    %31 = vector.shape_cast %28 : vector<16x1xf32> to vector<16x1xf32>
    %32 = vector.broadcast %31 : vector<16x1xf32> to vector<16x2xf32>
    %33 = arith.select %30, %32, %25 : vector<16x2xi1>, vector<16x2xf32>
    %c16_11 = arith.constant 16 : index
    %c0_12 = arith.constant 0 : index
    %34 = vector.load %arg2[%c16_11, %c0_12] : memref<80x128xbf16, #tpu.memory_space<vmem>>, vector<16x16xbf16>
    %c80 = arith.constant 80 : index
    %c0_13 = arith.constant 0 : index
    %35 = vector.load %arg1[%c80, %c0_13] : memref<232x1xf32, #tpu.memory_space<vmem>>, vector<16x1xf32>
    %c48 = arith.constant 48 : index
    %c0_14 = arith.constant 0 : index
    %36 = vector.load %arg1[%c48, %c0_14] : memref<232x1xf32, #tpu.memory_space<vmem>>, vector<16x1xf32>
    %c64 = arith.constant 64 : index
    %c0_15 = arith.constant 0 : index
    %37 = vector.load %arg1[%c64, %c0_15] : memref<232x1xf32, #tpu.memory_space<vmem>>, vector<16x1xf32>
    %38 = vector.broadcast %36 : vector<16x1xf32> to vector<16x2xf32>
    %39 = arith.mulf %33, %38 : vector<16x2xf32>
    %40 = vector.broadcast %37 : vector<16x1xf32> to vector<16x2xf32>
    %41 = arith.addf %39, %40 : vector<16x2xf32>
    %cst_16 = arith.constant 0.000000e+00 : f32
    %42 = vector.broadcast %cst_16 : f32 to vector<16x2xf32>
    %43 = arith.maximumf %41, %42 : vector<16x2xf32>
    %44 = arith.truncf %43 : vector<16x2xf32> to vector<16x2xbf16>
    %cst_17 = arith.constant dense<0.000000e+00> : vector<16x2xf32>
    %45 = tpu.matmul %34, %44, %cst_17 {dimension_numbers = #tpu.dot_dimension_numbers<[1], [0], [0], [1], [0, 0, 1, 1], [], []>} : vector<16x16xbf16>, vector<16x2xbf16>, vector<16x2xf32> -> vector<16x2xf32>
    %46 = vector.broadcast %35 : vector<16x1xf32> to vector<16x2xf32>
    %47 = arith.addf %45, %46 : vector<16x2xf32>
    %48 = arith.negf %47 : vector<16x2xf32>
    %49 = math.exp %48 : vector<16x2xf32>
    %cst_18 = arith.constant 1.000000e+00 : f32
    %50 = vector.broadcast %cst_18 : f32 to vector<16x2xf32>
    %51 = arith.addf %50, %49 : vector<16x2xf32>
    %52 = arith.divf %50, %51 : vector<16x2xf32>
    %c32_19 = arith.constant 32 : index
    %c0_20 = arith.constant 0 : index
    %53 = vector.load %arg2[%c32_19, %c0_20] : memref<80x128xbf16, #tpu.memory_space<vmem>>, vector<32x9xbf16>
    %cst_21 = arith.constant dense<0.000000e+00> : vector<32x128xf32>
    %54 = tpu.matmul %53, %0, %cst_21 {dimension_numbers = #tpu.dot_dimension_numbers<[1], [0], [0], [1], [0, 0, 1, 1], [], []>} : vector<32x9xbf16>, vector<9x128xbf16>, vector<32x128xf32> -> vector<32x128xf32>
    %c96 = arith.constant 96 : index
    %c0_22 = arith.constant 0 : index
    %55 = vector.load %arg1[%c96, %c0_22] : memref<232x1xf32, #tpu.memory_space<vmem>>, vector<32x1xf32>
    %56 = vector.broadcast %55 : vector<32x1xf32> to vector<32x128xf32>
    %57 = arith.addf %54, %56 : vector<32x128xf32>
    %58 = tpu.iota {dimensions = array<i32: 1>} : vector<16x128xi32>
    %cst_23 = arith.constant 0.000000e+00 : f32
    %59 = vector.broadcast %cst_23 : f32 to vector<16x128xf32>
    %c0_i32_24 = arith.constant 0 : i32
    %60 = vector.broadcast %c0_i32_24 : i32 to vector<16x128xi32>
    %61 = arith.cmpi sge, %58, %60 : vector<16x128xi32>
    %c64_i32 = arith.constant 64 : i32
    %62 = vector.broadcast %c64_i32 : i32 to vector<16x128xi32>
    %63 = arith.cmpi slt, %58, %62 : vector<16x128xi32>
    %64 = arith.andi %61, %63 : vector<16x128xi1>
    %65 = vector.extract_strided_slice %52 {offsets = [0, 0], sizes = [16, 1], strides = [1, 1]} : vector<16x2xf32> to vector<16x1xf32>
    %66 = vector.shape_cast %65 : vector<16x1xf32> to vector<16x1xf32>
    %67 = vector.broadcast %66 : vector<16x1xf32> to vector<16x128xf32>
    %68 = arith.select %64, %67, %59 : vector<16x128xi1>, vector<16x128xf32>
    %c64_i32_25 = arith.constant 64 : i32
    %69 = vector.broadcast %c64_i32_25 : i32 to vector<16x128xi32>
    %70 = arith.cmpi sge, %58, %69 : vector<16x128xi32>
    %c128_i32 = arith.constant 128 : i32
    %71 = vector.broadcast %c128_i32 : i32 to vector<16x128xi32>
    %72 = arith.cmpi slt, %58, %71 : vector<16x128xi32>
    %73 = arith.andi %70, %72 : vector<16x128xi1>
    %74 = vector.extract_strided_slice %52 {offsets = [0, 1], sizes = [16, 1], strides = [1, 1]} : vector<16x2xf32> to vector<16x1xf32>
    %75 = vector.shape_cast %74 : vector<16x1xf32> to vector<16x1xf32>
    %76 = vector.broadcast %75 : vector<16x1xf32> to vector<16x128xf32>
    %77 = arith.select %73, %76, %68 : vector<16x128xi1>, vector<16x128xf32>
    %78 = vector.extract_strided_slice %57 {offsets = [0, 0], sizes = [16, 128], strides = [1, 1]} : vector<32x128xf32> to vector<16x128xf32>
    %79 = arith.mulf %77, %78 : vector<16x128xf32>
    %80 = vector.extract_strided_slice %57 {offsets = [16, 0], sizes = [16, 128], strides = [1, 1]} : vector<32x128xf32> to vector<16x128xf32>
    %81 = arith.addf %79, %80 : vector<16x128xf32>
    %c64_26 = arith.constant 64 : index
    %c0_27 = arith.constant 0 : index
    %82 = vector.load %arg2[%c64_26, %c0_27] : memref<80x128xbf16, #tpu.memory_space<vmem>>, vector<16x16xbf16>
    %c160 = arith.constant 160 : index
    %c0_28 = arith.constant 0 : index
    %83 = vector.load %arg1[%c160, %c0_28] : memref<232x1xf32, #tpu.memory_space<vmem>>, vector<16x1xf32>
    %c128 = arith.constant 128 : index
    %c0_29 = arith.constant 0 : index
    %84 = vector.load %arg1[%c128, %c0_29] : memref<232x1xf32, #tpu.memory_space<vmem>>, vector<16x1xf32>
    %c144 = arith.constant 144 : index
    %c0_30 = arith.constant 0 : index
    %85 = vector.load %arg1[%c144, %c0_30] : memref<232x1xf32, #tpu.memory_space<vmem>>, vector<16x1xf32>
    %86 = vector.broadcast %84 : vector<16x1xf32> to vector<16x128xf32>
    %87 = arith.mulf %81, %86 : vector<16x128xf32>
    %88 = vector.broadcast %85 : vector<16x1xf32> to vector<16x128xf32>
    %89 = arith.addf %87, %88 : vector<16x128xf32>
    %cst_31 = arith.constant 0.000000e+00 : f32
    %90 = vector.broadcast %cst_31 : f32 to vector<16x128xf32>
    %91 = arith.maximumf %89, %90 : vector<16x128xf32>
    %92 = arith.truncf %91 : vector<16x128xf32> to vector<16x128xbf16>
    %cst_32 = arith.constant dense<0.000000e+00> : vector<16x128xf32>
    %93 = tpu.matmul %82, %92, %cst_32 {dimension_numbers = #tpu.dot_dimension_numbers<[1], [0], [0], [1], [0, 0, 1, 1], [], []>} : vector<16x16xbf16>, vector<16x128xbf16>, vector<16x128xf32> -> vector<16x128xf32>
    %94 = vector.broadcast %83 : vector<16x1xf32> to vector<16x128xf32>
    %95 = arith.addf %93, %94 : vector<16x128xf32>
    %96 = arith.truncf %95 : vector<16x128xf32> to vector<16x128xbf16>
    %c0_33 = arith.constant 0 : index
    %c0_34 = arith.constant 0 : index
    %97 = vector.load %arg3[%c0_33, %c0_34] : memref<16x128xbf16, #tpu.memory_space<vmem>>, vector<16x128xbf16>
    tpu.vector_store %arg3[%c0_33, %c0_34], %96 {strides = array<i32>} : memref<16x128xbf16, #tpu.memory_space<vmem>>, vector<16x128xbf16>,
    %c176 = arith.constant 176 : index
    %c0_35 = arith.constant 0 : index
    %98 = vector.load %arg1[%c176, %c0_35] : memref<232x1xf32, #tpu.memory_space<vmem>>, vector<16x1xf32>
    %99 = vector.broadcast %98 : vector<16x1xf32> to vector<16x128xf32>
    %100 = arith.mulf %95, %99 : vector<16x128xf32>
    %c192 = arith.constant 192 : index
    %c0_36 = arith.constant 0 : index
    %101 = vector.load %arg1[%c192, %c0_36] : memref<232x1xf32, #tpu.memory_space<vmem>>, vector<16x1xf32>
    %102 = vector.broadcast %101 : vector<16x1xf32> to vector<16x128xf32>
    %103 = arith.addf %100, %102 : vector<16x128xf32>
    %cst_37 = arith.constant 0.000000e+00 : f32
    %104 = vector.broadcast %cst_37 : f32 to vector<16x128xf32>
    %105 = arith.maximumf %103, %104 : vector<16x128xf32>
    %c208 = arith.constant 208 : index
    %c0_38 = arith.constant 0 : index
    %106 = vector.load %arg1[%c208, %c0_38] : memref<232x1xf32, #tpu.memory_space<vmem>>, vector<16x1xf32>
    %107 = vector.broadcast %106 : vector<16x1xf32> to vector<16x128xf32>
    %108 = arith.mulf %105, %107 : vector<16x128xf32>
    %cst_39 = arith.constant dense<0.000000e+00> : vector<128xf32>
    %109 = vector.multi_reduction <add>, %108, %cst_39 [0] : vector<16x128xf32> to vector<128xf32>
    %110 = vector.shape_cast %109 : vector<128xf32> to vector<1x128xf32>
    %c224 = arith.constant 224 : index
    %c0_40 = arith.constant 0 : index
    %111 = vector.load %arg1[%c224, %c0_40] : memref<232x1xf32, #tpu.memory_space<vmem>>, vector<1x1xf32>
    %112 = vector.broadcast %111 : vector<1x1xf32> to vector<1x128xf32>
    %113 = arith.addf %110, %112 : vector<1x128xf32>
    %114 = arith.negf %113 : vector<1x128xf32>
    %115 = math.exp %114 : vector<1x128xf32>
    %cst_41 = arith.constant 1.000000e+00 : f32
    %116 = vector.broadcast %cst_41 : f32 to vector<1x128xf32>
    %117 = arith.addf %116, %115 : vector<1x128xf32>
    %118 = arith.divf %116, %117 : vector<1x128xf32>
    %c0_42 = arith.constant 0 : index
    %c0_43 = arith.constant 0 : index
    %119 = vector.load %arg4[%c0_42, %c0_43] : memref<1x128xf32, #tpu.memory_space<vmem>>, vector<1x128xf32>
    tpu.vector_store %arg4[%c0_42, %c0_43], %118 {strides = array<i32>} : memref<1x128xf32, #tpu.memory_space<vmem>>, vector<1x128xf32>,
    return
  }
}

module attributes {stable_mosaic.version = 11 : i64} {
  func.func @_down_kernel(%arg0: memref<17x64xbf16, #tpu.memory_space<vmem>>, %arg1: memref<248x1xf32, #tpu.memory_space<vmem>>, %arg2: memref<80x128xbf16, #tpu.memory_space<vmem>>, %arg3: memref<16x64xbf16, #tpu.memory_space<vmem>>, %arg4: memref<1x64xf32, #tpu.memory_space<vmem>>) attributes {dimension_semantics = [], scalar_prefetch = 0 : i64, scratch_operands = 0 : i64, tpu.core_type = #tpu.core_type<tc>} {
    %c0 = arith.constant 0 : index
    %c0_0 = arith.constant 0 : index
    %0 = vector.load %arg0[%c0, %c0_0] : memref<17x64xbf16, #tpu.memory_space<vmem>>, vector<17x64xbf16>
    %c0_1 = arith.constant 0 : index
    %c0_2 = arith.constant 0 : index
    %1 = vector.load %arg2[%c0_1, %c0_2] : memref<80x128xbf16, #tpu.memory_space<vmem>>, vector<16x17xbf16>
    %c48 = arith.constant 48 : index
    %c0_3 = arith.constant 0 : index
    %2 = vector.load %arg1[%c48, %c0_3] : memref<248x1xf32, #tpu.memory_space<vmem>>, vector<16x1xf32>
    %c0_4 = arith.constant 0 : index
    %c0_5 = arith.constant 0 : index
    %3 = vector.load %arg1[%c0_4, %c0_5] : memref<248x1xf32, #tpu.memory_space<vmem>>, vector<17x1xf32>
    %c24 = arith.constant 24 : index
    %c0_6 = arith.constant 0 : index
    %4 = vector.load %arg1[%c24, %c0_6] : memref<248x1xf32, #tpu.memory_space<vmem>>, vector<17x1xf32>
    %5 = arith.extf %0 : vector<17x64xbf16> to vector<17x64xf32>
    %6 = vector.broadcast %3 : vector<17x1xf32> to vector<17x64xf32>
    %7 = arith.mulf %5, %6 : vector<17x64xf32>
    %8 = vector.broadcast %4 : vector<17x1xf32> to vector<17x64xf32>
    %9 = arith.addf %7, %8 : vector<17x64xf32>
    %cst = arith.constant 0.000000e+00 : f32
    %10 = vector.broadcast %cst : f32 to vector<17x64xf32>
    %11 = arith.maximumf %9, %10 : vector<17x64xf32>
    %12 = arith.truncf %11 : vector<17x64xf32> to vector<17x64xbf16>
    %cst_7 = arith.constant dense<0.000000e+00> : vector<16x64xf32>
    %13 = tpu.matmul %1, %12, %cst_7 {dimension_numbers = #tpu.dot_dimension_numbers<[1], [0], [0], [1], [0, 0, 1, 1], [], []>} : vector<16x17xbf16>, vector<17x64xbf16>, vector<16x64xf32> -> vector<16x64xf32>
    %14 = vector.broadcast %2 : vector<16x1xf32> to vector<16x64xf32>
    %15 = arith.addf %13, %14 : vector<16x64xf32>
    %16 = tpu.iota {dimensions = array<i32: 1>} : vector<16x2xi32>
    %cst_8 = arith.constant 0.000000e+00 : f32
    %17 = vector.broadcast %cst_8 : f32 to vector<16x2xf32>
    %18 = vector.extract_strided_slice %15 {offsets = [0, 0], sizes = [16, 32], strides = [1, 1]} : vector<16x64xf32> to vector<16x32xf32>
    %cst_9 = arith.constant dense<0xFF800000> : vector<16xf32>
    %19 = vector.multi_reduction <maximumf>, %18, %cst_9 [1] : vector<16x32xf32> to vector<16xf32>
    %20 = vector.shape_cast %19 : vector<16xf32> to vector<16x1xf32>
    %c0_i32 = arith.constant 0 : i32
    %21 = vector.broadcast %c0_i32 : i32 to vector<16x2xi32>
    %22 = arith.cmpi eq, %16, %21 : vector<16x2xi32>
    %23 = vector.shape_cast %20 : vector<16x1xf32> to vector<16x1xf32>
    %24 = vector.broadcast %23 : vector<16x1xf32> to vector<16x2xf32>
    %25 = arith.select %22, %24, %17 : vector<16x2xi1>, vector<16x2xf32>
    %26 = vector.extract_strided_slice %15 {offsets = [0, 32], sizes = [16, 32], strides = [1, 1]} : vector<16x64xf32> to vector<16x32xf32>
    %cst_10 = arith.constant dense<0xFF800000> : vector<16xf32>
    %27 = vector.multi_reduction <maximumf>, %26, %cst_10 [1] : vector<16x32xf32> to vector<16xf32>
    %28 = vector.shape_cast %27 : vector<16xf32> to vector<16x1xf32>
    %c1_i32 = arith.constant 1 : i32
    %29 = vector.broadcast %c1_i32 : i32 to vector<16x2xi32>
    %30 = arith.cmpi eq, %16, %29 : vector<16x2xi32>
    %31 = vector.shape_cast %28 : vector<16x1xf32> to vector<16x1xf32>
    %32 = vector.broadcast %31 : vector<16x1xf32> to vector<16x2xf32>
    %33 = arith.select %30, %32, %25 : vector<16x2xi1>, vector<16x2xf32>
    %c16 = arith.constant 16 : index
    %c0_11 = arith.constant 0 : index
    %34 = vector.load %arg2[%c16, %c0_11] : memref<80x128xbf16, #tpu.memory_space<vmem>>, vector<16x16xbf16>
    %c96 = arith.constant 96 : index
    %c0_12 = arith.constant 0 : index
    %35 = vector.load %arg1[%c96, %c0_12] : memref<248x1xf32, #tpu.memory_space<vmem>>, vector<16x1xf32>
    %c64 = arith.constant 64 : index
    %c0_13 = arith.constant 0 : index
    %36 = vector.load %arg1[%c64, %c0_13] : memref<248x1xf32, #tpu.memory_space<vmem>>, vector<16x1xf32>
    %c80 = arith.constant 80 : index
    %c0_14 = arith.constant 0 : index
    %37 = vector.load %arg1[%c80, %c0_14] : memref<248x1xf32, #tpu.memory_space<vmem>>, vector<16x1xf32>
    %38 = vector.broadcast %36 : vector<16x1xf32> to vector<16x2xf32>
    %39 = arith.mulf %33, %38 : vector<16x2xf32>
    %40 = vector.broadcast %37 : vector<16x1xf32> to vector<16x2xf32>
    %41 = arith.addf %39, %40 : vector<16x2xf32>
    %cst_15 = arith.constant 0.000000e+00 : f32
    %42 = vector.broadcast %cst_15 : f32 to vector<16x2xf32>
    %43 = arith.maximumf %41, %42 : vector<16x2xf32>
    %44 = arith.truncf %43 : vector<16x2xf32> to vector<16x2xbf16>
    %cst_16 = arith.constant dense<0.000000e+00> : vector<16x2xf32>
    %45 = tpu.matmul %34, %44, %cst_16 {dimension_numbers = #tpu.dot_dimension_numbers<[1], [0], [0], [1], [0, 0, 1, 1], [], []>} : vector<16x16xbf16>, vector<16x2xbf16>, vector<16x2xf32> -> vector<16x2xf32>
    %46 = vector.broadcast %35 : vector<16x1xf32> to vector<16x2xf32>
    %47 = arith.addf %45, %46 : vector<16x2xf32>
    %48 = arith.negf %47 : vector<16x2xf32>
    %49 = math.exp %48 : vector<16x2xf32>
    %cst_17 = arith.constant 1.000000e+00 : f32
    %50 = vector.broadcast %cst_17 : f32 to vector<16x2xf32>
    %51 = arith.addf %50, %49 : vector<16x2xf32>
    %52 = arith.divf %50, %51 : vector<16x2xf32>
    %c32 = arith.constant 32 : index
    %c0_18 = arith.constant 0 : index
    %53 = vector.load %arg2[%c32, %c0_18] : memref<80x128xbf16, #tpu.memory_space<vmem>>, vector<32x17xbf16>
    %cst_19 = arith.constant dense<0.000000e+00> : vector<32x64xf32>
    %54 = tpu.matmul %53, %0, %cst_19 {dimension_numbers = #tpu.dot_dimension_numbers<[1], [0], [0], [1], [0, 0, 1, 1], [], []>} : vector<32x17xbf16>, vector<17x64xbf16>, vector<32x64xf32> -> vector<32x64xf32>
    %c112 = arith.constant 112 : index
    %c0_20 = arith.constant 0 : index
    %55 = vector.load %arg1[%c112, %c0_20] : memref<248x1xf32, #tpu.memory_space<vmem>>, vector<32x1xf32>
    %56 = vector.broadcast %55 : vector<32x1xf32> to vector<32x64xf32>
    %57 = arith.addf %54, %56 : vector<32x64xf32>
    %58 = tpu.iota {dimensions = array<i32: 1>} : vector<16x64xi32>
    %cst_21 = arith.constant 0.000000e+00 : f32
    %59 = vector.broadcast %cst_21 : f32 to vector<16x64xf32>
    %c0_i32_22 = arith.constant 0 : i32
    %60 = vector.broadcast %c0_i32_22 : i32 to vector<16x64xi32>
    %61 = arith.cmpi sge, %58, %60 : vector<16x64xi32>
    %c32_i32 = arith.constant 32 : i32
    %62 = vector.broadcast %c32_i32 : i32 to vector<16x64xi32>
    %63 = arith.cmpi slt, %58, %62 : vector<16x64xi32>
    %64 = arith.andi %61, %63 : vector<16x64xi1>
    %65 = vector.extract_strided_slice %52 {offsets = [0, 0], sizes = [16, 1], strides = [1, 1]} : vector<16x2xf32> to vector<16x1xf32>
    %66 = vector.shape_cast %65 : vector<16x1xf32> to vector<16x1xf32>
    %67 = vector.broadcast %66 : vector<16x1xf32> to vector<16x64xf32>
    %68 = arith.select %64, %67, %59 : vector<16x64xi1>, vector<16x64xf32>
    %c32_i32_23 = arith.constant 32 : i32
    %69 = vector.broadcast %c32_i32_23 : i32 to vector<16x64xi32>
    %70 = arith.cmpi sge, %58, %69 : vector<16x64xi32>
    %c64_i32 = arith.constant 64 : i32
    %71 = vector.broadcast %c64_i32 : i32 to vector<16x64xi32>
    %72 = arith.cmpi slt, %58, %71 : vector<16x64xi32>
    %73 = arith.andi %70, %72 : vector<16x64xi1>
    %74 = vector.extract_strided_slice %52 {offsets = [0, 1], sizes = [16, 1], strides = [1, 1]} : vector<16x2xf32> to vector<16x1xf32>
    %75 = vector.shape_cast %74 : vector<16x1xf32> to vector<16x1xf32>
    %76 = vector.broadcast %75 : vector<16x1xf32> to vector<16x64xf32>
    %77 = arith.select %73, %76, %68 : vector<16x64xi1>, vector<16x64xf32>
    %78 = vector.extract_strided_slice %57 {offsets = [0, 0], sizes = [16, 64], strides = [1, 1]} : vector<32x64xf32> to vector<16x64xf32>
    %79 = arith.mulf %77, %78 : vector<16x64xf32>
    %80 = vector.extract_strided_slice %57 {offsets = [16, 0], sizes = [16, 64], strides = [1, 1]} : vector<32x64xf32> to vector<16x64xf32>
    %81 = arith.addf %79, %80 : vector<16x64xf32>
    %c64_24 = arith.constant 64 : index
    %c0_25 = arith.constant 0 : index
    %82 = vector.load %arg2[%c64_24, %c0_25] : memref<80x128xbf16, #tpu.memory_space<vmem>>, vector<16x16xbf16>
    %c176 = arith.constant 176 : index
    %c0_26 = arith.constant 0 : index
    %83 = vector.load %arg1[%c176, %c0_26] : memref<248x1xf32, #tpu.memory_space<vmem>>, vector<16x1xf32>
    %c144 = arith.constant 144 : index
    %c0_27 = arith.constant 0 : index
    %84 = vector.load %arg1[%c144, %c0_27] : memref<248x1xf32, #tpu.memory_space<vmem>>, vector<16x1xf32>
    %c160 = arith.constant 160 : index
    %c0_28 = arith.constant 0 : index
    %85 = vector.load %arg1[%c160, %c0_28] : memref<248x1xf32, #tpu.memory_space<vmem>>, vector<16x1xf32>
    %86 = vector.broadcast %84 : vector<16x1xf32> to vector<16x64xf32>
    %87 = arith.mulf %81, %86 : vector<16x64xf32>
    %88 = vector.broadcast %85 : vector<16x1xf32> to vector<16x64xf32>
    %89 = arith.addf %87, %88 : vector<16x64xf32>
    %cst_29 = arith.constant 0.000000e+00 : f32
    %90 = vector.broadcast %cst_29 : f32 to vector<16x64xf32>
    %91 = arith.maximumf %89, %90 : vector<16x64xf32>
    %92 = arith.truncf %91 : vector<16x64xf32> to vector<16x64xbf16>
    %cst_30 = arith.constant dense<0.000000e+00> : vector<16x64xf32>
    %93 = tpu.matmul %82, %92, %cst_30 {dimension_numbers = #tpu.dot_dimension_numbers<[1], [0], [0], [1], [0, 0, 1, 1], [], []>} : vector<16x16xbf16>, vector<16x64xbf16>, vector<16x64xf32> -> vector<16x64xf32>
    %94 = vector.broadcast %83 : vector<16x1xf32> to vector<16x64xf32>
    %95 = arith.addf %93, %94 : vector<16x64xf32>
    %96 = arith.truncf %95 : vector<16x64xf32> to vector<16x64xbf16>
    %c0_31 = arith.constant 0 : index
    %c0_32 = arith.constant 0 : index
    %97 = vector.load %arg3[%c0_31, %c0_32] : memref<16x64xbf16, #tpu.memory_space<vmem>>, vector<16x64xbf16>
    tpu.vector_store %arg3[%c0_31, %c0_32], %96 {strides = array<i32>} : memref<16x64xbf16, #tpu.memory_space<vmem>>, vector<16x64xbf16>,
    %c192 = arith.constant 192 : index
    %c0_33 = arith.constant 0 : index
    %98 = vector.load %arg1[%c192, %c0_33] : memref<248x1xf32, #tpu.memory_space<vmem>>, vector<16x1xf32>
    %99 = vector.broadcast %98 : vector<16x1xf32> to vector<16x64xf32>
    %100 = arith.mulf %95, %99 : vector<16x64xf32>
    %c208 = arith.constant 208 : index
    %c0_34 = arith.constant 0 : index
    %101 = vector.load %arg1[%c208, %c0_34] : memref<248x1xf32, #tpu.memory_space<vmem>>, vector<16x1xf32>
    %102 = vector.broadcast %101 : vector<16x1xf32> to vector<16x64xf32>
    %103 = arith.addf %100, %102 : vector<16x64xf32>
    %cst_35 = arith.constant 0.000000e+00 : f32
    %104 = vector.broadcast %cst_35 : f32 to vector<16x64xf32>
    %105 = arith.maximumf %103, %104 : vector<16x64xf32>
    %c224 = arith.constant 224 : index
    %c0_36 = arith.constant 0 : index
    %106 = vector.load %arg1[%c224, %c0_36] : memref<248x1xf32, #tpu.memory_space<vmem>>, vector<16x1xf32>
    %107 = vector.broadcast %106 : vector<16x1xf32> to vector<16x64xf32>
    %108 = arith.mulf %105, %107 : vector<16x64xf32>
    %cst_37 = arith.constant dense<0.000000e+00> : vector<64xf32>
    %109 = vector.multi_reduction <add>, %108, %cst_37 [0] : vector<16x64xf32> to vector<64xf32>
    %110 = vector.shape_cast %109 : vector<64xf32> to vector<1x64xf32>
    %c240 = arith.constant 240 : index
    %c0_38 = arith.constant 0 : index
    %111 = vector.load %arg1[%c240, %c0_38] : memref<248x1xf32, #tpu.memory_space<vmem>>, vector<1x1xf32>
    %112 = vector.broadcast %111 : vector<1x1xf32> to vector<1x64xf32>
    %113 = arith.addf %110, %112 : vector<1x64xf32>
    %114 = arith.negf %113 : vector<1x64xf32>
    %115 = math.exp %114 : vector<1x64xf32>
    %cst_39 = arith.constant 1.000000e+00 : f32
    %116 = vector.broadcast %cst_39 : f32 to vector<1x64xf32>
    %117 = arith.addf %116, %115 : vector<1x64xf32>
    %118 = arith.divf %116, %117 : vector<1x64xf32>
    %c0_40 = arith.constant 0 : index
    %c0_41 = arith.constant 0 : index
    %119 = vector.load %arg4[%c0_40, %c0_41] : memref<1x64xf32, #tpu.memory_space<vmem>>, vector<1x64xf32>
    tpu.vector_store %arg4[%c0_40, %c0_41], %118 {strides = array<i32>} : memref<1x64xf32, #tpu.memory_space<vmem>>, vector<1x64xf32>,
    return
  }
}

module attributes {stable_mosaic.version = 11 : i64} {
  func.func @_down_kernel(%arg0: memref<17x32xbf16, #tpu.memory_space<vmem>>, %arg1: memref<248x1xf32, #tpu.memory_space<vmem>>, %arg2: memref<80x128xbf16, #tpu.memory_space<vmem>>, %arg3: memref<16x32xbf16, #tpu.memory_space<vmem>>, %arg4: memref<1x32xf32, #tpu.memory_space<vmem>>) attributes {dimension_semantics = [], scalar_prefetch = 0 : i64, scratch_operands = 0 : i64, tpu.core_type = #tpu.core_type<tc>} {
    %c0 = arith.constant 0 : index
    %c0_0 = arith.constant 0 : index
    %0 = vector.load %arg0[%c0, %c0_0] : memref<17x32xbf16, #tpu.memory_space<vmem>>, vector<17x32xbf16>
    %c0_1 = arith.constant 0 : index
    %c0_2 = arith.constant 0 : index
    %1 = vector.load %arg2[%c0_1, %c0_2] : memref<80x128xbf16, #tpu.memory_space<vmem>>, vector<16x17xbf16>
    %c48 = arith.constant 48 : index
    %c0_3 = arith.constant 0 : index
    %2 = vector.load %arg1[%c48, %c0_3] : memref<248x1xf32, #tpu.memory_space<vmem>>, vector<16x1xf32>
    %c0_4 = arith.constant 0 : index
    %c0_5 = arith.constant 0 : index
    %3 = vector.load %arg1[%c0_4, %c0_5] : memref<248x1xf32, #tpu.memory_space<vmem>>, vector<17x1xf32>
    %c24 = arith.constant 24 : index
    %c0_6 = arith.constant 0 : index
    %4 = vector.load %arg1[%c24, %c0_6] : memref<248x1xf32, #tpu.memory_space<vmem>>, vector<17x1xf32>
    %5 = arith.extf %0 : vector<17x32xbf16> to vector<17x32xf32>
    %6 = vector.broadcast %3 : vector<17x1xf32> to vector<17x32xf32>
    %7 = arith.mulf %5, %6 : vector<17x32xf32>
    %8 = vector.broadcast %4 : vector<17x1xf32> to vector<17x32xf32>
    %9 = arith.addf %7, %8 : vector<17x32xf32>
    %cst = arith.constant 0.000000e+00 : f32
    %10 = vector.broadcast %cst : f32 to vector<17x32xf32>
    %11 = arith.maximumf %9, %10 : vector<17x32xf32>
    %12 = arith.truncf %11 : vector<17x32xf32> to vector<17x32xbf16>
    %cst_7 = arith.constant dense<0.000000e+00> : vector<16x32xf32>
    %13 = tpu.matmul %1, %12, %cst_7 {dimension_numbers = #tpu.dot_dimension_numbers<[1], [0], [0], [1], [0, 0, 1, 1], [], []>} : vector<16x17xbf16>, vector<17x32xbf16>, vector<16x32xf32> -> vector<16x32xf32>
    %14 = vector.broadcast %2 : vector<16x1xf32> to vector<16x32xf32>
    %15 = arith.addf %13, %14 : vector<16x32xf32>
    %16 = tpu.iota {dimensions = array<i32: 1>} : vector<16x2xi32>
    %cst_8 = arith.constant 0.000000e+00 : f32
    %17 = vector.broadcast %cst_8 : f32 to vector<16x2xf32>
    %18 = vector.extract_strided_slice %15 {offsets = [0, 0], sizes = [16, 16], strides = [1, 1]} : vector<16x32xf32> to vector<16x16xf32>
    %cst_9 = arith.constant dense<0xFF800000> : vector<16xf32>
    %19 = vector.multi_reduction <maximumf>, %18, %cst_9 [1] : vector<16x16xf32> to vector<16xf32>
    %20 = vector.shape_cast %19 : vector<16xf32> to vector<16x1xf32>
    %c0_i32 = arith.constant 0 : i32
    %21 = vector.broadcast %c0_i32 : i32 to vector<16x2xi32>
    %22 = arith.cmpi eq, %16, %21 : vector<16x2xi32>
    %23 = vector.shape_cast %20 : vector<16x1xf32> to vector<16x1xf32>
    %24 = vector.broadcast %23 : vector<16x1xf32> to vector<16x2xf32>
    %25 = arith.select %22, %24, %17 : vector<16x2xi1>, vector<16x2xf32>
    %26 = vector.extract_strided_slice %15 {offsets = [0, 16], sizes = [16, 16], strides = [1, 1]} : vector<16x32xf32> to vector<16x16xf32>
    %cst_10 = arith.constant dense<0xFF800000> : vector<16xf32>
    %27 = vector.multi_reduction <maximumf>, %26, %cst_10 [1] : vector<16x16xf32> to vector<16xf32>
    %28 = vector.shape_cast %27 : vector<16xf32> to vector<16x1xf32>
    %c1_i32 = arith.constant 1 : i32
    %29 = vector.broadcast %c1_i32 : i32 to vector<16x2xi32>
    %30 = arith.cmpi eq, %16, %29 : vector<16x2xi32>
    %31 = vector.shape_cast %28 : vector<16x1xf32> to vector<16x1xf32>
    %32 = vector.broadcast %31 : vector<16x1xf32> to vector<16x2xf32>
    %33 = arith.select %30, %32, %25 : vector<16x2xi1>, vector<16x2xf32>
    %c16 = arith.constant 16 : index
    %c0_11 = arith.constant 0 : index
    %34 = vector.load %arg2[%c16, %c0_11] : memref<80x128xbf16, #tpu.memory_space<vmem>>, vector<16x16xbf16>
    %c96 = arith.constant 96 : index
    %c0_12 = arith.constant 0 : index
    %35 = vector.load %arg1[%c96, %c0_12] : memref<248x1xf32, #tpu.memory_space<vmem>>, vector<16x1xf32>
    %c64 = arith.constant 64 : index
    %c0_13 = arith.constant 0 : index
    %36 = vector.load %arg1[%c64, %c0_13] : memref<248x1xf32, #tpu.memory_space<vmem>>, vector<16x1xf32>
    %c80 = arith.constant 80 : index
    %c0_14 = arith.constant 0 : index
    %37 = vector.load %arg1[%c80, %c0_14] : memref<248x1xf32, #tpu.memory_space<vmem>>, vector<16x1xf32>
    %38 = vector.broadcast %36 : vector<16x1xf32> to vector<16x2xf32>
    %39 = arith.mulf %33, %38 : vector<16x2xf32>
    %40 = vector.broadcast %37 : vector<16x1xf32> to vector<16x2xf32>
    %41 = arith.addf %39, %40 : vector<16x2xf32>
    %cst_15 = arith.constant 0.000000e+00 : f32
    %42 = vector.broadcast %cst_15 : f32 to vector<16x2xf32>
    %43 = arith.maximumf %41, %42 : vector<16x2xf32>
    %44 = arith.truncf %43 : vector<16x2xf32> to vector<16x2xbf16>
    %cst_16 = arith.constant dense<0.000000e+00> : vector<16x2xf32>
    %45 = tpu.matmul %34, %44, %cst_16 {dimension_numbers = #tpu.dot_dimension_numbers<[1], [0], [0], [1], [0, 0, 1, 1], [], []>} : vector<16x16xbf16>, vector<16x2xbf16>, vector<16x2xf32> -> vector<16x2xf32>
    %46 = vector.broadcast %35 : vector<16x1xf32> to vector<16x2xf32>
    %47 = arith.addf %45, %46 : vector<16x2xf32>
    %48 = arith.negf %47 : vector<16x2xf32>
    %49 = math.exp %48 : vector<16x2xf32>
    %cst_17 = arith.constant 1.000000e+00 : f32
    %50 = vector.broadcast %cst_17 : f32 to vector<16x2xf32>
    %51 = arith.addf %50, %49 : vector<16x2xf32>
    %52 = arith.divf %50, %51 : vector<16x2xf32>
    %c32 = arith.constant 32 : index
    %c0_18 = arith.constant 0 : index
    %53 = vector.load %arg2[%c32, %c0_18] : memref<80x128xbf16, #tpu.memory_space<vmem>>, vector<32x17xbf16>
    %cst_19 = arith.constant dense<0.000000e+00> : vector<32x32xf32>
    %54 = tpu.matmul %53, %0, %cst_19 {dimension_numbers = #tpu.dot_dimension_numbers<[1], [0], [0], [1], [0, 0, 1, 1], [], []>} : vector<32x17xbf16>, vector<17x32xbf16>, vector<32x32xf32> -> vector<32x32xf32>
    %c112 = arith.constant 112 : index
    %c0_20 = arith.constant 0 : index
    %55 = vector.load %arg1[%c112, %c0_20] : memref<248x1xf32, #tpu.memory_space<vmem>>, vector<32x1xf32>
    %56 = vector.broadcast %55 : vector<32x1xf32> to vector<32x32xf32>
    %57 = arith.addf %54, %56 : vector<32x32xf32>
    %58 = tpu.iota {dimensions = array<i32: 1>} : vector<16x32xi32>
    %cst_21 = arith.constant 0.000000e+00 : f32
    %59 = vector.broadcast %cst_21 : f32 to vector<16x32xf32>
    %c0_i32_22 = arith.constant 0 : i32
    %60 = vector.broadcast %c0_i32_22 : i32 to vector<16x32xi32>
    %61 = arith.cmpi sge, %58, %60 : vector<16x32xi32>
    %c16_i32 = arith.constant 16 : i32
    %62 = vector.broadcast %c16_i32 : i32 to vector<16x32xi32>
    %63 = arith.cmpi slt, %58, %62 : vector<16x32xi32>
    %64 = arith.andi %61, %63 : vector<16x32xi1>
    %65 = vector.extract_strided_slice %52 {offsets = [0, 0], sizes = [16, 1], strides = [1, 1]} : vector<16x2xf32> to vector<16x1xf32>
    %66 = vector.shape_cast %65 : vector<16x1xf32> to vector<16x1xf32>
    %67 = vector.broadcast %66 : vector<16x1xf32> to vector<16x32xf32>
    %68 = arith.select %64, %67, %59 : vector<16x32xi1>, vector<16x32xf32>
    %c16_i32_23 = arith.constant 16 : i32
    %69 = vector.broadcast %c16_i32_23 : i32 to vector<16x32xi32>
    %70 = arith.cmpi sge, %58, %69 : vector<16x32xi32>
    %c32_i32 = arith.constant 32 : i32
    %71 = vector.broadcast %c32_i32 : i32 to vector<16x32xi32>
    %72 = arith.cmpi slt, %58, %71 : vector<16x32xi32>
    %73 = arith.andi %70, %72 : vector<16x32xi1>
    %74 = vector.extract_strided_slice %52 {offsets = [0, 1], sizes = [16, 1], strides = [1, 1]} : vector<16x2xf32> to vector<16x1xf32>
    %75 = vector.shape_cast %74 : vector<16x1xf32> to vector<16x1xf32>
    %76 = vector.broadcast %75 : vector<16x1xf32> to vector<16x32xf32>
    %77 = arith.select %73, %76, %68 : vector<16x32xi1>, vector<16x32xf32>
    %78 = vector.extract_strided_slice %57 {offsets = [0, 0], sizes = [16, 32], strides = [1, 1]} : vector<32x32xf32> to vector<16x32xf32>
    %79 = arith.mulf %77, %78 : vector<16x32xf32>
    %80 = vector.extract_strided_slice %57 {offsets = [16, 0], sizes = [16, 32], strides = [1, 1]} : vector<32x32xf32> to vector<16x32xf32>
    %81 = arith.addf %79, %80 : vector<16x32xf32>
    %c64_24 = arith.constant 64 : index
    %c0_25 = arith.constant 0 : index
    %82 = vector.load %arg2[%c64_24, %c0_25] : memref<80x128xbf16, #tpu.memory_space<vmem>>, vector<16x16xbf16>
    %c176 = arith.constant 176 : index
    %c0_26 = arith.constant 0 : index
    %83 = vector.load %arg1[%c176, %c0_26] : memref<248x1xf32, #tpu.memory_space<vmem>>, vector<16x1xf32>
    %c144 = arith.constant 144 : index
    %c0_27 = arith.constant 0 : index
    %84 = vector.load %arg1[%c144, %c0_27] : memref<248x1xf32, #tpu.memory_space<vmem>>, vector<16x1xf32>
    %c160 = arith.constant 160 : index
    %c0_28 = arith.constant 0 : index
    %85 = vector.load %arg1[%c160, %c0_28] : memref<248x1xf32, #tpu.memory_space<vmem>>, vector<16x1xf32>
    %86 = vector.broadcast %84 : vector<16x1xf32> to vector<16x32xf32>
    %87 = arith.mulf %81, %86 : vector<16x32xf32>
    %88 = vector.broadcast %85 : vector<16x1xf32> to vector<16x32xf32>
    %89 = arith.addf %87, %88 : vector<16x32xf32>
    %cst_29 = arith.constant 0.000000e+00 : f32
    %90 = vector.broadcast %cst_29 : f32 to vector<16x32xf32>
    %91 = arith.maximumf %89, %90 : vector<16x32xf32>
    %92 = arith.truncf %91 : vector<16x32xf32> to vector<16x32xbf16>
    %cst_30 = arith.constant dense<0.000000e+00> : vector<16x32xf32>
    %93 = tpu.matmul %82, %92, %cst_30 {dimension_numbers = #tpu.dot_dimension_numbers<[1], [0], [0], [1], [0, 0, 1, 1], [], []>} : vector<16x16xbf16>, vector<16x32xbf16>, vector<16x32xf32> -> vector<16x32xf32>
    %94 = vector.broadcast %83 : vector<16x1xf32> to vector<16x32xf32>
    %95 = arith.addf %93, %94 : vector<16x32xf32>
    %96 = arith.truncf %95 : vector<16x32xf32> to vector<16x32xbf16>
    %c0_31 = arith.constant 0 : index
    %c0_32 = arith.constant 0 : index
    %97 = vector.load %arg3[%c0_31, %c0_32] : memref<16x32xbf16, #tpu.memory_space<vmem>>, vector<16x32xbf16>
    tpu.vector_store %arg3[%c0_31, %c0_32], %96 {strides = array<i32>} : memref<16x32xbf16, #tpu.memory_space<vmem>>, vector<16x32xbf16>,
    %c192 = arith.constant 192 : index
    %c0_33 = arith.constant 0 : index
    %98 = vector.load %arg1[%c192, %c0_33] : memref<248x1xf32, #tpu.memory_space<vmem>>, vector<16x1xf32>
    %99 = vector.broadcast %98 : vector<16x1xf32> to vector<16x32xf32>
    %100 = arith.mulf %95, %99 : vector<16x32xf32>
    %c208 = arith.constant 208 : index
    %c0_34 = arith.constant 0 : index
    %101 = vector.load %arg1[%c208, %c0_34] : memref<248x1xf32, #tpu.memory_space<vmem>>, vector<16x1xf32>
    %102 = vector.broadcast %101 : vector<16x1xf32> to vector<16x32xf32>
    %103 = arith.addf %100, %102 : vector<16x32xf32>
    %cst_35 = arith.constant 0.000000e+00 : f32
    %104 = vector.broadcast %cst_35 : f32 to vector<16x32xf32>
    %105 = arith.maximumf %103, %104 : vector<16x32xf32>
    %c224 = arith.constant 224 : index
    %c0_36 = arith.constant 0 : index
    %106 = vector.load %arg1[%c224, %c0_36] : memref<248x1xf32, #tpu.memory_space<vmem>>, vector<16x1xf32>
    %107 = vector.broadcast %106 : vector<16x1xf32> to vector<16x32xf32>
    %108 = arith.mulf %105, %107 : vector<16x32xf32>
    %cst_37 = arith.constant dense<0.000000e+00> : vector<32xf32>
    %109 = vector.multi_reduction <add>, %108, %cst_37 [0] : vector<16x32xf32> to vector<32xf32>
    %110 = vector.shape_cast %109 : vector<32xf32> to vector<1x32xf32>
    %c240 = arith.constant 240 : index
    %c0_38 = arith.constant 0 : index
    %111 = vector.load %arg1[%c240, %c0_38] : memref<248x1xf32, #tpu.memory_space<vmem>>, vector<1x1xf32>
    %112 = vector.broadcast %111 : vector<1x1xf32> to vector<1x32xf32>
    %113 = arith.addf %110, %112 : vector<1x32xf32>
    %114 = arith.negf %113 : vector<1x32xf32>
    %115 = math.exp %114 : vector<1x32xf32>
    %cst_39 = arith.constant 1.000000e+00 : f32
    %116 = vector.broadcast %cst_39 : f32 to vector<1x32xf32>
    %117 = arith.addf %116, %115 : vector<1x32xf32>
    %118 = arith.divf %116, %117 : vector<1x32xf32>
    %c0_40 = arith.constant 0 : index
    %c0_41 = arith.constant 0 : index
    %119 = vector.load %arg4[%c0_40, %c0_41] : memref<1x32xf32, #tpu.memory_space<vmem>>, vector<1x32xf32>
    tpu.vector_store %arg4[%c0_40, %c0_41], %118 {strides = array<i32>} : memref<1x32xf32, #tpu.memory_space<vmem>>, vector<1x32xf32>,
    return
  }
}

module attributes {stable_mosaic.version = 11 : i64} {
  func.func @_up_kernel(%arg0: memref<16x16xbf16, #tpu.memory_space<vmem>>, %arg1: memref<16x32xbf16, #tpu.memory_space<vmem>>, %arg2: memref<224x1xf32, #tpu.memory_space<vmem>>, %arg3: memref<144x128xbf16, #tpu.memory_space<vmem>>, %arg4: memref<16x32xbf16, #tpu.memory_space<vmem>>) attributes {dimension_semantics = [], scalar_prefetch = 0 : i64, scratch_operands = 0 : i64, tpu.core_type = #tpu.core_type<tc>} {
    %c0 = arith.constant 0 : index
    %c0_0 = arith.constant 0 : index
    %0 = vector.load %arg0[%c0, %c0_0] : memref<16x16xbf16, #tpu.memory_space<vmem>>, vector<16x16xbf16>
    %c0_1 = arith.constant 0 : index
    %c0_2 = arith.constant 0 : index
    %1 = vector.load %arg1[%c0_1, %c0_2] : memref<16x32xbf16, #tpu.memory_space<vmem>>, vector<16x32xbf16>
    %c0_3 = arith.constant 0 : index
    %c0_4 = arith.constant 0 : index
    %2 = vector.load %arg3[%c0_3, %c0_4] : memref<144x128xbf16, #tpu.memory_space<vmem>>, vector<16x16xbf16>
    %cst = arith.constant dense<0.000000e+00> : vector<16x16xf32>
    %3 = tpu.matmul %2, %0, %cst {dimension_numbers = #tpu.dot_dimension_numbers<[1], [0], [0], [1], [0, 0, 1, 1], [], []>} : vector<16x16xbf16>, vector<16x16xbf16>, vector<16x16xf32> -> vector<16x16xf32>
    %c0_5 = arith.constant 0 : index
    %c0_6 = arith.constant 0 : index
    %4 = vector.load %arg2[%c0_5, %c0_6] : memref<224x1xf32, #tpu.memory_space<vmem>>, vector<16x1xf32>
    %5 = vector.broadcast %4 : vector<16x1xf32> to vector<16x16xf32>
    %6 = arith.addf %3, %5 : vector<16x16xf32>
    %7 = tpu.iota {dimensions = array<i32: 1>} : vector<16x2xi32>
    %cst_7 = arith.constant 0.000000e+00 : f32
    %8 = vector.broadcast %cst_7 : f32 to vector<16x2xf32>
    %9 = vector.extract_strided_slice %6 {offsets = [0, 0], sizes = [16, 8], strides = [1, 1]} : vector<16x16xf32> to vector<16x8xf32>
    %cst_8 = arith.constant dense<0xFF800000> : vector<16xf32>
    %10 = vector.multi_reduction <maximumf>, %9, %cst_8 [1] : vector<16x8xf32> to vector<16xf32>
    %11 = vector.shape_cast %10 : vector<16xf32> to vector<16x1xf32>
    %c0_i32 = arith.constant 0 : i32
    %12 = vector.broadcast %c0_i32 : i32 to vector<16x2xi32>
    %13 = arith.cmpi eq, %7, %12 : vector<16x2xi32>
    %14 = vector.shape_cast %11 : vector<16x1xf32> to vector<16x1xf32>
    %15 = vector.broadcast %14 : vector<16x1xf32> to vector<16x2xf32>
    %16 = arith.select %13, %15, %8 : vector<16x2xi1>, vector<16x2xf32>
    %17 = vector.extract_strided_slice %6 {offsets = [0, 8], sizes = [16, 8], strides = [1, 1]} : vector<16x16xf32> to vector<16x8xf32>
    %cst_9 = arith.constant dense<0xFF800000> : vector<16xf32>
    %18 = vector.multi_reduction <maximumf>, %17, %cst_9 [1] : vector<16x8xf32> to vector<16xf32>
    %19 = vector.shape_cast %18 : vector<16xf32> to vector<16x1xf32>
    %c1_i32 = arith.constant 1 : i32
    %20 = vector.broadcast %c1_i32 : i32 to vector<16x2xi32>
    %21 = arith.cmpi eq, %7, %20 : vector<16x2xi32>
    %22 = vector.shape_cast %19 : vector<16x1xf32> to vector<16x1xf32>
    %23 = vector.broadcast %22 : vector<16x1xf32> to vector<16x2xf32>
    %24 = arith.select %21, %23, %16 : vector<16x2xi1>, vector<16x2xf32>
    %c16 = arith.constant 16 : index
    %c0_10 = arith.constant 0 : index
    %25 = vector.load %arg2[%c16, %c0_10] : memref<224x1xf32, #tpu.memory_space<vmem>>, vector<16x1xf32>
    %26 = vector.broadcast %25 : vector<16x1xf32> to vector<16x2xf32>
    %27 = arith.mulf %24, %26 : vector<16x2xf32>
    %c32 = arith.constant 32 : index
    %c0_11 = arith.constant 0 : index
    %28 = vector.load %arg2[%c32, %c0_11] : memref<224x1xf32, #tpu.memory_space<vmem>>, vector<16x1xf32>
    %29 = vector.broadcast %28 : vector<16x1xf32> to vector<16x2xf32>
    %30 = arith.addf %27, %29 : vector<16x2xf32>
    %cst_12 = arith.constant 0.000000e+00 : f32
    %31 = vector.broadcast %cst_12 : f32 to vector<16x2xf32>
    %32 = arith.maximumf %30, %31 : vector<16x2xf32>
    %33 = arith.extf %1 : vector<16x32xbf16> to vector<16x32xf32>
    %c48 = arith.constant 48 : index
    %c0_13 = arith.constant 0 : index
    %34 = vector.load %arg2[%c48, %c0_13] : memref<224x1xf32, #tpu.memory_space<vmem>>, vector<16x1xf32>
    %35 = vector.broadcast %34 : vector<16x1xf32> to vector<16x32xf32>
    %36 = arith.mulf %33, %35 : vector<16x32xf32>
    %c64 = arith.constant 64 : index
    %c0_14 = arith.constant 0 : index
    %37 = vector.load %arg2[%c64, %c0_14] : memref<224x1xf32, #tpu.memory_space<vmem>>, vector<16x1xf32>
    %38 = vector.broadcast %37 : vector<16x1xf32> to vector<16x32xf32>
    %39 = arith.addf %36, %38 : vector<16x32xf32>
    %cst_15 = arith.constant 0.000000e+00 : f32
    %40 = vector.broadcast %cst_15 : f32 to vector<16x32xf32>
    %41 = arith.maximumf %39, %40 : vector<16x32xf32>
    %c16_16 = arith.constant 16 : index
    %c0_17 = arith.constant 0 : index
    %42 = vector.load %arg3[%c16_16, %c0_17] : memref<144x128xbf16, #tpu.memory_space<vmem>>, vector<16x16xbf16>
    %c32_18 = arith.constant 32 : index
    %c0_19 = arith.constant 0 : index
    %43 = vector.load %arg3[%c32_18, %c0_19] : memref<144x128xbf16, #tpu.memory_space<vmem>>, vector<16x16xbf16>
    %44 = arith.truncf %32 : vector<16x2xf32> to vector<16x2xbf16>
    %cst_20 = arith.constant dense<0.000000e+00> : vector<16x2xf32>
    %45 = tpu.matmul %42, %44, %cst_20 {dimension_numbers = #tpu.dot_dimension_numbers<[1], [0], [0], [1], [0, 0, 1, 1], [], []>} : vector<16x16xbf16>, vector<16x2xbf16>, vector<16x2xf32> -> vector<16x2xf32>
    %c80 = arith.constant 80 : index
    %c0_21 = arith.constant 0 : index
    %46 = vector.load %arg2[%c80, %c0_21] : memref<224x1xf32, #tpu.memory_space<vmem>>, vector<16x1xf32>
    %47 = vector.broadcast %46 : vector<16x1xf32> to vector<16x2xf32>
    %48 = arith.addf %45, %47 : vector<16x2xf32>
    %49 = arith.truncf %41 : vector<16x32xf32> to vector<16x32xbf16>
    %cst_22 = arith.constant dense<0.000000e+00> : vector<16x32xf32>
    %50 = tpu.matmul %43, %49, %cst_22 {dimension_numbers = #tpu.dot_dimension_numbers<[1], [0], [0], [1], [0, 0, 1, 1], [], []>} : vector<16x16xbf16>, vector<16x32xbf16>, vector<16x32xf32> -> vector<16x32xf32>
    %51 = tpu.iota {dimensions = array<i32: 1>} : vector<16x2xi32>
    %cst_23 = arith.constant 0.000000e+00 : f32
    %52 = vector.broadcast %cst_23 : f32 to vector<16x2xf32>
    %53 = vector.extract_strided_slice %50 {offsets = [0, 0], sizes = [16, 16], strides = [1, 1]} : vector<16x32xf32> to vector<16x16xf32>
    %cst_24 = arith.constant dense<0xFF800000> : vector<16xf32>
    %54 = vector.multi_reduction <maximumf>, %53, %cst_24 [1] : vector<16x16xf32> to vector<16xf32>
    %55 = vector.shape_cast %54 : vector<16xf32> to vector<16x1xf32>
    %c0_i32_25 = arith.constant 0 : i32
    %56 = vector.broadcast %c0_i32_25 : i32 to vector<16x2xi32>
    %57 = arith.cmpi eq, %51, %56 : vector<16x2xi32>
    %58 = vector.shape_cast %55 : vector<16x1xf32> to vector<16x1xf32>
    %59 = vector.broadcast %58 : vector<16x1xf32> to vector<16x2xf32>
    %60 = arith.select %57, %59, %52 : vector<16x2xi1>, vector<16x2xf32>
    %61 = vector.extract_strided_slice %50 {offsets = [0, 16], sizes = [16, 16], strides = [1, 1]} : vector<16x32xf32> to vector<16x16xf32>
    %cst_26 = arith.constant dense<0xFF800000> : vector<16xf32>
    %62 = vector.multi_reduction <maximumf>, %61, %cst_26 [1] : vector<16x16xf32> to vector<16xf32>
    %63 = vector.shape_cast %62 : vector<16xf32> to vector<16x1xf32>
    %c1_i32_27 = arith.constant 1 : i32
    %64 = vector.broadcast %c1_i32_27 : i32 to vector<16x2xi32>
    %65 = arith.cmpi eq, %51, %64 : vector<16x2xi32>
    %66 = vector.shape_cast %63 : vector<16x1xf32> to vector<16x1xf32>
    %67 = vector.broadcast %66 : vector<16x1xf32> to vector<16x2xf32>
    %68 = arith.select %65, %67, %60 : vector<16x2xi1>, vector<16x2xf32>
    %69 = arith.addf %48, %68 : vector<16x2xf32>
    %c48_28 = arith.constant 48 : index
    %c0_29 = arith.constant 0 : index
    %70 = vector.load %arg3[%c48_28, %c0_29] : memref<144x128xbf16, #tpu.memory_space<vmem>>, vector<16x16xbf16>
    %c128 = arith.constant 128 : index
    %c0_30 = arith.constant 0 : index
    %71 = vector.load %arg2[%c128, %c0_30] : memref<224x1xf32, #tpu.memory_space<vmem>>, vector<16x1xf32>
    %c96 = arith.constant 96 : index
    %c0_31 = arith.constant 0 : index
    %72 = vector.load %arg2[%c96, %c0_31] : memref<224x1xf32, #tpu.memory_space<vmem>>, vector<16x1xf32>
    %c112 = arith.constant 112 : index
    %c0_32 = arith.constant 0 : index
    %73 = vector.load %arg2[%c112, %c0_32] : memref<224x1xf32, #tpu.memory_space<vmem>>, vector<16x1xf32>
    %74 = vector.broadcast %72 : vector<16x1xf32> to vector<16x2xf32>
    %75 = arith.mulf %69, %74 : vector<16x2xf32>
    %76 = vector.broadcast %73 : vector<16x1xf32> to vector<16x2xf32>
    %77 = arith.addf %75, %76 : vector<16x2xf32>
    %cst_33 = arith.constant 0.000000e+00 : f32
    %78 = vector.broadcast %cst_33 : f32 to vector<16x2xf32>
    %79 = arith.maximumf %77, %78 : vector<16x2xf32>
    %80 = arith.truncf %79 : vector<16x2xf32> to vector<16x2xbf16>
    %cst_34 = arith.constant dense<0.000000e+00> : vector<16x2xf32>
    %81 = tpu.matmul %70, %80, %cst_34 {dimension_numbers = #tpu.dot_dimension_numbers<[1], [0], [0], [1], [0, 0, 1, 1], [], []>} : vector<16x16xbf16>, vector<16x2xbf16>, vector<16x2xf32> -> vector<16x2xf32>
    %82 = vector.broadcast %71 : vector<16x1xf32> to vector<16x2xf32>
    %83 = arith.addf %81, %82 : vector<16x2xf32>
    %84 = arith.negf %83 : vector<16x2xf32>
    %85 = math.exp %84 : vector<16x2xf32>
    %cst_35 = arith.constant 1.000000e+00 : f32
    %86 = vector.broadcast %cst_35 : f32 to vector<16x2xf32>
    %87 = arith.addf %86, %85 : vector<16x2xf32>
    %88 = arith.divf %86, %87 : vector<16x2xf32>
    %c64_36 = arith.constant 64 : index
    %c0_37 = arith.constant 0 : index
    %89 = vector.load %arg3[%c64_36, %c0_37] : memref<144x128xbf16, #tpu.memory_space<vmem>>, vector<32x16xbf16>
    %c96_38 = arith.constant 96 : index
    %c0_39 = arith.constant 0 : index
    %90 = vector.load %arg3[%c96_38, %c0_39] : memref<144x128xbf16, #tpu.memory_space<vmem>>, vector<32x16xbf16>
    %91 = arith.truncf %24 : vector<16x2xf32> to vector<16x2xbf16>
    %cst_40 = arith.constant dense<0.000000e+00> : vector<32x2xf32>
    %92 = tpu.matmul %89, %91, %cst_40 {dimension_numbers = #tpu.dot_dimension_numbers<[1], [0], [0], [1], [0, 0, 1, 1], [], []>} : vector<32x16xbf16>, vector<16x2xbf16>, vector<32x2xf32> -> vector<32x2xf32>
    %c144 = arith.constant 144 : index
    %c0_41 = arith.constant 0 : index
    %93 = vector.load %arg2[%c144, %c0_41] : memref<224x1xf32, #tpu.memory_space<vmem>>, vector<32x1xf32>
    %94 = vector.broadcast %93 : vector<32x1xf32> to vector<32x2xf32>
    %95 = arith.addf %92, %94 : vector<32x2xf32>
    %cst_42 = arith.constant dense<0.000000e+00> : vector<32x32xf32>
    %96 = tpu.matmul %90, %1, %cst_42 {dimension_numbers = #tpu.dot_dimension_numbers<[1], [0], [0], [1], [0, 0, 1, 1], [], []>} : vector<32x16xbf16>, vector<16x32xbf16>, vector<32x32xf32> -> vector<32x32xf32>
    %97 = tpu.iota {dimensions = array<i32: 1>} : vector<32x32xi32>
    %cst_43 = arith.constant 0.000000e+00 : f32
    %98 = vector.broadcast %cst_43 : f32 to vector<32x32xf32>
    %c0_i32_44 = arith.constant 0 : i32
    %99 = vector.broadcast %c0_i32_44 : i32 to vector<32x32xi32>
    %100 = arith.cmpi sge, %97, %99 : vector<32x32xi32>
    %c16_i32 = arith.constant 16 : i32
    %101 = vector.broadcast %c16_i32 : i32 to vector<32x32xi32>
    %102 = arith.cmpi slt, %97, %101 : vector<32x32xi32>
    %103 = arith.andi %100, %102 : vector<32x32xi1>
    %104 = vector.extract_strided_slice %95 {offsets = [0, 0], sizes = [32, 1], strides = [1, 1]} : vector<32x2xf32> to vector<32x1xf32>
    %105 = vector.shape_cast %104 : vector<32x1xf32> to vector<32x1xf32>
    %106 = vector.broadcast %105 : vector<32x1xf32> to vector<32x32xf32>
    %107 = arith.select %103, %106, %98 : vector<32x32xi1>, vector<32x32xf32>
    %c16_i32_45 = arith.constant 16 : i32
    %108 = vector.broadcast %c16_i32_45 : i32 to vector<32x32xi32>
    %109 = arith.cmpi sge, %97, %108 : vector<32x32xi32>
    %c32_i32 = arith.constant 32 : i32
    %110 = vector.broadcast %c32_i32 : i32 to vector<32x32xi32>
    %111 = arith.cmpi slt, %97, %110 : vector<32x32xi32>
    %112 = arith.andi %109, %111 : vector<32x32xi1>
    %113 = vector.extract_strided_slice %95 {offsets = [0, 1], sizes = [32, 1], strides = [1, 1]} : vector<32x2xf32> to vector<32x1xf32>
    %114 = vector.shape_cast %113 : vector<32x1xf32> to vector<32x1xf32>
    %115 = vector.broadcast %114 : vector<32x1xf32> to vector<32x32xf32>
    %116 = arith.select %112, %115, %107 : vector<32x32xi1>, vector<32x32xf32>
    %117 = arith.addf %96, %116 : vector<32x32xf32>
    %118 = tpu.iota {dimensions = array<i32: 1>} : vector<16x32xi32>
    %cst_46 = arith.constant 0.000000e+00 : f32
    %119 = vector.broadcast %cst_46 : f32 to vector<16x32xf32>
    %c0_i32_47 = arith.constant 0 : i32
    %120 = vector.broadcast %c0_i32_47 : i32 to vector<16x32xi32>
    %121 = arith.cmpi sge, %118, %120 : vector<16x32xi32>
    %c16_i32_48 = arith.constant 16 : i32
    %122 = vector.broadcast %c16_i32_48 : i32 to vector<16x32xi32>
    %123 = arith.cmpi slt, %118, %122 : vector<16x32xi32>
    %124 = arith.andi %121, %123 : vector<16x32xi1>
    %125 = vector.extract_strided_slice %88 {offsets = [0, 0], sizes = [16, 1], strides = [1, 1]} : vector<16x2xf32> to vector<16x1xf32>
    %126 = vector.shape_cast %125 : vector<16x1xf32> to vector<16x1xf32>
    %127 = vector.broadcast %126 : vector<16x1xf32> to vector<16x32xf32>
    %128 = arith.select %124, %127, %119 : vector<16x32xi1>, vector<16x32xf32>
    %c16_i32_49 = arith.constant 16 : i32
    %129 = vector.broadcast %c16_i32_49 : i32 to vector<16x32xi32>
    %130 = arith.cmpi sge, %118, %129 : vector<16x32xi32>
    %c32_i32_50 = arith.constant 32 : i32
    %131 = vector.broadcast %c32_i32_50 : i32 to vector<16x32xi32>
    %132 = arith.cmpi slt, %118, %131 : vector<16x32xi32>
    %133 = arith.andi %130, %132 : vector<16x32xi1>
    %134 = vector.extract_strided_slice %88 {offsets = [0, 1], sizes = [16, 1], strides = [1, 1]} : vector<16x2xf32> to vector<16x1xf32>
    %135 = vector.shape_cast %134 : vector<16x1xf32> to vector<16x1xf32>
    %136 = vector.broadcast %135 : vector<16x1xf32> to vector<16x32xf32>
    %137 = arith.select %133, %136, %128 : vector<16x32xi1>, vector<16x32xf32>
    %138 = vector.extract_strided_slice %117 {offsets = [0, 0], sizes = [16, 32], strides = [1, 1]} : vector<32x32xf32> to vector<16x32xf32>
    %139 = arith.mulf %137, %138 : vector<16x32xf32>
    %140 = vector.extract_strided_slice %117 {offsets = [16, 0], sizes = [16, 32], strides = [1, 1]} : vector<32x32xf32> to vector<16x32xf32>
    %141 = arith.addf %139, %140 : vector<16x32xf32>
    %c128_51 = arith.constant 128 : index
    %c0_52 = arith.constant 0 : index
    %142 = vector.load %arg3[%c128_51, %c0_52] : memref<144x128xbf16, #tpu.memory_space<vmem>>, vector<16x16xbf16>
    %c208 = arith.constant 208 : index
    %c0_53 = arith.constant 0 : index
    %143 = vector.load %arg2[%c208, %c0_53] : memref<224x1xf32, #tpu.memory_space<vmem>>, vector<16x1xf32>
    %c176 = arith.constant 176 : index
    %c0_54 = arith.constant 0 : index
    %144 = vector.load %arg2[%c176, %c0_54] : memref<224x1xf32, #tpu.memory_space<vmem>>, vector<16x1xf32>
    %c192 = arith.constant 192 : index
    %c0_55 = arith.constant 0 : index
    %145 = vector.load %arg2[%c192, %c0_55] : memref<224x1xf32, #tpu.memory_space<vmem>>, vector<16x1xf32>
    %146 = vector.broadcast %144 : vector<16x1xf32> to vector<16x32xf32>
    %147 = arith.mulf %141, %146 : vector<16x32xf32>
    %148 = vector.broadcast %145 : vector<16x1xf32> to vector<16x32xf32>
    %149 = arith.addf %147, %148 : vector<16x32xf32>
    %cst_56 = arith.constant 0.000000e+00 : f32
    %150 = vector.broadcast %cst_56 : f32 to vector<16x32xf32>
    %151 = arith.maximumf %149, %150 : vector<16x32xf32>
    %152 = arith.truncf %151 : vector<16x32xf32> to vector<16x32xbf16>
    %cst_57 = arith.constant dense<0.000000e+00> : vector<16x32xf32>
    %153 = tpu.matmul %142, %152, %cst_57 {dimension_numbers = #tpu.dot_dimension_numbers<[1], [0], [0], [1], [0, 0, 1, 1], [], []>} : vector<16x16xbf16>, vector<16x32xbf16>, vector<16x32xf32> -> vector<16x32xf32>
    %154 = vector.broadcast %143 : vector<16x1xf32> to vector<16x32xf32>
    %155 = arith.addf %153, %154 : vector<16x32xf32>
    %156 = arith.truncf %155 : vector<16x32xf32> to vector<16x32xbf16>
    %c0_58 = arith.constant 0 : index
    %c0_59 = arith.constant 0 : index
    %157 = vector.load %arg4[%c0_58, %c0_59] : memref<16x32xbf16, #tpu.memory_space<vmem>>, vector<16x32xbf16>
    tpu.vector_store %arg4[%c0_58, %c0_59], %156 {strides = array<i32>} : memref<16x32xbf16, #tpu.memory_space<vmem>>, vector<16x32xbf16>,
    return
  }
}

module attributes {stable_mosaic.version = 11 : i64} {
  func.func @_cross_kernel(%arg0: memref<17x16xbf16, #tpu.memory_space<vmem>>, %arg1: memref<248x1xf32, #tpu.memory_space<vmem>>, %arg2: memref<128x128xbf16, #tpu.memory_space<vmem>>, %arg3: memref<16x16xbf16, #tpu.memory_space<vmem>>) attributes {dimension_semantics = [], scalar_prefetch = 0 : i64, scratch_operands = 0 : i64, tpu.core_type = #tpu.core_type<tc>} {
    %c0 = arith.constant 0 : index
    %c0_0 = arith.constant 0 : index
    %0 = vector.load %arg0[%c0, %c0_0] : memref<17x16xbf16, #tpu.memory_space<vmem>>, vector<17x16xbf16>
    %c0_1 = arith.constant 0 : index
    %c0_2 = arith.constant 0 : index
    %1 = vector.load %arg2[%c0_1, %c0_2] : memref<128x128xbf16, #tpu.memory_space<vmem>>, vector<16x17xbf16>
    %c48 = arith.constant 48 : index
    %c0_3 = arith.constant 0 : index
    %2 = vector.load %arg1[%c48, %c0_3] : memref<248x1xf32, #tpu.memory_space<vmem>>, vector<16x1xf32>
    %c0_4 = arith.constant 0 : index
    %c0_5 = arith.constant 0 : index
    %3 = vector.load %arg1[%c0_4, %c0_5] : memref<248x1xf32, #tpu.memory_space<vmem>>, vector<17x1xf32>
    %c24 = arith.constant 24 : index
    %c0_6 = arith.constant 0 : index
    %4 = vector.load %arg1[%c24, %c0_6] : memref<248x1xf32, #tpu.memory_space<vmem>>, vector<17x1xf32>
    %5 = arith.extf %0 : vector<17x16xbf16> to vector<17x16xf32>
    %6 = vector.broadcast %3 : vector<17x1xf32> to vector<17x16xf32>
    %7 = arith.mulf %5, %6 : vector<17x16xf32>
    %8 = vector.broadcast %4 : vector<17x1xf32> to vector<17x16xf32>
    %9 = arith.addf %7, %8 : vector<17x16xf32>
    %cst = arith.constant 0.000000e+00 : f32
    %10 = vector.broadcast %cst : f32 to vector<17x16xf32>
    %11 = arith.maximumf %9, %10 : vector<17x16xf32>
    %12 = arith.truncf %11 : vector<17x16xf32> to vector<17x16xbf16>
    %cst_7 = arith.constant dense<0.000000e+00> : vector<16x16xf32>
    %13 = tpu.matmul %1, %12, %cst_7 {dimension_numbers = #tpu.dot_dimension_numbers<[1], [0], [0], [1], [0, 0, 1, 1], [], []>} : vector<16x17xbf16>, vector<17x16xbf16>, vector<16x16xf32> -> vector<16x16xf32>
    %14 = vector.broadcast %2 : vector<16x1xf32> to vector<16x16xf32>
    %15 = arith.addf %13, %14 : vector<16x16xf32>
    %16 = tpu.iota {dimensions = array<i32: 1>} : vector<16x2xi32>
    %cst_8 = arith.constant 0.000000e+00 : f32
    %17 = vector.broadcast %cst_8 : f32 to vector<16x2xf32>
    %18 = vector.extract_strided_slice %15 {offsets = [0, 0], sizes = [16, 8], strides = [1, 1]} : vector<16x16xf32> to vector<16x8xf32>
    %cst_9 = arith.constant dense<0xFF800000> : vector<16xf32>
    %19 = vector.multi_reduction <maximumf>, %18, %cst_9 [1] : vector<16x8xf32> to vector<16xf32>
    %20 = vector.shape_cast %19 : vector<16xf32> to vector<16x1xf32>
    %c0_i32 = arith.constant 0 : i32
    %21 = vector.broadcast %c0_i32 : i32 to vector<16x2xi32>
    %22 = arith.cmpi eq, %16, %21 : vector<16x2xi32>
    %23 = vector.shape_cast %20 : vector<16x1xf32> to vector<16x1xf32>
    %24 = vector.broadcast %23 : vector<16x1xf32> to vector<16x2xf32>
    %25 = arith.select %22, %24, %17 : vector<16x2xi1>, vector<16x2xf32>
    %26 = vector.extract_strided_slice %15 {offsets = [0, 8], sizes = [16, 8], strides = [1, 1]} : vector<16x16xf32> to vector<16x8xf32>
    %cst_10 = arith.constant dense<0xFF800000> : vector<16xf32>
    %27 = vector.multi_reduction <maximumf>, %26, %cst_10 [1] : vector<16x8xf32> to vector<16xf32>
    %28 = vector.shape_cast %27 : vector<16xf32> to vector<16x1xf32>
    %c1_i32 = arith.constant 1 : i32
    %29 = vector.broadcast %c1_i32 : i32 to vector<16x2xi32>
    %30 = arith.cmpi eq, %16, %29 : vector<16x2xi32>
    %31 = vector.shape_cast %28 : vector<16x1xf32> to vector<16x1xf32>
    %32 = vector.broadcast %31 : vector<16x1xf32> to vector<16x2xf32>
    %33 = arith.select %30, %32, %25 : vector<16x2xi1>, vector<16x2xf32>
    %c16 = arith.constant 16 : index
    %c0_11 = arith.constant 0 : index
    %34 = vector.load %arg2[%c16, %c0_11] : memref<128x128xbf16, #tpu.memory_space<vmem>>, vector<16x16xbf16>
    %c96 = arith.constant 96 : index
    %c0_12 = arith.constant 0 : index
    %35 = vector.load %arg1[%c96, %c0_12] : memref<248x1xf32, #tpu.memory_space<vmem>>, vector<16x1xf32>
    %c64 = arith.constant 64 : index
    %c0_13 = arith.constant 0 : index
    %36 = vector.load %arg1[%c64, %c0_13] : memref<248x1xf32, #tpu.memory_space<vmem>>, vector<16x1xf32>
    %c80 = arith.constant 80 : index
    %c0_14 = arith.constant 0 : index
    %37 = vector.load %arg1[%c80, %c0_14] : memref<248x1xf32, #tpu.memory_space<vmem>>, vector<16x1xf32>
    %38 = vector.broadcast %36 : vector<16x1xf32> to vector<16x2xf32>
    %39 = arith.mulf %33, %38 : vector<16x2xf32>
    %40 = vector.broadcast %37 : vector<16x1xf32> to vector<16x2xf32>
    %41 = arith.addf %39, %40 : vector<16x2xf32>
    %cst_15 = arith.constant 0.000000e+00 : f32
    %42 = vector.broadcast %cst_15 : f32 to vector<16x2xf32>
    %43 = arith.maximumf %41, %42 : vector<16x2xf32>
    %44 = arith.truncf %43 : vector<16x2xf32> to vector<16x2xbf16>
    %cst_16 = arith.constant dense<0.000000e+00> : vector<16x2xf32>
    %45 = tpu.matmul %34, %44, %cst_16 {dimension_numbers = #tpu.dot_dimension_numbers<[1], [0], [0], [1], [0, 0, 1, 1], [], []>} : vector<16x16xbf16>, vector<16x2xbf16>, vector<16x2xf32> -> vector<16x2xf32>
    %46 = vector.broadcast %35 : vector<16x1xf32> to vector<16x2xf32>
    %47 = arith.addf %45, %46 : vector<16x2xf32>
    %48 = arith.negf %47 : vector<16x2xf32>
    %49 = math.exp %48 : vector<16x2xf32>
    %cst_17 = arith.constant 1.000000e+00 : f32
    %50 = vector.broadcast %cst_17 : f32 to vector<16x2xf32>
    %51 = arith.addf %50, %49 : vector<16x2xf32>
    %52 = arith.divf %50, %51 : vector<16x2xf32>
    %c32 = arith.constant 32 : index
    %c0_18 = arith.constant 0 : index
    %53 = vector.load %arg2[%c32, %c0_18] : memref<128x128xbf16, #tpu.memory_space<vmem>>, vector<32x17xbf16>
    %cst_19 = arith.constant dense<0.000000e+00> : vector<32x16xf32>
    %54 = tpu.matmul %53, %0, %cst_19 {dimension_numbers = #tpu.dot_dimension_numbers<[1], [0], [0], [1], [0, 0, 1, 1], [], []>} : vector<32x17xbf16>, vector<17x16xbf16>, vector<32x16xf32> -> vector<32x16xf32>
    %c112 = arith.constant 112 : index
    %c0_20 = arith.constant 0 : index
    %55 = vector.load %arg1[%c112, %c0_20] : memref<248x1xf32, #tpu.memory_space<vmem>>, vector<32x1xf32>
    %56 = vector.broadcast %55 : vector<32x1xf32> to vector<32x16xf32>
    %57 = arith.addf %54, %56 : vector<32x16xf32>
    %58 = tpu.iota {dimensions = array<i32: 1>} : vector<16x16xi32>
    %cst_21 = arith.constant 0.000000e+00 : f32
    %59 = vector.broadcast %cst_21 : f32 to vector<16x16xf32>
    %c0_i32_22 = arith.constant 0 : i32
    %60 = vector.broadcast %c0_i32_22 : i32 to vector<16x16xi32>
    %61 = arith.cmpi sge, %58, %60 : vector<16x16xi32>
    %c8_i32 = arith.constant 8 : i32
    %62 = vector.broadcast %c8_i32 : i32 to vector<16x16xi32>
    %63 = arith.cmpi slt, %58, %62 : vector<16x16xi32>
    %64 = arith.andi %61, %63 : vector<16x16xi1>
    %65 = vector.extract_strided_slice %52 {offsets = [0, 0], sizes = [16, 1], strides = [1, 1]} : vector<16x2xf32> to vector<16x1xf32>
    %66 = vector.shape_cast %65 : vector<16x1xf32> to vector<16x1xf32>
    %67 = vector.broadcast %66 : vector<16x1xf32> to vector<16x16xf32>
    %68 = arith.select %64, %67, %59 : vector<16x16xi1>, vector<16x16xf32>
    %c8_i32_23 = arith.constant 8 : i32
    %69 = vector.broadcast %c8_i32_23 : i32 to vector<16x16xi32>
    %70 = arith.cmpi sge, %58, %69 : vector<16x16xi32>
    %c16_i32 = arith.constant 16 : i32
    %71 = vector.broadcast %c16_i32 : i32 to vector<16x16xi32>
    %72 = arith.cmpi slt, %58, %71 : vector<16x16xi32>
    %73 = arith.andi %70, %72 : vector<16x16xi1>
    %74 = vector.extract_strided_slice %52 {offsets = [0, 1], sizes = [16, 1], strides = [1, 1]} : vector<16x2xf32> to vector<16x1xf32>
    %75 = vector.shape_cast %74 : vector<16x1xf32> to vector<16x1xf32>
    %76 = vector.broadcast %75 : vector<16x1xf32> to vector<16x16xf32>
    %77 = arith.select %73, %76, %68 : vector<16x16xi1>, vector<16x16xf32>
    %78 = vector.extract_strided_slice %57 {offsets = [0, 0], sizes = [16, 16], strides = [1, 1]} : vector<32x16xf32> to vector<16x16xf32>
    %79 = arith.mulf %77, %78 : vector<16x16xf32>
    %80 = vector.extract_strided_slice %57 {offsets = [16, 0], sizes = [16, 16], strides = [1, 1]} : vector<32x16xf32> to vector<16x16xf32>
    %81 = arith.addf %79, %80 : vector<16x16xf32>
    %c64_24 = arith.constant 64 : index
    %c0_25 = arith.constant 0 : index
    %82 = vector.load %arg2[%c64_24, %c0_25] : memref<128x128xbf16, #tpu.memory_space<vmem>>, vector<16x16xbf16>
    %c176 = arith.constant 176 : index
    %c0_26 = arith.constant 0 : index
    %83 = vector.load %arg1[%c176, %c0_26] : memref<248x1xf32, #tpu.memory_space<vmem>>, vector<16x1xf32>
    %c144 = arith.constant 144 : index
    %c0_27 = arith.constant 0 : index
    %84 = vector.load %arg1[%c144, %c0_27] : memref<248x1xf32, #tpu.memory_space<vmem>>, vector<16x1xf32>
    %c160 = arith.constant 160 : index
    %c0_28 = arith.constant 0 : index
    %85 = vector.load %arg1[%c160, %c0_28] : memref<248x1xf32, #tpu.memory_space<vmem>>, vector<16x1xf32>
    %86 = vector.broadcast %84 : vector<16x1xf32> to vector<16x16xf32>
    %87 = arith.mulf %81, %86 : vector<16x16xf32>
    %88 = vector.broadcast %85 : vector<16x1xf32> to vector<16x16xf32>
    %89 = arith.addf %87, %88 : vector<16x16xf32>
    %cst_29 = arith.constant 0.000000e+00 : f32
    %90 = vector.broadcast %cst_29 : f32 to vector<16x16xf32>
    %91 = arith.maximumf %89, %90 : vector<16x16xf32>
    %92 = arith.truncf %91 : vector<16x16xf32> to vector<16x16xbf16>
    %cst_30 = arith.constant dense<0.000000e+00> : vector<16x16xf32>
    %93 = tpu.matmul %82, %92, %cst_30 {dimension_numbers = #tpu.dot_dimension_numbers<[1], [0], [0], [1], [0, 0, 1, 1], [], []>} : vector<16x16xbf16>, vector<16x16xbf16>, vector<16x16xf32> -> vector<16x16xf32>
    %94 = vector.broadcast %83 : vector<16x1xf32> to vector<16x16xf32>
    %95 = arith.addf %93, %94 : vector<16x16xf32>
    %c80_31 = arith.constant 80 : index
    %c0_32 = arith.constant 0 : index
    %96 = vector.load %arg2[%c80_31, %c0_32] : memref<128x128xbf16, #tpu.memory_space<vmem>>, vector<16x16xbf16>
    %c224 = arith.constant 224 : index
    %c0_33 = arith.constant 0 : index
    %97 = vector.load %arg1[%c224, %c0_33] : memref<248x1xf32, #tpu.memory_space<vmem>>, vector<16x1xf32>
    %c192 = arith.constant 192 : index
    %c0_34 = arith.constant 0 : index
    %98 = vector.load %arg1[%c192, %c0_34] : memref<248x1xf32, #tpu.memory_space<vmem>>, vector<16x1xf32>
    %c208 = arith.constant 208 : index
    %c0_35 = arith.constant 0 : index
    %99 = vector.load %arg1[%c208, %c0_35] : memref<248x1xf32, #tpu.memory_space<vmem>>, vector<16x1xf32>
    %100 = vector.broadcast %98 : vector<16x1xf32> to vector<16x16xf32>
    %101 = arith.mulf %95, %100 : vector<16x16xf32>
    %102 = vector.broadcast %99 : vector<16x1xf32> to vector<16x16xf32>
    %103 = arith.addf %101, %102 : vector<16x16xf32>
    %cst_36 = arith.constant 0.000000e+00 : f32
    %104 = vector.broadcast %cst_36 : f32 to vector<16x16xf32>
    %105 = arith.maximumf %103, %104 : vector<16x16xf32>
    %106 = arith.truncf %105 : vector<16x16xf32> to vector<16x16xbf16>
    %cst_37 = arith.constant dense<0.000000e+00> : vector<16x16xf32>
    %107 = tpu.matmul %96, %106, %cst_37 {dimension_numbers = #tpu.dot_dimension_numbers<[1], [0], [0], [1], [0, 0, 1, 1], [], []>} : vector<16x16xbf16>, vector<16x16xbf16>, vector<16x16xf32> -> vector<16x16xf32>
    %108 = vector.broadcast %97 : vector<16x1xf32> to vector<16x16xf32>
    %109 = arith.addf %107, %108 : vector<16x16xf32>
    %c96_38 = arith.constant 96 : index
    %c0_39 = arith.constant 0 : index
    %110 = vector.load %arg2[%c96_38, %c0_39] : memref<128x128xbf16, #tpu.memory_space<vmem>>, vector<16x16xbf16>
    %c112_40 = arith.constant 112 : index
    %c0_41 = arith.constant 0 : index
    %111 = vector.load %arg2[%c112_40, %c0_41] : memref<128x128xbf16, #tpu.memory_space<vmem>>, vector<16x16xbf16>
    %c240 = arith.constant 240 : index
    %c0_42 = arith.constant 0 : index
    %112 = vector.load %arg1[%c240, %c0_42] : memref<248x1xf32, #tpu.memory_space<vmem>>, vector<1x1xf32>
    %113 = arith.truncf %109 : vector<16x16xf32> to vector<16x16xbf16>
    %cst_43 = arith.constant dense<0.000000e+00> : vector<16x16xf32>
    %114 = tpu.matmul %110, %113, %cst_43 {dimension_numbers = #tpu.dot_dimension_numbers<[1], [0], [0], [1], [0, 0, 1, 1], [], []>} : vector<16x16xbf16>, vector<16x16xbf16>, vector<16x16xf32> -> vector<16x16xf32>
    %cst_44 = arith.constant dense<0.000000e+00> : vector<16x16xf32>
    %115 = tpu.matmul %111, %113, %cst_44 {dimension_numbers = #tpu.dot_dimension_numbers<[1], [0], [0], [1], [0, 0, 1, 1], [], []>} : vector<16x16xbf16>, vector<16x16xbf16>, vector<16x16xf32> -> vector<16x16xf32>
    %116 = vector.extract_strided_slice %113 {offsets = [0, 0], sizes = [16, 8], strides = [1, 1]} : vector<16x16xbf16> to vector<16x8xbf16>
    %117 = vector.extract_strided_slice %114 {offsets = [0, 0], sizes = [16, 8], strides = [1, 1]} : vector<16x16xf32> to vector<16x8xf32>
    %118 = arith.truncf %117 : vector<16x8xf32> to vector<16x8xbf16>
    %cst_45 = arith.constant dense<0.000000e+00> : vector<8x8xf32>
    %119 = tpu.matmul %116, %118, %cst_45 {dimension_numbers = #tpu.dot_dimension_numbers<[0], [0], [1], [1], [0, 1, 1, 1], [], []>} : vector<16x8xbf16>, vector<16x8xbf16>, vector<8x8xf32> -> vector<8x8xf32>
    %cst_46 = arith.constant dense<0xFF800000> : vector<8xf32>
    %120 = vector.multi_reduction <maximumf>, %119, %cst_46 [0] : vector<8x8xf32> to vector<8xf32>
    %121 = vector.shape_cast %120 : vector<8xf32> to vector<1x8xf32>
    %122 = vector.broadcast %121 : vector<1x8xf32> to vector<8x8xf32>
    %123 = arith.subf %119, %122 : vector<8x8xf32>
    %124 = math.exp %123 : vector<8x8xf32>
    %cst_47 = arith.constant dense<0.000000e+00> : vector<8xf32>
    %125 = vector.multi_reduction <add>, %124, %cst_47 [0] : vector<8x8xf32> to vector<8xf32>
    %126 = vector.shape_cast %125 : vector<8xf32> to vector<1x8xf32>
    %127 = tpu.reciprocal %126 {approx = true} : vector<1x8xf32> -> vector<1x8xf32>
    %128 = vector.broadcast %127 : vector<1x8xf32> to vector<8x8xf32>
    %129 = arith.mulf %124, %128 : vector<8x8xf32>
    %130 = vector.extract_strided_slice %115 {offsets = [0, 0], sizes = [16, 8], strides = [1, 1]} : vector<16x16xf32> to vector<16x8xf32>
    %131 = arith.truncf %130 : vector<16x8xf32> to vector<16x8xbf16>
    %132 = arith.truncf %129 : vector<8x8xf32> to vector<8x8xbf16>
    %cst_48 = arith.constant dense<0.000000e+00> : vector<16x8xf32>
    %133 = tpu.matmul %131, %132, %cst_48 {dimension_numbers = #tpu.dot_dimension_numbers<[1], [0], [0], [1], [0, 0, 1, 1], [], []>} : vector<16x8xbf16>, vector<8x8xbf16>, vector<16x8xf32> -> vector<16x8xf32>
    %134 = vector.broadcast %112 : vector<1x1xf32> to vector<16x8xf32>
    %135 = arith.mulf %134, %133 : vector<16x8xf32>
    %136 = vector.extract_strided_slice %109 {offsets = [0, 0], sizes = [16, 8], strides = [1, 1]} : vector<16x16xf32> to vector<16x8xf32>
    %137 = arith.addf %135, %136 : vector<16x8xf32>
    %138 = arith.truncf %137 : vector<16x8xf32> to vector<16x8xbf16>
    %c0_49 = arith.constant 0 : index
    %c0_50 = arith.constant 0 : index
    %139 = vector.load %arg3[%c0_49, %c0_50] : memref<16x16xbf16, #tpu.memory_space<vmem>>, vector<16x8xbf16>
    tpu.vector_store %arg3[%c0_49, %c0_50], %138 {strides = array<i32>} : memref<16x16xbf16, #tpu.memory_space<vmem>>, vector<16x8xbf16>,
    %140 = vector.extract_strided_slice %113 {offsets = [0, 8], sizes = [16, 8], strides = [1, 1]} : vector<16x16xbf16> to vector<16x8xbf16>
    %141 = vector.extract_strided_slice %114 {offsets = [0, 8], sizes = [16, 8], strides = [1, 1]} : vector<16x16xf32> to vector<16x8xf32>
    %142 = arith.truncf %141 : vector<16x8xf32> to vector<16x8xbf16>
    %cst_51 = arith.constant dense<0.000000e+00> : vector<8x8xf32>
    %143 = tpu.matmul %140, %142, %cst_51 {dimension_numbers = #tpu.dot_dimension_numbers<[0], [0], [1], [1], [0, 1, 1, 1], [], []>} : vector<16x8xbf16>, vector<16x8xbf16>, vector<8x8xf32> -> vector<8x8xf32>
    %cst_52 = arith.constant dense<0xFF800000> : vector<8xf32>
    %144 = vector.multi_reduction <maximumf>, %143, %cst_52 [0] : vector<8x8xf32> to vector<8xf32>
    %145 = vector.shape_cast %144 : vector<8xf32> to vector<1x8xf32>
    %146 = vector.broadcast %145 : vector<1x8xf32> to vector<8x8xf32>
    %147 = arith.subf %143, %146 : vector<8x8xf32>
    %148 = math.exp %147 : vector<8x8xf32>
    %cst_53 = arith.constant dense<0.000000e+00> : vector<8xf32>
    %149 = vector.multi_reduction <add>, %148, %cst_53 [0] : vector<8x8xf32> to vector<8xf32>
    %150 = vector.shape_cast %149 : vector<8xf32> to vector<1x8xf32>
    %151 = tpu.reciprocal %150 {approx = true} : vector<1x8xf32> -> vector<1x8xf32>
    %152 = vector.broadcast %151 : vector<1x8xf32> to vector<8x8xf32>
    %153 = arith.mulf %148, %152 : vector<8x8xf32>
    %154 = vector.extract_strided_slice %115 {offsets = [0, 8], sizes = [16, 8], strides = [1, 1]} : vector<16x16xf32> to vector<16x8xf32>
    %155 = arith.truncf %154 : vector<16x8xf32> to vector<16x8xbf16>
    %156 = arith.truncf %153 : vector<8x8xf32> to vector<8x8xbf16>
    %cst_54 = arith.constant dense<0.000000e+00> : vector<16x8xf32>
    %157 = tpu.matmul %155, %156, %cst_54 {dimension_numbers = #tpu.dot_dimension_numbers<[1], [0], [0], [1], [0, 0, 1, 1], [], []>} : vector<16x8xbf16>, vector<8x8xbf16>, vector<16x8xf32> -> vector<16x8xf32>
    %158 = vector.broadcast %112 : vector<1x1xf32> to vector<16x8xf32>
    %159 = arith.mulf %158, %157 : vector<16x8xf32>
    %160 = vector.extract_strided_slice %109 {offsets = [0, 8], sizes = [16, 8], strides = [1, 1]} : vector<16x16xf32> to vector<16x8xf32>
    %161 = arith.addf %159, %160 : vector<16x8xf32>
    %162 = arith.truncf %161 : vector<16x8xf32> to vector<16x8xbf16>
    %c0_55 = arith.constant 0 : index
    %c8 = arith.constant 8 : index
    %163 = vector.load %arg3[%c0_55, %c8] : memref<16x16xbf16, #tpu.memory_space<vmem>>, vector<16x8xbf16>
    tpu.vector_store %arg3[%c0_55, %c8], %162 {strides = array<i32>} : memref<16x16xbf16, #tpu.memory_space<vmem>>, vector<16x8xbf16>,
    return
  }
}

module attributes {stable_mosaic.version = 11 : i64} {
  func.func @_up_kernel(%arg0: memref<16x32xbf16, #tpu.memory_space<vmem>>, %arg1: memref<16x64xbf16, #tpu.memory_space<vmem>>, %arg2: memref<224x1xf32, #tpu.memory_space<vmem>>, %arg3: memref<144x128xbf16, #tpu.memory_space<vmem>>, %arg4: memref<16x64xbf16, #tpu.memory_space<vmem>>) attributes {dimension_semantics = [], scalar_prefetch = 0 : i64, scratch_operands = 0 : i64, tpu.core_type = #tpu.core_type<tc>} {
    %c0 = arith.constant 0 : index
    %c0_0 = arith.constant 0 : index
    %0 = vector.load %arg0[%c0, %c0_0] : memref<16x32xbf16, #tpu.memory_space<vmem>>, vector<16x32xbf16>
    %c0_1 = arith.constant 0 : index
    %c0_2 = arith.constant 0 : index
    %1 = vector.load %arg1[%c0_1, %c0_2] : memref<16x64xbf16, #tpu.memory_space<vmem>>, vector<16x64xbf16>
    %c0_3 = arith.constant 0 : index
    %c0_4 = arith.constant 0 : index
    %2 = vector.load %arg3[%c0_3, %c0_4] : memref<144x128xbf16, #tpu.memory_space<vmem>>, vector<16x16xbf16>
    %cst = arith.constant dense<0.000000e+00> : vector<16x32xf32>
    %3 = tpu.matmul %2, %0, %cst {dimension_numbers = #tpu.dot_dimension_numbers<[1], [0], [0], [1], [0, 0, 1, 1], [], []>} : vector<16x16xbf16>, vector<16x32xbf16>, vector<16x32xf32> -> vector<16x32xf32>
    %c0_5 = arith.constant 0 : index
    %c0_6 = arith.constant 0 : index
    %4 = vector.load %arg2[%c0_5, %c0_6] : memref<224x1xf32, #tpu.memory_space<vmem>>, vector<16x1xf32>
    %5 = vector.broadcast %4 : vector<16x1xf32> to vector<16x32xf32>
    %6 = arith.addf %3, %5 : vector<16x32xf32>
    %7 = tpu.iota {dimensions = array<i32: 1>} : vector<16x2xi32>
    %cst_7 = arith.constant 0.000000e+00 : f32
    %8 = vector.broadcast %cst_7 : f32 to vector<16x2xf32>
    %9 = vector.extract_strided_slice %6 {offsets = [0, 0], sizes = [16, 16], strides = [1, 1]} : vector<16x32xf32> to vector<16x16xf32>
    %cst_8 = arith.constant dense<0xFF800000> : vector<16xf32>
    %10 = vector.multi_reduction <maximumf>, %9, %cst_8 [1] : vector<16x16xf32> to vector<16xf32>
    %11 = vector.shape_cast %10 : vector<16xf32> to vector<16x1xf32>
    %c0_i32 = arith.constant 0 : i32
    %12 = vector.broadcast %c0_i32 : i32 to vector<16x2xi32>
    %13 = arith.cmpi eq, %7, %12 : vector<16x2xi32>
    %14 = vector.shape_cast %11 : vector<16x1xf32> to vector<16x1xf32>
    %15 = vector.broadcast %14 : vector<16x1xf32> to vector<16x2xf32>
    %16 = arith.select %13, %15, %8 : vector<16x2xi1>, vector<16x2xf32>
    %17 = vector.extract_strided_slice %6 {offsets = [0, 16], sizes = [16, 16], strides = [1, 1]} : vector<16x32xf32> to vector<16x16xf32>
    %cst_9 = arith.constant dense<0xFF800000> : vector<16xf32>
    %18 = vector.multi_reduction <maximumf>, %17, %cst_9 [1] : vector<16x16xf32> to vector<16xf32>
    %19 = vector.shape_cast %18 : vector<16xf32> to vector<16x1xf32>
    %c1_i32 = arith.constant 1 : i32
    %20 = vector.broadcast %c1_i32 : i32 to vector<16x2xi32>
    %21 = arith.cmpi eq, %7, %20 : vector<16x2xi32>
    %22 = vector.shape_cast %19 : vector<16x1xf32> to vector<16x1xf32>
    %23 = vector.broadcast %22 : vector<16x1xf32> to vector<16x2xf32>
    %24 = arith.select %21, %23, %16 : vector<16x2xi1>, vector<16x2xf32>
    %c16 = arith.constant 16 : index
    %c0_10 = arith.constant 0 : index
    %25 = vector.load %arg2[%c16, %c0_10] : memref<224x1xf32, #tpu.memory_space<vmem>>, vector<16x1xf32>
    %26 = vector.broadcast %25 : vector<16x1xf32> to vector<16x2xf32>
    %27 = arith.mulf %24, %26 : vector<16x2xf32>
    %c32 = arith.constant 32 : index
    %c0_11 = arith.constant 0 : index
    %28 = vector.load %arg2[%c32, %c0_11] : memref<224x1xf32, #tpu.memory_space<vmem>>, vector<16x1xf32>
    %29 = vector.broadcast %28 : vector<16x1xf32> to vector<16x2xf32>
    %30 = arith.addf %27, %29 : vector<16x2xf32>
    %cst_12 = arith.constant 0.000000e+00 : f32
    %31 = vector.broadcast %cst_12 : f32 to vector<16x2xf32>
    %32 = arith.maximumf %30, %31 : vector<16x2xf32>
    %33 = arith.extf %1 : vector<16x64xbf16> to vector<16x64xf32>
    %c48 = arith.constant 48 : index
    %c0_13 = arith.constant 0 : index
    %34 = vector.load %arg2[%c48, %c0_13] : memref<224x1xf32, #tpu.memory_space<vmem>>, vector<16x1xf32>
    %35 = vector.broadcast %34 : vector<16x1xf32> to vector<16x64xf32>
    %36 = arith.mulf %33, %35 : vector<16x64xf32>
    %c64 = arith.constant 64 : index
    %c0_14 = arith.constant 0 : index
    %37 = vector.load %arg2[%c64, %c0_14] : memref<224x1xf32, #tpu.memory_space<vmem>>, vector<16x1xf32>
    %38 = vector.broadcast %37 : vector<16x1xf32> to vector<16x64xf32>
    %39 = arith.addf %36, %38 : vector<16x64xf32>
    %cst_15 = arith.constant 0.000000e+00 : f32
    %40 = vector.broadcast %cst_15 : f32 to vector<16x64xf32>
    %41 = arith.maximumf %39, %40 : vector<16x64xf32>
    %c16_16 = arith.constant 16 : index
    %c0_17 = arith.constant 0 : index
    %42 = vector.load %arg3[%c16_16, %c0_17] : memref<144x128xbf16, #tpu.memory_space<vmem>>, vector<16x16xbf16>
    %c32_18 = arith.constant 32 : index
    %c0_19 = arith.constant 0 : index
    %43 = vector.load %arg3[%c32_18, %c0_19] : memref<144x128xbf16, #tpu.memory_space<vmem>>, vector<16x16xbf16>
    %44 = arith.truncf %32 : vector<16x2xf32> to vector<16x2xbf16>
    %cst_20 = arith.constant dense<0.000000e+00> : vector<16x2xf32>
    %45 = tpu.matmul %42, %44, %cst_20 {dimension_numbers = #tpu.dot_dimension_numbers<[1], [0], [0], [1], [0, 0, 1, 1], [], []>} : vector<16x16xbf16>, vector<16x2xbf16>, vector<16x2xf32> -> vector<16x2xf32>
    %c80 = arith.constant 80 : index
    %c0_21 = arith.constant 0 : index
    %46 = vector.load %arg2[%c80, %c0_21] : memref<224x1xf32, #tpu.memory_space<vmem>>, vector<16x1xf32>
    %47 = vector.broadcast %46 : vector<16x1xf32> to vector<16x2xf32>
    %48 = arith.addf %45, %47 : vector<16x2xf32>
    %49 = arith.truncf %41 : vector<16x64xf32> to vector<16x64xbf16>
    %cst_22 = arith.constant dense<0.000000e+00> : vector<16x64xf32>
    %50 = tpu.matmul %43, %49, %cst_22 {dimension_numbers = #tpu.dot_dimension_numbers<[1], [0], [0], [1], [0, 0, 1, 1], [], []>} : vector<16x16xbf16>, vector<16x64xbf16>, vector<16x64xf32> -> vector<16x64xf32>
    %51 = tpu.iota {dimensions = array<i32: 1>} : vector<16x2xi32>
    %cst_23 = arith.constant 0.000000e+00 : f32
    %52 = vector.broadcast %cst_23 : f32 to vector<16x2xf32>
    %53 = vector.extract_strided_slice %50 {offsets = [0, 0], sizes = [16, 32], strides = [1, 1]} : vector<16x64xf32> to vector<16x32xf32>
    %cst_24 = arith.constant dense<0xFF800000> : vector<16xf32>
    %54 = vector.multi_reduction <maximumf>, %53, %cst_24 [1] : vector<16x32xf32> to vector<16xf32>
    %55 = vector.shape_cast %54 : vector<16xf32> to vector<16x1xf32>
    %c0_i32_25 = arith.constant 0 : i32
    %56 = vector.broadcast %c0_i32_25 : i32 to vector<16x2xi32>
    %57 = arith.cmpi eq, %51, %56 : vector<16x2xi32>
    %58 = vector.shape_cast %55 : vector<16x1xf32> to vector<16x1xf32>
    %59 = vector.broadcast %58 : vector<16x1xf32> to vector<16x2xf32>
    %60 = arith.select %57, %59, %52 : vector<16x2xi1>, vector<16x2xf32>
    %61 = vector.extract_strided_slice %50 {offsets = [0, 32], sizes = [16, 32], strides = [1, 1]} : vector<16x64xf32> to vector<16x32xf32>
    %cst_26 = arith.constant dense<0xFF800000> : vector<16xf32>
    %62 = vector.multi_reduction <maximumf>, %61, %cst_26 [1] : vector<16x32xf32> to vector<16xf32>
    %63 = vector.shape_cast %62 : vector<16xf32> to vector<16x1xf32>
    %c1_i32_27 = arith.constant 1 : i32
    %64 = vector.broadcast %c1_i32_27 : i32 to vector<16x2xi32>
    %65 = arith.cmpi eq, %51, %64 : vector<16x2xi32>
    %66 = vector.shape_cast %63 : vector<16x1xf32> to vector<16x1xf32>
    %67 = vector.broadcast %66 : vector<16x1xf32> to vector<16x2xf32>
    %68 = arith.select %65, %67, %60 : vector<16x2xi1>, vector<16x2xf32>
    %69 = arith.addf %48, %68 : vector<16x2xf32>
    %c48_28 = arith.constant 48 : index
    %c0_29 = arith.constant 0 : index
    %70 = vector.load %arg3[%c48_28, %c0_29] : memref<144x128xbf16, #tpu.memory_space<vmem>>, vector<16x16xbf16>
    %c128 = arith.constant 128 : index
    %c0_30 = arith.constant 0 : index
    %71 = vector.load %arg2[%c128, %c0_30] : memref<224x1xf32, #tpu.memory_space<vmem>>, vector<16x1xf32>
    %c96 = arith.constant 96 : index
    %c0_31 = arith.constant 0 : index
    %72 = vector.load %arg2[%c96, %c0_31] : memref<224x1xf32, #tpu.memory_space<vmem>>, vector<16x1xf32>
    %c112 = arith.constant 112 : index
    %c0_32 = arith.constant 0 : index
    %73 = vector.load %arg2[%c112, %c0_32] : memref<224x1xf32, #tpu.memory_space<vmem>>, vector<16x1xf32>
    %74 = vector.broadcast %72 : vector<16x1xf32> to vector<16x2xf32>
    %75 = arith.mulf %69, %74 : vector<16x2xf32>
    %76 = vector.broadcast %73 : vector<16x1xf32> to vector<16x2xf32>
    %77 = arith.addf %75, %76 : vector<16x2xf32>
    %cst_33 = arith.constant 0.000000e+00 : f32
    %78 = vector.broadcast %cst_33 : f32 to vector<16x2xf32>
    %79 = arith.maximumf %77, %78 : vector<16x2xf32>
    %80 = arith.truncf %79 : vector<16x2xf32> to vector<16x2xbf16>
    %cst_34 = arith.constant dense<0.000000e+00> : vector<16x2xf32>
    %81 = tpu.matmul %70, %80, %cst_34 {dimension_numbers = #tpu.dot_dimension_numbers<[1], [0], [0], [1], [0, 0, 1, 1], [], []>} : vector<16x16xbf16>, vector<16x2xbf16>, vector<16x2xf32> -> vector<16x2xf32>
    %82 = vector.broadcast %71 : vector<16x1xf32> to vector<16x2xf32>
    %83 = arith.addf %81, %82 : vector<16x2xf32>
    %84 = arith.negf %83 : vector<16x2xf32>
    %85 = math.exp %84 : vector<16x2xf32>
    %cst_35 = arith.constant 1.000000e+00 : f32
    %86 = vector.broadcast %cst_35 : f32 to vector<16x2xf32>
    %87 = arith.addf %86, %85 : vector<16x2xf32>
    %88 = arith.divf %86, %87 : vector<16x2xf32>
    %c64_36 = arith.constant 64 : index
    %c0_37 = arith.constant 0 : index
    %89 = vector.load %arg3[%c64_36, %c0_37] : memref<144x128xbf16, #tpu.memory_space<vmem>>, vector<32x16xbf16>
    %c96_38 = arith.constant 96 : index
    %c0_39 = arith.constant 0 : index
    %90 = vector.load %arg3[%c96_38, %c0_39] : memref<144x128xbf16, #tpu.memory_space<vmem>>, vector<32x16xbf16>
    %91 = arith.truncf %24 : vector<16x2xf32> to vector<16x2xbf16>
    %cst_40 = arith.constant dense<0.000000e+00> : vector<32x2xf32>
    %92 = tpu.matmul %89, %91, %cst_40 {dimension_numbers = #tpu.dot_dimension_numbers<[1], [0], [0], [1], [0, 0, 1, 1], [], []>} : vector<32x16xbf16>, vector<16x2xbf16>, vector<32x2xf32> -> vector<32x2xf32>
    %c144 = arith.constant 144 : index
    %c0_41 = arith.constant 0 : index
    %93 = vector.load %arg2[%c144, %c0_41] : memref<224x1xf32, #tpu.memory_space<vmem>>, vector<32x1xf32>
    %94 = vector.broadcast %93 : vector<32x1xf32> to vector<32x2xf32>
    %95 = arith.addf %92, %94 : vector<32x2xf32>
    %cst_42 = arith.constant dense<0.000000e+00> : vector<32x64xf32>
    %96 = tpu.matmul %90, %1, %cst_42 {dimension_numbers = #tpu.dot_dimension_numbers<[1], [0], [0], [1], [0, 0, 1, 1], [], []>} : vector<32x16xbf16>, vector<16x64xbf16>, vector<32x64xf32> -> vector<32x64xf32>
    %97 = tpu.iota {dimensions = array<i32: 1>} : vector<32x64xi32>
    %cst_43 = arith.constant 0.000000e+00 : f32
    %98 = vector.broadcast %cst_43 : f32 to vector<32x64xf32>
    %c0_i32_44 = arith.constant 0 : i32
    %99 = vector.broadcast %c0_i32_44 : i32 to vector<32x64xi32>
    %100 = arith.cmpi sge, %97, %99 : vector<32x64xi32>
    %c32_i32 = arith.constant 32 : i32
    %101 = vector.broadcast %c32_i32 : i32 to vector<32x64xi32>
    %102 = arith.cmpi slt, %97, %101 : vector<32x64xi32>
    %103 = arith.andi %100, %102 : vector<32x64xi1>
    %104 = vector.extract_strided_slice %95 {offsets = [0, 0], sizes = [32, 1], strides = [1, 1]} : vector<32x2xf32> to vector<32x1xf32>
    %105 = vector.shape_cast %104 : vector<32x1xf32> to vector<32x1xf32>
    %106 = vector.broadcast %105 : vector<32x1xf32> to vector<32x64xf32>
    %107 = arith.select %103, %106, %98 : vector<32x64xi1>, vector<32x64xf32>
    %c32_i32_45 = arith.constant 32 : i32
    %108 = vector.broadcast %c32_i32_45 : i32 to vector<32x64xi32>
    %109 = arith.cmpi sge, %97, %108 : vector<32x64xi32>
    %c64_i32 = arith.constant 64 : i32
    %110 = vector.broadcast %c64_i32 : i32 to vector<32x64xi32>
    %111 = arith.cmpi slt, %97, %110 : vector<32x64xi32>
    %112 = arith.andi %109, %111 : vector<32x64xi1>
    %113 = vector.extract_strided_slice %95 {offsets = [0, 1], sizes = [32, 1], strides = [1, 1]} : vector<32x2xf32> to vector<32x1xf32>
    %114 = vector.shape_cast %113 : vector<32x1xf32> to vector<32x1xf32>
    %115 = vector.broadcast %114 : vector<32x1xf32> to vector<32x64xf32>
    %116 = arith.select %112, %115, %107 : vector<32x64xi1>, vector<32x64xf32>
    %117 = arith.addf %96, %116 : vector<32x64xf32>
    %118 = tpu.iota {dimensions = array<i32: 1>} : vector<16x64xi32>
    %cst_46 = arith.constant 0.000000e+00 : f32
    %119 = vector.broadcast %cst_46 : f32 to vector<16x64xf32>
    %c0_i32_47 = arith.constant 0 : i32
    %120 = vector.broadcast %c0_i32_47 : i32 to vector<16x64xi32>
    %121 = arith.cmpi sge, %118, %120 : vector<16x64xi32>
    %c32_i32_48 = arith.constant 32 : i32
    %122 = vector.broadcast %c32_i32_48 : i32 to vector<16x64xi32>
    %123 = arith.cmpi slt, %118, %122 : vector<16x64xi32>
    %124 = arith.andi %121, %123 : vector<16x64xi1>
    %125 = vector.extract_strided_slice %88 {offsets = [0, 0], sizes = [16, 1], strides = [1, 1]} : vector<16x2xf32> to vector<16x1xf32>
    %126 = vector.shape_cast %125 : vector<16x1xf32> to vector<16x1xf32>
    %127 = vector.broadcast %126 : vector<16x1xf32> to vector<16x64xf32>
    %128 = arith.select %124, %127, %119 : vector<16x64xi1>, vector<16x64xf32>
    %c32_i32_49 = arith.constant 32 : i32
    %129 = vector.broadcast %c32_i32_49 : i32 to vector<16x64xi32>
    %130 = arith.cmpi sge, %118, %129 : vector<16x64xi32>
    %c64_i32_50 = arith.constant 64 : i32
    %131 = vector.broadcast %c64_i32_50 : i32 to vector<16x64xi32>
    %132 = arith.cmpi slt, %118, %131 : vector<16x64xi32>
    %133 = arith.andi %130, %132 : vector<16x64xi1>
    %134 = vector.extract_strided_slice %88 {offsets = [0, 1], sizes = [16, 1], strides = [1, 1]} : vector<16x2xf32> to vector<16x1xf32>
    %135 = vector.shape_cast %134 : vector<16x1xf32> to vector<16x1xf32>
    %136 = vector.broadcast %135 : vector<16x1xf32> to vector<16x64xf32>
    %137 = arith.select %133, %136, %128 : vector<16x64xi1>, vector<16x64xf32>
    %138 = vector.extract_strided_slice %117 {offsets = [0, 0], sizes = [16, 64], strides = [1, 1]} : vector<32x64xf32> to vector<16x64xf32>
    %139 = arith.mulf %137, %138 : vector<16x64xf32>
    %140 = vector.extract_strided_slice %117 {offsets = [16, 0], sizes = [16, 64], strides = [1, 1]} : vector<32x64xf32> to vector<16x64xf32>
    %141 = arith.addf %139, %140 : vector<16x64xf32>
    %c128_51 = arith.constant 128 : index
    %c0_52 = arith.constant 0 : index
    %142 = vector.load %arg3[%c128_51, %c0_52] : memref<144x128xbf16, #tpu.memory_space<vmem>>, vector<16x16xbf16>
    %c208 = arith.constant 208 : index
    %c0_53 = arith.constant 0 : index
    %143 = vector.load %arg2[%c208, %c0_53] : memref<224x1xf32, #tpu.memory_space<vmem>>, vector<16x1xf32>
    %c176 = arith.constant 176 : index
    %c0_54 = arith.constant 0 : index
    %144 = vector.load %arg2[%c176, %c0_54] : memref<224x1xf32, #tpu.memory_space<vmem>>, vector<16x1xf32>
    %c192 = arith.constant 192 : index
    %c0_55 = arith.constant 0 : index
    %145 = vector.load %arg2[%c192, %c0_55] : memref<224x1xf32, #tpu.memory_space<vmem>>, vector<16x1xf32>
    %146 = vector.broadcast %144 : vector<16x1xf32> to vector<16x64xf32>
    %147 = arith.mulf %141, %146 : vector<16x64xf32>
    %148 = vector.broadcast %145 : vector<16x1xf32> to vector<16x64xf32>
    %149 = arith.addf %147, %148 : vector<16x64xf32>
    %cst_56 = arith.constant 0.000000e+00 : f32
    %150 = vector.broadcast %cst_56 : f32 to vector<16x64xf32>
    %151 = arith.maximumf %149, %150 : vector<16x64xf32>
    %152 = arith.truncf %151 : vector<16x64xf32> to vector<16x64xbf16>
    %cst_57 = arith.constant dense<0.000000e+00> : vector<16x64xf32>
    %153 = tpu.matmul %142, %152, %cst_57 {dimension_numbers = #tpu.dot_dimension_numbers<[1], [0], [0], [1], [0, 0, 1, 1], [], []>} : vector<16x16xbf16>, vector<16x64xbf16>, vector<16x64xf32> -> vector<16x64xf32>
    %154 = vector.broadcast %143 : vector<16x1xf32> to vector<16x64xf32>
    %155 = arith.addf %153, %154 : vector<16x64xf32>
    %156 = arith.truncf %155 : vector<16x64xf32> to vector<16x64xbf16>
    %c0_58 = arith.constant 0 : index
    %c0_59 = arith.constant 0 : index
    %157 = vector.load %arg4[%c0_58, %c0_59] : memref<16x64xbf16, #tpu.memory_space<vmem>>, vector<16x64xbf16>
    tpu.vector_store %arg4[%c0_58, %c0_59], %156 {strides = array<i32>} : memref<16x64xbf16, #tpu.memory_space<vmem>>, vector<16x64xbf16>,
    return
  }
}

module attributes {stable_mosaic.version = 11 : i64} {
  func.func @_up_kernel(%arg0: memref<16x64xbf16, #tpu.memory_space<vmem>>, %arg1: memref<16x128xbf16, #tpu.memory_space<vmem>>, %arg2: memref<224x1xf32, #tpu.memory_space<vmem>>, %arg3: memref<144x128xbf16, #tpu.memory_space<vmem>>, %arg4: memref<16x128xbf16, #tpu.memory_space<vmem>>) attributes {dimension_semantics = [], scalar_prefetch = 0 : i64, scratch_operands = 0 : i64, tpu.core_type = #tpu.core_type<tc>} {
    %c0 = arith.constant 0 : index
    %c0_0 = arith.constant 0 : index
    %0 = vector.load %arg0[%c0, %c0_0] : memref<16x64xbf16, #tpu.memory_space<vmem>>, vector<16x64xbf16>
    %c0_1 = arith.constant 0 : index
    %c0_2 = arith.constant 0 : index
    %1 = vector.load %arg1[%c0_1, %c0_2] : memref<16x128xbf16, #tpu.memory_space<vmem>>, vector<16x128xbf16>
    %c0_3 = arith.constant 0 : index
    %c0_4 = arith.constant 0 : index
    %2 = vector.load %arg3[%c0_3, %c0_4] : memref<144x128xbf16, #tpu.memory_space<vmem>>, vector<16x16xbf16>
    %cst = arith.constant dense<0.000000e+00> : vector<16x64xf32>
    %3 = tpu.matmul %2, %0, %cst {dimension_numbers = #tpu.dot_dimension_numbers<[1], [0], [0], [1], [0, 0, 1, 1], [], []>} : vector<16x16xbf16>, vector<16x64xbf16>, vector<16x64xf32> -> vector<16x64xf32>
    %c0_5 = arith.constant 0 : index
    %c0_6 = arith.constant 0 : index
    %4 = vector.load %arg2[%c0_5, %c0_6] : memref<224x1xf32, #tpu.memory_space<vmem>>, vector<16x1xf32>
    %5 = vector.broadcast %4 : vector<16x1xf32> to vector<16x64xf32>
    %6 = arith.addf %3, %5 : vector<16x64xf32>
    %7 = tpu.iota {dimensions = array<i32: 1>} : vector<16x2xi32>
    %cst_7 = arith.constant 0.000000e+00 : f32
    %8 = vector.broadcast %cst_7 : f32 to vector<16x2xf32>
    %9 = vector.extract_strided_slice %6 {offsets = [0, 0], sizes = [16, 32], strides = [1, 1]} : vector<16x64xf32> to vector<16x32xf32>
    %cst_8 = arith.constant dense<0xFF800000> : vector<16xf32>
    %10 = vector.multi_reduction <maximumf>, %9, %cst_8 [1] : vector<16x32xf32> to vector<16xf32>
    %11 = vector.shape_cast %10 : vector<16xf32> to vector<16x1xf32>
    %c0_i32 = arith.constant 0 : i32
    %12 = vector.broadcast %c0_i32 : i32 to vector<16x2xi32>
    %13 = arith.cmpi eq, %7, %12 : vector<16x2xi32>
    %14 = vector.shape_cast %11 : vector<16x1xf32> to vector<16x1xf32>
    %15 = vector.broadcast %14 : vector<16x1xf32> to vector<16x2xf32>
    %16 = arith.select %13, %15, %8 : vector<16x2xi1>, vector<16x2xf32>
    %17 = vector.extract_strided_slice %6 {offsets = [0, 32], sizes = [16, 32], strides = [1, 1]} : vector<16x64xf32> to vector<16x32xf32>
    %cst_9 = arith.constant dense<0xFF800000> : vector<16xf32>
    %18 = vector.multi_reduction <maximumf>, %17, %cst_9 [1] : vector<16x32xf32> to vector<16xf32>
    %19 = vector.shape_cast %18 : vector<16xf32> to vector<16x1xf32>
    %c1_i32 = arith.constant 1 : i32
    %20 = vector.broadcast %c1_i32 : i32 to vector<16x2xi32>
    %21 = arith.cmpi eq, %7, %20 : vector<16x2xi32>
    %22 = vector.shape_cast %19 : vector<16x1xf32> to vector<16x1xf32>
    %23 = vector.broadcast %22 : vector<16x1xf32> to vector<16x2xf32>
    %24 = arith.select %21, %23, %16 : vector<16x2xi1>, vector<16x2xf32>
    %c16 = arith.constant 16 : index
    %c0_10 = arith.constant 0 : index
    %25 = vector.load %arg2[%c16, %c0_10] : memref<224x1xf32, #tpu.memory_space<vmem>>, vector<16x1xf32>
    %26 = vector.broadcast %25 : vector<16x1xf32> to vector<16x2xf32>
    %27 = arith.mulf %24, %26 : vector<16x2xf32>
    %c32 = arith.constant 32 : index
    %c0_11 = arith.constant 0 : index
    %28 = vector.load %arg2[%c32, %c0_11] : memref<224x1xf32, #tpu.memory_space<vmem>>, vector<16x1xf32>
    %29 = vector.broadcast %28 : vector<16x1xf32> to vector<16x2xf32>
    %30 = arith.addf %27, %29 : vector<16x2xf32>
    %cst_12 = arith.constant 0.000000e+00 : f32
    %31 = vector.broadcast %cst_12 : f32 to vector<16x2xf32>
    %32 = arith.maximumf %30, %31 : vector<16x2xf32>
    %33 = arith.extf %1 : vector<16x128xbf16> to vector<16x128xf32>
    %c48 = arith.constant 48 : index
    %c0_13 = arith.constant 0 : index
    %34 = vector.load %arg2[%c48, %c0_13] : memref<224x1xf32, #tpu.memory_space<vmem>>, vector<16x1xf32>
    %35 = vector.broadcast %34 : vector<16x1xf32> to vector<16x128xf32>
    %36 = arith.mulf %33, %35 : vector<16x128xf32>
    %c64 = arith.constant 64 : index
    %c0_14 = arith.constant 0 : index
    %37 = vector.load %arg2[%c64, %c0_14] : memref<224x1xf32, #tpu.memory_space<vmem>>, vector<16x1xf32>
    %38 = vector.broadcast %37 : vector<16x1xf32> to vector<16x128xf32>
    %39 = arith.addf %36, %38 : vector<16x128xf32>
    %cst_15 = arith.constant 0.000000e+00 : f32
    %40 = vector.broadcast %cst_15 : f32 to vector<16x128xf32>
    %41 = arith.maximumf %39, %40 : vector<16x128xf32>
    %c16_16 = arith.constant 16 : index
    %c0_17 = arith.constant 0 : index
    %42 = vector.load %arg3[%c16_16, %c0_17] : memref<144x128xbf16, #tpu.memory_space<vmem>>, vector<16x16xbf16>
    %c32_18 = arith.constant 32 : index
    %c0_19 = arith.constant 0 : index
    %43 = vector.load %arg3[%c32_18, %c0_19] : memref<144x128xbf16, #tpu.memory_space<vmem>>, vector<16x16xbf16>
    %44 = arith.truncf %32 : vector<16x2xf32> to vector<16x2xbf16>
    %cst_20 = arith.constant dense<0.000000e+00> : vector<16x2xf32>
    %45 = tpu.matmul %42, %44, %cst_20 {dimension_numbers = #tpu.dot_dimension_numbers<[1], [0], [0], [1], [0, 0, 1, 1], [], []>} : vector<16x16xbf16>, vector<16x2xbf16>, vector<16x2xf32> -> vector<16x2xf32>
    %c80 = arith.constant 80 : index
    %c0_21 = arith.constant 0 : index
    %46 = vector.load %arg2[%c80, %c0_21] : memref<224x1xf32, #tpu.memory_space<vmem>>, vector<16x1xf32>
    %47 = vector.broadcast %46 : vector<16x1xf32> to vector<16x2xf32>
    %48 = arith.addf %45, %47 : vector<16x2xf32>
    %49 = arith.truncf %41 : vector<16x128xf32> to vector<16x128xbf16>
    %cst_22 = arith.constant dense<0.000000e+00> : vector<16x128xf32>
    %50 = tpu.matmul %43, %49, %cst_22 {dimension_numbers = #tpu.dot_dimension_numbers<[1], [0], [0], [1], [0, 0, 1, 1], [], []>} : vector<16x16xbf16>, vector<16x128xbf16>, vector<16x128xf32> -> vector<16x128xf32>
    %51 = tpu.iota {dimensions = array<i32: 1>} : vector<16x2xi32>
    %cst_23 = arith.constant 0.000000e+00 : f32
    %52 = vector.broadcast %cst_23 : f32 to vector<16x2xf32>
    %53 = vector.extract_strided_slice %50 {offsets = [0, 0], sizes = [16, 64], strides = [1, 1]} : vector<16x128xf32> to vector<16x64xf32>
    %cst_24 = arith.constant dense<0xFF800000> : vector<16xf32>
    %54 = vector.multi_reduction <maximumf>, %53, %cst_24 [1] : vector<16x64xf32> to vector<16xf32>
    %55 = vector.shape_cast %54 : vector<16xf32> to vector<16x1xf32>
    %c0_i32_25 = arith.constant 0 : i32
    %56 = vector.broadcast %c0_i32_25 : i32 to vector<16x2xi32>
    %57 = arith.cmpi eq, %51, %56 : vector<16x2xi32>
    %58 = vector.shape_cast %55 : vector<16x1xf32> to vector<16x1xf32>
    %59 = vector.broadcast %58 : vector<16x1xf32> to vector<16x2xf32>
    %60 = arith.select %57, %59, %52 : vector<16x2xi1>, vector<16x2xf32>
    %61 = vector.extract_strided_slice %50 {offsets = [0, 64], sizes = [16, 64], strides = [1, 1]} : vector<16x128xf32> to vector<16x64xf32>
    %cst_26 = arith.constant dense<0xFF800000> : vector<16xf32>
    %62 = vector.multi_reduction <maximumf>, %61, %cst_26 [1] : vector<16x64xf32> to vector<16xf32>
    %63 = vector.shape_cast %62 : vector<16xf32> to vector<16x1xf32>
    %c1_i32_27 = arith.constant 1 : i32
    %64 = vector.broadcast %c1_i32_27 : i32 to vector<16x2xi32>
    %65 = arith.cmpi eq, %51, %64 : vector<16x2xi32>
    %66 = vector.shape_cast %63 : vector<16x1xf32> to vector<16x1xf32>
    %67 = vector.broadcast %66 : vector<16x1xf32> to vector<16x2xf32>
    %68 = arith.select %65, %67, %60 : vector<16x2xi1>, vector<16x2xf32>
    %69 = arith.addf %48, %68 : vector<16x2xf32>
    %c48_28 = arith.constant 48 : index
    %c0_29 = arith.constant 0 : index
    %70 = vector.load %arg3[%c48_28, %c0_29] : memref<144x128xbf16, #tpu.memory_space<vmem>>, vector<16x16xbf16>
    %c128 = arith.constant 128 : index
    %c0_30 = arith.constant 0 : index
    %71 = vector.load %arg2[%c128, %c0_30] : memref<224x1xf32, #tpu.memory_space<vmem>>, vector<16x1xf32>
    %c96 = arith.constant 96 : index
    %c0_31 = arith.constant 0 : index
    %72 = vector.load %arg2[%c96, %c0_31] : memref<224x1xf32, #tpu.memory_space<vmem>>, vector<16x1xf32>
    %c112 = arith.constant 112 : index
    %c0_32 = arith.constant 0 : index
    %73 = vector.load %arg2[%c112, %c0_32] : memref<224x1xf32, #tpu.memory_space<vmem>>, vector<16x1xf32>
    %74 = vector.broadcast %72 : vector<16x1xf32> to vector<16x2xf32>
    %75 = arith.mulf %69, %74 : vector<16x2xf32>
    %76 = vector.broadcast %73 : vector<16x1xf32> to vector<16x2xf32>
    %77 = arith.addf %75, %76 : vector<16x2xf32>
    %cst_33 = arith.constant 0.000000e+00 : f32
    %78 = vector.broadcast %cst_33 : f32 to vector<16x2xf32>
    %79 = arith.maximumf %77, %78 : vector<16x2xf32>
    %80 = arith.truncf %79 : vector<16x2xf32> to vector<16x2xbf16>
    %cst_34 = arith.constant dense<0.000000e+00> : vector<16x2xf32>
    %81 = tpu.matmul %70, %80, %cst_34 {dimension_numbers = #tpu.dot_dimension_numbers<[1], [0], [0], [1], [0, 0, 1, 1], [], []>} : vector<16x16xbf16>, vector<16x2xbf16>, vector<16x2xf32> -> vector<16x2xf32>
    %82 = vector.broadcast %71 : vector<16x1xf32> to vector<16x2xf32>
    %83 = arith.addf %81, %82 : vector<16x2xf32>
    %84 = arith.negf %83 : vector<16x2xf32>
    %85 = math.exp %84 : vector<16x2xf32>
    %cst_35 = arith.constant 1.000000e+00 : f32
    %86 = vector.broadcast %cst_35 : f32 to vector<16x2xf32>
    %87 = arith.addf %86, %85 : vector<16x2xf32>
    %88 = arith.divf %86, %87 : vector<16x2xf32>
    %c64_36 = arith.constant 64 : index
    %c0_37 = arith.constant 0 : index
    %89 = vector.load %arg3[%c64_36, %c0_37] : memref<144x128xbf16, #tpu.memory_space<vmem>>, vector<32x16xbf16>
    %c96_38 = arith.constant 96 : index
    %c0_39 = arith.constant 0 : index
    %90 = vector.load %arg3[%c96_38, %c0_39] : memref<144x128xbf16, #tpu.memory_space<vmem>>, vector<32x16xbf16>
    %91 = arith.truncf %24 : vector<16x2xf32> to vector<16x2xbf16>
    %cst_40 = arith.constant dense<0.000000e+00> : vector<32x2xf32>
    %92 = tpu.matmul %89, %91, %cst_40 {dimension_numbers = #tpu.dot_dimension_numbers<[1], [0], [0], [1], [0, 0, 1, 1], [], []>} : vector<32x16xbf16>, vector<16x2xbf16>, vector<32x2xf32> -> vector<32x2xf32>
    %c144 = arith.constant 144 : index
    %c0_41 = arith.constant 0 : index
    %93 = vector.load %arg2[%c144, %c0_41] : memref<224x1xf32, #tpu.memory_space<vmem>>, vector<32x1xf32>
    %94 = vector.broadcast %93 : vector<32x1xf32> to vector<32x2xf32>
    %95 = arith.addf %92, %94 : vector<32x2xf32>
    %cst_42 = arith.constant dense<0.000000e+00> : vector<32x128xf32>
    %96 = tpu.matmul %90, %1, %cst_42 {dimension_numbers = #tpu.dot_dimension_numbers<[1], [0], [0], [1], [0, 0, 1, 1], [], []>} : vector<32x16xbf16>, vector<16x128xbf16>, vector<32x128xf32> -> vector<32x128xf32>
    %97 = tpu.iota {dimensions = array<i32: 1>} : vector<32x128xi32>
    %cst_43 = arith.constant 0.000000e+00 : f32
    %98 = vector.broadcast %cst_43 : f32 to vector<32x128xf32>
    %c0_i32_44 = arith.constant 0 : i32
    %99 = vector.broadcast %c0_i32_44 : i32 to vector<32x128xi32>
    %100 = arith.cmpi sge, %97, %99 : vector<32x128xi32>
    %c64_i32 = arith.constant 64 : i32
    %101 = vector.broadcast %c64_i32 : i32 to vector<32x128xi32>
    %102 = arith.cmpi slt, %97, %101 : vector<32x128xi32>
    %103 = arith.andi %100, %102 : vector<32x128xi1>
    %104 = vector.extract_strided_slice %95 {offsets = [0, 0], sizes = [32, 1], strides = [1, 1]} : vector<32x2xf32> to vector<32x1xf32>
    %105 = vector.shape_cast %104 : vector<32x1xf32> to vector<32x1xf32>
    %106 = vector.broadcast %105 : vector<32x1xf32> to vector<32x128xf32>
    %107 = arith.select %103, %106, %98 : vector<32x128xi1>, vector<32x128xf32>
    %c64_i32_45 = arith.constant 64 : i32
    %108 = vector.broadcast %c64_i32_45 : i32 to vector<32x128xi32>
    %109 = arith.cmpi sge, %97, %108 : vector<32x128xi32>
    %c128_i32 = arith.constant 128 : i32
    %110 = vector.broadcast %c128_i32 : i32 to vector<32x128xi32>
    %111 = arith.cmpi slt, %97, %110 : vector<32x128xi32>
    %112 = arith.andi %109, %111 : vector<32x128xi1>
    %113 = vector.extract_strided_slice %95 {offsets = [0, 1], sizes = [32, 1], strides = [1, 1]} : vector<32x2xf32> to vector<32x1xf32>
    %114 = vector.shape_cast %113 : vector<32x1xf32> to vector<32x1xf32>
    %115 = vector.broadcast %114 : vector<32x1xf32> to vector<32x128xf32>
    %116 = arith.select %112, %115, %107 : vector<32x128xi1>, vector<32x128xf32>
    %117 = arith.addf %96, %116 : vector<32x128xf32>
    %118 = tpu.iota {dimensions = array<i32: 1>} : vector<16x128xi32>
    %cst_46 = arith.constant 0.000000e+00 : f32
    %119 = vector.broadcast %cst_46 : f32 to vector<16x128xf32>
    %c0_i32_47 = arith.constant 0 : i32
    %120 = vector.broadcast %c0_i32_47 : i32 to vector<16x128xi32>
    %121 = arith.cmpi sge, %118, %120 : vector<16x128xi32>
    %c64_i32_48 = arith.constant 64 : i32
    %122 = vector.broadcast %c64_i32_48 : i32 to vector<16x128xi32>
    %123 = arith.cmpi slt, %118, %122 : vector<16x128xi32>
    %124 = arith.andi %121, %123 : vector<16x128xi1>
    %125 = vector.extract_strided_slice %88 {offsets = [0, 0], sizes = [16, 1], strides = [1, 1]} : vector<16x2xf32> to vector<16x1xf32>
    %126 = vector.shape_cast %125 : vector<16x1xf32> to vector<16x1xf32>
    %127 = vector.broadcast %126 : vector<16x1xf32> to vector<16x128xf32>
    %128 = arith.select %124, %127, %119 : vector<16x128xi1>, vector<16x128xf32>
    %c64_i32_49 = arith.constant 64 : i32
    %129 = vector.broadcast %c64_i32_49 : i32 to vector<16x128xi32>
    %130 = arith.cmpi sge, %118, %129 : vector<16x128xi32>
    %c128_i32_50 = arith.constant 128 : i32
    %131 = vector.broadcast %c128_i32_50 : i32 to vector<16x128xi32>
    %132 = arith.cmpi slt, %118, %131 : vector<16x128xi32>
    %133 = arith.andi %130, %132 : vector<16x128xi1>
    %134 = vector.extract_strided_slice %88 {offsets = [0, 1], sizes = [16, 1], strides = [1, 1]} : vector<16x2xf32> to vector<16x1xf32>
    %135 = vector.shape_cast %134 : vector<16x1xf32> to vector<16x1xf32>
    %136 = vector.broadcast %135 : vector<16x1xf32> to vector<16x128xf32>
    %137 = arith.select %133, %136, %128 : vector<16x128xi1>, vector<16x128xf32>
    %138 = vector.extract_strided_slice %117 {offsets = [0, 0], sizes = [16, 128], strides = [1, 1]} : vector<32x128xf32> to vector<16x128xf32>
    %139 = arith.mulf %137, %138 : vector<16x128xf32>
    %140 = vector.extract_strided_slice %117 {offsets = [16, 0], sizes = [16, 128], strides = [1, 1]} : vector<32x128xf32> to vector<16x128xf32>
    %141 = arith.addf %139, %140 : vector<16x128xf32>
    %c128_51 = arith.constant 128 : index
    %c0_52 = arith.constant 0 : index
    %142 = vector.load %arg3[%c128_51, %c0_52] : memref<144x128xbf16, #tpu.memory_space<vmem>>, vector<16x16xbf16>
    %c208 = arith.constant 208 : index
    %c0_53 = arith.constant 0 : index
    %143 = vector.load %arg2[%c208, %c0_53] : memref<224x1xf32, #tpu.memory_space<vmem>>, vector<16x1xf32>
    %c176 = arith.constant 176 : index
    %c0_54 = arith.constant 0 : index
    %144 = vector.load %arg2[%c176, %c0_54] : memref<224x1xf32, #tpu.memory_space<vmem>>, vector<16x1xf32>
    %c192 = arith.constant 192 : index
    %c0_55 = arith.constant 0 : index
    %145 = vector.load %arg2[%c192, %c0_55] : memref<224x1xf32, #tpu.memory_space<vmem>>, vector<16x1xf32>
    %146 = vector.broadcast %144 : vector<16x1xf32> to vector<16x128xf32>
    %147 = arith.mulf %141, %146 : vector<16x128xf32>
    %148 = vector.broadcast %145 : vector<16x1xf32> to vector<16x128xf32>
    %149 = arith.addf %147, %148 : vector<16x128xf32>
    %cst_56 = arith.constant 0.000000e+00 : f32
    %150 = vector.broadcast %cst_56 : f32 to vector<16x128xf32>
    %151 = arith.maximumf %149, %150 : vector<16x128xf32>
    %152 = arith.truncf %151 : vector<16x128xf32> to vector<16x128xbf16>
    %cst_57 = arith.constant dense<0.000000e+00> : vector<16x128xf32>
    %153 = tpu.matmul %142, %152, %cst_57 {dimension_numbers = #tpu.dot_dimension_numbers<[1], [0], [0], [1], [0, 0, 1, 1], [], []>} : vector<16x16xbf16>, vector<16x128xbf16>, vector<16x128xf32> -> vector<16x128xf32>
    %154 = vector.broadcast %143 : vector<16x1xf32> to vector<16x128xf32>
    %155 = arith.addf %153, %154 : vector<16x128xf32>
    %156 = arith.truncf %155 : vector<16x128xf32> to vector<16x128xbf16>
    %c0_58 = arith.constant 0 : index
    %c0_59 = arith.constant 0 : index
    %157 = vector.load %arg4[%c0_58, %c0_59] : memref<16x128xbf16, #tpu.memory_space<vmem>>, vector<16x128xbf16>
    tpu.vector_store %arg4[%c0_58, %c0_59], %156 {strides = array<i32>} : memref<16x128xbf16, #tpu.memory_space<vmem>>, vector<16x128xbf16>,
    return
  }
}

module attributes {stable_mosaic.version = 11 : i64} {
  func.func @_up_kernel(%arg0: memref<16x128xbf16, #tpu.memory_space<vmem>>, %arg1: memref<8x256xbf16, #tpu.memory_space<vmem>>, %arg2: memref<136x1xf32, #tpu.memory_space<vmem>>, %arg3: memref<128x128xbf16, #tpu.memory_space<vmem>>, %arg4: memref<2x256xf32, #tpu.memory_space<vmem>>) attributes {dimension_semantics = [], scalar_prefetch = 0 : i64, scratch_operands = 0 : i64, tpu.core_type = #tpu.core_type<tc>} {
    %c0 = arith.constant 0 : index
    %c0_0 = arith.constant 0 : index
    %0 = vector.load %arg0[%c0, %c0_0] : memref<16x128xbf16, #tpu.memory_space<vmem>>, vector<16x128xbf16>
    %c0_1 = arith.constant 0 : index
    %c0_2 = arith.constant 0 : index
    %1 = vector.load %arg1[%c0_1, %c0_2] : memref<8x256xbf16, #tpu.memory_space<vmem>>, vector<8x256xbf16>
    %c0_3 = arith.constant 0 : index
    %c0_4 = arith.constant 0 : index
    %2 = vector.load %arg3[%c0_3, %c0_4] : memref<128x128xbf16, #tpu.memory_space<vmem>>, vector<8x16xbf16>
    %cst = arith.constant dense<0.000000e+00> : vector<8x128xf32>
    %3 = tpu.matmul %2, %0, %cst {dimension_numbers = #tpu.dot_dimension_numbers<[1], [0], [0], [1], [0, 0, 1, 1], [], []>} : vector<8x16xbf16>, vector<16x128xbf16>, vector<8x128xf32> -> vector<8x128xf32>
    %c0_5 = arith.constant 0 : index
    %c0_6 = arith.constant 0 : index
    %4 = vector.load %arg2[%c0_5, %c0_6] : memref<136x1xf32, #tpu.memory_space<vmem>>, vector<8x1xf32>
    %5 = vector.broadcast %4 : vector<8x1xf32> to vector<8x128xf32>
    %6 = arith.addf %3, %5 : vector<8x128xf32>
    %7 = tpu.iota {dimensions = array<i32: 1>} : vector<8x2xi32>
    %cst_7 = arith.constant 0.000000e+00 : f32
    %8 = vector.broadcast %cst_7 : f32 to vector<8x2xf32>
    %9 = vector.extract_strided_slice %6 {offsets = [0, 0], sizes = [8, 64], strides = [1, 1]} : vector<8x128xf32> to vector<8x64xf32>
    %cst_8 = arith.constant dense<0xFF800000> : vector<8xf32>
    %10 = vector.multi_reduction <maximumf>, %9, %cst_8 [1] : vector<8x64xf32> to vector<8xf32>
    %11 = vector.shape_cast %10 : vector<8xf32> to vector<8x1xf32>
    %c0_i32 = arith.constant 0 : i32
    %12 = vector.broadcast %c0_i32 : i32 to vector<8x2xi32>
    %13 = arith.cmpi eq, %7, %12 : vector<8x2xi32>
    %14 = vector.shape_cast %11 : vector<8x1xf32> to vector<8x1xf32>
    %15 = vector.broadcast %14 : vector<8x1xf32> to vector<8x2xf32>
    %16 = arith.select %13, %15, %8 : vector<8x2xi1>, vector<8x2xf32>
    %17 = vector.extract_strided_slice %6 {offsets = [0, 64], sizes = [8, 64], strides = [1, 1]} : vector<8x128xf32> to vector<8x64xf32>
    %cst_9 = arith.constant dense<0xFF800000> : vector<8xf32>
    %18 = vector.multi_reduction <maximumf>, %17, %cst_9 [1] : vector<8x64xf32> to vector<8xf32>
    %19 = vector.shape_cast %18 : vector<8xf32> to vector<8x1xf32>
    %c1_i32 = arith.constant 1 : i32
    %20 = vector.broadcast %c1_i32 : i32 to vector<8x2xi32>
    %21 = arith.cmpi eq, %7, %20 : vector<8x2xi32>
    %22 = vector.shape_cast %19 : vector<8x1xf32> to vector<8x1xf32>
    %23 = vector.broadcast %22 : vector<8x1xf32> to vector<8x2xf32>
    %24 = arith.select %21, %23, %16 : vector<8x2xi1>, vector<8x2xf32>
    %c8 = arith.constant 8 : index
    %c0_10 = arith.constant 0 : index
    %25 = vector.load %arg2[%c8, %c0_10] : memref<136x1xf32, #tpu.memory_space<vmem>>, vector<8x1xf32>
    %26 = vector.broadcast %25 : vector<8x1xf32> to vector<8x2xf32>
    %27 = arith.mulf %24, %26 : vector<8x2xf32>
    %c16 = arith.constant 16 : index
    %c0_11 = arith.constant 0 : index
    %28 = vector.load %arg2[%c16, %c0_11] : memref<136x1xf32, #tpu.memory_space<vmem>>, vector<8x1xf32>
    %29 = vector.broadcast %28 : vector<8x1xf32> to vector<8x2xf32>
    %30 = arith.addf %27, %29 : vector<8x2xf32>
    %cst_12 = arith.constant 0.000000e+00 : f32
    %31 = vector.broadcast %cst_12 : f32 to vector<8x2xf32>
    %32 = arith.maximumf %30, %31 : vector<8x2xf32>
    %33 = arith.extf %1 : vector<8x256xbf16> to vector<8x256xf32>
    %c24 = arith.constant 24 : index
    %c0_13 = arith.constant 0 : index
    %34 = vector.load %arg2[%c24, %c0_13] : memref<136x1xf32, #tpu.memory_space<vmem>>, vector<8x1xf32>
    %35 = vector.broadcast %34 : vector<8x1xf32> to vector<8x256xf32>
    %36 = arith.mulf %33, %35 : vector<8x256xf32>
    %c32 = arith.constant 32 : index
    %c0_14 = arith.constant 0 : index
    %37 = vector.load %arg2[%c32, %c0_14] : memref<136x1xf32, #tpu.memory_space<vmem>>, vector<8x1xf32>
    %38 = vector.broadcast %37 : vector<8x1xf32> to vector<8x256xf32>
    %39 = arith.addf %36, %38 : vector<8x256xf32>
    %cst_15 = arith.constant 0.000000e+00 : f32
    %40 = vector.broadcast %cst_15 : f32 to vector<8x256xf32>
    %41 = arith.maximumf %39, %40 : vector<8x256xf32>
    %c16_16 = arith.constant 16 : index
    %c0_17 = arith.constant 0 : index
    %42 = vector.load %arg3[%c16_16, %c0_17] : memref<128x128xbf16, #tpu.memory_space<vmem>>, vector<8x8xbf16>
    %c32_18 = arith.constant 32 : index
    %c0_19 = arith.constant 0 : index
    %43 = vector.load %arg3[%c32_18, %c0_19] : memref<128x128xbf16, #tpu.memory_space<vmem>>, vector<8x8xbf16>
    %44 = arith.truncf %32 : vector<8x2xf32> to vector<8x2xbf16>
    %cst_20 = arith.constant dense<0.000000e+00> : vector<8x2xf32>
    %45 = tpu.matmul %42, %44, %cst_20 {dimension_numbers = #tpu.dot_dimension_numbers<[1], [0], [0], [1], [0, 0, 1, 1], [], []>} : vector<8x8xbf16>, vector<8x2xbf16>, vector<8x2xf32> -> vector<8x2xf32>
    %c40 = arith.constant 40 : index
    %c0_21 = arith.constant 0 : index
    %46 = vector.load %arg2[%c40, %c0_21] : memref<136x1xf32, #tpu.memory_space<vmem>>, vector<8x1xf32>
    %47 = vector.broadcast %46 : vector<8x1xf32> to vector<8x2xf32>
    %48 = arith.addf %45, %47 : vector<8x2xf32>
    %49 = arith.truncf %41 : vector<8x256xf32> to vector<8x256xbf16>
    %cst_22 = arith.constant dense<0.000000e+00> : vector<8x256xf32>
    %50 = tpu.matmul %43, %49, %cst_22 {dimension_numbers = #tpu.dot_dimension_numbers<[1], [0], [0], [1], [0, 0, 1, 1], [], []>} : vector<8x8xbf16>, vector<8x256xbf16>, vector<8x256xf32> -> vector<8x256xf32>
    %51 = tpu.iota {dimensions = array<i32: 1>} : vector<8x2xi32>
    %cst_23 = arith.constant 0.000000e+00 : f32
    %52 = vector.broadcast %cst_23 : f32 to vector<8x2xf32>
    %53 = vector.extract_strided_slice %50 {offsets = [0, 0], sizes = [8, 128], strides = [1, 1]} : vector<8x256xf32> to vector<8x128xf32>
    %cst_24 = arith.constant dense<0xFF800000> : vector<8xf32>
    %54 = vector.multi_reduction <maximumf>, %53, %cst_24 [1] : vector<8x128xf32> to vector<8xf32>
    %55 = vector.shape_cast %54 : vector<8xf32> to vector<8x1xf32>
    %c0_i32_25 = arith.constant 0 : i32
    %56 = vector.broadcast %c0_i32_25 : i32 to vector<8x2xi32>
    %57 = arith.cmpi eq, %51, %56 : vector<8x2xi32>
    %58 = vector.shape_cast %55 : vector<8x1xf32> to vector<8x1xf32>
    %59 = vector.broadcast %58 : vector<8x1xf32> to vector<8x2xf32>
    %60 = arith.select %57, %59, %52 : vector<8x2xi1>, vector<8x2xf32>
    %61 = vector.extract_strided_slice %50 {offsets = [0, 128], sizes = [8, 128], strides = [1, 1]} : vector<8x256xf32> to vector<8x128xf32>
    %cst_26 = arith.constant dense<0xFF800000> : vector<8xf32>
    %62 = vector.multi_reduction <maximumf>, %61, %cst_26 [1] : vector<8x128xf32> to vector<8xf32>
    %63 = vector.shape_cast %62 : vector<8xf32> to vector<8x1xf32>
    %c1_i32_27 = arith.constant 1 : i32
    %64 = vector.broadcast %c1_i32_27 : i32 to vector<8x2xi32>
    %65 = arith.cmpi eq, %51, %64 : vector<8x2xi32>
    %66 = vector.shape_cast %63 : vector<8x1xf32> to vector<8x1xf32>
    %67 = vector.broadcast %66 : vector<8x1xf32> to vector<8x2xf32>
    %68 = arith.select %65, %67, %60 : vector<8x2xi1>, vector<8x2xf32>
    %69 = arith.addf %48, %68 : vector<8x2xf32>
    %c48 = arith.constant 48 : index
    %c0_28 = arith.constant 0 : index
    %70 = vector.load %arg3[%c48, %c0_28] : memref<128x128xbf16, #tpu.memory_space<vmem>>, vector<8x8xbf16>
    %c64 = arith.constant 64 : index
    %c0_29 = arith.constant 0 : index
    %71 = vector.load %arg2[%c64, %c0_29] : memref<136x1xf32, #tpu.memory_space<vmem>>, vector<8x1xf32>
    %c48_30 = arith.constant 48 : index
    %c0_31 = arith.constant 0 : index
    %72 = vector.load %arg2[%c48_30, %c0_31] : memref<136x1xf32, #tpu.memory_space<vmem>>, vector<8x1xf32>
    %c56 = arith.constant 56 : index
    %c0_32 = arith.constant 0 : index
    %73 = vector.load %arg2[%c56, %c0_32] : memref<136x1xf32, #tpu.memory_space<vmem>>, vector<8x1xf32>
    %74 = vector.broadcast %72 : vector<8x1xf32> to vector<8x2xf32>
    %75 = arith.mulf %69, %74 : vector<8x2xf32>
    %76 = vector.broadcast %73 : vector<8x1xf32> to vector<8x2xf32>
    %77 = arith.addf %75, %76 : vector<8x2xf32>
    %cst_33 = arith.constant 0.000000e+00 : f32
    %78 = vector.broadcast %cst_33 : f32 to vector<8x2xf32>
    %79 = arith.maximumf %77, %78 : vector<8x2xf32>
    %80 = arith.truncf %79 : vector<8x2xf32> to vector<8x2xbf16>
    %cst_34 = arith.constant dense<0.000000e+00> : vector<8x2xf32>
    %81 = tpu.matmul %70, %80, %cst_34 {dimension_numbers = #tpu.dot_dimension_numbers<[1], [0], [0], [1], [0, 0, 1, 1], [], []>} : vector<8x8xbf16>, vector<8x2xbf16>, vector<8x2xf32> -> vector<8x2xf32>
    %82 = vector.broadcast %71 : vector<8x1xf32> to vector<8x2xf32>
    %83 = arith.addf %81, %82 : vector<8x2xf32>
    %84 = arith.negf %83 : vector<8x2xf32>
    %85 = math.exp %84 : vector<8x2xf32>
    %cst_35 = arith.constant 1.000000e+00 : f32
    %86 = vector.broadcast %cst_35 : f32 to vector<8x2xf32>
    %87 = arith.addf %86, %85 : vector<8x2xf32>
    %88 = arith.divf %86, %87 : vector<8x2xf32>
    %c64_36 = arith.constant 64 : index
    %c0_37 = arith.constant 0 : index
    %89 = vector.load %arg3[%c64_36, %c0_37] : memref<128x128xbf16, #tpu.memory_space<vmem>>, vector<16x8xbf16>
    %c80 = arith.constant 80 : index
    %c0_38 = arith.constant 0 : index
    %90 = vector.load %arg3[%c80, %c0_38] : memref<128x128xbf16, #tpu.memory_space<vmem>>, vector<16x8xbf16>
    %91 = arith.truncf %24 : vector<8x2xf32> to vector<8x2xbf16>
    %cst_39 = arith.constant dense<0.000000e+00> : vector<16x2xf32>
    %92 = tpu.matmul %89, %91, %cst_39 {dimension_numbers = #tpu.dot_dimension_numbers<[1], [0], [0], [1], [0, 0, 1, 1], [], []>} : vector<16x8xbf16>, vector<8x2xbf16>, vector<16x2xf32> -> vector<16x2xf32>
    %c72 = arith.constant 72 : index
    %c0_40 = arith.constant 0 : index
    %93 = vector.load %arg2[%c72, %c0_40] : memref<136x1xf32, #tpu.memory_space<vmem>>, vector<16x1xf32>
    %94 = vector.broadcast %93 : vector<16x1xf32> to vector<16x2xf32>
    %95 = arith.addf %92, %94 : vector<16x2xf32>
    %cst_41 = arith.constant dense<0.000000e+00> : vector<16x256xf32>
    %96 = tpu.matmul %90, %1, %cst_41 {dimension_numbers = #tpu.dot_dimension_numbers<[1], [0], [0], [1], [0, 0, 1, 1], [], []>} : vector<16x8xbf16>, vector<8x256xbf16>, vector<16x256xf32> -> vector<16x256xf32>
    %97 = tpu.iota {dimensions = array<i32: 1>} : vector<16x256xi32>
    %cst_42 = arith.constant 0.000000e+00 : f32
    %98 = vector.broadcast %cst_42 : f32 to vector<16x256xf32>
    %c0_i32_43 = arith.constant 0 : i32
    %99 = vector.broadcast %c0_i32_43 : i32 to vector<16x256xi32>
    %100 = arith.cmpi sge, %97, %99 : vector<16x256xi32>
    %c128_i32 = arith.constant 128 : i32
    %101 = vector.broadcast %c128_i32 : i32 to vector<16x256xi32>
    %102 = arith.cmpi slt, %97, %101 : vector<16x256xi32>
    %103 = arith.andi %100, %102 : vector<16x256xi1>
    %104 = vector.extract_strided_slice %95 {offsets = [0, 0], sizes = [16, 1], strides = [1, 1]} : vector<16x2xf32> to vector<16x1xf32>
    %105 = vector.shape_cast %104 : vector<16x1xf32> to vector<16x1xf32>
    %106 = vector.broadcast %105 : vector<16x1xf32> to vector<16x256xf32>
    %107 = arith.select %103, %106, %98 : vector<16x256xi1>, vector<16x256xf32>
    %c128_i32_44 = arith.constant 128 : i32
    %108 = vector.broadcast %c128_i32_44 : i32 to vector<16x256xi32>
    %109 = arith.cmpi sge, %97, %108 : vector<16x256xi32>
    %c256_i32 = arith.constant 256 : i32
    %110 = vector.broadcast %c256_i32 : i32 to vector<16x256xi32>
    %111 = arith.cmpi slt, %97, %110 : vector<16x256xi32>
    %112 = arith.andi %109, %111 : vector<16x256xi1>
    %113 = vector.extract_strided_slice %95 {offsets = [0, 1], sizes = [16, 1], strides = [1, 1]} : vector<16x2xf32> to vector<16x1xf32>
    %114 = vector.shape_cast %113 : vector<16x1xf32> to vector<16x1xf32>
    %115 = vector.broadcast %114 : vector<16x1xf32> to vector<16x256xf32>
    %116 = arith.select %112, %115, %107 : vector<16x256xi1>, vector<16x256xf32>
    %117 = arith.addf %96, %116 : vector<16x256xf32>
    %118 = tpu.iota {dimensions = array<i32: 1>} : vector<8x256xi32>
    %cst_45 = arith.constant 0.000000e+00 : f32
    %119 = vector.broadcast %cst_45 : f32 to vector<8x256xf32>
    %c0_i32_46 = arith.constant 0 : i32
    %120 = vector.broadcast %c0_i32_46 : i32 to vector<8x256xi32>
    %121 = arith.cmpi sge, %118, %120 : vector<8x256xi32>
    %c128_i32_47 = arith.constant 128 : i32
    %122 = vector.broadcast %c128_i32_47 : i32 to vector<8x256xi32>
    %123 = arith.cmpi slt, %118, %122 : vector<8x256xi32>
    %124 = arith.andi %121, %123 : vector<8x256xi1>
    %125 = vector.extract_strided_slice %88 {offsets = [0, 0], sizes = [8, 1], strides = [1, 1]} : vector<8x2xf32> to vector<8x1xf32>
    %126 = vector.shape_cast %125 : vector<8x1xf32> to vector<8x1xf32>
    %127 = vector.broadcast %126 : vector<8x1xf32> to vector<8x256xf32>
    %128 = arith.select %124, %127, %119 : vector<8x256xi1>, vector<8x256xf32>
    %c128_i32_48 = arith.constant 128 : i32
    %129 = vector.broadcast %c128_i32_48 : i32 to vector<8x256xi32>
    %130 = arith.cmpi sge, %118, %129 : vector<8x256xi32>
    %c256_i32_49 = arith.constant 256 : i32
    %131 = vector.broadcast %c256_i32_49 : i32 to vector<8x256xi32>
    %132 = arith.cmpi slt, %118, %131 : vector<8x256xi32>
    %133 = arith.andi %130, %132 : vector<8x256xi1>
    %134 = vector.extract_strided_slice %88 {offsets = [0, 1], sizes = [8, 1], strides = [1, 1]} : vector<8x2xf32> to vector<8x1xf32>
    %135 = vector.shape_cast %134 : vector<8x1xf32> to vector<8x1xf32>
    %136 = vector.broadcast %135 : vector<8x1xf32> to vector<8x256xf32>
    %137 = arith.select %133, %136, %128 : vector<8x256xi1>, vector<8x256xf32>
    %138 = vector.extract_strided_slice %117 {offsets = [0, 0], sizes = [8, 256], strides = [1, 1]} : vector<16x256xf32> to vector<8x256xf32>
    %139 = arith.mulf %137, %138 : vector<8x256xf32>
    %140 = vector.extract_strided_slice %117 {offsets = [8, 0], sizes = [8, 256], strides = [1, 1]} : vector<16x256xf32> to vector<8x256xf32>
    %141 = arith.addf %139, %140 : vector<8x256xf32>
    %c96 = arith.constant 96 : index
    %c0_50 = arith.constant 0 : index
    %142 = vector.load %arg3[%c96, %c0_50] : memref<128x128xbf16, #tpu.memory_space<vmem>>, vector<8x8xbf16>
    %c104 = arith.constant 104 : index
    %c0_51 = arith.constant 0 : index
    %143 = vector.load %arg2[%c104, %c0_51] : memref<136x1xf32, #tpu.memory_space<vmem>>, vector<8x1xf32>
    %c88 = arith.constant 88 : index
    %c0_52 = arith.constant 0 : index
    %144 = vector.load %arg2[%c88, %c0_52] : memref<136x1xf32, #tpu.memory_space<vmem>>, vector<8x1xf32>
    %c96_53 = arith.constant 96 : index
    %c0_54 = arith.constant 0 : index
    %145 = vector.load %arg2[%c96_53, %c0_54] : memref<136x1xf32, #tpu.memory_space<vmem>>, vector<8x1xf32>
    %146 = vector.broadcast %144 : vector<8x1xf32> to vector<8x256xf32>
    %147 = arith.mulf %141, %146 : vector<8x256xf32>
    %148 = vector.broadcast %145 : vector<8x1xf32> to vector<8x256xf32>
    %149 = arith.addf %147, %148 : vector<8x256xf32>
    %cst_55 = arith.constant 0.000000e+00 : f32
    %150 = vector.broadcast %cst_55 : f32 to vector<8x256xf32>
    %151 = arith.maximumf %149, %150 : vector<8x256xf32>
    %152 = arith.truncf %151 : vector<8x256xf32> to vector<8x256xbf16>
    %cst_56 = arith.constant dense<0.000000e+00> : vector<8x256xf32>
    %153 = tpu.matmul %142, %152, %cst_56 {dimension_numbers = #tpu.dot_dimension_numbers<[1], [0], [0], [1], [0, 0, 1, 1], [], []>} : vector<8x8xbf16>, vector<8x256xbf16>, vector<8x256xf32> -> vector<8x256xf32>
    %154 = vector.broadcast %143 : vector<8x1xf32> to vector<8x256xf32>
    %155 = arith.addf %153, %154 : vector<8x256xf32>
    %c112 = arith.constant 112 : index
    %c0_57 = arith.constant 0 : index
    %156 = vector.load %arg3[%c112, %c0_57] : memref<128x128xbf16, #tpu.memory_space<vmem>>, vector<2x8xbf16>
    %c128 = arith.constant 128 : index
    %c0_58 = arith.constant 0 : index
    %157 = vector.load %arg2[%c128, %c0_58] : memref<136x1xf32, #tpu.memory_space<vmem>>, vector<2x1xf32>
    %c112_59 = arith.constant 112 : index
    %c0_60 = arith.constant 0 : index
    %158 = vector.load %arg2[%c112_59, %c0_60] : memref<136x1xf32, #tpu.memory_space<vmem>>, vector<8x1xf32>
    %c120 = arith.constant 120 : index
    %c0_61 = arith.constant 0 : index
    %159 = vector.load %arg2[%c120, %c0_61] : memref<136x1xf32, #tpu.memory_space<vmem>>, vector<8x1xf32>
    %160 = vector.broadcast %158 : vector<8x1xf32> to vector<8x256xf32>
    %161 = arith.mulf %155, %160 : vector<8x256xf32>
    %162 = vector.broadcast %159 : vector<8x1xf32> to vector<8x256xf32>
    %163 = arith.addf %161, %162 : vector<8x256xf32>
    %cst_62 = arith.constant 0.000000e+00 : f32
    %164 = vector.broadcast %cst_62 : f32 to vector<8x256xf32>
    %165 = arith.maximumf %163, %164 : vector<8x256xf32>
    %166 = arith.truncf %165 : vector<8x256xf32> to vector<8x256xbf16>
    %cst_63 = arith.constant dense<0.000000e+00> : vector<2x256xf32>
    %167 = tpu.matmul %156, %166, %cst_63 {dimension_numbers = #tpu.dot_dimension_numbers<[1], [0], [0], [1], [0, 0, 1, 1], [], []>} : vector<2x8xbf16>, vector<8x256xbf16>, vector<2x256xf32> -> vector<2x256xf32>
    %168 = vector.broadcast %157 : vector<2x1xf32> to vector<2x256xf32>
    %169 = arith.addf %167, %168 : vector<2x256xf32>
    %c0_64 = arith.constant 0 : index
    %c0_65 = arith.constant 0 : index
    %170 = vector.load %arg4[%c0_64, %c0_65] : memref<2x256xf32, #tpu.memory_space<vmem>>, vector<2x256xf32>
    tpu.vector_store %arg4[%c0_64, %c0_65], %169 {strides = array<i32>} : memref<2x256xf32, #tpu.memory_space<vmem>>, vector<2x256xf32>,
    return
  }
}

</mosaic_0001>

<llo_original>
// kernel: neg.0
$region0: #{neg.0}
  #allocation0 [shape = 's32[1]{0}', space=sflag, size = 0x4, scoped, tag = 'scoped memory for neg.0']
  %s0 = inlined_call_operand.vmem [shape: f32[1,256], index: 0, kind: input, shape index: {}]
  %s1 = inlined_call_operand.vmem [shape: f32[1,256], index: 1, kind: output, shape index: {}]
  %v2 = vld [vmem:[%s0] sm:$0x1]
  %3 = xla_tuple %v2
  %4 = xla_tuple %3
  %v5 = vxor.u32 %v2, 2147483648
  %6 = xla_tuple %v5
  %7 = vst [vmem:[%s1] sm:$0x1] %v5
  %s8 = scalar_lea.vmem %s0, 1
  %v9 = vld [vmem:[%s8] sm:$0x1]
  %10 = xla_tuple %v9
  %11 = xla_tuple %10
  %v12 = vxor.u32 %v9, 2147483648
  %13 = xla_tuple %v12
  %s14 = scalar_lea.vmem %s1, 1
  %15 = vst [vmem:[%s14] sm:$0x1] %v12

// kernel: forward.9
$region0: #{forward.9}
  #allocation0 [shape = 'u32[]', space=smem, size = 0x4, offset = 0x4, fixed_abs, tag = 'smem constant byte address 0x4 - core index']
  #allocation1 [shape = 'u32[144,128]{1,0:T(1,128)}', space=vmem, size = 0x12000, scoped, tag = 'internal scratch']
  %s0 = inlined_call_operand.vmem [shape: f32[4,256], index: 0, kind: input, shape index: {}]
  %s1 = inlined_call_operand.vmem [shape: f32[120,1], index: 1, kind: input, shape index: {}]
  %s2 = inlined_call_operand.vmem [shape: bf16[64,128], index: 2, kind: input, shape index: {}]
  %s3 = inlined_call_operand.vmem [shape: bf16[8,256], index: 3, kind: output, shape index: {0}]
  %s4 = inlined_call_operand.vmem [shape: f32[1,256], index: 4, kind: output, shape index: {1}]
  %5 = xla_tuple %s3, %s4
  %s6 = sld [smem:[#allocation0]]
  $region30: #{forward.9} parent=0
    _
  %s8 = ssub.s32 1, %s6
  %s9 = scalar_select 0, %s8, %s6
  // Predicated region
  $region2: #{forward.9} parent=0 // pred_check
    _
  $region3: #{forward.9} parent=0 // pred_check_branch
    %11 = sbr.rel (0) target = $region5
  $region4: #{forward.9} parent=0 // pred_region
    _
  $region5: #{forward.9} parent=0 // pred_fallthru
    _
  // Predicated region
  $region6: #{forward.9} parent=0 // pred_check
    _
  $region7: #{forward.9} parent=0 // pred_check_branch
    %13 = sbr.rel (0) target = $region9
  $region8: #{forward.9} parent=0 // pred_region
    _
  $region9: #{forward.9} parent=0 // pred_fallthru
    _
  // Predicated region
  $region10: #{forward.9} parent=0 // pred_check
    _
  $region11: #{forward.9} parent=0 // pred_check_branch
    %15 = sbr.rel (0) target = $region13
  $region12: #{forward.9} parent=0 // pred_region
    _
  $region13: #{forward.9} parent=0 // pred_fallthru
    _
  %v17 = vld [vmem:[%s0] sm:$0xff]
  %v18 = vld [vmem:[%s2] sm:$0xf]
  %v19 = vld [vmem:[%s1 + $0x10] sm:$0xff]
  %v20 = vld [vmem:[%s1] sm:$0xf]
  %v21 = vld [vmem:[%s1 + $0x8] sm:$0xf]
  %23 = vset.pattern.permute.xlu0 0
  %24 = vperm.xlu0 %23, %v20
  %v25 = vpop.permute.xlu0 %24
  %v27 = vunpack.c.l.s4 839922192
  %v28 = vunpack.c.0.s8 %v27
  %v29 = vlaneseq
  %v30 = vshrl.u32 %v29, 7
  %v31 = vsub.s32 %v28, %v30
  %v32 = vrot.slane %v25, %v31
  %v34 = vmul.f32 %v17, %v32
  %36 = vset.pattern.permute.xlu0 0
  %37 = vperm.xlu0 %36, %v21
  %v38 = vpop.permute.xlu0 %37
  %v40 = vunpack.c.l.s4 839922192
  %v41 = vunpack.c.0.s8 %v40
  %v42 = vlaneseq
  %v43 = vshrl.u32 %v42, 7
  %v44 = vsub.s32 %v41, %v43
  %v45 = vrot.slane %v38, %v44
  %v47 = vadd.f32 %v34, %v45
  %v48 = vmax.f32 %v47, 0.0
  %v50 = vcombine.high %v48, %v48
  %v52 = vpack.c.bf16 %v48, %v48
  %v53 = vpack.c.bf16 %v50, %v50
  %55 = vset.pattern.permute.xlu0 0
  %56 = vperm.xlu0 %55, %v19
  %v57 = vpop.permute.xlu0 %56
  %vm59 = vcmask 31744
  %v61 = vsel %vm59, %v18, 0
  %vm63 = vcmask 1041408
  %v65 = vsel %vm63, %v52, 0
  %v68 = vsel %vm63, %v53, 0
  %70 = vmatprep.subr.bf16.mxu0 0
  %71 = vmatpush1.bf16.msra.mxu0 0
  %72 = vmatprep.subr.bf16.mxu0 0
  %73 = vmatpush1.bf16.msra.mxu0 0
  %74 = vmatprep.subr.bf16.mxu0 0
  %75 = vmatpush1.bf16.msra.mxu0 0
  %76 = vmatprep.subr.bf16.mxu0 0
  %77 = vmatpush1.bf16.msra.mxu0 0
  %78 = vmatprep.subr.bf16.mxu0 0
  %79 = vmatpush1.bf16.msra.mxu0 0
  %80 = vmatprep.subr.bf16.mxu0 0
  %81 = vmatpush1.bf16.msra.mxu0 0
  %82 = vmatprep.subr.bf16.mxu0 0
  %83 = vmatpush1.bf16.msra.mxu0 0
  %84 = vmatprep.subr.bf16.mxu0 %v68
  %85 = vmatpush1.bf16.msra.mxu0 %v65
  %86 = vmatprep.subr.bf16.mxu0 0
  %87 = vmatpush2.bf16.msra.mxu0 0
  %88 = vmatprep.subr.bf16.mxu0 0
  %89 = vmatpush2.bf16.msra.mxu0 0
  %90 = vmatprep.subr.bf16.mxu0 0
  %91 = vmatpush2.bf16.msra.mxu0 0
  %92 = vmatprep.subr.bf16.mxu0 0
  %93 = vmatpush2.bf16.msra.mxu0 0
  %94 = vmatprep.subr.bf16.mxu0 0
  %95 = vmatpush2.bf16.msra.mxu0 0
  %96 = vmatprep.subr.bf16.mxu0 0
  %97 = vmatpush2.bf16.msra.mxu0 0
  %98 = vmatprep.subr.bf16.mxu0 0
  %99 = vmatpush2.bf16.msra.mxu0 0
  %100 = vmatprep.subr.bf16.mxu0 0
  %101 = vmatpush2.bf16.msra.mxu0 0
  %102 = vmatprep.mubr.bf16.mxu0 0
  %103 = vmatmul.mubr.bf16.gmra.mxu0 %v61
  %v104 = vpop.f32.mrf.mxu0
  %v105 = vadd.f32 %v57, %v104
  %v106 = vpop.f32.mrf.mxu0
  %v107 = vadd.f32 %v57, %v106
  %v108 = vpop.f32.mrf.mxu0
  %v109 = vpop.f32.mrf.mxu0
  %110 = vdwg.mxu0
  %v111 = vlaneseq
  %v112 = vand.u32 %v111, 127
  %113 = vmax.xlane.f32.xlu0 %v105
  %v114 = vpop.xlane.xlu0 %113
  %vm115 = vcmp.eq.s32.totalorder %v112, 0
  %v116 = vsel %vm115, %v114, 0.0
  %117 = vmax.xlane.f32.xlu0 %v107
  %v118 = vpop.xlane.xlu0 %117
  %vm119 = vcmp.eq.s32.totalorder %v112, 1
  %v120 = vsel %vm119, %v118, %v116
  %v121 = vld [vmem:[%s2 + $0x8] sm:$0xf]
  %v122 = vld [vmem:[%s1 + $0x28] sm:$0xff]
  %v123 = vld [vmem:[%s1 + $0x18] sm:$0xff]
  %v124 = vld [vmem:[%s1 + $0x20] sm:$0xff]
  %126 = vset.pattern.permute.xlu0 0
  %127 = vperm.xlu0 %126, %v123
  %v128 = vpop.permute.xlu0 %127
  %v130 = vmul.f32 %v120, %v128
  %132 = vset.pattern.permute.xlu0 0
  %133 = vperm.xlu0 %132, %v124
  %v134 = vpop.permute.xlu0 %133
  %v136 = vadd.f32 %v130, %v134
  %v137 = vmax.f32 %v136, 0.0
  %v138 = vpack.c.bf16 %v137, %v137
  %140 = vset.pattern.permute.xlu0 0
  %141 = vperm.xlu0 %140, %v122
  %v142 = vpop.permute.xlu0 %141
  %vm144 = vcmask 64512
  %v146 = vsel %vm144, %v121, 0
  %vm148 = vcmask 1043456
  %v150 = vsel %vm148, %v138, 0
  %152 = vmatprep.subr.bf16.mxu0 0
  %153 = vmatpush1.bf16.msra.mxu0 0
  %154 = vmatprep.subr.bf16.mxu0 0
  %155 = vmatpush1.bf16.msra.mxu0 0
  %156 = vmatprep.subr.bf16.mxu0 0
  %157 = vmatpush1.bf16.msra.mxu0 0
  %158 = vmatprep.subr.bf16.mxu0 0
  %159 = vmatpush1.bf16.msra.mxu0 0
  %160 = vmatprep.subr.bf16.mxu0 0
  %161 = vmatpush1.bf16.msra.mxu0 0
  %162 = vmatprep.subr.bf16.mxu0 0
  %163 = vmatpush1.bf16.msra.mxu0 0
  %164 = vmatprep.subr.bf16.mxu0 0
  %165 = vmatpush1.bf16.msra.mxu0 0
  %166 = vmatprep.subr.bf16.mxu0 0
  %167 = vmatpush1.bf16.msra.mxu0 %v150
  %168 = vmatprep.subr.bf16.mxu0 0
  %169 = vmatpush2.bf16.msra.mxu0 0
  %170 = vmatprep.subr.bf16.mxu0 0
  %171 = vmatpush2.bf16.msra.mxu0 0
  %172 = vmatprep.subr.bf16.mxu0 0
  %173 = vmatpush2.bf16.msra.mxu0 0
  %174 = vmatprep.subr.bf16.mxu0 0
  %175 = vmatpush2.bf16.msra.mxu0 0
  %176 = vmatprep.subr.bf16.mxu0 0
  %177 = vmatpush2.bf16.msra.mxu0 0
  %178 = vmatprep.subr.bf16.mxu0 0
  %179 = vmatpush2.bf16.msra.mxu0 0
  %180 = vmatprep.subr.bf16.mxu0 0
  %181 = vmatpush2.bf16.msra.mxu0 0
  %182 = vmatprep.subr.bf16.mxu0 0
  %183 = vmatpush2.bf16.msra.mxu0 0
  %184 = vmatprep.mubr.bf16.mxu0 0
  %185 = vmatmul.mubr.bf16.gmra.mxu0 %v146
  %v186 = vpop.f32.mrf.mxu0
  %v187 = vadd.f32 %v142, %v186
  %v188 = vpop.f32.mrf.mxu0
  %v189 = vpop.f32.mrf.mxu0
  %v190 = vpop.f32.mrf.mxu0
  %191 = vdwg.mxu0
  %v192 = vxor.u32 %v187, 2147483648
  %v193 = vmul.f32 %v192, 1.442695
  %v194 = vpow.pop %v193
  %v195 = vadd.f32 %v194, 1.0
  %v196 = vrcp.pop %v195
  %v197 = vmul.f32 1.0, %v196
  %v198 = vld [vmem:[%s2 + $0x10] sm:$0xf]
  %v199 = vld [vmem:[%s2 + $0x14] sm:$0xf]
  %v201 = vcombine.high %v17, %v17
  %v203 = vpack.c.bf16 %v17, %v17
  %v204 = vpack.c.bf16 %v201, %v201
  %v205 = vld [vmem:[%s1 + $0x30] sm:$0xff]
  %v206 = vld [vmem:[%s1 + $0x38] sm:$0xff]
  %208 = vset.pattern.permute.xlu0 0
  %209 = vperm.xlu0 %208, %v205
  %v210 = vpop.permute.xlu0 %209
  %213 = vset.pattern.permute.xlu0 0
  %214 = vperm.xlu0 %213, %v206
  %v215 = vpop.permute.xlu0 %214
  %v219 = vunpack.c.l.b16 %v198
  %v220 = vunpack.c.l.b16 %v199
  %v221 = vpack.c.b16 %v220, %v219
  %v223 = vsel %vm59, %v221, 0
  %v226 = vsel %vm63, %v203, 0
  %v229 = vsel %vm63, %v204, 0
  %231 = vmatprep.subr.bf16.mxu0 0
  %232 = vmatpush1.bf16.msra.mxu0 0
  %233 = vmatprep.subr.bf16.mxu0 0
  %234 = vmatpush1.bf16.msra.mxu0 0
  %235 = vmatprep.subr.bf16.mxu0 0
  %236 = vmatpush1.bf16.msra.mxu0 0
  %237 = vmatprep.subr.bf16.mxu0 0
  %238 = vmatpush1.bf16.msra.mxu0 0
  %239 = vmatprep.subr.bf16.mxu0 0
  %240 = vmatpush1.bf16.msra.mxu0 0
  %241 = vmatprep.subr.bf16.mxu0 0
  %242 = vmatpush1.bf16.msra.mxu0 0
  %243 = vmatprep.subr.bf16.mxu0 0
  %244 = vmatpush1.bf16.msra.mxu0 0
  %245 = vmatprep.subr.bf16.mxu0 %v229
  %246 = vmatpush1.bf16.msra.mxu0 %v226
  %247 = vmatprep.subr.bf16.mxu0 0
  %248 = vmatpush2.bf16.msra.mxu0 0
  %249 = vmatprep.subr.bf16.mxu0 0
  %250 = vmatpush2.bf16.msra.mxu0 0
  %251 = vmatprep.subr.bf16.mxu0 0
  %252 = vmatpush2.bf16.msra.mxu0 0
  %253 = vmatprep.subr.bf16.mxu0 0
  %254 = vmatpush2.bf16.msra.mxu0 0
  %255 = vmatprep.subr.bf16.mxu0 0
  %256 = vmatpush2.bf16.msra.mxu0 0
  %257 = vmatprep.subr.bf16.mxu0 0
  %258 = vmatpush2.bf16.msra.mxu0 0
  %259 = vmatprep.subr.bf16.mxu0 0
  %260 = vmatpush2.bf16.msra.mxu0 0
  %261 = vmatprep.subr.bf16.mxu0 0
  %262 = vmatpush2.bf16.msra.mxu0 0
  %263 = vmatprep.mubr.bf16.mxu0 0
  %264 = vmatmul.mubr.bf16.gmra.mxu0 %v223
  %v265 = vpop.f32.mrf.mxu0
  %v266 = vadd.f32 %v210, %v265
  %v267 = vpop.f32.mrf.mxu0
  %v268 = vadd.f32 %v210, %v267
  %v269 = vpop.f32.mrf.mxu0
  %v270 = vadd.f32 %v215, %v269
  %v271 = vpop.f32.mrf.mxu0
  %v272 = vadd.f32 %v215, %v271
  %273 = vdwg.mxu0
  %v274 = vadd.s32 %v112, 128
  %vm275 = vcmp.ge.s32.totalorder %v112, 0
  %vm276 = vcmp.ge.s32.totalorder %v274, 0
  %vm277 = vcmp.lt.s32.totalorder %v112, 128
  %vm278 = vcmp.lt.s32.totalorder %v274, 128
  %vm279 = vmand %vm275, %vm277
  %vm280 = vmand %vm276, %vm278
  %282 = vset.pattern.permute.xlu0 0
  %283 = vperm.xlu0 %282, %v197
  %v284 = vpop.permute.xlu0 %283
  %v286 = vsel %vm279, %v284, 0.0
  %v287 = vsel %vm280, %v284, 0.0
  %vm288 = vcmp.ge.s32.totalorder %v112, 128
  %vm289 = vcmp.ge.s32.totalorder %v274, 128
  %vm290 = vcmp.lt.s32.totalorder %v112, 256
  %vm291 = vcmp.lt.s32.totalorder %v274, 256
  %vm292 = vmand %vm288, %vm290
  %vm293 = vmand %vm289, %vm291
  %294 = vset.pattern.permute.xlu0 1
  %295 = vperm.xlu0 %294, %v197
  %v296 = vpop.permute.xlu0 %295
  %v298 = vsel %vm292, %v296, %v286
  %v299 = vsel %vm293, %v296, %v287
  %v300 = vmul.f32 %v298, %v266
  %v301 = vmul.f32 %v299, %v268
  %v302 = vadd.f32 %v300, %v270
  %v303 = vadd.f32 %v301, %v272
  %v304 = vld [vmem:[%s2 + $0x18] sm:$0xf]
  %v305 = vld [vmem:[%s1 + $0x50] sm:$0xff]
  %v306 = vld [vmem:[%s1 + $0x40] sm:$0xff]
  %v307 = vld [vmem:[%s1 + $0x48] sm:$0xff]
  %309 = vset.pattern.permute.xlu0 0
  %310 = vperm.xlu0 %309, %v306
  %v311 = vpop.permute.xlu0 %310
  %v313 = vmul.f32 %v302, %v311
  %v314 = vmul.f32 %v303, %v311
  %316 = vset.pattern.permute.xlu0 0
  %317 = vperm.xlu0 %316, %v307
  %v318 = vpop.permute.xlu0 %317
  %v320 = vadd.f32 %v313, %v318
  %v321 = vadd.f32 %v314, %v318
  %v322 = vmax.f32 %v320, 0.0
  %v323 = vmax.f32 %v321, 0.0
  %v324 = vpack.c.bf16 %v322, %v322
  %v325 = vpack.c.bf16 %v323, %v323
  %327 = vset.pattern.permute.xlu0 0
  %328 = vperm.xlu0 %327, %v305
  %v329 = vpop.permute.xlu0 %328
  %v332 = vsel %vm144, %v304, 0
  %v335 = vsel %vm148, %v324, 0
  %v338 = vsel %vm148, %v325, 0
  %340 = vmatprep.subr.bf16.mxu0 0
  %341 = vmatpush1.bf16.msra.mxu0 0
  %342 = vmatprep.subr.bf16.mxu0 0
  %343 = vmatpush1.bf16.msra.mxu0 0
  %344 = vmatprep.subr.bf16.mxu0 0
  %345 = vmatpush1.bf16.msra.mxu0 0
  %346 = vmatprep.subr.bf16.mxu0 0
  %347 = vmatpush1.bf16.msra.mxu0 0
  %348 = vmatprep.subr.bf16.mxu0 0
  %349 = vmatpush1.bf16.msra.mxu0 0
  %350 = vmatprep.subr.bf16.mxu0 0
  %351 = vmatpush1.bf16.msra.mxu0 0
  %352 = vmatprep.subr.bf16.mxu0 0
  %353 = vmatpush1.bf16.msra.mxu0 0
  %354 = vmatprep.subr.bf16.mxu0 %v338
  %355 = vmatpush1.bf16.msra.mxu0 %v335
  %356 = vmatprep.subr.bf16.mxu0 0
  %357 = vmatpush2.bf16.msra.mxu0 0
  %358 = vmatprep.subr.bf16.mxu0 0
  %359 = vmatpush2.bf16.msra.mxu0 0
  %360 = vmatprep.subr.bf16.mxu0 0
  %361 = vmatpush2.bf16.msra.mxu0 0
  %362 = vmatprep.subr.bf16.mxu0 0
  %363 = vmatpush2.bf16.msra.mxu0 0
  %364 = vmatprep.subr.bf16.mxu0 0
  %365 = vmatpush2.bf16.msra.mxu0 0
  %366 = vmatprep.subr.bf16.mxu0 0
  %367 = vmatpush2.bf16.msra.mxu0 0
  %368 = vmatprep.subr.bf16.mxu0 0
  %369 = vmatpush2.bf16.msra.mxu0 0
  %370 = vmatprep.subr.bf16.mxu0 0
  %371 = vmatpush2.bf16.msra.mxu0 0
  %372 = vmatprep.mubr.bf16.mxu0 0
  %373 = vmatmul.mubr.bf16.gmra.mxu0 %v332
  %v374 = vpop.f32.mrf.mxu0
  %v375 = vadd.f32 %v329, %v374
  %v376 = vpop.f32.mrf.mxu0
  %v377 = vadd.f32 %v329, %v376
  %v378 = vpop.f32.mrf.mxu0
  %v379 = vpop.f32.mrf.mxu0
  %380 = vdwg.mxu0
  %v381 = vpack.c.bf16 %v375, %v375
  %v382 = vpack.c.bf16 %v377, %v377
  %v385 = vunpack.c.l.b16 %v381
  %v386 = vunpack.c.l.b16 %v382
  %v387 = vpack.c.b16 %v386, %v385
  %389 = vst [vmem:[%s3] sm:$0xff] %v387
  %v390 = vld [vmem:[%s1 + $0x58] sm:$0xff]
  %392 = vset.pattern.permute.xlu0 0
  %393 = vperm.xlu0 %392, %v390
  %v394 = vpop.permute.xlu0 %393
  %v396 = vmul.f32 %v375, %v394
  %v397 = vmul.f32 %v377, %v394
  %v398 = vld [vmem:[%s1 + $0x60] sm:$0xff]
  %400 = vset.pattern.permute.xlu0 0
  %401 = vperm.xlu0 %400, %v398
  %v402 = vpop.permute.xlu0 %401
  %v404 = vadd.f32 %v396, %v402
  %v405 = vadd.f32 %v397, %v402
  %v406 = vmax.f32 %v404, 0.0
  %v407 = vmax.f32 %v405, 0.0
  %v408 = vld [vmem:[%s1 + $0x68] sm:$0xff]
  %410 = vset.pattern.permute.xlu0 0
  %411 = vperm.xlu0 %410, %v408
  %v412 = vpop.permute.xlu0 %411
  %v414 = vmul.f32 %v406, %v412
  %v415 = vmul.f32 %v407, %v412
  %v416 = vrot.slane %v414, 4
  %v417 = vadd.f32 %v414, %v416
  %v418 = vrot.slane %v417, 2
  %v419 = vadd.f32 %v417, %v418
  %v420 = vrot.slane %v419, 1
  %v421 = vadd.f32 %v419, %v420
  %v422 = vrot.slane %v415, 4
  %v423 = vadd.f32 %v415, %v422
  %v424 = vrot.slane %v423, 2
  %v425 = vadd.f32 %v423, %v424
  %v426 = vrot.slane %v425, 1
  %v427 = vadd.f32 %v425, %v426
  %v428 = vld [vmem:[%s1 + $0x70] sm:$0x1]
  %430 = vset.pattern.permute.xlu0 0
  %431 = vperm.xlu0 %430, %v428
  %v432 = vpop.permute.xlu0 %431
  %v434 = vadd.f32 %v421, %v432
  %v435 = vadd.f32 %v427, %v432
  %v436 = vxor.u32 %v434, 2147483648
  %v437 = vxor.u32 %v435, 2147483648
  %v438 = vmul.f32 %v436, 1.442695
  %v439 = vpow.pop %v438
  %v440 = vmul.f32 %v437, 1.442695
  %v441 = vpow.pop %v440
  %v442 = vadd.f32 %v439, 1.0
  %v443 = vadd.f32 %v441, 1.0
  %v444 = vrcp.pop %v442
  %v445 = vmul.f32 1.0, %v444
  %v446 = vrcp.pop %v443
  %v447 = vmul.f32 1.0, %v446
  %v450 = vcombine.low %v445, %v447
  %v452 = vunpack.c.l.s4 1966171168
  %v453 = vunpack.c.0.s8 %v452
  %v454 = vlaneseq
  %v455 = vshrl.u32 %v454, 7
  %v456 = vsub.s32 %v453, %v455
  %v457 = vrot.slane %v450, %v456
  %v459 = vunpack.c.l.s4 1966171168
  %v460 = vunpack.c.0.s8 %v459
  %v461 = vlaneseq
  %v462 = vshrl.u32 %v461, 7
  %v463 = vsub.s32 %v460, %v462
  %v464 = vrot.slane %v457, %v463
  %v466 = vlaneseq
  %vm467 = vcmp.ge.s32.totalorder %v466, 0
  %vm468 = vcmp.lt.s32.totalorder %v466, 256
  %vm469 = vmand %vm467, %vm468
  %470 = vst.msk [vmem:[%s4] sm:$0x3] %vm469, %v464
  // Predicated region
  $region14: #{forward.9} parent=0 // pred_check
    _
  $region15: #{forward.9} parent=0 // pred_check_branch
    %472 = sbr.rel (0) target = $region17
  $region16: #{forward.9} parent=0 // pred_region
    _
  $region17: #{forward.9} parent=0 // pred_fallthru
    _
  // Predicated region
  $region18: #{forward.9} parent=0 // pred_check
    _
  $region19: #{forward.9} parent=0 // pred_check_branch
    %474 = sbr.rel (0) target = $region21
  $region20: #{forward.9} parent=0 // pred_region
    _
  $region21: #{forward.9} parent=0 // pred_fallthru
    _
  // Predicated region
  $region22: #{forward.9} parent=0 // pred_check
    _
  $region23: #{forward.9} parent=0 // pred_check_branch
    %476 = sbr.rel (0) target = $region25
  $region24: #{forward.9} parent=0 // pred_region
    _
  $region25: #{forward.9} parent=0 // pred_fallthru
    _
  // Predicated region
  $region26: #{forward.9} parent=0 // pred_check
    _
  $region27: #{forward.9} parent=0 // pred_check_branch
    %478 = sbr.rel (0) target = $region29
  $region28: #{forward.9} parent=0 // pred_region
    _
  $region29: #{forward.9} parent=0 // pred_fallthru
    _

// kernel: forward.10
$region0: #{forward.10}
  #allocation0 [shape = 'u32[]', space=smem, size = 0x4, offset = 0x4, fixed_abs, tag = 'smem constant byte address 0x4 - core index']
  #allocation1 [shape = 'u32[144,128]{1,0:T(1,128)}', space=vmem, size = 0x12000, scoped, tag = 'internal scratch']
  %s0 = inlined_call_operand.vmem [shape: bf16[9,128], index: 0, kind: input, shape index: {}]
  %s1 = inlined_call_operand.vmem [shape: f32[232,1], index: 1, kind: input, shape index: {}]
  %s2 = inlined_call_operand.vmem [shape: bf16[80,128], index: 2, kind: input, shape index: {}]
  %s3 = inlined_call_operand.vmem [shape: bf16[16,128], index: 3, kind: output, shape index: {0}]
  %s4 = inlined_call_operand.vmem [shape: f32[1,128], index: 4, kind: output, shape index: {1}]
  %5 = xla_tuple %s3, %s4
  %s6 = sld [smem:[#allocation0]]
  $region30: #{forward.10} parent=0
    _
  %s8 = ssub.s32 1, %s6
  %s9 = scalar_select 0, %s8, %s6
  // Predicated region
  $region2: #{forward.10} parent=0 // pred_check
    _
  $region3: #{forward.10} parent=0 // pred_check_branch
    %11 = sbr.rel (0) target = $region5
  $region4: #{forward.10} parent=0 // pred_region
    _
  $region5: #{forward.10} parent=0 // pred_fallthru
    _
  // Predicated region
  $region6: #{forward.10} parent=0 // pred_check
    _
  $region7: #{forward.10} parent=0 // pred_check_branch
    %13 = sbr.rel (0) target = $region9
  $region8: #{forward.10} parent=0 // pred_region
    _
  $region9: #{forward.10} parent=0 // pred_fallthru
    _
  // Predicated region
  $region10: #{forward.10} parent=0 // pred_check
    _
  $region11: #{forward.10} parent=0 // pred_check_branch
    %15 = sbr.rel (0) target = $region13
  $region12: #{forward.10} parent=0 // pred_region
    _
  $region13: #{forward.10} parent=0 // pred_fallthru
    _
  %v17 = vld [vmem:[%s0] sm:$0xf]
  %v18 = vld [vmem:[%s0 + $0x4] sm:$0x1]
  %v19 = vld [vmem:[%s2] sm:$0xf]
  %v20 = vld [vmem:[%s2 + $0x4] sm:$0xf]
  %v21 = vld [vmem:[%s1 + $0x20] sm:$0xff]
  %v22 = vld [vmem:[%s1 + $0x28] sm:$0xff]
  %v23 = vld [vmem:[%s1] sm:$0xff]
  %v24 = vld [vmem:[%s1 + $0x8] sm:$0x1]
  %v25 = vld [vmem:[%s1 + $0x10] sm:$0xff]
  %v26 = vld [vmem:[%s1 + $0x18] sm:$0x1]
  %v27 = vunpack.c.l.bf16 %v17
  %v28 = vunpack.c.l.bf16 %v18
  %30 = vset.pattern.permute.xlu0 0
  %31 = vperm.xlu0 %30, %v23
  %v32 = vpop.permute.xlu0 %31
  %35 = vset.pattern.permute.xlu0 0
  %36 = vperm.xlu0 %35, %v24
  %v37 = vpop.permute.xlu0 %36
  %v39 = vmul.f32 %v27, %v32
  %v40 = vmul.f32 %v28, %v37
  %42 = vset.pattern.permute.xlu0 0
  %43 = vperm.xlu0 %42, %v25
  %v44 = vpop.permute.xlu0 %43
  %47 = vset.pattern.permute.xlu0 0
  %48 = vperm.xlu0 %47, %v26
  %v49 = vpop.permute.xlu0 %48
  %v51 = vadd.f32 %v39, %v44
  %v52 = vadd.f32 %v40, %v49
  %v53 = vmax.f32 %v51, 0.0
  %v54 = vmax.f32 %v52, 0.0
  %v55 = vpack.c.bf16 %v54, %v53
  %57 = vset.pattern.permute.xlu0 0
  %58 = vperm.xlu0 %57, %v21
  %v59 = vpop.permute.xlu0 %58
  %62 = vset.pattern.permute.xlu0 0
  %63 = vperm.xlu0 %62, %v22
  %v64 = vpop.permute.xlu0 %63
  %v68 = vunpack.c.l.b16 %v19
  %v69 = vunpack.c.l.b16 %v20
  %v70 = vpack.c.b16 %v69, %v68
  %vm71 = vcmask 72704
  %v73 = vsel %vm71, %v70, 0
  %vm75 = vcmask 1043456
  %vm76 = vcmask 1044480
  %v77 = vsel %vm75, 4294967295, 65535
  %v78 = vsel %vm76, %v77, 0
  %v80 = vand.u32 %v55, %v78
  %82 = vmatprep.subr.bf16.mxu0 0
  %83 = vmatpush1.bf16.msra.mxu0 0
  %84 = vmatprep.subr.bf16.mxu0 0
  %85 = vmatpush1.bf16.msra.mxu0 0
  %86 = vmatprep.subr.bf16.mxu0 0
  %87 = vmatpush1.bf16.msra.mxu0 0
  %88 = vmatprep.subr.bf16.mxu0 0
  %89 = vmatpush1.bf16.msra.mxu0 0
  %90 = vmatprep.subr.bf16.mxu0 0
  %91 = vmatpush1.bf16.msra.mxu0 0
  %92 = vmatprep.subr.bf16.mxu0 0
  %93 = vmatpush1.bf16.msra.mxu0 0
  %94 = vmatprep.subr.bf16.mxu0 0
  %95 = vmatpush1.bf16.msra.mxu0 0
  %96 = vmatprep.subr.bf16.mxu0 0
  %97 = vmatpush1.bf16.msra.mxu0 %v80
  %98 = vmatprep.subr.bf16.mxu0 0
  %99 = vmatpush2.bf16.msra.mxu0 0
  %100 = vmatprep.subr.bf16.mxu0 0
  %101 = vmatpush2.bf16.msra.mxu0 0
  %102 = vmatprep.subr.bf16.mxu0 0
  %103 = vmatpush2.bf16.msra.mxu0 0
  %104 = vmatprep.subr.bf16.mxu0 0
  %105 = vmatpush2.bf16.msra.mxu0 0
  %106 = vmatprep.subr.bf16.mxu0 0
  %107 = vmatpush2.bf16.msra.mxu0 0
  %108 = vmatprep.subr.bf16.mxu0 0
  %109 = vmatpush2.bf16.msra.mxu0 0
  %110 = vmatprep.subr.bf16.mxu0 0
  %111 = vmatpush2.bf16.msra.mxu0 0
  %112 = vmatprep.subr.bf16.mxu0 0
  %113 = vmatpush2.bf16.msra.mxu0 0
  %114 = vmatprep.mubr.bf16.mxu0 0
  %115 = vmatmul.mubr.bf16.gmra.mxu0 %v73
  %v116 = vpop.f32.mrf.mxu0
  %v117 = vadd.f32 %v59, %v116
  %v118 = vpop.f32.mrf.mxu0
  %v119 = vpop.f32.mrf.mxu0
  %v120 = vadd.f32 %v64, %v119
  %v121 = vpop.f32.mrf.mxu0
  %122 = vdwg.mxu0
  %v123 = vlaneseq
  %v124 = vand.u32 %v123, 127
  %vm125 = vcmask 523264
  %v126 = vsel %vm125, %v117, -inf
  %127 = vmax.xlane.f32.xlu0 %v126
  %v128 = vpop.xlane.xlu0 %127
  %v129 = vsel %vm125, %v120, -inf
  %130 = vmax.xlane.f32.xlu0 %v129
  %v131 = vpop.xlane.xlu0 %130
  %vm132 = vcmp.eq.s32.totalorder %v124, 0
  %v133 = vsel %vm132, %v128, 0.0
  %v134 = vsel %vm132, %v131, 0.0
  %vm135 = vcmask 1048064
  %v136 = vsel %vm135, %v117, -inf
  %137 = vmax.xlane.f32.xlu0 %v136
  %v138 = vpop.xlane.xlu0 %137
  %v139 = vsel %vm135, %v120, -inf
  %140 = vmax.xlane.f32.xlu0 %v139
  %v141 = vpop.xlane.xlu0 %140
  %vm142 = vcmp.eq.s32.totalorder %v124, 1
  %v143 = vsel %vm142, %v138, %v133
  %v144 = vsel %vm142, %v141, %v134
  %v145 = vld [vmem:[%s2 + $0x8] sm:$0xf]
  %v146 = vld [vmem:[%s2 + $0xc] sm:$0xf]
  %v147 = vld [vmem:[%s1 + $0x50] sm:$0xff]
  %v148 = vld [vmem:[%s1 + $0x58] sm:$0xff]
  %v149 = vld [vmem:[%s1 + $0x30] sm:$0xff]
  %v150 = vld [vmem:[%s1 + $0x38] sm:$0xff]
  %v151 = vld [vmem:[%s1 + $0x40] sm:$0xff]
  %v152 = vld [vmem:[%s1 + $0x48] sm:$0xff]
  %154 = vset.pattern.permute.xlu0 0
  %155 = vperm.xlu0 %154, %v149
  %v156 = vpop.permute.xlu0 %155
  %159 = vset.pattern.permute.xlu0 0
  %160 = vperm.xlu0 %159, %v150
  %v161 = vpop.permute.xlu0 %160
  %v163 = vmul.f32 %v143, %v156
  %v164 = vmul.f32 %v144, %v161
  %166 = vset.pattern.permute.xlu0 0
  %167 = vperm.xlu0 %166, %v151
  %v168 = vpop.permute.xlu0 %167
  %171 = vset.pattern.permute.xlu0 0
  %172 = vperm.xlu0 %171, %v152
  %v173 = vpop.permute.xlu0 %172
  %v175 = vadd.f32 %v163, %v168
  %v176 = vadd.f32 %v164, %v173
  %v177 = vmax.f32 %v175, 0.0
  %v178 = vmax.f32 %v176, 0.0
  %v179 = vpack.c.bf16 %v178, %v177
  %181 = vset.pattern.permute.xlu0 0
  %182 = vperm.xlu0 %181, %v147
  %v183 = vpop.permute.xlu0 %182
  %186 = vset.pattern.permute.xlu0 0
  %187 = vperm.xlu0 %186, %v148
  %v188 = vpop.permute.xlu0 %187
  %v192 = vunpack.c.l.b16 %v145
  %v193 = vunpack.c.l.b16 %v146
  %v194 = vpack.c.b16 %v193, %v192
  %vm195 = vcmask 130048
  %v197 = vsel %vm195, %v194, 0
  %199 = vmatprep.subr.bf16.mxu0 0
  %200 = vmatpush1.bf16.msra.mxu0 0
  %201 = vmatprep.subr.bf16.mxu0 0
  %202 = vmatpush1.bf16.msra.mxu0 0
  %203 = vmatprep.subr.bf16.mxu0 0
  %204 = vmatpush1.bf16.msra.mxu0 0
  %205 = vmatprep.subr.bf16.mxu0 0
  %206 = vmatpush1.bf16.msra.mxu0 0
  %207 = vmatprep.subr.bf16.mxu0 0
  %208 = vmatpush1.bf16.msra.mxu0 0
  %209 = vmatprep.subr.bf16.mxu0 0
  %210 = vmatpush1.bf16.msra.mxu0 0
  %211 = vmatprep.subr.bf16.mxu0 0
  %212 = vmatpush1.bf16.msra.mxu0 0
  %213 = vmatprep.subr.bf16.mxu0 0
  %214 = vmatpush1.bf16.msra.mxu0 %v179
  %215 = vmatprep.subr.bf16.mxu0 0
  %216 = vmatpush2.bf16.msra.mxu0 0
  %217 = vmatprep.subr.bf16.mxu0 0
  %218 = vmatpush2.bf16.msra.mxu0 0
  %219 = vmatprep.subr.bf16.mxu0 0
  %220 = vmatpush2.bf16.msra.mxu0 0
  %221 = vmatprep.subr.bf16.mxu0 0
  %222 = vmatpush2.bf16.msra.mxu0 0
  %223 = vmatprep.subr.bf16.mxu0 0
  %224 = vmatpush2.bf16.msra.mxu0 0
  %225 = vmatprep.subr.bf16.mxu0 0
  %226 = vmatpush2.bf16.msra.mxu0 0
  %227 = vmatprep.subr.bf16.mxu0 0
  %228 = vmatpush2.bf16.msra.mxu0 0
  %229 = vmatprep.subr.bf16.mxu0 0
  %230 = vmatpush2.bf16.msra.mxu0 0
  %231 = vmatprep.mubr.bf16.mxu0 0
  %232 = vmatmul.mubr.bf16.gmra.mxu0 %v197
  %v233 = vpop.f32.mrf.mxu0
  %v234 = vadd.f32 %v183, %v233
  %v235 = vpop.f32.mrf.mxu0
  %v236 = vpop.f32.mrf.mxu0
  %v237 = vadd.f32 %v188, %v236
  %v238 = vpop.f32.mrf.mxu0
  %239 = vdwg.mxu0
  %v240 = vxor.u32 %v234, 2147483648
  %v241 = vxor.u32 %v237, 2147483648
  %v242 = vmul.f32 %v240, 1.442695
  %v243 = vpow.pop %v242
  %v244 = vmul.f32 %v241, 1.442695
  %v245 = vpow.pop %v244
  %v246 = vadd.f32 %v243, 1.0
  %v247 = vadd.f32 %v245, 1.0
  %v248 = vrcp.pop %v246
  %v249 = vmul.f32 1.0, %v248
  %v250 = vrcp.pop %v247
  %v251 = vmul.f32 1.0, %v250
  %v252 = vld [vmem:[%s2 + $0x10] sm:$0xf]
  %v253 = vld [vmem:[%s2 + $0x14] sm:$0xf]
  %v254 = vld [vmem:[%s2 + $0x18] sm:$0xf]
  %v255 = vld [vmem:[%s2 + $0x1c] sm:$0xf]
  %v256 = vld [vmem:[%s1 + $0x60] sm:$0xff]
  %v257 = vld [vmem:[%s1 + $0x68] sm:$0xff]
  %v258 = vld [vmem:[%s1 + $0x70] sm:$0xff]
  %v259 = vld [vmem:[%s1 + $0x78] sm:$0xff]
  %261 = vset.pattern.permute.xlu0 0
  %262 = vperm.xlu0 %261, %v256
  %v263 = vpop.permute.xlu0 %262
  %266 = vset.pattern.permute.xlu0 0
  %267 = vperm.xlu0 %266, %v257
  %v268 = vpop.permute.xlu0 %267
  %271 = vset.pattern.permute.xlu0 0
  %272 = vperm.xlu0 %271, %v258
  %v273 = vpop.permute.xlu0 %272
  %276 = vset.pattern.permute.xlu0 0
  %277 = vperm.xlu0 %276, %v259
  %v278 = vpop.permute.xlu0 %277
  %v284 = vunpack.c.l.b16 %v252
  %v285 = vunpack.c.l.b16 %v253
  %v286 = vunpack.c.l.b16 %v254
  %v287 = vunpack.c.l.b16 %v255
  %v288 = vpack.c.b16 %v285, %v284
  %v289 = vpack.c.b16 %v287, %v286
  %v292 = vunpack.c.l.b16 %v17
  %v293 = vunpack.c.l.b16 %v18
  %v294 = vpack.c.b16 %v293, %v292
  %v296 = vsel %vm71, %v288, 0
  %v299 = vsel %vm71, %v289, 0
  %v302 = vand.u32 %v294, %v78
  %304 = vmatprep.subr.bf16.mxu0 0
  %305 = vmatpush1.bf16.msra.mxu0 0
  %306 = vmatprep.subr.bf16.mxu0 0
  %307 = vmatpush1.bf16.msra.mxu0 0
  %308 = vmatprep.subr.bf16.mxu0 0
  %309 = vmatpush1.bf16.msra.mxu0 0
  %310 = vmatprep.subr.bf16.mxu0 0
  %311 = vmatpush1.bf16.msra.mxu0 0
  %312 = vmatprep.subr.bf16.mxu0 0
  %313 = vmatpush1.bf16.msra.mxu0 0
  %314 = vmatprep.subr.bf16.mxu0 0
  %315 = vmatpush1.bf16.msra.mxu0 0
  %316 = vmatprep.subr.bf16.mxu0 0
  %317 = vmatpush1.bf16.msra.mxu0 0
  %318 = vmatprep.subr.bf16.mxu0 0
  %319 = vmatpush1.bf16.msra.mxu0 %v302
  %320 = vmatprep.subr.bf16.mxu0 0
  %321 = vmatpush2.bf16.msra.mxu0 0
  %322 = vmatprep.subr.bf16.mxu0 0
  %323 = vmatpush2.bf16.msra.mxu0 0
  %324 = vmatprep.subr.bf16.mxu0 0
  %325 = vmatpush2.bf16.msra.mxu0 0
  %326 = vmatprep.subr.bf16.mxu0 0
  %327 = vmatpush2.bf16.msra.mxu0 0
  %328 = vmatprep.subr.bf16.mxu0 0
  %329 = vmatpush2.bf16.msra.mxu0 0
  %330 = vmatprep.subr.bf16.mxu0 0
  %331 = vmatpush2.bf16.msra.mxu0 0
  %332 = vmatprep.subr.bf16.mxu0 0
  %333 = vmatpush2.bf16.msra.mxu0 0
  %334 = vmatprep.subr.bf16.mxu0 0
  %335 = vmatpush2.bf16.msra.mxu0 0
  %336 = vmatprep.mubr.bf16.mxu0 0
  %337 = vmatmul.mubr.bf16.gmra.mxu0 %v296
  %v338 = vpop.f32.mrf.mxu0
  %v339 = vadd.f32 %v263, %v338
  %v340 = vpop.f32.mrf.mxu0
  %v341 = vpop.f32.mrf.mxu0
  %v342 = vadd.f32 %v268, %v341
  %v343 = vpop.f32.mrf.mxu0
  %344 = vmatprep.mubr.bf16.mxu0 0
  %345 = vmatmul.mubr.bf16.gmra.mxu0 %v299
  %v346 = vpop.f32.mrf.mxu0
  %v347 = vadd.f32 %v273, %v346
  %v348 = vpop.f32.mrf.mxu0
  %v349 = vpop.f32.mrf.mxu0
  %v350 = vadd.f32 %v278, %v349
  %v351 = vpop.f32.mrf.mxu0
  %352 = vdwg.mxu0
  %vm353 = vcmp.ge.s32.totalorder %v124, 0
  %vm354 = vcmp.lt.s32.totalorder %v124, 64
  %vm355 = vmand %vm353, %vm354
  %357 = vset.pattern.permute.xlu0 0
  %358 = vperm.xlu0 %357, %v249
  %v359 = vpop.permute.xlu0 %358
  %362 = vset.pattern.permute.xlu0 0
  %363 = vperm.xlu0 %362, %v251
  %v364 = vpop.permute.xlu0 %363
  %v366 = vsel %vm355, %v359, 0.0
  %v367 = vsel %vm355, %v364, 0.0
  %vm368 = vcmp.ge.s32.totalorder %v124, 64
  %vm369 = vcmp.lt.s32.totalorder %v124, 128
  %vm370 = vmand %vm368, %vm369
  %371 = vset.pattern.permute.xlu0 1
  %372 = vperm.xlu0 %371, %v249
  %v373 = vpop.permute.xlu0 %372
  %375 = vset.pattern.permute.xlu0 1
  %376 = vperm.xlu0 %375, %v251
  %v377 = vpop.permute.xlu0 %376
  %v379 = vsel %vm370, %v373, %v366
  %v380 = vsel %vm370, %v377, %v367
  %v381 = vmul.f32 %v379, %v339
  %v382 = vmul.f32 %v380, %v342
  %v383 = vadd.f32 %v381, %v347
  %v384 = vadd.f32 %v382, %v350
  %v385 = vld [vmem:[%s2 + $0x20] sm:$0xf]
  %v386 = vld [vmem:[%s2 + $0x24] sm:$0xf]
  %v387 = vld [vmem:[%s1 + $0xa0] sm:$0xff]
  %v388 = vld [vmem:[%s1 + $0xa8] sm:$0xff]
  %v389 = vld [vmem:[%s1 + $0x80] sm:$0xff]
  %v390 = vld [vmem:[%s1 + $0x88] sm:$0xff]
  %v391 = vld [vmem:[%s1 + $0x90] sm:$0xff]
  %v392 = vld [vmem:[%s1 + $0x98] sm:$0xff]
  %394 = vset.pattern.permute.xlu0 0
  %395 = vperm.xlu0 %394, %v389
  %v396 = vpop.permute.xlu0 %395
  %399 = vset.pattern.permute.xlu0 0
  %400 = vperm.xlu0 %399, %v390
  %v401 = vpop.permute.xlu0 %400
  %v403 = vmul.f32 %v383, %v396
  %v404 = vmul.f32 %v384, %v401
  %406 = vset.pattern.permute.xlu0 0
  %407 = vperm.xlu0 %406, %v391
  %v408 = vpop.permute.xlu0 %407
  %411 = vset.pattern.permute.xlu0 0
  %412 = vperm.xlu0 %411, %v392
  %v413 = vpop.permute.xlu0 %412
  %v415 = vadd.f32 %v403, %v408
  %v416 = vadd.f32 %v404, %v413
  %v417 = vmax.f32 %v415, 0.0
  %v418 = vmax.f32 %v416, 0.0
  %v419 = vpack.c.bf16 %v418, %v417
  %421 = vset.pattern.permute.xlu0 0
  %422 = vperm.xlu0 %421, %v387
  %v423 = vpop.permute.xlu0 %422
  %426 = vset.pattern.permute.xlu0 0
  %427 = vperm.xlu0 %426, %v388
  %v428 = vpop.permute.xlu0 %427
  %v432 = vunpack.c.l.b16 %v385
  %v433 = vunpack.c.l.b16 %v386
  %v434 = vpack.c.b16 %v433, %v432
  %v436 = vsel %vm195, %v434, 0
  %438 = vmatprep.subr.bf16.mxu0 0
  %439 = vmatpush1.bf16.msra.mxu0 0
  %440 = vmatprep.subr.bf16.mxu0 0
  %441 = vmatpush1.bf16.msra.mxu0 0
  %442 = vmatprep.subr.bf16.mxu0 0
  %443 = vmatpush1.bf16.msra.mxu0 0
  %444 = vmatprep.subr.bf16.mxu0 0
  %445 = vmatpush1.bf16.msra.mxu0 0
  %446 = vmatprep.subr.bf16.mxu0 0
  %447 = vmatpush1.bf16.msra.mxu0 0
  %448 = vmatprep.subr.bf16.mxu0 0
  %449 = vmatpush1.bf16.msra.mxu0 0
  %450 = vmatprep.subr.bf16.mxu0 0
  %451 = vmatpush1.bf16.msra.mxu0 0
  %452 = vmatprep.subr.bf16.mxu0 0
  %453 = vmatpush1.bf16.msra.mxu0 %v419
  %454 = vmatprep.subr.bf16.mxu0 0
  %455 = vmatpush2.bf16.msra.mxu0 0
  %456 = vmatprep.subr.bf16.mxu0 0
  %457 = vmatpush2.bf16.msra.mxu0 0
  %458 = vmatprep.subr.bf16.mxu0 0
  %459 = vmatpush2.bf16.msra.mxu0 0
  %460 = vmatprep.subr.bf16.mxu0 0
  %461 = vmatpush2.bf16.msra.mxu0 0
  %462 = vmatprep.subr.bf16.mxu0 0
  %463 = vmatpush2.bf16.msra.mxu0 0
  %464 = vmatprep.subr.bf16.mxu0 0
  %465 = vmatpush2.bf16.msra.mxu0 0
  %466 = vmatprep.subr.bf16.mxu0 0
  %467 = vmatpush2.bf16.msra.mxu0 0
  %468 = vmatprep.subr.bf16.mxu0 0
  %469 = vmatpush2.bf16.msra.mxu0 0
  %470 = vmatprep.mubr.bf16.mxu0 0
  %471 = vmatmul.mubr.bf16.gmra.mxu0 %v436
  %v472 = vpop.f32.mrf.mxu0
  %v473 = vadd.f32 %v423, %v472
  %v474 = vpop.f32.mrf.mxu0
  %v475 = vpop.f32.mrf.mxu0
  %v476 = vadd.f32 %v428, %v475
  %v477 = vpop.f32.mrf.mxu0
  %478 = vdwg.mxu0
  %v479 = vpack.c.bf16 %v476, %v473
  %v481 = vunpack.c.l.b16 %v479
  %v482 = vunpack.c.h.b16 %v479
  %v483 = vpack.c.b16 %v481, %v481
  %v484 = vpack.c.b16 %v482, %v482
  %487 = vst [vmem:[%s3] sm:$0xf] %v483
  %488 = vst [vmem:[%s3 + $0x4] sm:$0xf] %v484
  %v489 = vld [vmem:[%s1 + $0xb0] sm:$0xff]
  %v490 = vld [vmem:[%s1 + $0xb8] sm:$0xff]
  %492 = vset.pattern.permute.xlu0 0
  %493 = vperm.xlu0 %492, %v489
  %v494 = vpop.permute.xlu0 %493
  %497 = vset.pattern.permute.xlu0 0
  %498 = vperm.xlu0 %497, %v490
  %v499 = vpop.permute.xlu0 %498
  %v501 = vmul.f32 %v473, %v494
  %v502 = vmul.f32 %v476, %v499
  %v503 = vld [vmem:[%s1 + $0xc0] sm:$0xff]
  %v504 = vld [vmem:[%s1 + $0xc8] sm:$0xff]
  %506 = vset.pattern.permute.xlu0 0
  %507 = vperm.xlu0 %506, %v503
  %v508 = vpop.permute.xlu0 %507
  %511 = vset.pattern.permute.xlu0 0
  %512 = vperm.xlu0 %511, %v504
  %v513 = vpop.permute.xlu0 %512
  %v515 = vadd.f32 %v501, %v508
  %v516 = vadd.f32 %v502, %v513
  %v517 = vmax.f32 %v515, 0.0
  %v518 = vmax.f32 %v516, 0.0
  %v519 = vld [vmem:[%s1 + $0xd0] sm:$0xff]
  %v520 = vld [vmem:[%s1 + $0xd8] sm:$0xff]
  %522 = vset.pattern.permute.xlu0 0
  %523 = vperm.xlu0 %522, %v519
  %v524 = vpop.permute.xlu0 %523
  %527 = vset.pattern.permute.xlu0 0
  %528 = vperm.xlu0 %527, %v520
  %v529 = vpop.permute.xlu0 %528
  %v531 = vmul.f32 %v517, %v524
  %v532 = vmul.f32 %v518, %v529
  %v533 = vadd.f32 %v531, %v532
  %v534 = vrot.slane %v533, 4
  %v535 = vadd.f32 %v533, %v534
  %v536 = vrot.slane %v535, 2
  %v537 = vadd.f32 %v535, %v536
  %v538 = vrot.slane %v537, 1
  %v539 = vadd.f32 %v537, %v538
  %v540 = vld [vmem:[%s1 + $0xe0] sm:$0x1]
  %542 = vset.pattern.permute.xlu0 0
  %543 = vperm.xlu0 %542, %v540
  %v544 = vpop.permute.xlu0 %543
  %v546 = vadd.f32 %v539, %v544
  %v547 = vxor.u32 %v546, 2147483648
  %v548 = vmul.f32 %v547, 1.442695
  %v549 = vpow.pop %v548
  %v550 = vadd.f32 %v549, 1.0
  %v551 = vrcp.pop %v550
  %v552 = vmul.f32 1.0, %v551
  %553 = vst [vmem:[%s4] sm:$0x1] %v552
  // Predicated region
  $region14: #{forward.10} parent=0 // pred_check
    _
  $region15: #{forward.10} parent=0 // pred_check_branch
    %555 = sbr.rel (0) target = $region17
  $region16: #{forward.10} parent=0 // pred_region
    _
  $region17: #{forward.10} parent=0 // pred_fallthru
    _
  // Predicated region
  $region18: #{forward.10} parent=0 // pred_check
    _
  $region19: #{forward.10} parent=0 // pred_check_branch
    %557 = sbr.rel (0) target = $region21
  $region20: #{forward.10} parent=0 // pred_region
    _
  $region21: #{forward.10} parent=0 // pred_fallthru
    _
  // Predicated region
  $region22: #{forward.10} parent=0 // pred_check
    _
  $region23: #{forward.10} parent=0 // pred_check_branch
    %559 = sbr.rel (0) target = $region25
  $region24: #{forward.10} parent=0 // pred_region
    _
  $region25: #{forward.10} parent=0 // pred_fallthru
    _
  // Predicated region
  $region26: #{forward.10} parent=0 // pred_check
    _
  $region27: #{forward.10} parent=0 // pred_check_branch
    %561 = sbr.rel (0) target = $region29
  $region28: #{forward.10} parent=0 // pred_region
    _
  $region29: #{forward.10} parent=0 // pred_fallthru
    _

// kernel: forward.11
$region0: #{forward.11}
  #allocation0 [shape = 'u32[]', space=smem, size = 0x4, offset = 0x4, fixed_abs, tag = 'smem constant byte address 0x4 - core index']
  #allocation1 [shape = 'u32[144,128]{1,0:T(1,128)}', space=vmem, size = 0x12000, scoped, tag = 'internal scratch']
  %s0 = inlined_call_operand.vmem [shape: bf16[17,64], index: 0, kind: input, shape index: {}]
  %s1 = inlined_call_operand.vmem [shape: f32[248,1], index: 1, kind: input, shape index: {}]
  %s2 = inlined_call_operand.vmem [shape: bf16[80,128], index: 2, kind: input, shape index: {}]
  %s3 = inlined_call_operand.vmem [shape: bf16[16,64], index: 3, kind: output, shape index: {0}]
  %s4 = inlined_call_operand.vmem [shape: f32[1,64], index: 4, kind: output, shape index: {1}]
  %5 = xla_tuple %s3, %s4
  %s6 = sld [smem:[#allocation0]]
  $region30: #{forward.11} parent=0
    _
  %s8 = ssub.s32 1, %s6
  %s9 = scalar_select 0, %s8, %s6
  // Predicated region
  $region2: #{forward.11} parent=0 // pred_check
    _
  $region3: #{forward.11} parent=0 // pred_check_branch
    %11 = sbr.rel (0) target = $region5
  $region4: #{forward.11} parent=0 // pred_region
    _
  $region5: #{forward.11} parent=0 // pred_fallthru
    _
  // Predicated region
  $region6: #{forward.11} parent=0 // pred_check
    _
  $region7: #{forward.11} parent=0 // pred_check_branch
    %13 = sbr.rel (0) target = $region9
  $region8: #{forward.11} parent=0 // pred_region
    _
  $region9: #{forward.11} parent=0 // pred_fallthru
    _
  // Predicated region
  $region10: #{forward.11} parent=0 // pred_check
    _
  $region11: #{forward.11} parent=0 // pred_check_branch
    %15 = sbr.rel (0) target = $region13
  $region12: #{forward.11} parent=0 // pred_region
    _
  $region13: #{forward.11} parent=0 // pred_fallthru
    _
  %v17 = vld [vmem:[%s0] sm:$0xf]
  %v18 = vld [vmem:[%s0 + $0x4] sm:$0xf]
  %v19 = vld [vmem:[%s0 + $0x8] sm:$0x1]
  %v20 = vld [vmem:[%s2] sm:$0xf]
  %v21 = vld [vmem:[%s2 + $0x4] sm:$0xf]
  %v22 = vld [vmem:[%s1 + $0x30] sm:$0xff]
  %v23 = vld [vmem:[%s1 + $0x38] sm:$0xff]
  %v24 = vld [vmem:[%s1] sm:$0xff]
  %v25 = vld [vmem:[%s1 + $0x8] sm:$0xff]
  %v26 = vld [vmem:[%s1 + $0x10] sm:$0x1]
  %v27 = vld [vmem:[%s1 + $0x18] sm:$0xff]
  %v28 = vld [vmem:[%s1 + $0x20] sm:$0xff]
  %v29 = vld [vmem:[%s1 + $0x28] sm:$0x1]
  %v30 = vunpack.c.l.bf16 %v17
  %v31 = vunpack.c.l.bf16 %v18
  %v32 = vunpack.c.l.bf16 %v19
  %34 = vset.pattern.permute.xlu0 0
  %35 = vperm.xlu0 %34, %v24
  %v36 = vpop.permute.xlu0 %35
  %39 = vset.pattern.permute.xlu0 0
  %40 = vperm.xlu0 %39, %v25
  %v41 = vpop.permute.xlu0 %40
  %44 = vset.pattern.permute.xlu0 0
  %45 = vperm.xlu0 %44, %v26
  %v46 = vpop.permute.xlu0 %45
  %v48 = vmul.f32 %v30, %v36
  %v49 = vmul.f32 %v31, %v41
  %v50 = vmul.f32 %v32, %v46
  %52 = vset.pattern.permute.xlu0 0
  %53 = vperm.xlu0 %52, %v27
  %v54 = vpop.permute.xlu0 %53
  %57 = vset.pattern.permute.xlu0 0
  %58 = vperm.xlu0 %57, %v28
  %v59 = vpop.permute.xlu0 %58
  %62 = vset.pattern.permute.xlu0 0
  %63 = vperm.xlu0 %62, %v29
  %v64 = vpop.permute.xlu0 %63
  %v66 = vadd.f32 %v48, %v54
  %v67 = vadd.f32 %v49, %v59
  %v68 = vadd.f32 %v50, %v64
  %v69 = vmax.f32 %v66, 0.0
  %v70 = vmax.f32 %v67, 0.0
  %v71 = vmax.f32 %v68, 0.0
  %v72 = vpack.c.bf16 %v70, %v69
  %v73 = vpack.c.bf16 %v71, %v71
  %75 = vset.pattern.permute.xlu0 0
  %76 = vperm.xlu0 %75, %v22
  %v77 = vpop.permute.xlu0 %76
  %80 = vset.pattern.permute.xlu0 0
  %81 = vperm.xlu0 %80, %v23
  %v82 = vpop.permute.xlu0 %81
  %v86 = vunpack.c.l.b16 %v20
  %v87 = vunpack.c.l.b16 %v21
  %v88 = vpack.c.b16 %v87, %v86
  %vm89 = vcmask 138240
  %v91 = vsel %vm89, %v88, 0
  %vm93 = vcmask 1040384
  %v94 = vsel 0, 4294967295, 65535
  %v95 = vsel %vm93, %v94, 0
  %v97 = vand.u32 %v73, %v95
  %99 = vmatprep.subr.bf16.mxu0 0
  %100 = vmatpush1.bf16.msra.mxu0 0
  %101 = vmatprep.subr.bf16.mxu0 0
  %102 = vmatpush1.bf16.msra.mxu0 0
  %103 = vmatprep.subr.bf16.mxu0 0
  %104 = vmatpush1.bf16.msra.mxu0 0
  %105 = vmatprep.subr.bf16.mxu0 0
  %106 = vmatpush1.bf16.msra.mxu0 0
  %107 = vmatprep.subr.bf16.mxu0 0
  %108 = vmatpush1.bf16.msra.mxu0 0
  %109 = vmatprep.subr.bf16.mxu0 0
  %110 = vmatpush1.bf16.msra.mxu0 0
  %111 = vmatprep.subr.bf16.mxu0 0
  %112 = vmatpush1.bf16.msra.mxu0 %v97
  %113 = vmatprep.subr.bf16.mxu0 0
  %114 = vmatpush1.bf16.msra.mxu0 %v72
  %115 = vmatprep.subr.bf16.mxu0 0
  %116 = vmatpush2.bf16.msra.mxu0 0
  %117 = vmatprep.subr.bf16.mxu0 0
  %118 = vmatpush2.bf16.msra.mxu0 0
  %119 = vmatprep.subr.bf16.mxu0 0
  %120 = vmatpush2.bf16.msra.mxu0 0
  %121 = vmatprep.subr.bf16.mxu0 0
  %122 = vmatpush2.bf16.msra.mxu0 0
  %123 = vmatprep.subr.bf16.mxu0 0
  %124 = vmatpush2.bf16.msra.mxu0 0
  %125 = vmatprep.subr.bf16.mxu0 0
  %126 = vmatpush2.bf16.msra.mxu0 0
  %127 = vmatprep.subr.bf16.mxu0 0
  %128 = vmatpush2.bf16.msra.mxu0 0
  %129 = vmatprep.subr.bf16.mxu0 0
  %130 = vmatpush2.bf16.msra.mxu0 0
  %131 = vmatprep.mubr.bf16.mxu0 0
  %132 = vmatmul.mubr.bf16.gmra.mxu0 %v91
  %v133 = vpop.f32.mrf.mxu0
  %v134 = vadd.f32 %v77, %v133
  %v135 = vpop.f32.mrf.mxu0
  %v136 = vpop.f32.mrf.mxu0
  %v137 = vadd.f32 %v82, %v136
  %v138 = vpop.f32.mrf.mxu0
  %139 = vdwg.mxu0
  %v140 = vlaneseq
  %v141 = vand.u32 %v140, 127
  %vm142 = vcmask 261120
  %v143 = vsel %vm142, %v134, -inf
  %144 = vmax.xlane.f32.xlu0 %v143
  %v145 = vpop.xlane.xlu0 %144
  %v146 = vsel %vm142, %v137, -inf
  %147 = vmax.xlane.f32.xlu0 %v146
  %v148 = vpop.xlane.xlu0 %147
  %vm149 = vcmp.eq.s32.totalorder %v141, 0
  %v150 = vsel %vm149, %v145, 0.0
  %v151 = vsel %vm149, %v148, 0.0
  %vm152 = vcmask 523520
  %v153 = vsel %vm152, %v134, -inf
  %154 = vmax.xlane.f32.xlu0 %v153
  %v155 = vpop.xlane.xlu0 %154
  %v156 = vsel %vm152, %v137, -inf
  %157 = vmax.xlane.f32.xlu0 %v156
  %v158 = vpop.xlane.xlu0 %157
  %vm159 = vcmp.eq.s32.totalorder %v141, 1
  %v160 = vsel %vm159, %v155, %v150
  %v161 = vsel %vm159, %v158, %v151
  %v162 = vld [vmem:[%s2 + $0x8] sm:$0xf]
  %v163 = vld [vmem:[%s2 + $0xc] sm:$0xf]
  %v164 = vld [vmem:[%s1 + $0x60] sm:$0xff]
  %v165 = vld [vmem:[%s1 + $0x68] sm:$0xff]
  %v166 = vld [vmem:[%s1 + $0x40] sm:$0xff]
  %v167 = vld [vmem:[%s1 + $0x48] sm:$0xff]
  %v168 = vld [vmem:[%s1 + $0x50] sm:$0xff]
  %v169 = vld [vmem:[%s1 + $0x58] sm:$0xff]
  %171 = vset.pattern.permute.xlu0 0
  %172 = vperm.xlu0 %171, %v166
  %v173 = vpop.permute.xlu0 %172
  %176 = vset.pattern.permute.xlu0 0
  %177 = vperm.xlu0 %176, %v167
  %v178 = vpop.permute.xlu0 %177
  %v180 = vmul.f32 %v160, %v173
  %v181 = vmul.f32 %v161, %v178
  %183 = vset.pattern.permute.xlu0 0
  %184 = vperm.xlu0 %183, %v168
  %v185 = vpop.permute.xlu0 %184
  %188 = vset.pattern.permute.xlu0 0
  %189 = vperm.xlu0 %188, %v169
  %v190 = vpop.permute.xlu0 %189
  %v192 = vadd.f32 %v180, %v185
  %v193 = vadd.f32 %v181, %v190
  %v194 = vmax.f32 %v192, 0.0
  %v195 = vmax.f32 %v193, 0.0
  %v196 = vpack.c.bf16 %v195, %v194
  %198 = vset.pattern.permute.xlu0 0
  %199 = vperm.xlu0 %198, %v164
  %v200 = vpop.permute.xlu0 %199
  %203 = vset.pattern.permute.xlu0 0
  %204 = vperm.xlu0 %203, %v165
  %v205 = vpop.permute.xlu0 %204
  %v209 = vunpack.c.l.b16 %v162
  %v210 = vunpack.c.l.b16 %v163
  %v211 = vpack.c.b16 %v210, %v209
  %vm212 = vcmask 130048
  %v214 = vsel %vm212, %v211, 0
  %216 = vmatprep.subr.bf16.mxu0 0
  %217 = vmatpush1.bf16.msra.mxu0 0
  %218 = vmatprep.subr.bf16.mxu0 0
  %219 = vmatpush1.bf16.msra.mxu0 0
  %220 = vmatprep.subr.bf16.mxu0 0
  %221 = vmatpush1.bf16.msra.mxu0 0
  %222 = vmatprep.subr.bf16.mxu0 0
  %223 = vmatpush1.bf16.msra.mxu0 0
  %224 = vmatprep.subr.bf16.mxu0 0
  %225 = vmatpush1.bf16.msra.mxu0 0
  %226 = vmatprep.subr.bf16.mxu0 0
  %227 = vmatpush1.bf16.msra.mxu0 0
  %228 = vmatprep.subr.bf16.mxu0 0
  %229 = vmatpush1.bf16.msra.mxu0 0
  %230 = vmatprep.subr.bf16.mxu0 0
  %231 = vmatpush1.bf16.msra.mxu0 %v196
  %232 = vmatprep.subr.bf16.mxu0 0
  %233 = vmatpush2.bf16.msra.mxu0 0
  %234 = vmatprep.subr.bf16.mxu0 0
  %235 = vmatpush2.bf16.msra.mxu0 0
  %236 = vmatprep.subr.bf16.mxu0 0
  %237 = vmatpush2.bf16.msra.mxu0 0
  %238 = vmatprep.subr.bf16.mxu0 0
  %239 = vmatpush2.bf16.msra.mxu0 0
  %240 = vmatprep.subr.bf16.mxu0 0
  %241 = vmatpush2.bf16.msra.mxu0 0
  %242 = vmatprep.subr.bf16.mxu0 0
  %243 = vmatpush2.bf16.msra.mxu0 0
  %244 = vmatprep.subr.bf16.mxu0 0
  %245 = vmatpush2.bf16.msra.mxu0 0
  %246 = vmatprep.subr.bf16.mxu0 0
  %247 = vmatpush2.bf16.msra.mxu0 0
  %248 = vmatprep.mubr.bf16.mxu0 0
  %249 = vmatmul.mubr.bf16.gmra.mxu0 %v214
  %v250 = vpop.f32.mrf.mxu0
  %v251 = vadd.f32 %v200, %v250
  %v252 = vpop.f32.mrf.mxu0
  %v253 = vpop.f32.mrf.mxu0
  %v254 = vadd.f32 %v205, %v253
  %v255 = vpop.f32.mrf.mxu0
  %256 = vdwg.mxu0
  %v257 = vxor.u32 %v251, 2147483648
  %v258 = vxor.u32 %v254, 2147483648
  %v259 = vmul.f32 %v257, 1.442695
  %v260 = vpow.pop %v259
  %v261 = vmul.f32 %v258, 1.442695
  %v262 = vpow.pop %v261
  %v263 = vadd.f32 %v260, 1.0
  %v264 = vadd.f32 %v262, 1.0
  %v265 = vrcp.pop %v263
  %v266 = vmul.f32 1.0, %v265
  %v267 = vrcp.pop %v264
  %v268 = vmul.f32 1.0, %v267
  %v269 = vld [vmem:[%s2 + $0x10] sm:$0xf]
  %v270 = vld [vmem:[%s2 + $0x14] sm:$0xf]
  %v271 = vld [vmem:[%s2 + $0x18] sm:$0xf]
  %v272 = vld [vmem:[%s2 + $0x1c] sm:$0xf]
  %v273 = vld [vmem:[%s1 + $0x70] sm:$0xff]
  %v274 = vld [vmem:[%s1 + $0x78] sm:$0xff]
  %v275 = vld [vmem:[%s1 + $0x80] sm:$0xff]
  %v276 = vld [vmem:[%s1 + $0x88] sm:$0xff]
  %278 = vset.pattern.permute.xlu0 0
  %279 = vperm.xlu0 %278, %v273
  %v280 = vpop.permute.xlu0 %279
  %283 = vset.pattern.permute.xlu0 0
  %284 = vperm.xlu0 %283, %v274
  %v285 = vpop.permute.xlu0 %284
  %288 = vset.pattern.permute.xlu0 0
  %289 = vperm.xlu0 %288, %v275
  %v290 = vpop.permute.xlu0 %289
  %293 = vset.pattern.permute.xlu0 0
  %294 = vperm.xlu0 %293, %v276
  %v295 = vpop.permute.xlu0 %294
  %v301 = vunpack.c.l.b16 %v269
  %v302 = vunpack.c.l.b16 %v270
  %v303 = vunpack.c.l.b16 %v271
  %v304 = vunpack.c.l.b16 %v272
  %v305 = vpack.c.b16 %v302, %v301
  %v306 = vpack.c.b16 %v304, %v303
  %v310 = vunpack.c.l.b16 %v17
  %v311 = vunpack.c.l.b16 %v18
  %v312 = vunpack.c.l.b16 %v19
  %v313 = vpack.c.b16 %v311, %v310
  %v314 = vpack.c.b16 %v312, %v312
  %v317 = vsel %vm89, %v305, 0
  %v320 = vsel %vm89, %v306, 0
  %v323 = vand.u32 %v314, %v95
  %325 = vmatprep.subr.bf16.mxu0 0
  %326 = vmatpush1.bf16.msra.mxu0 0
  %327 = vmatprep.subr.bf16.mxu0 0
  %328 = vmatpush1.bf16.msra.mxu0 0
  %329 = vmatprep.subr.bf16.mxu0 0
  %330 = vmatpush1.bf16.msra.mxu0 0
  %331 = vmatprep.subr.bf16.mxu0 0
  %332 = vmatpush1.bf16.msra.mxu0 0
  %333 = vmatprep.subr.bf16.mxu0 0
  %334 = vmatpush1.bf16.msra.mxu0 0
  %335 = vmatprep.subr.bf16.mxu0 0
  %336 = vmatpush1.bf16.msra.mxu0 0
  %337 = vmatprep.subr.bf16.mxu0 0
  %338 = vmatpush1.bf16.msra.mxu0 %v323
  %339 = vmatprep.subr.bf16.mxu0 0
  %340 = vmatpush1.bf16.msra.mxu0 %v313
  %341 = vmatprep.subr.bf16.mxu0 0
  %342 = vmatpush2.bf16.msra.mxu0 0
  %343 = vmatprep.subr.bf16.mxu0 0
  %344 = vmatpush2.bf16.msra.mxu0 0
  %345 = vmatprep.subr.bf16.mxu0 0
  %346 = vmatpush2.bf16.msra.mxu0 0
  %347 = vmatprep.subr.bf16.mxu0 0
  %348 = vmatpush2.bf16.msra.mxu0 0
  %349 = vmatprep.subr.bf16.mxu0 0
  %350 = vmatpush2.bf16.msra.mxu0 0
  %351 = vmatprep.subr.bf16.mxu0 0
  %352 = vmatpush2.bf16.msra.mxu0 0
  %353 = vmatprep.subr.bf16.mxu0 0
  %354 = vmatpush2.bf16.msra.mxu0 0
  %355 = vmatprep.subr.bf16.mxu0 0
  %356 = vmatpush2.bf16.msra.mxu0 0
  %357 = vmatprep.mubr.bf16.mxu0 0
  %358 = vmatmul.mubr.bf16.gmra.mxu0 %v317
  %v359 = vpop.f32.mrf.mxu0
  %v360 = vadd.f32 %v280, %v359
  %v361 = vpop.f32.mrf.mxu0
  %v362 = vpop.f32.mrf.mxu0
  %v363 = vadd.f32 %v285, %v362
  %v364 = vpop.f32.mrf.mxu0
  %365 = vmatprep.mubr.bf16.mxu0 0
  %366 = vmatmul.mubr.bf16.gmra.mxu0 %v320
  %v367 = vpop.f32.mrf.mxu0
  %v368 = vadd.f32 %v290, %v367
  %v369 = vpop.f32.mrf.mxu0
  %v370 = vpop.f32.mrf.mxu0
  %v371 = vadd.f32 %v295, %v370
  %v372 = vpop.f32.mrf.mxu0
  %373 = vdwg.mxu0
  %vm374 = vcmp.ge.s32.totalorder %v141, 0
  %vm375 = vcmp.lt.s32.totalorder %v141, 32
  %vm376 = vmand %vm374, %vm375
  %378 = vset.pattern.permute.xlu0 0
  %379 = vperm.xlu0 %378, %v266
  %v380 = vpop.permute.xlu0 %379
  %383 = vset.pattern.permute.xlu0 0
  %384 = vperm.xlu0 %383, %v268
  %v385 = vpop.permute.xlu0 %384
  %v387 = vsel %vm376, %v380, 0.0
  %v388 = vsel %vm376, %v385, 0.0
  %vm389 = vcmp.ge.s32.totalorder %v141, 32
  %vm390 = vcmp.lt.s32.totalorder %v141, 64
  %vm391 = vmand %vm389, %vm390
  %392 = vset.pattern.permute.xlu0 1
  %393 = vperm.xlu0 %392, %v266
  %v394 = vpop.permute.xlu0 %393
  %396 = vset.pattern.permute.xlu0 1
  %397 = vperm.xlu0 %396, %v268
  %v398 = vpop.permute.xlu0 %397
  %v400 = vsel %vm391, %v394, %v387
  %v401 = vsel %vm391, %v398, %v388
  %v402 = vmul.f32 %v400, %v360
  %v403 = vmul.f32 %v401, %v363
  %v404 = vadd.f32 %v402, %v368
  %v405 = vadd.f32 %v403, %v371
  %v406 = vld [vmem:[%s2 + $0x20] sm:$0xf]
  %v407 = vld [vmem:[%s2 + $0x24] sm:$0xf]
  %v408 = vld [vmem:[%s1 + $0xb0] sm:$0xff]
  %v409 = vld [vmem:[%s1 + $0xb8] sm:$0xff]
  %v410 = vld [vmem:[%s1 + $0x90] sm:$0xff]
  %v411 = vld [vmem:[%s1 + $0x98] sm:$0xff]
  %v412 = vld [vmem:[%s1 + $0xa0] sm:$0xff]
  %v413 = vld [vmem:[%s1 + $0xa8] sm:$0xff]
  %415 = vset.pattern.permute.xlu0 0
  %416 = vperm.xlu0 %415, %v410
  %v417 = vpop.permute.xlu0 %416
  %420 = vset.pattern.permute.xlu0 0
  %421 = vperm.xlu0 %420, %v411
  %v422 = vpop.permute.xlu0 %421
  %v424 = vmul.f32 %v404, %v417
  %v425 = vmul.f32 %v405, %v422
  %427 = vset.pattern.permute.xlu0 0
  %428 = vperm.xlu0 %427, %v412
  %v429 = vpop.permute.xlu0 %428
  %432 = vset.pattern.permute.xlu0 0
  %433 = vperm.xlu0 %432, %v413
  %v434 = vpop.permute.xlu0 %433
  %v436 = vadd.f32 %v424, %v429
  %v437 = vadd.f32 %v425, %v434
  %v438 = vmax.f32 %v436, 0.0
  %v439 = vmax.f32 %v437, 0.0
  %v440 = vpack.c.bf16 %v439, %v438
  %442 = vset.pattern.permute.xlu0 0
  %443 = vperm.xlu0 %442, %v408
  %v444 = vpop.permute.xlu0 %443
  %447 = vset.pattern.permute.xlu0 0
  %448 = vperm.xlu0 %447, %v409
  %v449 = vpop.permute.xlu0 %448
  %v453 = vunpack.c.l.b16 %v406
  %v454 = vunpack.c.l.b16 %v407
  %v455 = vpack.c.b16 %v454, %v453
  %v457 = vsel %vm212, %v455, 0
  %459 = vmatprep.subr.bf16.mxu0 0
  %460 = vmatpush1.bf16.msra.mxu0 0
  %461 = vmatprep.subr.bf16.mxu0 0
  %462 = vmatpush1.bf16.msra.mxu0 0
  %463 = vmatprep.subr.bf16.mxu0 0
  %464 = vmatpush1.bf16.msra.mxu0 0
  %465 = vmatprep.subr.bf16.mxu0 0
  %466 = vmatpush1.bf16.msra.mxu0 0
  %467 = vmatprep.subr.bf16.mxu0 0
  %468 = vmatpush1.bf16.msra.mxu0 0
  %469 = vmatprep.subr.bf16.mxu0 0
  %470 = vmatpush1.bf16.msra.mxu0 0
  %471 = vmatprep.subr.bf16.mxu0 0
  %472 = vmatpush1.bf16.msra.mxu0 0
  %473 = vmatprep.subr.bf16.mxu0 0
  %474 = vmatpush1.bf16.msra.mxu0 %v440
  %475 = vmatprep.subr.bf16.mxu0 0
  %476 = vmatpush2.bf16.msra.mxu0 0
  %477 = vmatprep.subr.bf16.mxu0 0
  %478 = vmatpush2.bf16.msra.mxu0 0
  %479 = vmatprep.subr.bf16.mxu0 0
  %480 = vmatpush2.bf16.msra.mxu0 0
  %481 = vmatprep.subr.bf16.mxu0 0
  %482 = vmatpush2.bf16.msra.mxu0 0
  %483 = vmatprep.subr.bf16.mxu0 0
  %484 = vmatpush2.bf16.msra.mxu0 0
  %485 = vmatprep.subr.bf16.mxu0 0
  %486 = vmatpush2.bf16.msra.mxu0 0
  %487 = vmatprep.subr.bf16.mxu0 0
  %488 = vmatpush2.bf16.msra.mxu0 0
  %489 = vmatprep.subr.bf16.mxu0 0
  %490 = vmatpush2.bf16.msra.mxu0 0
  %491 = vmatprep.mubr.bf16.mxu0 0
  %492 = vmatmul.mubr.bf16.gmra.mxu0 %v457
  %v493 = vpop.f32.mrf.mxu0
  %v494 = vadd.f32 %v444, %v493
  %v495 = vpop.f32.mrf.mxu0
  %v496 = vpop.f32.mrf.mxu0
  %v497 = vadd.f32 %v449, %v496
  %v498 = vpop.f32.mrf.mxu0
  %499 = vdwg.mxu0
  %v500 = vpack.c.bf16 %v497, %v494
  %v502 = vunpack.c.l.b16 %v500
  %v503 = vunpack.c.h.b16 %v500
  %v504 = vpack.c.b16 %v502, %v502
  %v505 = vpack.c.b16 %v503, %v503
  %vm508 = vcmask 519168
  %509 = vst.msk [vmem:[%s3] sm:$0xf] %vm508, %v504
  %510 = vst.msk [vmem:[%s3 + $0x4] sm:$0xf] %vm508, %v505
  %v511 = vld [vmem:[%s1 + $0xc0] sm:$0xff]
  %v512 = vld [vmem:[%s1 + $0xc8] sm:$0xff]
  %514 = vset.pattern.permute.xlu0 0
  %515 = vperm.xlu0 %514, %v511
  %v516 = vpop.permute.xlu0 %515
  %519 = vset.pattern.permute.xlu0 0
  %520 = vperm.xlu0 %519, %v512
  %v521 = vpop.permute.xlu0 %520
  %v523 = vmul.f32 %v494, %v516
  %v524 = vmul.f32 %v497, %v521
  %v525 = vld [vmem:[%s1 + $0xd0] sm:$0xff]
  %v526 = vld [vmem:[%s1 + $0xd8] sm:$0xff]
  %528 = vset.pattern.permute.xlu0 0
  %529 = vperm.xlu0 %528, %v525
  %v530 = vpop.permute.xlu0 %529
  %533 = vset.pattern.permute.xlu0 0
  %534 = vperm.xlu0 %533, %v526
  %v535 = vpop.permute.xlu0 %534
  %v537 = vadd.f32 %v523, %v530
  %v538 = vadd.f32 %v524, %v535
  %v539 = vmax.f32 %v537, 0.0
  %v540 = vmax.f32 %v538, 0.0
  %v541 = vld [vmem:[%s1 + $0xe0] sm:$0xff]
  %v542 = vld [vmem:[%s1 + $0xe8] sm:$0xff]
  %544 = vset.pattern.permute.xlu0 0
  %545 = vperm.xlu0 %544, %v541
  %v546 = vpop.permute.xlu0 %545
  %549 = vset.pattern.permute.xlu0 0
  %550 = vperm.xlu0 %549, %v542
  %v551 = vpop.permute.xlu0 %550
  %v553 = vmul.f32 %v539, %v546
  %v554 = vmul.f32 %v540, %v551
  %vm555 = vcmask 523264
  %v556 = vsel %vm555, %v553, 0.0
  %v557 = vsel %vm555, %v554, 0.0
  %v558 = vadd.f32 %v556, %v557
  %v559 = vrot.slane %v558, 4
  %v560 = vadd.f32 %v558, %v559
  %v561 = vrot.slane %v560, 2
  %v562 = vadd.f32 %v560, %v561
  %v563 = vrot.slane %v562, 1
  %v564 = vadd.f32 %v562, %v563
  %v565 = vld [vmem:[%s1 + $0xf0] sm:$0x1]
  %567 = vset.pattern.permute.xlu0 0
  %568 = vperm.xlu0 %567, %v565
  %v569 = vpop.permute.xlu0 %568
  %v571 = vadd.f32 %v564, %v569
  %v572 = vxor.u32 %v571, 2147483648
  %v573 = vmul.f32 %v572, 1.442695
  %v574 = vpow.pop %v573
  %v575 = vadd.f32 %v574, 1.0
  %v576 = vrcp.pop %v575
  %v577 = vmul.f32 1.0, %v576
  %vm578 = vcmask 516096
  %579 = vst.msk [vmem:[%s4] sm:$0x1] %vm578, %v577
  // Predicated region
  $region14: #{forward.11} parent=0 // pred_check
    _
  $region15: #{forward.11} parent=0 // pred_check_branch
    %581 = sbr.rel (0) target = $region17
  $region16: #{forward.11} parent=0 // pred_region
    _
  $region17: #{forward.11} parent=0 // pred_fallthru
    _
  // Predicated region
  $region18: #{forward.11} parent=0 // pred_check
    _
  $region19: #{forward.11} parent=0 // pred_check_branch
    %583 = sbr.rel (0) target = $region21
  $region20: #{forward.11} parent=0 // pred_region
    _
  $region21: #{forward.11} parent=0 // pred_fallthru
    _
  // Predicated region
  $region22: #{forward.11} parent=0 // pred_check
    _
  $region23: #{forward.11} parent=0 // pred_check_branch
    %585 = sbr.rel (0) target = $region25
  $region24: #{forward.11} parent=0 // pred_region
    _
  $region25: #{forward.11} parent=0 // pred_fallthru
    _
  // Predicated region
  $region26: #{forward.11} parent=0 // pred_check
    _
  $region27: #{forward.11} parent=0 // pred_check_branch
    %587 = sbr.rel (0) target = $region29
  $region28: #{forward.11} parent=0 // pred_region
    _
  $region29: #{forward.11} parent=0 // pred_fallthru
    _

// kernel: forward.12
$region0: #{forward.12}
  #allocation0 [shape = 'u32[]', space=smem, size = 0x4, offset = 0x4, fixed_abs, tag = 'smem constant byte address 0x4 - core index']
  #allocation1 [shape = 'u32[144,128]{1,0:T(1,128)}', space=vmem, size = 0x12000, scoped, tag = 'internal scratch']
  %s0 = inlined_call_operand.vmem [shape: bf16[17,32], index: 0, kind: input, shape index: {}]
  %s1 = inlined_call_operand.vmem [shape: f32[248,1], index: 1, kind: input, shape index: {}]
  %s2 = inlined_call_operand.vmem [shape: bf16[80,128], index: 2, kind: input, shape index: {}]
  %s3 = inlined_call_operand.vmem [shape: bf16[16,32], index: 3, kind: output, shape index: {0}]
  %s4 = inlined_call_operand.vmem [shape: f32[1,32], index: 4, kind: output, shape index: {1}]
  %5 = xla_tuple %s3, %s4
  %s6 = sld [smem:[#allocation0]]
  $region30: #{forward.12} parent=0
    _
  %s8 = ssub.s32 1, %s6
  %s9 = scalar_select 0, %s8, %s6
  // Predicated region
  $region2: #{forward.12} parent=0 // pred_check
    _
  $region3: #{forward.12} parent=0 // pred_check_branch
    %11 = sbr.rel (0) target = $region5
  $region4: #{forward.12} parent=0 // pred_region
    _
  $region5: #{forward.12} parent=0 // pred_fallthru
    _
  // Predicated region
  $region6: #{forward.12} parent=0 // pred_check
    _
  $region7: #{forward.12} parent=0 // pred_check_branch
    %13 = sbr.rel (0) target = $region9
  $region8: #{forward.12} parent=0 // pred_region
    _
  $region9: #{forward.12} parent=0 // pred_fallthru
    _
  // Predicated region
  $region10: #{forward.12} parent=0 // pred_check
    _
  $region11: #{forward.12} parent=0 // pred_check_branch
    %15 = sbr.rel (0) target = $region13
  $region12: #{forward.12} parent=0 // pred_region
    _
  $region13: #{forward.12} parent=0 // pred_fallthru
    _
  %v17 = vld [vmem:[%s0] sm:$0xf]
  %v18 = vld [vmem:[%s0 + $0x4] sm:$0xf]
  %v19 = vld [vmem:[%s0 + $0x8] sm:$0x1]
  %v20 = vld [vmem:[%s2] sm:$0xf]
  %v21 = vld [vmem:[%s2 + $0x4] sm:$0xf]
  %v22 = vld [vmem:[%s1 + $0x30] sm:$0xff]
  %v23 = vld [vmem:[%s1 + $0x38] sm:$0xff]
  %v24 = vld [vmem:[%s1] sm:$0xff]
  %v25 = vld [vmem:[%s1 + $0x8] sm:$0xff]
  %v26 = vld [vmem:[%s1 + $0x10] sm:$0x1]
  %v27 = vld [vmem:[%s1 + $0x18] sm:$0xff]
  %v28 = vld [vmem:[%s1 + $0x20] sm:$0xff]
  %v29 = vld [vmem:[%s1 + $0x28] sm:$0x1]
  %v30 = vunpack.c.l.bf16 %v17
  %v31 = vunpack.c.l.bf16 %v18
  %v32 = vunpack.c.l.bf16 %v19
  %34 = vset.pattern.permute.xlu0 0
  %35 = vperm.xlu0 %34, %v24
  %v36 = vpop.permute.xlu0 %35
  %39 = vset.pattern.permute.xlu0 0
  %40 = vperm.xlu0 %39, %v25
  %v41 = vpop.permute.xlu0 %40
  %44 = vset.pattern.permute.xlu0 0
  %45 = vperm.xlu0 %44, %v26
  %v46 = vpop.permute.xlu0 %45
  %v48 = vmul.f32 %v30, %v36
  %v49 = vmul.f32 %v31, %v41
  %v50 = vmul.f32 %v32, %v46
  %52 = vset.pattern.permute.xlu0 0
  %53 = vperm.xlu0 %52, %v27
  %v54 = vpop.permute.xlu0 %53
  %57 = vset.pattern.permute.xlu0 0
  %58 = vperm.xlu0 %57, %v28
  %v59 = vpop.permute.xlu0 %58
  %62 = vset.pattern.permute.xlu0 0
  %63 = vperm.xlu0 %62, %v29
  %v64 = vpop.permute.xlu0 %63
  %v66 = vadd.f32 %v48, %v54
  %v67 = vadd.f32 %v49, %v59
  %v68 = vadd.f32 %v50, %v64
  %v69 = vmax.f32 %v66, 0.0
  %v70 = vmax.f32 %v67, 0.0
  %v71 = vmax.f32 %v68, 0.0
  %v72 = vpack.c.bf16 %v70, %v69
  %v73 = vpack.c.bf16 %v71, %v71
  %75 = vset.pattern.permute.xlu0 0
  %76 = vperm.xlu0 %75, %v22
  %v77 = vpop.permute.xlu0 %76
  %80 = vset.pattern.permute.xlu0 0
  %81 = vperm.xlu0 %80, %v23
  %v82 = vpop.permute.xlu0 %81
  %v86 = vunpack.c.l.b16 %v20
  %v87 = vunpack.c.l.b16 %v21
  %v88 = vpack.c.b16 %v87, %v86
  %vm89 = vcmask 138240
  %v91 = vsel %vm89, %v88, 0
  %vm93 = vcmask 1040384
  %v94 = vsel 0, 4294967295, 65535
  %v95 = vsel %vm93, %v94, 0
  %v97 = vand.u32 %v73, %v95
  %99 = vmatprep.subr.bf16.mxu0 0
  %100 = vmatpush1.bf16.msra.mxu0 0
  %101 = vmatprep.subr.bf16.mxu0 0
  %102 = vmatpush1.bf16.msra.mxu0 0
  %103 = vmatprep.subr.bf16.mxu0 0
  %104 = vmatpush1.bf16.msra.mxu0 0
  %105 = vmatprep.subr.bf16.mxu0 0
  %106 = vmatpush1.bf16.msra.mxu0 0
  %107 = vmatprep.subr.bf16.mxu0 0
  %108 = vmatpush1.bf16.msra.mxu0 0
  %109 = vmatprep.subr.bf16.mxu0 0
  %110 = vmatpush1.bf16.msra.mxu0 0
  %111 = vmatprep.subr.bf16.mxu0 0
  %112 = vmatpush1.bf16.msra.mxu0 %v97
  %113 = vmatprep.subr.bf16.mxu0 0
  %114 = vmatpush1.bf16.msra.mxu0 %v72
  %115 = vmatprep.subr.bf16.mxu0 0
  %116 = vmatpush2.bf16.msra.mxu0 0
  %117 = vmatprep.subr.bf16.mxu0 0
  %118 = vmatpush2.bf16.msra.mxu0 0
  %119 = vmatprep.subr.bf16.mxu0 0
  %120 = vmatpush2.bf16.msra.mxu0 0
  %121 = vmatprep.subr.bf16.mxu0 0
  %122 = vmatpush2.bf16.msra.mxu0 0
  %123 = vmatprep.subr.bf16.mxu0 0
  %124 = vmatpush2.bf16.msra.mxu0 0
  %125 = vmatprep.subr.bf16.mxu0 0
  %126 = vmatpush2.bf16.msra.mxu0 0
  %127 = vmatprep.subr.bf16.mxu0 0
  %128 = vmatpush2.bf16.msra.mxu0 0
  %129 = vmatprep.subr.bf16.mxu0 0
  %130 = vmatpush2.bf16.msra.mxu0 0
  %131 = vmatprep.mubr.bf16.mxu0 0
  %132 = vmatmul.mubr.bf16.gmra.mxu0 %v91
  %v133 = vpop.f32.mrf.mxu0
  %v134 = vadd.f32 %v77, %v133
  %v135 = vpop.f32.mrf.mxu0
  %v136 = vpop.f32.mrf.mxu0
  %v137 = vadd.f32 %v82, %v136
  %v138 = vpop.f32.mrf.mxu0
  %139 = vdwg.mxu0
  %v140 = vlaneseq
  %v141 = vand.u32 %v140, 127
  %vm142 = vcmask 130048
  %v143 = vsel %vm142, %v134, -inf
  %144 = vmax.xlane.f32.xlu0 %v143
  %v145 = vpop.xlane.xlu0 %144
  %v146 = vsel %vm142, %v137, -inf
  %147 = vmax.xlane.f32.xlu0 %v146
  %v148 = vpop.xlane.xlu0 %147
  %vm149 = vcmp.eq.s32.totalorder %v141, 0
  %v150 = vsel %vm149, %v145, 0.0
  %v151 = vsel %vm149, %v148, 0.0
  %vm152 = vcmask 261248
  %v153 = vsel %vm152, %v134, -inf
  %154 = vmax.xlane.f32.xlu0 %v153
  %v155 = vpop.xlane.xlu0 %154
  %v156 = vsel %vm152, %v137, -inf
  %157 = vmax.xlane.f32.xlu0 %v156
  %v158 = vpop.xlane.xlu0 %157
  %vm159 = vcmp.eq.s32.totalorder %v141, 1
  %v160 = vsel %vm159, %v155, %v150
  %v161 = vsel %vm159, %v158, %v151
  %v162 = vld [vmem:[%s2 + $0x8] sm:$0xf]
  %v163 = vld [vmem:[%s2 + $0xc] sm:$0xf]
  %v164 = vld [vmem:[%s1 + $0x60] sm:$0xff]
  %v165 = vld [vmem:[%s1 + $0x68] sm:$0xff]
  %v166 = vld [vmem:[%s1 + $0x40] sm:$0xff]
  %v167 = vld [vmem:[%s1 + $0x48] sm:$0xff]
  %v168 = vld [vmem:[%s1 + $0x50] sm:$0xff]
  %v169 = vld [vmem:[%s1 + $0x58] sm:$0xff]
  %171 = vset.pattern.permute.xlu0 0
  %172 = vperm.xlu0 %171, %v166
  %v173 = vpop.permute.xlu0 %172
  %176 = vset.pattern.permute.xlu0 0
  %177 = vperm.xlu0 %176, %v167
  %v178 = vpop.permute.xlu0 %177
  %v180 = vmul.f32 %v160, %v173
  %v181 = vmul.f32 %v161, %v178
  %183 = vset.pattern.permute.xlu0 0
  %184 = vperm.xlu0 %183, %v168
  %v185 = vpop.permute.xlu0 %184
  %188 = vset.pattern.permute.xlu0 0
  %189 = vperm.xlu0 %188, %v169
  %v190 = vpop.permute.xlu0 %189
  %v192 = vadd.f32 %v180, %v185
  %v193 = vadd.f32 %v181, %v190
  %v194 = vmax.f32 %v192, 0.0
  %v195 = vmax.f32 %v193, 0.0
  %v196 = vpack.c.bf16 %v195, %v194
  %198 = vset.pattern.permute.xlu0 0
  %199 = vperm.xlu0 %198, %v164
  %v200 = vpop.permute.xlu0 %199
  %203 = vset.pattern.permute.xlu0 0
  %204 = vperm.xlu0 %203, %v165
  %v205 = vpop.permute.xlu0 %204
  %v209 = vunpack.c.l.b16 %v162
  %v210 = vunpack.c.l.b16 %v163
  %v211 = vpack.c.b16 %v210, %v209
  %v213 = vsel %vm142, %v211, 0
  %215 = vmatprep.subr.bf16.mxu0 0
  %216 = vmatpush1.bf16.msra.mxu0 0
  %217 = vmatprep.subr.bf16.mxu0 0
  %218 = vmatpush1.bf16.msra.mxu0 0
  %219 = vmatprep.subr.bf16.mxu0 0
  %220 = vmatpush1.bf16.msra.mxu0 0
  %221 = vmatprep.subr.bf16.mxu0 0
  %222 = vmatpush1.bf16.msra.mxu0 0
  %223 = vmatprep.subr.bf16.mxu0 0
  %224 = vmatpush1.bf16.msra.mxu0 0
  %225 = vmatprep.subr.bf16.mxu0 0
  %226 = vmatpush1.bf16.msra.mxu0 0
  %227 = vmatprep.subr.bf16.mxu0 0
  %228 = vmatpush1.bf16.msra.mxu0 0
  %229 = vmatprep.subr.bf16.mxu0 0
  %230 = vmatpush1.bf16.msra.mxu0 %v196
  %231 = vmatprep.subr.bf16.mxu0 0
  %232 = vmatpush2.bf16.msra.mxu0 0
  %233 = vmatprep.subr.bf16.mxu0 0
  %234 = vmatpush2.bf16.msra.mxu0 0
  %235 = vmatprep.subr.bf16.mxu0 0
  %236 = vmatpush2.bf16.msra.mxu0 0
  %237 = vmatprep.subr.bf16.mxu0 0
  %238 = vmatpush2.bf16.msra.mxu0 0
  %239 = vmatprep.subr.bf16.mxu0 0
  %240 = vmatpush2.bf16.msra.mxu0 0
  %241 = vmatprep.subr.bf16.mxu0 0
  %242 = vmatpush2.bf16.msra.mxu0 0
  %243 = vmatprep.subr.bf16.mxu0 0
  %244 = vmatpush2.bf16.msra.mxu0 0
  %245 = vmatprep.subr.bf16.mxu0 0
  %246 = vmatpush2.bf16.msra.mxu0 0
  %247 = vmatprep.mubr.bf16.mxu0 0
  %248 = vmatmul.mubr.bf16.gmra.mxu0 %v213
  %v249 = vpop.f32.mrf.mxu0
  %v250 = vadd.f32 %v200, %v249
  %v251 = vpop.f32.mrf.mxu0
  %v252 = vpop.f32.mrf.mxu0
  %v253 = vadd.f32 %v205, %v252
  %v254 = vpop.f32.mrf.mxu0
  %255 = vdwg.mxu0
  %v256 = vxor.u32 %v250, 2147483648
  %v257 = vxor.u32 %v253, 2147483648
  %v258 = vmul.f32 %v256, 1.442695
  %v259 = vpow.pop %v258
  %v260 = vmul.f32 %v257, 1.442695
  %v261 = vpow.pop %v260
  %v262 = vadd.f32 %v259, 1.0
  %v263 = vadd.f32 %v261, 1.0
  %v264 = vrcp.pop %v262
  %v265 = vmul.f32 1.0, %v264
  %v266 = vrcp.pop %v263
  %v267 = vmul.f32 1.0, %v266
  %v268 = vld [vmem:[%s2 + $0x10] sm:$0xf]
  %v269 = vld [vmem:[%s2 + $0x14] sm:$0xf]
  %v270 = vld [vmem:[%s2 + $0x18] sm:$0xf]
  %v271 = vld [vmem:[%s2 + $0x1c] sm:$0xf]
  %v272 = vld [vmem:[%s1 + $0x70] sm:$0xff]
  %v273 = vld [vmem:[%s1 + $0x78] sm:$0xff]
  %v274 = vld [vmem:[%s1 + $0x80] sm:$0xff]
  %v275 = vld [vmem:[%s1 + $0x88] sm:$0xff]
  %277 = vset.pattern.permute.xlu0 0
  %278 = vperm.xlu0 %277, %v272
  %v279 = vpop.permute.xlu0 %278
  %282 = vset.pattern.permute.xlu0 0
  %283 = vperm.xlu0 %282, %v273
  %v284 = vpop.permute.xlu0 %283
  %287 = vset.pattern.permute.xlu0 0
  %288 = vperm.xlu0 %287, %v274
  %v289 = vpop.permute.xlu0 %288
  %292 = vset.pattern.permute.xlu0 0
  %293 = vperm.xlu0 %292, %v275
  %v294 = vpop.permute.xlu0 %293
  %v300 = vunpack.c.l.b16 %v268
  %v301 = vunpack.c.l.b16 %v269
  %v302 = vunpack.c.l.b16 %v270
  %v303 = vunpack.c.l.b16 %v271
  %v304 = vpack.c.b16 %v301, %v300
  %v305 = vpack.c.b16 %v303, %v302
  %v309 = vunpack.c.l.b16 %v17
  %v310 = vunpack.c.l.b16 %v18
  %v311 = vunpack.c.l.b16 %v19
  %v312 = vpack.c.b16 %v310, %v309
  %v313 = vpack.c.b16 %v311, %v311
  %v316 = vsel %vm89, %v304, 0
  %v319 = vsel %vm89, %v305, 0
  %v322 = vand.u32 %v313, %v95
  %324 = vmatprep.subr.bf16.mxu0 0
  %325 = vmatpush1.bf16.msra.mxu0 0
  %326 = vmatprep.subr.bf16.mxu0 0
  %327 = vmatpush1.bf16.msra.mxu0 0
  %328 = vmatprep.subr.bf16.mxu0 0
  %329 = vmatpush1.bf16.msra.mxu0 0
  %330 = vmatprep.subr.bf16.mxu0 0
  %331 = vmatpush1.bf16.msra.mxu0 0
  %332 = vmatprep.subr.bf16.mxu0 0
  %333 = vmatpush1.bf16.msra.mxu0 0
  %334 = vmatprep.subr.bf16.mxu0 0
  %335 = vmatpush1.bf16.msra.mxu0 0
  %336 = vmatprep.subr.bf16.mxu0 0
  %337 = vmatpush1.bf16.msra.mxu0 %v322
  %338 = vmatprep.subr.bf16.mxu0 0
  %339 = vmatpush1.bf16.msra.mxu0 %v312
  %340 = vmatprep.subr.bf16.mxu0 0
  %341 = vmatpush2.bf16.msra.mxu0 0
  %342 = vmatprep.subr.bf16.mxu0 0
  %343 = vmatpush2.bf16.msra.mxu0 0
  %344 = vmatprep.subr.bf16.mxu0 0
  %345 = vmatpush2.bf16.msra.mxu0 0
  %346 = vmatprep.subr.bf16.mxu0 0
  %347 = vmatpush2.bf16.msra.mxu0 0
  %348 = vmatprep.subr.bf16.mxu0 0
  %349 = vmatpush2.bf16.msra.mxu0 0
  %350 = vmatprep.subr.bf16.mxu0 0
  %351 = vmatpush2.bf16.msra.mxu0 0
  %352 = vmatprep.subr.bf16.mxu0 0
  %353 = vmatpush2.bf16.msra.mxu0 0
  %354 = vmatprep.subr.bf16.mxu0 0
  %355 = vmatpush2.bf16.msra.mxu0 0
  %356 = vmatprep.mubr.bf16.mxu0 0
  %357 = vmatmul.mubr.bf16.gmra.mxu0 %v316
  %v358 = vpop.f32.mrf.mxu0
  %v359 = vadd.f32 %v279, %v358
  %v360 = vpop.f32.mrf.mxu0
  %v361 = vpop.f32.mrf.mxu0
  %v362 = vadd.f32 %v284, %v361
  %v363 = vpop.f32.mrf.mxu0
  %364 = vmatprep.mubr.bf16.mxu0 0
  %365 = vmatmul.mubr.bf16.gmra.mxu0 %v319
  %v366 = vpop.f32.mrf.mxu0
  %v367 = vadd.f32 %v289, %v366
  %v368 = vpop.f32.mrf.mxu0
  %v369 = vpop.f32.mrf.mxu0
  %v370 = vadd.f32 %v294, %v369
  %v371 = vpop.f32.mrf.mxu0
  %372 = vdwg.mxu0
  %vm373 = vcmp.ge.s32.totalorder %v141, 0
  %vm374 = vcmp.lt.s32.totalorder %v141, 16
  %vm375 = vmand %vm373, %vm374
  %377 = vset.pattern.permute.xlu0 0
  %378 = vperm.xlu0 %377, %v265
  %v379 = vpop.permute.xlu0 %378
  %382 = vset.pattern.permute.xlu0 0
  %383 = vperm.xlu0 %382, %v267
  %v384 = vpop.permute.xlu0 %383
  %v386 = vsel %vm375, %v379, 0.0
  %v387 = vsel %vm375, %v384, 0.0
  %vm388 = vcmp.ge.s32.totalorder %v141, 16
  %vm389 = vcmp.lt.s32.totalorder %v141, 32
  %vm390 = vmand %vm388, %vm389
  %391 = vset.pattern.permute.xlu0 1
  %392 = vperm.xlu0 %391, %v265
  %v393 = vpop.permute.xlu0 %392
  %395 = vset.pattern.permute.xlu0 1
  %396 = vperm.xlu0 %395, %v267
  %v397 = vpop.permute.xlu0 %396
  %v399 = vsel %vm390, %v393, %v386
  %v400 = vsel %vm390, %v397, %v387
  %v401 = vmul.f32 %v399, %v359
  %v402 = vmul.f32 %v400, %v362
  %v403 = vadd.f32 %v401, %v367
  %v404 = vadd.f32 %v402, %v370
  %v405 = vld [vmem:[%s2 + $0x20] sm:$0xf]
  %v406 = vld [vmem:[%s2 + $0x24] sm:$0xf]
  %v407 = vld [vmem:[%s1 + $0xb0] sm:$0xff]
  %v408 = vld [vmem:[%s1 + $0xb8] sm:$0xff]
  %v409 = vld [vmem:[%s1 + $0x90] sm:$0xff]
  %v410 = vld [vmem:[%s1 + $0x98] sm:$0xff]
  %v411 = vld [vmem:[%s1 + $0xa0] sm:$0xff]
  %v412 = vld [vmem:[%s1 + $0xa8] sm:$0xff]
  %414 = vset.pattern.permute.xlu0 0
  %415 = vperm.xlu0 %414, %v409
  %v416 = vpop.permute.xlu0 %415
  %419 = vset.pattern.permute.xlu0 0
  %420 = vperm.xlu0 %419, %v410
  %v421 = vpop.permute.xlu0 %420
  %v423 = vmul.f32 %v403, %v416
  %v424 = vmul.f32 %v404, %v421
  %426 = vset.pattern.permute.xlu0 0
  %427 = vperm.xlu0 %426, %v411
  %v428 = vpop.permute.xlu0 %427
  %431 = vset.pattern.permute.xlu0 0
  %432 = vperm.xlu0 %431, %v412
  %v433 = vpop.permute.xlu0 %432
  %v435 = vadd.f32 %v423, %v428
  %v436 = vadd.f32 %v424, %v433
  %v437 = vmax.f32 %v435, 0.0
  %v438 = vmax.f32 %v436, 0.0
  %v439 = vpack.c.bf16 %v438, %v437
  %441 = vset.pattern.permute.xlu0 0
  %442 = vperm.xlu0 %441, %v407
  %v443 = vpop.permute.xlu0 %442
  %446 = vset.pattern.permute.xlu0 0
  %447 = vperm.xlu0 %446, %v408
  %v448 = vpop.permute.xlu0 %447
  %v452 = vunpack.c.l.b16 %v405
  %v453 = vunpack.c.l.b16 %v406
  %v454 = vpack.c.b16 %v453, %v452
  %v456 = vsel %vm142, %v454, 0
  %458 = vmatprep.subr.bf16.mxu0 0
  %459 = vmatpush1.bf16.msra.mxu0 0
  %460 = vmatprep.subr.bf16.mxu0 0
  %461 = vmatpush1.bf16.msra.mxu0 0
  %462 = vmatprep.subr.bf16.mxu0 0
  %463 = vmatpush1.bf16.msra.mxu0 0
  %464 = vmatprep.subr.bf16.mxu0 0
  %465 = vmatpush1.bf16.msra.mxu0 0
  %466 = vmatprep.subr.bf16.mxu0 0
  %467 = vmatpush1.bf16.msra.mxu0 0
  %468 = vmatprep.subr.bf16.mxu0 0
  %469 = vmatpush1.bf16.msra.mxu0 0
  %470 = vmatprep.subr.bf16.mxu0 0
  %471 = vmatpush1.bf16.msra.mxu0 0
  %472 = vmatprep.subr.bf16.mxu0 0
  %473 = vmatpush1.bf16.msra.mxu0 %v439
  %474 = vmatprep.subr.bf16.mxu0 0
  %475 = vmatpush2.bf16.msra.mxu0 0
  %476 = vmatprep.subr.bf16.mxu0 0
  %477 = vmatpush2.bf16.msra.mxu0 0
  %478 = vmatprep.subr.bf16.mxu0 0
  %479 = vmatpush2.bf16.msra.mxu0 0
  %480 = vmatprep.subr.bf16.mxu0 0
  %481 = vmatpush2.bf16.msra.mxu0 0
  %482 = vmatprep.subr.bf16.mxu0 0
  %483 = vmatpush2.bf16.msra.mxu0 0
  %484 = vmatprep.subr.bf16.mxu0 0
  %485 = vmatpush2.bf16.msra.mxu0 0
  %486 = vmatprep.subr.bf16.mxu0 0
  %487 = vmatpush2.bf16.msra.mxu0 0
  %488 = vmatprep.subr.bf16.mxu0 0
  %489 = vmatpush2.bf16.msra.mxu0 0
  %490 = vmatprep.mubr.bf16.mxu0 0
  %491 = vmatmul.mubr.bf16.gmra.mxu0 %v456
  %v492 = vpop.f32.mrf.mxu0
  %v493 = vadd.f32 %v443, %v492
  %v494 = vpop.f32.mrf.mxu0
  %v495 = vpop.f32.mrf.mxu0
  %v496 = vadd.f32 %v448, %v495
  %v497 = vpop.f32.mrf.mxu0
  %498 = vdwg.mxu0
  %v499 = vpack.c.bf16 %v496, %v493
  %v501 = vunpack.c.l.b16 %v499
  %v502 = vunpack.c.h.b16 %v499
  %v503 = vpack.c.b16 %v501, %v501
  %v504 = vpack.c.b16 %v502, %v502
  %vm507 = vcmask 257024
  %508 = vst.msk [vmem:[%s3] sm:$0xf] %vm507, %v503
  %509 = vst.msk [vmem:[%s3 + $0x4] sm:$0xf] %vm507, %v504
  %v510 = vld [vmem:[%s1 + $0xc0] sm:$0xff]
  %v511 = vld [vmem:[%s1 + $0xc8] sm:$0xff]
  %513 = vset.pattern.permute.xlu0 0
  %514 = vperm.xlu0 %513, %v510
  %v515 = vpop.permute.xlu0 %514
  %518 = vset.pattern.permute.xlu0 0
  %519 = vperm.xlu0 %518, %v511
  %v520 = vpop.permute.xlu0 %519
  %v522 = vmul.f32 %v493, %v515
  %v523 = vmul.f32 %v496, %v520
  %v524 = vld [vmem:[%s1 + $0xd0] sm:$0xff]
  %v525 = vld [vmem:[%s1 + $0xd8] sm:$0xff]
  %527 = vset.pattern.permute.xlu0 0
  %528 = vperm.xlu0 %527, %v524
  %v529 = vpop.permute.xlu0 %528
  %532 = vset.pattern.permute.xlu0 0
  %533 = vperm.xlu0 %532, %v525
  %v534 = vpop.permute.xlu0 %533
  %v536 = vadd.f32 %v522, %v529
  %v537 = vadd.f32 %v523, %v534
  %v538 = vmax.f32 %v536, 0.0
  %v539 = vmax.f32 %v537, 0.0
  %v540 = vld [vmem:[%s1 + $0xe0] sm:$0xff]
  %v541 = vld [vmem:[%s1 + $0xe8] sm:$0xff]
  %543 = vset.pattern.permute.xlu0 0
  %544 = vperm.xlu0 %543, %v540
  %v545 = vpop.permute.xlu0 %544
  %548 = vset.pattern.permute.xlu0 0
  %549 = vperm.xlu0 %548, %v541
  %v550 = vpop.permute.xlu0 %549
  %v552 = vmul.f32 %v538, %v545
  %v553 = vmul.f32 %v539, %v550
  %vm554 = vcmask 261120
  %v555 = vsel %vm554, %v552, 0.0
  %v556 = vsel %vm554, %v553, 0.0
  %v557 = vadd.f32 %v555, %v556
  %v558 = vrot.slane %v557, 4
  %v559 = vadd.f32 %v557, %v558
  %v560 = vrot.slane %v559, 2
  %v561 = vadd.f32 %v559, %v560
  %v562 = vrot.slane %v561, 1
  %v563 = vadd.f32 %v561, %v562
  %v564 = vld [vmem:[%s1 + $0xf0] sm:$0x1]
  %566 = vset.pattern.permute.xlu0 0
  %567 = vperm.xlu0 %566, %v564
  %v568 = vpop.permute.xlu0 %567
  %v570 = vadd.f32 %v563, %v568
  %v571 = vxor.u32 %v570, 2147483648
  %v572 = vmul.f32 %v571, 1.442695
  %v573 = vpow.pop %v572
  %v574 = vadd.f32 %v573, 1.0
  %v575 = vrcp.pop %v574
  %v576 = vmul.f32 1.0, %v575
  %vm577 = vcmask 253952
  %578 = vst.msk [vmem:[%s4] sm:$0x1] %vm577, %v576
  // Predicated region
  $region14: #{forward.12} parent=0 // pred_check
    _
  $region15: #{forward.12} parent=0 // pred_check_branch
    %580 = sbr.rel (0) target = $region17
  $region16: #{forward.12} parent=0 // pred_region
    _
  $region17: #{forward.12} parent=0 // pred_fallthru
    _
  // Predicated region
  $region18: #{forward.12} parent=0 // pred_check
    _
  $region19: #{forward.12} parent=0 // pred_check_branch
    %582 = sbr.rel (0) target = $region21
  $region20: #{forward.12} parent=0 // pred_region
    _
  $region21: #{forward.12} parent=0 // pred_fallthru
    _
  // Predicated region
  $region22: #{forward.12} parent=0 // pred_check
    _
  $region23: #{forward.12} parent=0 // pred_check_branch
    %584 = sbr.rel (0) target = $region25
  $region24: #{forward.12} parent=0 // pred_region
    _
  $region25: #{forward.12} parent=0 // pred_fallthru
    _
  // Predicated region
  $region26: #{forward.12} parent=0 // pred_check
    _
  $region27: #{forward.12} parent=0 // pred_check_branch
    %586 = sbr.rel (0) target = $region29
  $region28: #{forward.12} parent=0 // pred_region
    _
  $region29: #{forward.12} parent=0 // pred_fallthru
    _

// kernel: forward.14
$region0: #{forward.14}
  #allocation0 [shape = 'u32[]', space=smem, size = 0x4, offset = 0x4, fixed_abs, tag = 'smem constant byte address 0x4 - core index']
  #allocation1 [shape = 'u32[144,128]{1,0:T(1,128)}', space=vmem, size = 0x12000, scoped, tag = 'internal scratch']
  %s0 = inlined_call_operand.vmem [shape: bf16[16,16], index: 0, kind: input, shape index: {}]
  %s1 = inlined_call_operand.vmem [shape: bf16[16,32], index: 1, kind: input, shape index: {}]
  %s2 = inlined_call_operand.vmem [shape: f32[224,1], index: 2, kind: input, shape index: {}]
  %s3 = inlined_call_operand.vmem [shape: bf16[144,128], index: 3, kind: input, shape index: {}]
  %s4 = inlined_call_operand.vmem [shape: bf16[16,32], index: 4, kind: output, shape index: {}]
  %s5 = sld [smem:[#allocation0]]
  $region26: #{forward.14} parent=0
    _
  %s7 = ssub.s32 1, %s5
  %s8 = scalar_select 0, %s7, %s5
  // Predicated region
  $region2: #{forward.14} parent=0 // pred_check
    _
  $region3: #{forward.14} parent=0 // pred_check_branch
    %10 = sbr.rel (0) target = $region5
  $region4: #{forward.14} parent=0 // pred_region
    _
  $region5: #{forward.14} parent=0 // pred_fallthru
    _
  // Predicated region
  $region6: #{forward.14} parent=0 // pred_check
    _
  $region7: #{forward.14} parent=0 // pred_check_branch
    %12 = sbr.rel (0) target = $region9
  $region8: #{forward.14} parent=0 // pred_region
    _
  $region9: #{forward.14} parent=0 // pred_fallthru
    _
  // Predicated region
  $region10: #{forward.14} parent=0 // pred_check
    _
  $region11: #{forward.14} parent=0 // pred_check_branch
    %14 = sbr.rel (0) target = $region13
  $region12: #{forward.14} parent=0 // pred_region
    _
  $region13: #{forward.14} parent=0 // pred_fallthru
    _
  // Predicated region
  $region14: #{forward.14} parent=0 // pred_check
    _
  $region15: #{forward.14} parent=0 // pred_check_branch
    %16 = sbr.rel (0) target = $region17
  $region16: #{forward.14} parent=0 // pred_region
    _
  $region17: #{forward.14} parent=0 // pred_fallthru
    _
  %v18 = vld [vmem:[%s0] sm:$0xf]
  %v19 = vld [vmem:[%s0 + $0x4] sm:$0xf]
  %v20 = vld [vmem:[%s1] sm:$0xf]
  %v21 = vld [vmem:[%s1 + $0x4] sm:$0xf]
  %v22 = vld [vmem:[%s3] sm:$0xf]
  %v23 = vld [vmem:[%s3 + $0x4] sm:$0xf]
  %v24 = vld [vmem:[%s2] sm:$0xff]
  %v25 = vld [vmem:[%s2 + $0x8] sm:$0xff]
  %27 = vset.pattern.permute.xlu0 0
  %28 = vperm.xlu0 %27, %v24
  %v29 = vpop.permute.xlu0 %28
  %32 = vset.pattern.permute.xlu0 0
  %33 = vperm.xlu0 %32, %v25
  %v34 = vpop.permute.xlu0 %33
  %v38 = vunpack.c.l.b16 %v22
  %v39 = vunpack.c.l.b16 %v23
  %v40 = vpack.c.b16 %v39, %v38
  %v43 = vunpack.c.l.b16 %v18
  %v44 = vunpack.c.l.b16 %v19
  %v45 = vpack.c.b16 %v44, %v43
  %vm47 = vcmask 130048
  %v49 = vsel %vm47, %v40, 0
  %51 = vmatprep.subr.bf16.mxu0 0
  %52 = vmatpush1.bf16.msra.mxu0 0
  %53 = vmatprep.subr.bf16.mxu0 0
  %54 = vmatpush1.bf16.msra.mxu0 0
  %55 = vmatprep.subr.bf16.mxu0 0
  %56 = vmatpush1.bf16.msra.mxu0 0
  %57 = vmatprep.subr.bf16.mxu0 0
  %58 = vmatpush1.bf16.msra.mxu0 0
  %59 = vmatprep.subr.bf16.mxu0 0
  %60 = vmatpush1.bf16.msra.mxu0 0
  %61 = vmatprep.subr.bf16.mxu0 0
  %62 = vmatpush1.bf16.msra.mxu0 0
  %63 = vmatprep.subr.bf16.mxu0 0
  %64 = vmatpush1.bf16.msra.mxu0 0
  %65 = vmatprep.subr.bf16.mxu0 0
  %66 = vmatpush1.bf16.msra.mxu0 %v45
  %67 = vmatprep.subr.bf16.mxu0 0
  %68 = vmatpush2.bf16.msra.mxu0 0
  %69 = vmatprep.subr.bf16.mxu0 0
  %70 = vmatpush2.bf16.msra.mxu0 0
  %71 = vmatprep.subr.bf16.mxu0 0
  %72 = vmatpush2.bf16.msra.mxu0 0
  %73 = vmatprep.subr.bf16.mxu0 0
  %74 = vmatpush2.bf16.msra.mxu0 0
  %75 = vmatprep.subr.bf16.mxu0 0
  %76 = vmatpush2.bf16.msra.mxu0 0
  %77 = vmatprep.subr.bf16.mxu0 0
  %78 = vmatpush2.bf16.msra.mxu0 0
  %79 = vmatprep.subr.bf16.mxu0 0
  %80 = vmatpush2.bf16.msra.mxu0 0
  %81 = vmatprep.subr.bf16.mxu0 0
  %82 = vmatpush2.bf16.msra.mxu0 0
  %83 = vmatprep.mubr.bf16.mxu0 0
  %84 = vmatmul.mubr.bf16.gmra.mxu0 %v49
  %v85 = vpop.f32.mrf.mxu0
  %v86 = vadd.f32 %v29, %v85
  %v87 = vpop.f32.mrf.mxu0
  %v88 = vpop.f32.mrf.mxu0
  %v89 = vadd.f32 %v34, %v88
  %v90 = vpop.f32.mrf.mxu0
  %91 = vdwg.mxu0
  %v92 = vlaneseq
  %v93 = vand.u32 %v92, 127
  %vm94 = vcmask 64512
  %v95 = vsel %vm94, %v86, -inf
  %96 = vmax.xlane.f32.xlu0 %v95
  %v97 = vpop.xlane.xlu0 %96
  %v98 = vsel %vm94, %v89, -inf
  %99 = vmax.xlane.f32.xlu0 %v98
  %v100 = vpop.xlane.xlu0 %99
  %vm101 = vcmp.eq.s32.totalorder %v93, 0
  %v102 = vsel %vm101, %v97, 0.0
  %v103 = vsel %vm101, %v100, 0.0
  %vm104 = vcmask 130112
  %v105 = vsel %vm104, %v86, -inf
  %106 = vmax.xlane.f32.xlu0 %v105
  %v107 = vpop.xlane.xlu0 %106
  %v108 = vsel %vm104, %v89, -inf
  %109 = vmax.xlane.f32.xlu0 %v108
  %v110 = vpop.xlane.xlu0 %109
  %vm111 = vcmp.eq.s32.totalorder %v93, 1
  %v112 = vsel %vm111, %v107, %v102
  %v113 = vsel %vm111, %v110, %v103
  %v114 = vld [vmem:[%s2 + $0x10] sm:$0xff]
  %v115 = vld [vmem:[%s2 + $0x18] sm:$0xff]
  %117 = vset.pattern.permute.xlu0 0
  %118 = vperm.xlu0 %117, %v114
  %v119 = vpop.permute.xlu0 %118
  %122 = vset.pattern.permute.xlu0 0
  %123 = vperm.xlu0 %122, %v115
  %v124 = vpop.permute.xlu0 %123
  %v126 = vmul.f32 %v112, %v119
  %v127 = vmul.f32 %v113, %v124
  %v128 = vld [vmem:[%s2 + $0x20] sm:$0xff]
  %v129 = vld [vmem:[%s2 + $0x28] sm:$0xff]
  %131 = vset.pattern.permute.xlu0 0
  %132 = vperm.xlu0 %131, %v128
  %v133 = vpop.permute.xlu0 %132
  %136 = vset.pattern.permute.xlu0 0
  %137 = vperm.xlu0 %136, %v129
  %v138 = vpop.permute.xlu0 %137
  %v140 = vadd.f32 %v126, %v133
  %v141 = vadd.f32 %v127, %v138
  %v142 = vmax.f32 %v140, 0.0
  %v143 = vmax.f32 %v141, 0.0
  %v144 = vunpack.c.l.bf16 %v20
  %v145 = vunpack.c.l.bf16 %v21
  %v146 = vld [vmem:[%s2 + $0x30] sm:$0xff]
  %v147 = vld [vmem:[%s2 + $0x38] sm:$0xff]
  %149 = vset.pattern.permute.xlu0 0
  %150 = vperm.xlu0 %149, %v146
  %v151 = vpop.permute.xlu0 %150
  %154 = vset.pattern.permute.xlu0 0
  %155 = vperm.xlu0 %154, %v147
  %v156 = vpop.permute.xlu0 %155
  %v158 = vmul.f32 %v144, %v151
  %v159 = vmul.f32 %v145, %v156
  %v160 = vld [vmem:[%s2 + $0x40] sm:$0xff]
  %v161 = vld [vmem:[%s2 + $0x48] sm:$0xff]
  %163 = vset.pattern.permute.xlu0 0
  %164 = vperm.xlu0 %163, %v160
  %v165 = vpop.permute.xlu0 %164
  %168 = vset.pattern.permute.xlu0 0
  %169 = vperm.xlu0 %168, %v161
  %v170 = vpop.permute.xlu0 %169
  %v172 = vadd.f32 %v158, %v165
  %v173 = vadd.f32 %v159, %v170
  %v174 = vmax.f32 %v172, 0.0
  %v175 = vmax.f32 %v173, 0.0
  %v176 = vld [vmem:[%s3 + $0x8] sm:$0xf]
  %v177 = vld [vmem:[%s3 + $0xc] sm:$0xf]
  %v178 = vld [vmem:[%s3 + $0x10] sm:$0xf]
  %v179 = vld [vmem:[%s3 + $0x14] sm:$0xf]
  %v180 = vpack.c.bf16 %v143, %v142
  %v181 = vld [vmem:[%s2 + $0x50] sm:$0xff]
  %v182 = vld [vmem:[%s2 + $0x58] sm:$0xff]
  %184 = vset.pattern.permute.xlu0 0
  %185 = vperm.xlu0 %184, %v181
  %v186 = vpop.permute.xlu0 %185
  %189 = vset.pattern.permute.xlu0 0
  %190 = vperm.xlu0 %189, %v182
  %v191 = vpop.permute.xlu0 %190
  %v195 = vunpack.c.l.b16 %v176
  %v196 = vunpack.c.l.b16 %v177
  %v197 = vpack.c.b16 %v196, %v195
  %v199 = vsel %vm47, %v197, 0
  %201 = vmatprep.subr.bf16.mxu0 0
  %202 = vmatpush1.bf16.msra.mxu0 0
  %203 = vmatprep.subr.bf16.mxu0 0
  %204 = vmatpush1.bf16.msra.mxu0 0
  %205 = vmatprep.subr.bf16.mxu0 0
  %206 = vmatpush1.bf16.msra.mxu0 0
  %207 = vmatprep.subr.bf16.mxu0 0
  %208 = vmatpush1.bf16.msra.mxu0 0
  %209 = vmatprep.subr.bf16.mxu0 0
  %210 = vmatpush1.bf16.msra.mxu0 0
  %211 = vmatprep.subr.bf16.mxu0 0
  %212 = vmatpush1.bf16.msra.mxu0 0
  %213 = vmatprep.subr.bf16.mxu0 0
  %214 = vmatpush1.bf16.msra.mxu0 0
  %215 = vmatprep.subr.bf16.mxu0 0
  %216 = vmatpush1.bf16.msra.mxu0 %v180
  %217 = vmatprep.subr.bf16.mxu0 0
  %218 = vmatpush2.bf16.msra.mxu0 0
  %219 = vmatprep.subr.bf16.mxu0 0
  %220 = vmatpush2.bf16.msra.mxu0 0
  %221 = vmatprep.subr.bf16.mxu0 0
  %222 = vmatpush2.bf16.msra.mxu0 0
  %223 = vmatprep.subr.bf16.mxu0 0
  %224 = vmatpush2.bf16.msra.mxu0 0
  %225 = vmatprep.subr.bf16.mxu0 0
  %226 = vmatpush2.bf16.msra.mxu0 0
  %227 = vmatprep.subr.bf16.mxu0 0
  %228 = vmatpush2.bf16.msra.mxu0 0
  %229 = vmatprep.subr.bf16.mxu0 0
  %230 = vmatpush2.bf16.msra.mxu0 0
  %231 = vmatprep.subr.bf16.mxu0 0
  %232 = vmatpush2.bf16.msra.mxu0 0
  %233 = vmatprep.mubr.bf16.mxu0 0
  %234 = vmatmul.mubr.bf16.gmra.mxu0 %v199
  %v235 = vpop.f32.mrf.mxu0
  %v236 = vadd.f32 %v186, %v235
  %v237 = vpop.f32.mrf.mxu0
  %v238 = vpop.f32.mrf.mxu0
  %v239 = vadd.f32 %v191, %v238
  %v240 = vpop.f32.mrf.mxu0
  %241 = vdwg.mxu0
  %v242 = vpack.c.bf16 %v175, %v174
  %v245 = vunpack.c.l.b16 %v178
  %v246 = vunpack.c.l.b16 %v179
  %v247 = vpack.c.b16 %v246, %v245
  %v249 = vsel %vm47, %v247, 0
  %251 = vmatprep.subr.bf16.mxu0 0
  %252 = vmatpush1.bf16.msra.mxu0 0
  %253 = vmatprep.subr.bf16.mxu0 0
  %254 = vmatpush1.bf16.msra.mxu0 0
  %255 = vmatprep.subr.bf16.mxu0 0
  %256 = vmatpush1.bf16.msra.mxu0 0
  %257 = vmatprep.subr.bf16.mxu0 0
  %258 = vmatpush1.bf16.msra.mxu0 0
  %259 = vmatprep.subr.bf16.mxu0 0
  %260 = vmatpush1.bf16.msra.mxu0 0
  %261 = vmatprep.subr.bf16.mxu0 0
  %262 = vmatpush1.bf16.msra.mxu0 0
  %263 = vmatprep.subr.bf16.mxu0 0
  %264 = vmatpush1.bf16.msra.mxu0 0
  %265 = vmatprep.subr.bf16.mxu0 0
  %266 = vmatpush1.bf16.msra.mxu0 %v242
  %267 = vmatprep.subr.bf16.mxu0 0
  %268 = vmatpush2.bf16.msra.mxu0 0
  %269 = vmatprep.subr.bf16.mxu0 0
  %270 = vmatpush2.bf16.msra.mxu0 0
  %271 = vmatprep.subr.bf16.mxu0 0
  %272 = vmatpush2.bf16.msra.mxu0 0
  %273 = vmatprep.subr.bf16.mxu0 0
  %274 = vmatpush2.bf16.msra.mxu0 0
  %275 = vmatprep.subr.bf16.mxu0 0
  %276 = vmatpush2.bf16.msra.mxu0 0
  %277 = vmatprep.subr.bf16.mxu0 0
  %278 = vmatpush2.bf16.msra.mxu0 0
  %279 = vmatprep.subr.bf16.mxu0 0
  %280 = vmatpush2.bf16.msra.mxu0 0
  %281 = vmatprep.subr.bf16.mxu0 0
  %282 = vmatpush2.bf16.msra.mxu0 0
  %283 = vmatprep.mubr.bf16.mxu0 0
  %284 = vmatmul.mubr.bf16.gmra.mxu0 %v249
  %v285 = vpop.f32.mrf.mxu0
  %v286 = vadd.f32 0.0, %v285
  %v287 = vpop.f32.mrf.mxu0
  %v288 = vpop.f32.mrf.mxu0
  %v289 = vadd.f32 0.0, %v288
  %v290 = vpop.f32.mrf.mxu0
  %291 = vdwg.mxu0
  %v292 = vsel %vm47, %v286, -inf
  %293 = vmax.xlane.f32.xlu0 %v292
  %v294 = vpop.xlane.xlu0 %293
  %v295 = vsel %vm47, %v289, -inf
  %296 = vmax.xlane.f32.xlu0 %v295
  %v297 = vpop.xlane.xlu0 %296
  %v298 = vsel %vm101, %v294, 0.0
  %v299 = vsel %vm101, %v297, 0.0
  %vm300 = vcmask 261248
  %v301 = vsel %vm300, %v286, -inf
  %302 = vmax.xlane.f32.xlu0 %v301
  %v303 = vpop.xlane.xlu0 %302
  %v304 = vsel %vm300, %v289, -inf
  %305 = vmax.xlane.f32.xlu0 %v304
  %v306 = vpop.xlane.xlu0 %305
  %v307 = vsel %vm111, %v303, %v298
  %v308 = vsel %vm111, %v306, %v299
  %v309 = vadd.f32 %v236, %v307
  %v310 = vadd.f32 %v239, %v308
  %v311 = vld [vmem:[%s3 + $0x18] sm:$0xf]
  %v312 = vld [vmem:[%s3 + $0x1c] sm:$0xf]
  %v313 = vld [vmem:[%s2 + $0x80] sm:$0xff]
  %v314 = vld [vmem:[%s2 + $0x88] sm:$0xff]
  %v315 = vld [vmem:[%s2 + $0x60] sm:$0xff]
  %v316 = vld [vmem:[%s2 + $0x68] sm:$0xff]
  %v317 = vld [vmem:[%s2 + $0x70] sm:$0xff]
  %v318 = vld [vmem:[%s2 + $0x78] sm:$0xff]
  %320 = vset.pattern.permute.xlu0 0
  %321 = vperm.xlu0 %320, %v315
  %v322 = vpop.permute.xlu0 %321
  %325 = vset.pattern.permute.xlu0 0
  %326 = vperm.xlu0 %325, %v316
  %v327 = vpop.permute.xlu0 %326
  %v329 = vmul.f32 %v309, %v322
  %v330 = vmul.f32 %v310, %v327
  %332 = vset.pattern.permute.xlu0 0
  %333 = vperm.xlu0 %332, %v317
  %v334 = vpop.permute.xlu0 %333
  %337 = vset.pattern.permute.xlu0 0
  %338 = vperm.xlu0 %337, %v318
  %v339 = vpop.permute.xlu0 %338
  %v341 = vadd.f32 %v329, %v334
  %v342 = vadd.f32 %v330, %v339
  %v343 = vmax.f32 %v341, 0.0
  %v344 = vmax.f32 %v342, 0.0
  %v345 = vpack.c.bf16 %v344, %v343
  %347 = vset.pattern.permute.xlu0 0
  %348 = vperm.xlu0 %347, %v313
  %v349 = vpop.permute.xlu0 %348
  %352 = vset.pattern.permute.xlu0 0
  %353 = vperm.xlu0 %352, %v314
  %v354 = vpop.permute.xlu0 %353
  %v358 = vunpack.c.l.b16 %v311
  %v359 = vunpack.c.l.b16 %v312
  %v360 = vpack.c.b16 %v359, %v358
  %v362 = vsel %vm47, %v360, 0
  %364 = vmatprep.subr.bf16.mxu0 0
  %365 = vmatpush1.bf16.msra.mxu0 0
  %366 = vmatprep.subr.bf16.mxu0 0
  %367 = vmatpush1.bf16.msra.mxu0 0
  %368 = vmatprep.subr.bf16.mxu0 0
  %369 = vmatpush1.bf16.msra.mxu0 0
  %370 = vmatprep.subr.bf16.mxu0 0
  %371 = vmatpush1.bf16.msra.mxu0 0
  %372 = vmatprep.subr.bf16.mxu0 0
  %373 = vmatpush1.bf16.msra.mxu0 0
  %374 = vmatprep.subr.bf16.mxu0 0
  %375 = vmatpush1.bf16.msra.mxu0 0
  %376 = vmatprep.subr.bf16.mxu0 0
  %377 = vmatpush1.bf16.msra.mxu0 0
  %378 = vmatprep.subr.bf16.mxu0 0
  %379 = vmatpush1.bf16.msra.mxu0 %v345
  %380 = vmatprep.subr.bf16.mxu0 0
  %381 = vmatpush2.bf16.msra.mxu0 0
  %382 = vmatprep.subr.bf16.mxu0 0
  %383 = vmatpush2.bf16.msra.mxu0 0
  %384 = vmatprep.subr.bf16.mxu0 0
  %385 = vmatpush2.bf16.msra.mxu0 0
  %386 = vmatprep.subr.bf16.mxu0 0
  %387 = vmatpush2.bf16.msra.mxu0 0
  %388 = vmatprep.subr.bf16.mxu0 0
  %389 = vmatpush2.bf16.msra.mxu0 0
  %390 = vmatprep.subr.bf16.mxu0 0
  %391 = vmatpush2.bf16.msra.mxu0 0
  %392 = vmatprep.subr.bf16.mxu0 0
  %393 = vmatpush2.bf16.msra.mxu0 0
  %394 = vmatprep.subr.bf16.mxu0 0
  %395 = vmatpush2.bf16.msra.mxu0 0
  %396 = vmatprep.mubr.bf16.mxu0 0
  %397 = vmatmul.mubr.bf16.gmra.mxu0 %v362
  %v398 = vpop.f32.mrf.mxu0
  %v399 = vadd.f32 %v349, %v398
  %v400 = vpop.f32.mrf.mxu0
  %v401 = vpop.f32.mrf.mxu0
  %v402 = vadd.f32 %v354, %v401
  %v403 = vpop.f32.mrf.mxu0
  %404 = vdwg.mxu0
  %v405 = vxor.u32 %v399, 2147483648
  %v406 = vxor.u32 %v402, 2147483648
  %v407 = vmul.f32 %v405, 1.442695
  %v408 = vpow.pop %v407
  %v409 = vmul.f32 %v406, 1.442695
  %v410 = vpow.pop %v409
  %v411 = vadd.f32 %v408, 1.0
  %v412 = vadd.f32 %v410, 1.0
  %v413 = vrcp.pop %v411
  %v414 = vmul.f32 1.0, %v413
  %v415 = vrcp.pop %v412
  %v416 = vmul.f32 1.0, %v415
  %v417 = vld [vmem:[%s3 + $0x20] sm:$0xf]
  %v418 = vld [vmem:[%s3 + $0x24] sm:$0xf]
  %v419 = vld [vmem:[%s3 + $0x28] sm:$0xf]
  %v420 = vld [vmem:[%s3 + $0x2c] sm:$0xf]
  %v421 = vld [vmem:[%s3 + $0x30] sm:$0xf]
  %v422 = vld [vmem:[%s3 + $0x34] sm:$0xf]
  %v423 = vld [vmem:[%s3 + $0x38] sm:$0xf]
  %v424 = vld [vmem:[%s3 + $0x3c] sm:$0xf]
  %v425 = vpack.c.bf16 %v113, %v112
  %v426 = vld [vmem:[%s2 + $0x90] sm:$0xff]
  %v427 = vld [vmem:[%s2 + $0x98] sm:$0xff]
  %v428 = vld [vmem:[%s2 + $0xa0] sm:$0xff]
  %v429 = vld [vmem:[%s2 + $0xa8] sm:$0xff]
  %431 = vset.pattern.permute.xlu0 0
  %432 = vperm.xlu0 %431, %v426
  %v433 = vpop.permute.xlu0 %432
  %436 = vset.pattern.permute.xlu0 0
  %437 = vperm.xlu0 %436, %v427
  %v438 = vpop.permute.xlu0 %437
  %441 = vset.pattern.permute.xlu0 0
  %442 = vperm.xlu0 %441, %v428
  %v443 = vpop.permute.xlu0 %442
  %446 = vset.pattern.permute.xlu0 0
  %447 = vperm.xlu0 %446, %v429
  %v448 = vpop.permute.xlu0 %447
  %v454 = vunpack.c.l.b16 %v417
  %v455 = vunpack.c.l.b16 %v418
  %v456 = vunpack.c.l.b16 %v419
  %v457 = vunpack.c.l.b16 %v420
  %v458 = vpack.c.b16 %v455, %v454
  %v459 = vpack.c.b16 %v457, %v456
  %v461 = vsel %vm47, %v458, 0
  %v464 = vsel %vm47, %v459, 0
  %466 = vmatprep.subr.bf16.mxu0 0
  %467 = vmatpush1.bf16.msra.mxu0 0
  %468 = vmatprep.subr.bf16.mxu0 0
  %469 = vmatpush1.bf16.msra.mxu0 0
  %470 = vmatprep.subr.bf16.mxu0 0
  %471 = vmatpush1.bf16.msra.mxu0 0
  %472 = vmatprep.subr.bf16.mxu0 0
  %473 = vmatpush1.bf16.msra.mxu0 0
  %474 = vmatprep.subr.bf16.mxu0 0
  %475 = vmatpush1.bf16.msra.mxu0 0
  %476 = vmatprep.subr.bf16.mxu0 0
  %477 = vmatpush1.bf16.msra.mxu0 0
  %478 = vmatprep.subr.bf16.mxu0 0
  %479 = vmatpush1.bf16.msra.mxu0 0
  %480 = vmatprep.subr.bf16.mxu0 0
  %481 = vmatpush1.bf16.msra.mxu0 %v425
  %482 = vmatprep.subr.bf16.mxu0 0
  %483 = vmatpush2.bf16.msra.mxu0 0
  %484 = vmatprep.subr.bf16.mxu0 0
  %485 = vmatpush2.bf16.msra.mxu0 0
  %486 = vmatprep.subr.bf16.mxu0 0
  %487 = vmatpush2.bf16.msra.mxu0 0
  %488 = vmatprep.subr.bf16.mxu0 0
  %489 = vmatpush2.bf16.msra.mxu0 0
  %490 = vmatprep.subr.bf16.mxu0 0
  %491 = vmatpush2.bf16.msra.mxu0 0
  %492 = vmatprep.subr.bf16.mxu0 0
  %493 = vmatpush2.bf16.msra.mxu0 0
  %494 = vmatprep.subr.bf16.mxu0 0
  %495 = vmatpush2.bf16.msra.mxu0 0
  %496 = vmatprep.subr.bf16.mxu0 0
  %497 = vmatpush2.bf16.msra.mxu0 0
  %498 = vmatprep.mubr.bf16.mxu0 0
  %499 = vmatmul.mubr.bf16.gmra.mxu0 %v461
  %v500 = vpop.f32.mrf.mxu0
  %v501 = vadd.f32 %v433, %v500
  %v502 = vpop.f32.mrf.mxu0
  %v503 = vpop.f32.mrf.mxu0
  %v504 = vadd.f32 %v438, %v503
  %v505 = vpop.f32.mrf.mxu0
  %506 = vmatprep.mubr.bf16.mxu0 0
  %507 = vmatmul.mubr.bf16.gmra.mxu0 %v464
  %v508 = vpop.f32.mrf.mxu0
  %v509 = vadd.f32 %v443, %v508
  %v510 = vpop.f32.mrf.mxu0
  %v511 = vpop.f32.mrf.mxu0
  %v512 = vadd.f32 %v448, %v511
  %v513 = vpop.f32.mrf.mxu0
  %514 = vdwg.mxu0
  %vm515 = vcmp.ge.s32.totalorder %v93, 0
  %vm516 = vcmp.lt.s32.totalorder %v93, 16
  %vm517 = vmand %vm515, %vm516
  %519 = vset.pattern.permute.xlu0 0
  %520 = vperm.xlu0 %519, %v501
  %v521 = vpop.permute.xlu0 %520
  %524 = vset.pattern.permute.xlu0 0
  %525 = vperm.xlu0 %524, %v504
  %v526 = vpop.permute.xlu0 %525
  %529 = vset.pattern.permute.xlu0 0
  %530 = vperm.xlu0 %529, %v509
  %v531 = vpop.permute.xlu0 %530
  %534 = vset.pattern.permute.xlu0 0
  %535 = vperm.xlu0 %534, %v512
  %v536 = vpop.permute.xlu0 %535
  %v538 = vsel %vm517, %v521, 0.0
  %v539 = vsel %vm517, %v526, 0.0
  %v540 = vsel %vm517, %v531, 0.0
  %v541 = vsel %vm517, %v536, 0.0
  %vm542 = vcmp.ge.s32.totalorder %v93, 16
  %vm543 = vcmp.lt.s32.totalorder %v93, 32
  %vm544 = vmand %vm542, %vm543
  %545 = vset.pattern.permute.xlu0 1
  %546 = vperm.xlu0 %545, %v501
  %v547 = vpop.permute.xlu0 %546
  %549 = vset.pattern.permute.xlu0 1
  %550 = vperm.xlu0 %549, %v504
  %v551 = vpop.permute.xlu0 %550
  %553 = vset.pattern.permute.xlu0 1
  %554 = vperm.xlu0 %553, %v509
  %v555 = vpop.permute.xlu0 %554
  %557 = vset.pattern.permute.xlu0 1
  %558 = vperm.xlu0 %557, %v512
  %v559 = vpop.permute.xlu0 %558
  %v561 = vsel %vm544, %v547, %v538
  %v562 = vsel %vm544, %v551, %v539
  %v563 = vsel %vm544, %v555, %v540
  %v564 = vsel %vm544, %v559, %v541
  %v569 = vunpack.c.l.b16 %v421
  %v570 = vunpack.c.l.b16 %v422
  %v571 = vunpack.c.l.b16 %v423
  %v572 = vunpack.c.l.b16 %v424
  %v573 = vpack.c.b16 %v570, %v569
  %v574 = vpack.c.b16 %v572, %v571
  %v577 = vunpack.c.l.b16 %v20
  %v578 = vunpack.c.l.b16 %v21
  %v579 = vpack.c.b16 %v578, %v577
  %v582 = vsel %vm47, %v573, 0
  %v585 = vsel %vm47, %v574, 0
  %587 = vmatprep.subr.bf16.mxu0 0
  %588 = vmatpush1.bf16.msra.mxu0 0
  %589 = vmatprep.subr.bf16.mxu0 0
  %590 = vmatpush1.bf16.msra.mxu0 0
  %591 = vmatprep.subr.bf16.mxu0 0
  %592 = vmatpush1.bf16.msra.mxu0 0
  %593 = vmatprep.subr.bf16.mxu0 0
  %594 = vmatpush1.bf16.msra.mxu0 0
  %595 = vmatprep.subr.bf16.mxu0 0
  %596 = vmatpush1.bf16.msra.mxu0 0
  %597 = vmatprep.subr.bf16.mxu0 0
  %598 = vmatpush1.bf16.msra.mxu0 0
  %599 = vmatprep.subr.bf16.mxu0 0
  %600 = vmatpush1.bf16.msra.mxu0 0
  %601 = vmatprep.subr.bf16.mxu0 0
  %602 = vmatpush1.bf16.msra.mxu0 %v579
  %603 = vmatprep.subr.bf16.mxu0 0
  %604 = vmatpush2.bf16.msra.mxu0 0
  %605 = vmatprep.subr.bf16.mxu0 0
  %606 = vmatpush2.bf16.msra.mxu0 0
  %607 = vmatprep.subr.bf16.mxu0 0
  %608 = vmatpush2.bf16.msra.mxu0 0
  %609 = vmatprep.subr.bf16.mxu0 0
  %610 = vmatpush2.bf16.msra.mxu0 0
  %611 = vmatprep.subr.bf16.mxu0 0
  %612 = vmatpush2.bf16.msra.mxu0 0
  %613 = vmatprep.subr.bf16.mxu0 0
  %614 = vmatpush2.bf16.msra.mxu0 0
  %615 = vmatprep.subr.bf16.mxu0 0
  %616 = vmatpush2.bf16.msra.mxu0 0
  %617 = vmatprep.subr.bf16.mxu0 0
  %618 = vmatpush2.bf16.msra.mxu0 0
  %619 = vmatprep.mubr.bf16.mxu0 0
  %620 = vmatmul.mubr.bf16.gmra.mxu0 %v582
  %v621 = vpop.f32.mrf.mxu0
  %v622 = vadd.f32 %v561, %v621
  %v623 = vpop.f32.mrf.mxu0
  %v624 = vpop.f32.mrf.mxu0
  %v625 = vadd.f32 %v562, %v624
  %v626 = vpop.f32.mrf.mxu0
  %627 = vmatprep.mubr.bf16.mxu0 0
  %628 = vmatmul.mubr.bf16.gmra.mxu0 %v585
  %v629 = vpop.f32.mrf.mxu0
  %v630 = vadd.f32 %v563, %v629
  %v631 = vpop.f32.mrf.mxu0
  %v632 = vpop.f32.mrf.mxu0
  %v633 = vadd.f32 %v564, %v632
  %v634 = vpop.f32.mrf.mxu0
  %635 = vdwg.mxu0
  %637 = vset.pattern.permute.xlu0 0
  %638 = vperm.xlu0 %637, %v414
  %v639 = vpop.permute.xlu0 %638
  %642 = vset.pattern.permute.xlu0 0
  %643 = vperm.xlu0 %642, %v416
  %v644 = vpop.permute.xlu0 %643
  %v646 = vsel %vm517, %v639, 0.0
  %v647 = vsel %vm517, %v644, 0.0
  %648 = vset.pattern.permute.xlu0 1
  %649 = vperm.xlu0 %648, %v414
  %v650 = vpop.permute.xlu0 %649
  %652 = vset.pattern.permute.xlu0 1
  %653 = vperm.xlu0 %652, %v416
  %v654 = vpop.permute.xlu0 %653
  %v656 = vsel %vm544, %v650, %v646
  %v657 = vsel %vm544, %v654, %v647
  %v658 = vmul.f32 %v656, %v622
  %v659 = vmul.f32 %v657, %v625
  %v660 = vadd.f32 %v658, %v630
  %v661 = vadd.f32 %v659, %v633
  %v662 = vld [vmem:[%s3 + $0x40] sm:$0xf]
  %v663 = vld [vmem:[%s3 + $0x44] sm:$0xf]
  %v664 = vld [vmem:[%s2 + $0xd0] sm:$0xff]
  %v665 = vld [vmem:[%s2 + $0xd8] sm:$0xff]
  %v666 = vld [vmem:[%s2 + $0xb0] sm:$0xff]
  %v667 = vld [vmem:[%s2 + $0xb8] sm:$0xff]
  %v668 = vld [vmem:[%s2 + $0xc0] sm:$0xff]
  %v669 = vld [vmem:[%s2 + $0xc8] sm:$0xff]
  %671 = vset.pattern.permute.xlu0 0
  %672 = vperm.xlu0 %671, %v666
  %v673 = vpop.permute.xlu0 %672
  %676 = vset.pattern.permute.xlu0 0
  %677 = vperm.xlu0 %676, %v667
  %v678 = vpop.permute.xlu0 %677
  %v680 = vmul.f32 %v660, %v673
  %v681 = vmul.f32 %v661, %v678
  %683 = vset.pattern.permute.xlu0 0
  %684 = vperm.xlu0 %683, %v668
  %v685 = vpop.permute.xlu0 %684
  %688 = vset.pattern.permute.xlu0 0
  %689 = vperm.xlu0 %688, %v669
  %v690 = vpop.permute.xlu0 %689
  %v692 = vadd.f32 %v680, %v685
  %v693 = vadd.f32 %v681, %v690
  %v694 = vmax.f32 %v692, 0.0
  %v695 = vmax.f32 %v693, 0.0
  %v696 = vpack.c.bf16 %v695, %v694
  %698 = vset.pattern.permute.xlu0 0
  %699 = vperm.xlu0 %698, %v664
  %v700 = vpop.permute.xlu0 %699
  %703 = vset.pattern.permute.xlu0 0
  %704 = vperm.xlu0 %703, %v665
  %v705 = vpop.permute.xlu0 %704
  %v709 = vunpack.c.l.b16 %v662
  %v710 = vunpack.c.l.b16 %v663
  %v711 = vpack.c.b16 %v710, %v709
  %v713 = vsel %vm47, %v711, 0
  %715 = vmatprep.subr.bf16.mxu0 0
  %716 = vmatpush1.bf16.msra.mxu0 0
  %717 = vmatprep.subr.bf16.mxu0 0
  %718 = vmatpush1.bf16.msra.mxu0 0
  %719 = vmatprep.subr.bf16.mxu0 0
  %720 = vmatpush1.bf16.msra.mxu0 0
  %721 = vmatprep.subr.bf16.mxu0 0
  %722 = vmatpush1.bf16.msra.mxu0 0
  %723 = vmatprep.subr.bf16.mxu0 0
  %724 = vmatpush1.bf16.msra.mxu0 0
  %725 = vmatprep.subr.bf16.mxu0 0
  %726 = vmatpush1.bf16.msra.mxu0 0
  %727 = vmatprep.subr.bf16.mxu0 0
  %728 = vmatpush1.bf16.msra.mxu0 0
  %729 = vmatprep.subr.bf16.mxu0 0
  %730 = vmatpush1.bf16.msra.mxu0 %v696
  %731 = vmatprep.subr.bf16.mxu0 0
  %732 = vmatpush2.bf16.msra.mxu0 0
  %733 = vmatprep.subr.bf16.mxu0 0
  %734 = vmatpush2.bf16.msra.mxu0 0
  %735 = vmatprep.subr.bf16.mxu0 0
  %736 = vmatpush2.bf16.msra.mxu0 0
  %737 = vmatprep.subr.bf16.mxu0 0
  %738 = vmatpush2.bf16.msra.mxu0 0
  %739 = vmatprep.subr.bf16.mxu0 0
  %740 = vmatpush2.bf16.msra.mxu0 0
  %741 = vmatprep.subr.bf16.mxu0 0
  %742 = vmatpush2.bf16.msra.mxu0 0
  %743 = vmatprep.subr.bf16.mxu0 0
  %744 = vmatpush2.bf16.msra.mxu0 0
  %745 = vmatprep.subr.bf16.mxu0 0
  %746 = vmatpush2.bf16.msra.mxu0 0
  %747 = vmatprep.mubr.bf16.mxu0 0
  %748 = vmatmul.mubr.bf16.gmra.mxu0 %v713
  %v749 = vpop.f32.mrf.mxu0
  %v750 = vadd.f32 %v700, %v749
  %v751 = vpop.f32.mrf.mxu0
  %v752 = vpop.f32.mrf.mxu0
  %v753 = vadd.f32 %v705, %v752
  %v754 = vpop.f32.mrf.mxu0
  %755 = vdwg.mxu0
  %v756 = vpack.c.bf16 %v753, %v750
  %v758 = vunpack.c.l.b16 %v756
  %v759 = vunpack.c.h.b16 %v756
  %v760 = vpack.c.b16 %v758, %v758
  %v761 = vpack.c.b16 %v759, %v759
  %vm764 = vcmask 257024
  %765 = vst.msk [vmem:[%s4] sm:$0xf] %vm764, %v760
  %766 = vst.msk [vmem:[%s4 + $0x4] sm:$0xf] %vm764, %v761
  // Predicated region
  $region18: #{forward.14} parent=0 // pred_check
    _
  $region19: #{forward.14} parent=0 // pred_check_branch
    %768 = sbr.rel (0) target = $region21
  $region20: #{forward.14} parent=0 // pred_region
    _
  $region21: #{forward.14} parent=0 // pred_fallthru
    _
  // Predicated region
  $region22: #{forward.14} parent=0 // pred_check
    _
  $region23: #{forward.14} parent=0 // pred_check_branch
    %770 = sbr.rel (0) target = $region25
  $region24: #{forward.14} parent=0 // pred_region
    _
  $region25: #{forward.14} parent=0 // pred_fallthru
    _

// kernel: forward.15
$region0: #{forward.15}
  #allocation0 [shape = 'u32[]', space=smem, size = 0x4, offset = 0x4, fixed_abs, tag = 'smem constant byte address 0x4 - core index']
  #allocation1 [shape = 'u32[144,128]{1,0:T(1,128)}', space=vmem, size = 0x12000, scoped, tag = 'internal scratch']
  %s0 = inlined_call_operand.vmem [shape: bf16[16,32], index: 0, kind: input, shape index: {}]
  %s1 = inlined_call_operand.vmem [shape: bf16[16,64], index: 1, kind: input, shape index: {}]
  %s2 = inlined_call_operand.vmem [shape: f32[224,1], index: 2, kind: input, shape index: {}]
  %s3 = inlined_call_operand.vmem [shape: bf16[144,128], index: 3, kind: input, shape index: {}]
  %s4 = inlined_call_operand.vmem [shape: bf16[16,64], index: 4, kind: output, shape index: {}]
  %s5 = sld [smem:[#allocation0]]
  $region26: #{forward.15} parent=0
    _
  %s7 = ssub.s32 1, %s5
  %s8 = scalar_select 0, %s7, %s5
  // Predicated region
  $region2: #{forward.15} parent=0 // pred_check
    _
  $region3: #{forward.15} parent=0 // pred_check_branch
    %10 = sbr.rel (0) target = $region5
  $region4: #{forward.15} parent=0 // pred_region
    _
  $region5: #{forward.15} parent=0 // pred_fallthru
    _
  // Predicated region
  $region6: #{forward.15} parent=0 // pred_check
    _
  $region7: #{forward.15} parent=0 // pred_check_branch
    %12 = sbr.rel (0) target = $region9
  $region8: #{forward.15} parent=0 // pred_region
    _
  $region9: #{forward.15} parent=0 // pred_fallthru
    _
  // Predicated region
  $region10: #{forward.15} parent=0 // pred_check
    _
  $region11: #{forward.15} parent=0 // pred_check_branch
    %14 = sbr.rel (0) target = $region13
  $region12: #{forward.15} parent=0 // pred_region
    _
  $region13: #{forward.15} parent=0 // pred_fallthru
    _
  // Predicated region
  $region14: #{forward.15} parent=0 // pred_check
    _
  $region15: #{forward.15} parent=0 // pred_check_branch
    %16 = sbr.rel (0) target = $region17
  $region16: #{forward.15} parent=0 // pred_region
    _
  $region17: #{forward.15} parent=0 // pred_fallthru
    _
  %v18 = vld [vmem:[%s0] sm:$0xf]
  %v19 = vld [vmem:[%s0 + $0x4] sm:$0xf]
  %v20 = vld [vmem:[%s1] sm:$0xf]
  %v21 = vld [vmem:[%s1 + $0x4] sm:$0xf]
  %v22 = vld [vmem:[%s3] sm:$0xf]
  %v23 = vld [vmem:[%s3 + $0x4] sm:$0xf]
  %v24 = vld [vmem:[%s2] sm:$0xff]
  %v25 = vld [vmem:[%s2 + $0x8] sm:$0xff]
  %27 = vset.pattern.permute.xlu0 0
  %28 = vperm.xlu0 %27, %v24
  %v29 = vpop.permute.xlu0 %28
  %32 = vset.pattern.permute.xlu0 0
  %33 = vperm.xlu0 %32, %v25
  %v34 = vpop.permute.xlu0 %33
  %v38 = vunpack.c.l.b16 %v22
  %v39 = vunpack.c.l.b16 %v23
  %v40 = vpack.c.b16 %v39, %v38
  %v43 = vunpack.c.l.b16 %v18
  %v44 = vunpack.c.l.b16 %v19
  %v45 = vpack.c.b16 %v44, %v43
  %vm47 = vcmask 130048
  %v49 = vsel %vm47, %v40, 0
  %51 = vmatprep.subr.bf16.mxu0 0
  %52 = vmatpush1.bf16.msra.mxu0 0
  %53 = vmatprep.subr.bf16.mxu0 0
  %54 = vmatpush1.bf16.msra.mxu0 0
  %55 = vmatprep.subr.bf16.mxu0 0
  %56 = vmatpush1.bf16.msra.mxu0 0
  %57 = vmatprep.subr.bf16.mxu0 0
  %58 = vmatpush1.bf16.msra.mxu0 0
  %59 = vmatprep.subr.bf16.mxu0 0
  %60 = vmatpush1.bf16.msra.mxu0 0
  %61 = vmatprep.subr.bf16.mxu0 0
  %62 = vmatpush1.bf16.msra.mxu0 0
  %63 = vmatprep.subr.bf16.mxu0 0
  %64 = vmatpush1.bf16.msra.mxu0 0
  %65 = vmatprep.subr.bf16.mxu0 0
  %66 = vmatpush1.bf16.msra.mxu0 %v45
  %67 = vmatprep.subr.bf16.mxu0 0
  %68 = vmatpush2.bf16.msra.mxu0 0
  %69 = vmatprep.subr.bf16.mxu0 0
  %70 = vmatpush2.bf16.msra.mxu0 0
  %71 = vmatprep.subr.bf16.mxu0 0
  %72 = vmatpush2.bf16.msra.mxu0 0
  %73 = vmatprep.subr.bf16.mxu0 0
  %74 = vmatpush2.bf16.msra.mxu0 0
  %75 = vmatprep.subr.bf16.mxu0 0
  %76 = vmatpush2.bf16.msra.mxu0 0
  %77 = vmatprep.subr.bf16.mxu0 0
  %78 = vmatpush2.bf16.msra.mxu0 0
  %79 = vmatprep.subr.bf16.mxu0 0
  %80 = vmatpush2.bf16.msra.mxu0 0
  %81 = vmatprep.subr.bf16.mxu0 0
  %82 = vmatpush2.bf16.msra.mxu0 0
  %83 = vmatprep.mubr.bf16.mxu0 0
  %84 = vmatmul.mubr.bf16.gmra.mxu0 %v49
  %v85 = vpop.f32.mrf.mxu0
  %v86 = vadd.f32 %v29, %v85
  %v87 = vpop.f32.mrf.mxu0
  %v88 = vpop.f32.mrf.mxu0
  %v89 = vadd.f32 %v34, %v88
  %v90 = vpop.f32.mrf.mxu0
  %91 = vdwg.mxu0
  %v92 = vlaneseq
  %v93 = vand.u32 %v92, 127
  %v94 = vsel %vm47, %v86, -inf
  %95 = vmax.xlane.f32.xlu0 %v94
  %v96 = vpop.xlane.xlu0 %95
  %v97 = vsel %vm47, %v89, -inf
  %98 = vmax.xlane.f32.xlu0 %v97
  %v99 = vpop.xlane.xlu0 %98
  %vm100 = vcmp.eq.s32.totalorder %v93, 0
  %v101 = vsel %vm100, %v96, 0.0
  %v102 = vsel %vm100, %v99, 0.0
  %vm103 = vcmask 261248
  %v104 = vsel %vm103, %v86, -inf
  %105 = vmax.xlane.f32.xlu0 %v104
  %v106 = vpop.xlane.xlu0 %105
  %v107 = vsel %vm103, %v89, -inf
  %108 = vmax.xlane.f32.xlu0 %v107
  %v109 = vpop.xlane.xlu0 %108
  %vm110 = vcmp.eq.s32.totalorder %v93, 1
  %v111 = vsel %vm110, %v106, %v101
  %v112 = vsel %vm110, %v109, %v102
  %v113 = vld [vmem:[%s2 + $0x10] sm:$0xff]
  %v114 = vld [vmem:[%s2 + $0x18] sm:$0xff]
  %116 = vset.pattern.permute.xlu0 0
  %117 = vperm.xlu0 %116, %v113
  %v118 = vpop.permute.xlu0 %117
  %121 = vset.pattern.permute.xlu0 0
  %122 = vperm.xlu0 %121, %v114
  %v123 = vpop.permute.xlu0 %122
  %v125 = vmul.f32 %v111, %v118
  %v126 = vmul.f32 %v112, %v123
  %v127 = vld [vmem:[%s2 + $0x20] sm:$0xff]
  %v128 = vld [vmem:[%s2 + $0x28] sm:$0xff]
  %130 = vset.pattern.permute.xlu0 0
  %131 = vperm.xlu0 %130, %v127
  %v132 = vpop.permute.xlu0 %131
  %135 = vset.pattern.permute.xlu0 0
  %136 = vperm.xlu0 %135, %v128
  %v137 = vpop.permute.xlu0 %136
  %v139 = vadd.f32 %v125, %v132
  %v140 = vadd.f32 %v126, %v137
  %v141 = vmax.f32 %v139, 0.0
  %v142 = vmax.f32 %v140, 0.0
  %v143 = vunpack.c.l.bf16 %v20
  %v144 = vunpack.c.l.bf16 %v21
  %v145 = vld [vmem:[%s2 + $0x30] sm:$0xff]
  %v146 = vld [vmem:[%s2 + $0x38] sm:$0xff]
  %148 = vset.pattern.permute.xlu0 0
  %149 = vperm.xlu0 %148, %v145
  %v150 = vpop.permute.xlu0 %149
  %153 = vset.pattern.permute.xlu0 0
  %154 = vperm.xlu0 %153, %v146
  %v155 = vpop.permute.xlu0 %154
  %v157 = vmul.f32 %v143, %v150
  %v158 = vmul.f32 %v144, %v155
  %v159 = vld [vmem:[%s2 + $0x40] sm:$0xff]
  %v160 = vld [vmem:[%s2 + $0x48] sm:$0xff]
  %162 = vset.pattern.permute.xlu0 0
  %163 = vperm.xlu0 %162, %v159
  %v164 = vpop.permute.xlu0 %163
  %167 = vset.pattern.permute.xlu0 0
  %168 = vperm.xlu0 %167, %v160
  %v169 = vpop.permute.xlu0 %168
  %v171 = vadd.f32 %v157, %v164
  %v172 = vadd.f32 %v158, %v169
  %v173 = vmax.f32 %v171, 0.0
  %v174 = vmax.f32 %v172, 0.0
  %v175 = vld [vmem:[%s3 + $0x8] sm:$0xf]
  %v176 = vld [vmem:[%s3 + $0xc] sm:$0xf]
  %v177 = vld [vmem:[%s3 + $0x10] sm:$0xf]
  %v178 = vld [vmem:[%s3 + $0x14] sm:$0xf]
  %v179 = vpack.c.bf16 %v142, %v141
  %v180 = vld [vmem:[%s2 + $0x50] sm:$0xff]
  %v181 = vld [vmem:[%s2 + $0x58] sm:$0xff]
  %183 = vset.pattern.permute.xlu0 0
  %184 = vperm.xlu0 %183, %v180
  %v185 = vpop.permute.xlu0 %184
  %188 = vset.pattern.permute.xlu0 0
  %189 = vperm.xlu0 %188, %v181
  %v190 = vpop.permute.xlu0 %189
  %v194 = vunpack.c.l.b16 %v175
  %v195 = vunpack.c.l.b16 %v176
  %v196 = vpack.c.b16 %v195, %v194
  %v198 = vsel %vm47, %v196, 0
  %200 = vmatprep.subr.bf16.mxu0 0
  %201 = vmatpush1.bf16.msra.mxu0 0
  %202 = vmatprep.subr.bf16.mxu0 0
  %203 = vmatpush1.bf16.msra.mxu0 0
  %204 = vmatprep.subr.bf16.mxu0 0
  %205 = vmatpush1.bf16.msra.mxu0 0
  %206 = vmatprep.subr.bf16.mxu0 0
  %207 = vmatpush1.bf16.msra.mxu0 0
  %208 = vmatprep.subr.bf16.mxu0 0
  %209 = vmatpush1.bf16.msra.mxu0 0
  %210 = vmatprep.subr.bf16.mxu0 0
  %211 = vmatpush1.bf16.msra.mxu0 0
  %212 = vmatprep.subr.bf16.mxu0 0
  %213 = vmatpush1.bf16.msra.mxu0 0
  %214 = vmatprep.subr.bf16.mxu0 0
  %215 = vmatpush1.bf16.msra.mxu0 %v179
  %216 = vmatprep.subr.bf16.mxu0 0
  %217 = vmatpush2.bf16.msra.mxu0 0
  %218 = vmatprep.subr.bf16.mxu0 0
  %219 = vmatpush2.bf16.msra.mxu0 0
  %220 = vmatprep.subr.bf16.mxu0 0
  %221 = vmatpush2.bf16.msra.mxu0 0
  %222 = vmatprep.subr.bf16.mxu0 0
  %223 = vmatpush2.bf16.msra.mxu0 0
  %224 = vmatprep.subr.bf16.mxu0 0
  %225 = vmatpush2.bf16.msra.mxu0 0
  %226 = vmatprep.subr.bf16.mxu0 0
  %227 = vmatpush2.bf16.msra.mxu0 0
  %228 = vmatprep.subr.bf16.mxu0 0
  %229 = vmatpush2.bf16.msra.mxu0 0
  %230 = vmatprep.subr.bf16.mxu0 0
  %231 = vmatpush2.bf16.msra.mxu0 0
  %232 = vmatprep.mubr.bf16.mxu0 0
  %233 = vmatmul.mubr.bf16.gmra.mxu0 %v198
  %v234 = vpop.f32.mrf.mxu0
  %v235 = vadd.f32 %v185, %v234
  %v236 = vpop.f32.mrf.mxu0
  %v237 = vpop.f32.mrf.mxu0
  %v238 = vadd.f32 %v190, %v237
  %v239 = vpop.f32.mrf.mxu0
  %240 = vdwg.mxu0
  %v241 = vpack.c.bf16 %v174, %v173
  %v244 = vunpack.c.l.b16 %v177
  %v245 = vunpack.c.l.b16 %v178
  %v246 = vpack.c.b16 %v245, %v244
  %v248 = vsel %vm47, %v246, 0
  %250 = vmatprep.subr.bf16.mxu0 0
  %251 = vmatpush1.bf16.msra.mxu0 0
  %252 = vmatprep.subr.bf16.mxu0 0
  %253 = vmatpush1.bf16.msra.mxu0 0
  %254 = vmatprep.subr.bf16.mxu0 0
  %255 = vmatpush1.bf16.msra.mxu0 0
  %256 = vmatprep.subr.bf16.mxu0 0
  %257 = vmatpush1.bf16.msra.mxu0 0
  %258 = vmatprep.subr.bf16.mxu0 0
  %259 = vmatpush1.bf16.msra.mxu0 0
  %260 = vmatprep.subr.bf16.mxu0 0
  %261 = vmatpush1.bf16.msra.mxu0 0
  %262 = vmatprep.subr.bf16.mxu0 0
  %263 = vmatpush1.bf16.msra.mxu0 0
  %264 = vmatprep.subr.bf16.mxu0 0
  %265 = vmatpush1.bf16.msra.mxu0 %v241
  %266 = vmatprep.subr.bf16.mxu0 0
  %267 = vmatpush2.bf16.msra.mxu0 0
  %268 = vmatprep.subr.bf16.mxu0 0
  %269 = vmatpush2.bf16.msra.mxu0 0
  %270 = vmatprep.subr.bf16.mxu0 0
  %271 = vmatpush2.bf16.msra.mxu0 0
  %272 = vmatprep.subr.bf16.mxu0 0
  %273 = vmatpush2.bf16.msra.mxu0 0
  %274 = vmatprep.subr.bf16.mxu0 0
  %275 = vmatpush2.bf16.msra.mxu0 0
  %276 = vmatprep.subr.bf16.mxu0 0
  %277 = vmatpush2.bf16.msra.mxu0 0
  %278 = vmatprep.subr.bf16.mxu0 0
  %279 = vmatpush2.bf16.msra.mxu0 0
  %280 = vmatprep.subr.bf16.mxu0 0
  %281 = vmatpush2.bf16.msra.mxu0 0
  %282 = vmatprep.mubr.bf16.mxu0 0
  %283 = vmatmul.mubr.bf16.gmra.mxu0 %v248
  %v284 = vpop.f32.mrf.mxu0
  %v285 = vadd.f32 0.0, %v284
  %v286 = vpop.f32.mrf.mxu0
  %v287 = vpop.f32.mrf.mxu0
  %v288 = vadd.f32 0.0, %v287
  %v289 = vpop.f32.mrf.mxu0
  %290 = vdwg.mxu0
  %vm291 = vcmask 261120
  %v292 = vsel %vm291, %v285, -inf
  %293 = vmax.xlane.f32.xlu0 %v292
  %v294 = vpop.xlane.xlu0 %293
  %v295 = vsel %vm291, %v288, -inf
  %296 = vmax.xlane.f32.xlu0 %v295
  %v297 = vpop.xlane.xlu0 %296
  %v298 = vsel %vm100, %v294, 0.0
  %v299 = vsel %vm100, %v297, 0.0
  %vm300 = vcmask 523520
  %v301 = vsel %vm300, %v285, -inf
  %302 = vmax.xlane.f32.xlu0 %v301
  %v303 = vpop.xlane.xlu0 %302
  %v304 = vsel %vm300, %v288, -inf
  %305 = vmax.xlane.f32.xlu0 %v304
  %v306 = vpop.xlane.xlu0 %305
  %v307 = vsel %vm110, %v303, %v298
  %v308 = vsel %vm110, %v306, %v299
  %v309 = vadd.f32 %v235, %v307
  %v310 = vadd.f32 %v238, %v308
  %v311 = vld [vmem:[%s3 + $0x18] sm:$0xf]
  %v312 = vld [vmem:[%s3 + $0x1c] sm:$0xf]
  %v313 = vld [vmem:[%s2 + $0x80] sm:$0xff]
  %v314 = vld [vmem:[%s2 + $0x88] sm:$0xff]
  %v315 = vld [vmem:[%s2 + $0x60] sm:$0xff]
  %v316 = vld [vmem:[%s2 + $0x68] sm:$0xff]
  %v317 = vld [vmem:[%s2 + $0x70] sm:$0xff]
  %v318 = vld [vmem:[%s2 + $0x78] sm:$0xff]
  %320 = vset.pattern.permute.xlu0 0
  %321 = vperm.xlu0 %320, %v315
  %v322 = vpop.permute.xlu0 %321
  %325 = vset.pattern.permute.xlu0 0
  %326 = vperm.xlu0 %325, %v316
  %v327 = vpop.permute.xlu0 %326
  %v329 = vmul.f32 %v309, %v322
  %v330 = vmul.f32 %v310, %v327
  %332 = vset.pattern.permute.xlu0 0
  %333 = vperm.xlu0 %332, %v317
  %v334 = vpop.permute.xlu0 %333
  %337 = vset.pattern.permute.xlu0 0
  %338 = vperm.xlu0 %337, %v318
  %v339 = vpop.permute.xlu0 %338
  %v341 = vadd.f32 %v329, %v334
  %v342 = vadd.f32 %v330, %v339
  %v343 = vmax.f32 %v341, 0.0
  %v344 = vmax.f32 %v342, 0.0
  %v345 = vpack.c.bf16 %v344, %v343
  %347 = vset.pattern.permute.xlu0 0
  %348 = vperm.xlu0 %347, %v313
  %v349 = vpop.permute.xlu0 %348
  %352 = vset.pattern.permute.xlu0 0
  %353 = vperm.xlu0 %352, %v314
  %v354 = vpop.permute.xlu0 %353
  %v358 = vunpack.c.l.b16 %v311
  %v359 = vunpack.c.l.b16 %v312
  %v360 = vpack.c.b16 %v359, %v358
  %v362 = vsel %vm47, %v360, 0
  %364 = vmatprep.subr.bf16.mxu0 0
  %365 = vmatpush1.bf16.msra.mxu0 0
  %366 = vmatprep.subr.bf16.mxu0 0
  %367 = vmatpush1.bf16.msra.mxu0 0
  %368 = vmatprep.subr.bf16.mxu0 0
  %369 = vmatpush1.bf16.msra.mxu0 0
  %370 = vmatprep.subr.bf16.mxu0 0
  %371 = vmatpush1.bf16.msra.mxu0 0
  %372 = vmatprep.subr.bf16.mxu0 0
  %373 = vmatpush1.bf16.msra.mxu0 0
  %374 = vmatprep.subr.bf16.mxu0 0
  %375 = vmatpush1.bf16.msra.mxu0 0
  %376 = vmatprep.subr.bf16.mxu0 0
  %377 = vmatpush1.bf16.msra.mxu0 0
  %378 = vmatprep.subr.bf16.mxu0 0
  %379 = vmatpush1.bf16.msra.mxu0 %v345
  %380 = vmatprep.subr.bf16.mxu0 0
  %381 = vmatpush2.bf16.msra.mxu0 0
  %382 = vmatprep.subr.bf16.mxu0 0
  %383 = vmatpush2.bf16.msra.mxu0 0
  %384 = vmatprep.subr.bf16.mxu0 0
  %385 = vmatpush2.bf16.msra.mxu0 0
  %386 = vmatprep.subr.bf16.mxu0 0
  %387 = vmatpush2.bf16.msra.mxu0 0
  %388 = vmatprep.subr.bf16.mxu0 0
  %389 = vmatpush2.bf16.msra.mxu0 0
  %390 = vmatprep.subr.bf16.mxu0 0
  %391 = vmatpush2.bf16.msra.mxu0 0
  %392 = vmatprep.subr.bf16.mxu0 0
  %393 = vmatpush2.bf16.msra.mxu0 0
  %394 = vmatprep.subr.bf16.mxu0 0
  %395 = vmatpush2.bf16.msra.mxu0 0
  %396 = vmatprep.mubr.bf16.mxu0 0
  %397 = vmatmul.mubr.bf16.gmra.mxu0 %v362
  %v398 = vpop.f32.mrf.mxu0
  %v399 = vadd.f32 %v349, %v398
  %v400 = vpop.f32.mrf.mxu0
  %v401 = vpop.f32.mrf.mxu0
  %v402 = vadd.f32 %v354, %v401
  %v403 = vpop.f32.mrf.mxu0
  %404 = vdwg.mxu0
  %v405 = vxor.u32 %v399, 2147483648
  %v406 = vxor.u32 %v402, 2147483648
  %v407 = vmul.f32 %v405, 1.442695
  %v408 = vpow.pop %v407
  %v409 = vmul.f32 %v406, 1.442695
  %v410 = vpow.pop %v409
  %v411 = vadd.f32 %v408, 1.0
  %v412 = vadd.f32 %v410, 1.0
  %v413 = vrcp.pop %v411
  %v414 = vmul.f32 1.0, %v413
  %v415 = vrcp.pop %v412
  %v416 = vmul.f32 1.0, %v415
  %v417 = vld [vmem:[%s3 + $0x20] sm:$0xf]
  %v418 = vld [vmem:[%s3 + $0x24] sm:$0xf]
  %v419 = vld [vmem:[%s3 + $0x28] sm:$0xf]
  %v420 = vld [vmem:[%s3 + $0x2c] sm:$0xf]
  %v421 = vld [vmem:[%s3 + $0x30] sm:$0xf]
  %v422 = vld [vmem:[%s3 + $0x34] sm:$0xf]
  %v423 = vld [vmem:[%s3 + $0x38] sm:$0xf]
  %v424 = vld [vmem:[%s3 + $0x3c] sm:$0xf]
  %v425 = vpack.c.bf16 %v112, %v111
  %v426 = vld [vmem:[%s2 + $0x90] sm:$0xff]
  %v427 = vld [vmem:[%s2 + $0x98] sm:$0xff]
  %v428 = vld [vmem:[%s2 + $0xa0] sm:$0xff]
  %v429 = vld [vmem:[%s2 + $0xa8] sm:$0xff]
  %431 = vset.pattern.permute.xlu0 0
  %432 = vperm.xlu0 %431, %v426
  %v433 = vpop.permute.xlu0 %432
  %436 = vset.pattern.permute.xlu0 0
  %437 = vperm.xlu0 %436, %v427
  %v438 = vpop.permute.xlu0 %437
  %441 = vset.pattern.permute.xlu0 0
  %442 = vperm.xlu0 %441, %v428
  %v443 = vpop.permute.xlu0 %442
  %446 = vset.pattern.permute.xlu0 0
  %447 = vperm.xlu0 %446, %v429
  %v448 = vpop.permute.xlu0 %447
  %v454 = vunpack.c.l.b16 %v417
  %v455 = vunpack.c.l.b16 %v418
  %v456 = vunpack.c.l.b16 %v419
  %v457 = vunpack.c.l.b16 %v420
  %v458 = vpack.c.b16 %v455, %v454
  %v459 = vpack.c.b16 %v457, %v456
  %v461 = vsel %vm47, %v458, 0
  %v464 = vsel %vm47, %v459, 0
  %466 = vmatprep.subr.bf16.mxu0 0
  %467 = vmatpush1.bf16.msra.mxu0 0
  %468 = vmatprep.subr.bf16.mxu0 0
  %469 = vmatpush1.bf16.msra.mxu0 0
  %470 = vmatprep.subr.bf16.mxu0 0
  %471 = vmatpush1.bf16.msra.mxu0 0
  %472 = vmatprep.subr.bf16.mxu0 0
  %473 = vmatpush1.bf16.msra.mxu0 0
  %474 = vmatprep.subr.bf16.mxu0 0
  %475 = vmatpush1.bf16.msra.mxu0 0
  %476 = vmatprep.subr.bf16.mxu0 0
  %477 = vmatpush1.bf16.msra.mxu0 0
  %478 = vmatprep.subr.bf16.mxu0 0
  %479 = vmatpush1.bf16.msra.mxu0 0
  %480 = vmatprep.subr.bf16.mxu0 0
  %481 = vmatpush1.bf16.msra.mxu0 %v425
  %482 = vmatprep.subr.bf16.mxu0 0
  %483 = vmatpush2.bf16.msra.mxu0 0
  %484 = vmatprep.subr.bf16.mxu0 0
  %485 = vmatpush2.bf16.msra.mxu0 0
  %486 = vmatprep.subr.bf16.mxu0 0
  %487 = vmatpush2.bf16.msra.mxu0 0
  %488 = vmatprep.subr.bf16.mxu0 0
  %489 = vmatpush2.bf16.msra.mxu0 0
  %490 = vmatprep.subr.bf16.mxu0 0
  %491 = vmatpush2.bf16.msra.mxu0 0
  %492 = vmatprep.subr.bf16.mxu0 0
  %493 = vmatpush2.bf16.msra.mxu0 0
  %494 = vmatprep.subr.bf16.mxu0 0
  %495 = vmatpush2.bf16.msra.mxu0 0
  %496 = vmatprep.subr.bf16.mxu0 0
  %497 = vmatpush2.bf16.msra.mxu0 0
  %498 = vmatprep.mubr.bf16.mxu0 0
  %499 = vmatmul.mubr.bf16.gmra.mxu0 %v461
  %v500 = vpop.f32.mrf.mxu0
  %v501 = vadd.f32 %v433, %v500
  %v502 = vpop.f32.mrf.mxu0
  %v503 = vpop.f32.mrf.mxu0
  %v504 = vadd.f32 %v438, %v503
  %v505 = vpop.f32.mrf.mxu0
  %506 = vmatprep.mubr.bf16.mxu0 0
  %507 = vmatmul.mubr.bf16.gmra.mxu0 %v464
  %v508 = vpop.f32.mrf.mxu0
  %v509 = vadd.f32 %v443, %v508
  %v510 = vpop.f32.mrf.mxu0
  %v511 = vpop.f32.mrf.mxu0
  %v512 = vadd.f32 %v448, %v511
  %v513 = vpop.f32.mrf.mxu0
  %514 = vdwg.mxu0
  %vm515 = vcmp.ge.s32.totalorder %v93, 0
  %vm516 = vcmp.lt.s32.totalorder %v93, 32
  %vm517 = vmand %vm515, %vm516
  %519 = vset.pattern.permute.xlu0 0
  %520 = vperm.xlu0 %519, %v501
  %v521 = vpop.permute.xlu0 %520
  %524 = vset.pattern.permute.xlu0 0
  %525 = vperm.xlu0 %524, %v504
  %v526 = vpop.permute.xlu0 %525
  %529 = vset.pattern.permute.xlu0 0
  %530 = vperm.xlu0 %529, %v509
  %v531 = vpop.permute.xlu0 %530
  %534 = vset.pattern.permute.xlu0 0
  %535 = vperm.xlu0 %534, %v512
  %v536 = vpop.permute.xlu0 %535
  %v538 = vsel %vm517, %v521, 0.0
  %v539 = vsel %vm517, %v526, 0.0
  %v540 = vsel %vm517, %v531, 0.0
  %v541 = vsel %vm517, %v536, 0.0
  %vm542 = vcmp.ge.s32.totalorder %v93, 32
  %vm543 = vcmp.lt.s32.totalorder %v93, 64
  %vm544 = vmand %vm542, %vm543
  %545 = vset.pattern.permute.xlu0 1
  %546 = vperm.xlu0 %545, %v501
  %v547 = vpop.permute.xlu0 %546
  %549 = vset.pattern.permute.xlu0 1
  %550 = vperm.xlu0 %549, %v504
  %v551 = vpop.permute.xlu0 %550
  %553 = vset.pattern.permute.xlu0 1
  %554 = vperm.xlu0 %553, %v509
  %v555 = vpop.permute.xlu0 %554
  %557 = vset.pattern.permute.xlu0 1
  %558 = vperm.xlu0 %557, %v512
  %v559 = vpop.permute.xlu0 %558
  %v561 = vsel %vm544, %v547, %v538
  %v562 = vsel %vm544, %v551, %v539
  %v563 = vsel %vm544, %v555, %v540
  %v564 = vsel %vm544, %v559, %v541
  %v569 = vunpack.c.l.b16 %v421
  %v570 = vunpack.c.l.b16 %v422
  %v571 = vunpack.c.l.b16 %v423
  %v572 = vunpack.c.l.b16 %v424
  %v573 = vpack.c.b16 %v570, %v569
  %v574 = vpack.c.b16 %v572, %v571
  %v577 = vunpack.c.l.b16 %v20
  %v578 = vunpack.c.l.b16 %v21
  %v579 = vpack.c.b16 %v578, %v577
  %v582 = vsel %vm47, %v573, 0
  %v585 = vsel %vm47, %v574, 0
  %587 = vmatprep.subr.bf16.mxu0 0
  %588 = vmatpush1.bf16.msra.mxu0 0
  %589 = vmatprep.subr.bf16.mxu0 0
  %590 = vmatpush1.bf16.msra.mxu0 0
  %591 = vmatprep.subr.bf16.mxu0 0
  %592 = vmatpush1.bf16.msra.mxu0 0
  %593 = vmatprep.subr.bf16.mxu0 0
  %594 = vmatpush1.bf16.msra.mxu0 0
  %595 = vmatprep.subr.bf16.mxu0 0
  %596 = vmatpush1.bf16.msra.mxu0 0
  %597 = vmatprep.subr.bf16.mxu0 0
  %598 = vmatpush1.bf16.msra.mxu0 0
  %599 = vmatprep.subr.bf16.mxu0 0
  %600 = vmatpush1.bf16.msra.mxu0 0
  %601 = vmatprep.subr.bf16.mxu0 0
  %602 = vmatpush1.bf16.msra.mxu0 %v579
  %603 = vmatprep.subr.bf16.mxu0 0
  %604 = vmatpush2.bf16.msra.mxu0 0
  %605 = vmatprep.subr.bf16.mxu0 0
  %606 = vmatpush2.bf16.msra.mxu0 0
  %607 = vmatprep.subr.bf16.mxu0 0
  %608 = vmatpush2.bf16.msra.mxu0 0
  %609 = vmatprep.subr.bf16.mxu0 0
  %610 = vmatpush2.bf16.msra.mxu0 0
  %611 = vmatprep.subr.bf16.mxu0 0
  %612 = vmatpush2.bf16.msra.mxu0 0
  %613 = vmatprep.subr.bf16.mxu0 0
  %614 = vmatpush2.bf16.msra.mxu0 0
  %615 = vmatprep.subr.bf16.mxu0 0
  %616 = vmatpush2.bf16.msra.mxu0 0
  %617 = vmatprep.subr.bf16.mxu0 0
  %618 = vmatpush2.bf16.msra.mxu0 0
  %619 = vmatprep.mubr.bf16.mxu0 0
  %620 = vmatmul.mubr.bf16.gmra.mxu0 %v582
  %v621 = vpop.f32.mrf.mxu0
  %v622 = vadd.f32 %v561, %v621
  %v623 = vpop.f32.mrf.mxu0
  %v624 = vpop.f32.mrf.mxu0
  %v625 = vadd.f32 %v562, %v624
  %v626 = vpop.f32.mrf.mxu0
  %627 = vmatprep.mubr.bf16.mxu0 0
  %628 = vmatmul.mubr.bf16.gmra.mxu0 %v585
  %v629 = vpop.f32.mrf.mxu0
  %v630 = vadd.f32 %v563, %v629
  %v631 = vpop.f32.mrf.mxu0
  %v632 = vpop.f32.mrf.mxu0
  %v633 = vadd.f32 %v564, %v632
  %v634 = vpop.f32.mrf.mxu0
  %635 = vdwg.mxu0
  %637 = vset.pattern.permute.xlu0 0
  %638 = vperm.xlu0 %637, %v414
  %v639 = vpop.permute.xlu0 %638
  %642 = vset.pattern.permute.xlu0 0
  %643 = vperm.xlu0 %642, %v416
  %v644 = vpop.permute.xlu0 %643
  %v646 = vsel %vm517, %v639, 0.0
  %v647 = vsel %vm517, %v644, 0.0
  %648 = vset.pattern.permute.xlu0 1
  %649 = vperm.xlu0 %648, %v414
  %v650 = vpop.permute.xlu0 %649
  %652 = vset.pattern.permute.xlu0 1
  %653 = vperm.xlu0 %652, %v416
  %v654 = vpop.permute.xlu0 %653
  %v656 = vsel %vm544, %v650, %v646
  %v657 = vsel %vm544, %v654, %v647
  %v658 = vmul.f32 %v656, %v622
  %v659 = vmul.f32 %v657, %v625
  %v660 = vadd.f32 %v658, %v630
  %v661 = vadd.f32 %v659, %v633
  %v662 = vld [vmem:[%s3 + $0x40] sm:$0xf]
  %v663 = vld [vmem:[%s3 + $0x44] sm:$0xf]
  %v664 = vld [vmem:[%s2 + $0xd0] sm:$0xff]
  %v665 = vld [vmem:[%s2 + $0xd8] sm:$0xff]
  %v666 = vld [vmem:[%s2 + $0xb0] sm:$0xff]
  %v667 = vld [vmem:[%s2 + $0xb8] sm:$0xff]
  %v668 = vld [vmem:[%s2 + $0xc0] sm:$0xff]
  %v669 = vld [vmem:[%s2 + $0xc8] sm:$0xff]
  %671 = vset.pattern.permute.xlu0 0
  %672 = vperm.xlu0 %671, %v666
  %v673 = vpop.permute.xlu0 %672
  %676 = vset.pattern.permute.xlu0 0
  %677 = vperm.xlu0 %676, %v667
  %v678 = vpop.permute.xlu0 %677
  %v680 = vmul.f32 %v660, %v673
  %v681 = vmul.f32 %v661, %v678
  %683 = vset.pattern.permute.xlu0 0
  %684 = vperm.xlu0 %683, %v668
  %v685 = vpop.permute.xlu0 %684
  %688 = vset.pattern.permute.xlu0 0
  %689 = vperm.xlu0 %688, %v669
  %v690 = vpop.permute.xlu0 %689
  %v692 = vadd.f32 %v680, %v685
  %v693 = vadd.f32 %v681, %v690
  %v694 = vmax.f32 %v692, 0.0
  %v695 = vmax.f32 %v693, 0.0
  %v696 = vpack.c.bf16 %v695, %v694
  %698 = vset.pattern.permute.xlu0 0
  %699 = vperm.xlu0 %698, %v664
  %v700 = vpop.permute.xlu0 %699
  %703 = vset.pattern.permute.xlu0 0
  %704 = vperm.xlu0 %703, %v665
  %v705 = vpop.permute.xlu0 %704
  %v709 = vunpack.c.l.b16 %v662
  %v710 = vunpack.c.l.b16 %v663
  %v711 = vpack.c.b16 %v710, %v709
  %v713 = vsel %vm47, %v711, 0
  %715 = vmatprep.subr.bf16.mxu0 0
  %716 = vmatpush1.bf16.msra.mxu0 0
  %717 = vmatprep.subr.bf16.mxu0 0
  %718 = vmatpush1.bf16.msra.mxu0 0
  %719 = vmatprep.subr.bf16.mxu0 0
  %720 = vmatpush1.bf16.msra.mxu0 0
  %721 = vmatprep.subr.bf16.mxu0 0
  %722 = vmatpush1.bf16.msra.mxu0 0
  %723 = vmatprep.subr.bf16.mxu0 0
  %724 = vmatpush1.bf16.msra.mxu0 0
  %725 = vmatprep.subr.bf16.mxu0 0
  %726 = vmatpush1.bf16.msra.mxu0 0
  %727 = vmatprep.subr.bf16.mxu0 0
  %728 = vmatpush1.bf16.msra.mxu0 0
  %729 = vmatprep.subr.bf16.mxu0 0
  %730 = vmatpush1.bf16.msra.mxu0 %v696
  %731 = vmatprep.subr.bf16.mxu0 0
  %732 = vmatpush2.bf16.msra.mxu0 0
  %733 = vmatprep.subr.bf16.mxu0 0
  %734 = vmatpush2.bf16.msra.mxu0 0
  %735 = vmatprep.subr.bf16.mxu0 0
  %736 = vmatpush2.bf16.msra.mxu0 0
  %737 = vmatprep.subr.bf16.mxu0 0
  %738 = vmatpush2.bf16.msra.mxu0 0
  %739 = vmatprep.subr.bf16.mxu0 0
  %740 = vmatpush2.bf16.msra.mxu0 0
  %741 = vmatprep.subr.bf16.mxu0 0
  %742 = vmatpush2.bf16.msra.mxu0 0
  %743 = vmatprep.subr.bf16.mxu0 0
  %744 = vmatpush2.bf16.msra.mxu0 0
  %745 = vmatprep.subr.bf16.mxu0 0
  %746 = vmatpush2.bf16.msra.mxu0 0
  %747 = vmatprep.mubr.bf16.mxu0 0
  %748 = vmatmul.mubr.bf16.gmra.mxu0 %v713
  %v749 = vpop.f32.mrf.mxu0
  %v750 = vadd.f32 %v700, %v749
  %v751 = vpop.f32.mrf.mxu0
  %v752 = vpop.f32.mrf.mxu0
  %v753 = vadd.f32 %v705, %v752
  %v754 = vpop.f32.mrf.mxu0
  %755 = vdwg.mxu0
  %v756 = vpack.c.bf16 %v753, %v750
  %v758 = vunpack.c.l.b16 %v756
  %v759 = vunpack.c.h.b16 %v756
  %v760 = vpack.c.b16 %v758, %v758
  %v761 = vpack.c.b16 %v759, %v759
  %vm764 = vcmask 519168
  %765 = vst.msk [vmem:[%s4] sm:$0xf] %vm764, %v760
  %766 = vst.msk [vmem:[%s4 + $0x4] sm:$0xf] %vm764, %v761
  // Predicated region
  $region18: #{forward.15} parent=0 // pred_check
    _
  $region19: #{forward.15} parent=0 // pred_check_branch
    %768 = sbr.rel (0) target = $region21
  $region20: #{forward.15} parent=0 // pred_region
    _
  $region21: #{forward.15} parent=0 // pred_fallthru
    _
  // Predicated region
  $region22: #{forward.15} parent=0 // pred_check
    _
  $region23: #{forward.15} parent=0 // pred_check_branch
    %770 = sbr.rel (0) target = $region25
  $region24: #{forward.15} parent=0 // pred_region
    _
  $region25: #{forward.15} parent=0 // pred_fallthru
    _

// kernel: forward.13
$region0: #{forward.13}
  #allocation0 [shape = 'u32[]', space=smem, size = 0x4, offset = 0x4, fixed_abs, tag = 'smem constant byte address 0x4 - core index']
  #allocation1 [shape = 'u32[144,128]{1,0:T(1,128)}', space=vmem, size = 0x12000, scoped, tag = 'internal scratch']
  %s0 = inlined_call_operand.vmem [shape: bf16[17,16], index: 0, kind: input, shape index: {}]
  %s1 = inlined_call_operand.vmem [shape: f32[248,1], index: 1, kind: input, shape index: {}]
  %s2 = inlined_call_operand.vmem [shape: bf16[128,128], index: 2, kind: input, shape index: {}]
  %s3 = inlined_call_operand.vmem [shape: bf16[16,16], index: 3, kind: output, shape index: {}]
  %s4 = sld [smem:[#allocation0]]
  $region22: #{forward.13} parent=0
    _
  %s6 = ssub.s32 1, %s4
  %s7 = scalar_select 0, %s6, %s4
  // Predicated region
  $region2: #{forward.13} parent=0 // pred_check
    _
  $region3: #{forward.13} parent=0 // pred_check_branch
    %9 = sbr.rel (0) target = $region5
  $region4: #{forward.13} parent=0 // pred_region
    _
  $region5: #{forward.13} parent=0 // pred_fallthru
    _
  // Predicated region
  $region6: #{forward.13} parent=0 // pred_check
    _
  $region7: #{forward.13} parent=0 // pred_check_branch
    %11 = sbr.rel (0) target = $region9
  $region8: #{forward.13} parent=0 // pred_region
    _
  $region9: #{forward.13} parent=0 // pred_fallthru
    _
  // Predicated region
  $region10: #{forward.13} parent=0 // pred_check
    _
  $region11: #{forward.13} parent=0 // pred_check_branch
    %13 = sbr.rel (0) target = $region13
  $region12: #{forward.13} parent=0 // pred_region
    _
  $region13: #{forward.13} parent=0 // pred_fallthru
    _
  %v15 = vld [vmem:[%s0] sm:$0xf]
  %v16 = vld [vmem:[%s0 + $0x4] sm:$0xf]
  %v17 = vld [vmem:[%s0 + $0x8] sm:$0x1]
  %v18 = vld [vmem:[%s2] sm:$0xf]
  %v19 = vld [vmem:[%s2 + $0x4] sm:$0xf]
  %v20 = vld [vmem:[%s1 + $0x30] sm:$0xff]
  %v21 = vld [vmem:[%s1 + $0x38] sm:$0xff]
  %v22 = vld [vmem:[%s1] sm:$0xff]
  %v23 = vld [vmem:[%s1 + $0x8] sm:$0xff]
  %v24 = vld [vmem:[%s1 + $0x10] sm:$0x1]
  %v25 = vld [vmem:[%s1 + $0x18] sm:$0xff]
  %v26 = vld [vmem:[%s1 + $0x20] sm:$0xff]
  %v27 = vld [vmem:[%s1 + $0x28] sm:$0x1]
  %v28 = vunpack.c.l.bf16 %v15
  %v29 = vunpack.c.l.bf16 %v16
  %v30 = vunpack.c.l.bf16 %v17
  %32 = vset.pattern.permute.xlu0 0
  %33 = vperm.xlu0 %32, %v22
  %v34 = vpop.permute.xlu0 %33
  %37 = vset.pattern.permute.xlu0 0
  %38 = vperm.xlu0 %37, %v23
  %v39 = vpop.permute.xlu0 %38
  %42 = vset.pattern.permute.xlu0 0
  %43 = vperm.xlu0 %42, %v24
  %v44 = vpop.permute.xlu0 %43
  %v46 = vmul.f32 %v28, %v34
  %v47 = vmul.f32 %v29, %v39
  %v48 = vmul.f32 %v30, %v44
  %50 = vset.pattern.permute.xlu0 0
  %51 = vperm.xlu0 %50, %v25
  %v52 = vpop.permute.xlu0 %51
  %55 = vset.pattern.permute.xlu0 0
  %56 = vperm.xlu0 %55, %v26
  %v57 = vpop.permute.xlu0 %56
  %60 = vset.pattern.permute.xlu0 0
  %61 = vperm.xlu0 %60, %v27
  %v62 = vpop.permute.xlu0 %61
  %v64 = vadd.f32 %v46, %v52
  %v65 = vadd.f32 %v47, %v57
  %v66 = vadd.f32 %v48, %v62
  %v67 = vmax.f32 %v64, 0.0
  %v68 = vmax.f32 %v65, 0.0
  %v69 = vmax.f32 %v66, 0.0
  %v70 = vpack.c.bf16 %v68, %v67
  %v71 = vpack.c.bf16 %v69, %v69
  %73 = vset.pattern.permute.xlu0 0
  %74 = vperm.xlu0 %73, %v20
  %v75 = vpop.permute.xlu0 %74
  %78 = vset.pattern.permute.xlu0 0
  %79 = vperm.xlu0 %78, %v21
  %v80 = vpop.permute.xlu0 %79
  %v84 = vunpack.c.l.b16 %v18
  %v85 = vunpack.c.l.b16 %v19
  %v86 = vpack.c.b16 %v85, %v84
  %vm87 = vcmask 138240
  %v89 = vsel %vm87, %v86, 0
  %vm91 = vcmask 1040384
  %v92 = vsel 0, 4294967295, 65535
  %v93 = vsel %vm91, %v92, 0
  %v95 = vand.u32 %v71, %v93
  %97 = vmatprep.subr.bf16.mxu0 0
  %98 = vmatpush1.bf16.msra.mxu0 0
  %99 = vmatprep.subr.bf16.mxu0 0
  %100 = vmatpush1.bf16.msra.mxu0 0
  %101 = vmatprep.subr.bf16.mxu0 0
  %102 = vmatpush1.bf16.msra.mxu0 0
  %103 = vmatprep.subr.bf16.mxu0 0
  %104 = vmatpush1.bf16.msra.mxu0 0
  %105 = vmatprep.subr.bf16.mxu0 0
  %106 = vmatpush1.bf16.msra.mxu0 0
  %107 = vmatprep.subr.bf16.mxu0 0
  %108 = vmatpush1.bf16.msra.mxu0 0
  %109 = vmatprep.subr.bf16.mxu0 0
  %110 = vmatpush1.bf16.msra.mxu0 %v95
  %111 = vmatprep.subr.bf16.mxu0 0
  %112 = vmatpush1.bf16.msra.mxu0 %v70
  %113 = vmatprep.subr.bf16.mxu0 0
  %114 = vmatpush2.bf16.msra.mxu0 0
  %115 = vmatprep.subr.bf16.mxu0 0
  %116 = vmatpush2.bf16.msra.mxu0 0
  %117 = vmatprep.subr.bf16.mxu0 0
  %118 = vmatpush2.bf16.msra.mxu0 0
  %119 = vmatprep.subr.bf16.mxu0 0
  %120 = vmatpush2.bf16.msra.mxu0 0
  %121 = vmatprep.subr.bf16.mxu0 0
  %122 = vmatpush2.bf16.msra.mxu0 0
  %123 = vmatprep.subr.bf16.mxu0 0
  %124 = vmatpush2.bf16.msra.mxu0 0
  %125 = vmatprep.subr.bf16.mxu0 0
  %126 = vmatpush2.bf16.msra.mxu0 0
  %127 = vmatprep.subr.bf16.mxu0 0
  %128 = vmatpush2.bf16.msra.mxu0 0
  %129 = vmatprep.mubr.bf16.mxu0 0
  %130 = vmatmul.mubr.bf16.gmra.mxu0 %v89
  %v131 = vpop.f32.mrf.mxu0
  %v132 = vadd.f32 %v75, %v131
  %v133 = vpop.f32.mrf.mxu0
  %v134 = vpop.f32.mrf.mxu0
  %v135 = vadd.f32 %v80, %v134
  %v136 = vpop.f32.mrf.mxu0
  %137 = vdwg.mxu0
  %v138 = vlaneseq
  %v139 = vand.u32 %v138, 127
  %vm140 = vcmask 64512
  %v141 = vsel %vm140, %v132, -inf
  %142 = vmax.xlane.f32.xlu0 %v141
  %v143 = vpop.xlane.xlu0 %142
  %v144 = vsel %vm140, %v135, -inf
  %145 = vmax.xlane.f32.xlu0 %v144
  %v146 = vpop.xlane.xlu0 %145
  %vm147 = vcmp.eq.s32.totalorder %v139, 0
  %v148 = vsel %vm147, %v143, 0.0
  %v149 = vsel %vm147, %v146, 0.0
  %vm150 = vcmask 130112
  %v151 = vsel %vm150, %v132, -inf
  %152 = vmax.xlane.f32.xlu0 %v151
  %v153 = vpop.xlane.xlu0 %152
  %v154 = vsel %vm150, %v135, -inf
  %155 = vmax.xlane.f32.xlu0 %v154
  %v156 = vpop.xlane.xlu0 %155
  %vm157 = vcmp.eq.s32.totalorder %v139, 1
  %v158 = vsel %vm157, %v153, %v148
  %v159 = vsel %vm157, %v156, %v149
  %v160 = vld [vmem:[%s2 + $0x8] sm:$0xf]
  %v161 = vld [vmem:[%s2 + $0xc] sm:$0xf]
  %v162 = vld [vmem:[%s1 + $0x60] sm:$0xff]
  %v163 = vld [vmem:[%s1 + $0x68] sm:$0xff]
  %v164 = vld [vmem:[%s1 + $0x40] sm:$0xff]
  %v165 = vld [vmem:[%s1 + $0x48] sm:$0xff]
  %v166 = vld [vmem:[%s1 + $0x50] sm:$0xff]
  %v167 = vld [vmem:[%s1 + $0x58] sm:$0xff]
  %169 = vset.pattern.permute.xlu0 0
  %170 = vperm.xlu0 %169, %v164
  %v171 = vpop.permute.xlu0 %170
  %174 = vset.pattern.permute.xlu0 0
  %175 = vperm.xlu0 %174, %v165
  %v176 = vpop.permute.xlu0 %175
  %v178 = vmul.f32 %v158, %v171
  %v179 = vmul.f32 %v159, %v176
  %181 = vset.pattern.permute.xlu0 0
  %182 = vperm.xlu0 %181, %v166
  %v183 = vpop.permute.xlu0 %182
  %186 = vset.pattern.permute.xlu0 0
  %187 = vperm.xlu0 %186, %v167
  %v188 = vpop.permute.xlu0 %187
  %v190 = vadd.f32 %v178, %v183
  %v191 = vadd.f32 %v179, %v188
  %v192 = vmax.f32 %v190, 0.0
  %v193 = vmax.f32 %v191, 0.0
  %v194 = vpack.c.bf16 %v193, %v192
  %196 = vset.pattern.permute.xlu0 0
  %197 = vperm.xlu0 %196, %v162
  %v198 = vpop.permute.xlu0 %197
  %201 = vset.pattern.permute.xlu0 0
  %202 = vperm.xlu0 %201, %v163
  %v203 = vpop.permute.xlu0 %202
  %v207 = vunpack.c.l.b16 %v160
  %v208 = vunpack.c.l.b16 %v161
  %v209 = vpack.c.b16 %v208, %v207
  %vm210 = vcmask 130048
  %v212 = vsel %vm210, %v209, 0
  %214 = vmatprep.subr.bf16.mxu0 0
  %215 = vmatpush1.bf16.msra.mxu0 0
  %216 = vmatprep.subr.bf16.mxu0 0
  %217 = vmatpush1.bf16.msra.mxu0 0
  %218 = vmatprep.subr.bf16.mxu0 0
  %219 = vmatpush1.bf16.msra.mxu0 0
  %220 = vmatprep.subr.bf16.mxu0 0
  %221 = vmatpush1.bf16.msra.mxu0 0
  %222 = vmatprep.subr.bf16.mxu0 0
  %223 = vmatpush1.bf16.msra.mxu0 0
  %224 = vmatprep.subr.bf16.mxu0 0
  %225 = vmatpush1.bf16.msra.mxu0 0
  %226 = vmatprep.subr.bf16.mxu0 0
  %227 = vmatpush1.bf16.msra.mxu0 0
  %228 = vmatprep.subr.bf16.mxu0 0
  %229 = vmatpush1.bf16.msra.mxu0 %v194
  %230 = vmatprep.subr.bf16.mxu0 0
  %231 = vmatpush2.bf16.msra.mxu0 0
  %232 = vmatprep.subr.bf16.mxu0 0
  %233 = vmatpush2.bf16.msra.mxu0 0
  %234 = vmatprep.subr.bf16.mxu0 0
  %235 = vmatpush2.bf16.msra.mxu0 0
  %236 = vmatprep.subr.bf16.mxu0 0
  %237 = vmatpush2.bf16.msra.mxu0 0
  %238 = vmatprep.subr.bf16.mxu0 0
  %239 = vmatpush2.bf16.msra.mxu0 0
  %240 = vmatprep.subr.bf16.mxu0 0
  %241 = vmatpush2.bf16.msra.mxu0 0
  %242 = vmatprep.subr.bf16.mxu0 0
  %243 = vmatpush2.bf16.msra.mxu0 0
  %244 = vmatprep.subr.bf16.mxu0 0
  %245 = vmatpush2.bf16.msra.mxu0 0
  %246 = vmatprep.mubr.bf16.mxu0 0
  %247 = vmatmul.mubr.bf16.gmra.mxu0 %v212
  %v248 = vpop.f32.mrf.mxu0
  %v249 = vadd.f32 %v198, %v248
  %v250 = vpop.f32.mrf.mxu0
  %v251 = vpop.f32.mrf.mxu0
  %v252 = vadd.f32 %v203, %v251
  %v253 = vpop.f32.mrf.mxu0
  %254 = vdwg.mxu0
  %v255 = vxor.u32 %v249, 2147483648
  %v256 = vxor.u32 %v252, 2147483648
  %v257 = vmul.f32 %v255, 1.442695
  %v258 = vpow.pop %v257
  %v259 = vmul.f32 %v256, 1.442695
  %v260 = vpow.pop %v259
  %v261 = vadd.f32 %v258, 1.0
  %v262 = vadd.f32 %v260, 1.0
  %v263 = vrcp.pop %v261
  %v264 = vmul.f32 1.0, %v263
  %v265 = vrcp.pop %v262
  %v266 = vmul.f32 1.0, %v265
  %v267 = vld [vmem:[%s2 + $0x10] sm:$0xf]
  %v268 = vld [vmem:[%s2 + $0x14] sm:$0xf]
  %v269 = vld [vmem:[%s2 + $0x18] sm:$0xf]
  %v270 = vld [vmem:[%s2 + $0x1c] sm:$0xf]
  %v271 = vld [vmem:[%s1 + $0x70] sm:$0xff]
  %v272 = vld [vmem:[%s1 + $0x78] sm:$0xff]
  %v273 = vld [vmem:[%s1 + $0x80] sm:$0xff]
  %v274 = vld [vmem:[%s1 + $0x88] sm:$0xff]
  %276 = vset.pattern.permute.xlu0 0
  %277 = vperm.xlu0 %276, %v271
  %v278 = vpop.permute.xlu0 %277
  %281 = vset.pattern.permute.xlu0 0
  %282 = vperm.xlu0 %281, %v272
  %v283 = vpop.permute.xlu0 %282
  %286 = vset.pattern.permute.xlu0 0
  %287 = vperm.xlu0 %286, %v273
  %v288 = vpop.permute.xlu0 %287
  %291 = vset.pattern.permute.xlu0 0
  %292 = vperm.xlu0 %291, %v274
  %v293 = vpop.permute.xlu0 %292
  %v299 = vunpack.c.l.b16 %v267
  %v300 = vunpack.c.l.b16 %v268
  %v301 = vunpack.c.l.b16 %v269
  %v302 = vunpack.c.l.b16 %v270
  %v303 = vpack.c.b16 %v300, %v299
  %v304 = vpack.c.b16 %v302, %v301
  %v308 = vunpack.c.l.b16 %v15
  %v309 = vunpack.c.l.b16 %v16
  %v310 = vunpack.c.l.b16 %v17
  %v311 = vpack.c.b16 %v309, %v308
  %v312 = vpack.c.b16 %v310, %v310
  %v315 = vsel %vm87, %v303, 0
  %v318 = vsel %vm87, %v304, 0
  %v321 = vand.u32 %v312, %v93
  %323 = vmatprep.subr.bf16.mxu0 0
  %324 = vmatpush1.bf16.msra.mxu0 0
  %325 = vmatprep.subr.bf16.mxu0 0
  %326 = vmatpush1.bf16.msra.mxu0 0
  %327 = vmatprep.subr.bf16.mxu0 0
  %328 = vmatpush1.bf16.msra.mxu0 0
  %329 = vmatprep.subr.bf16.mxu0 0
  %330 = vmatpush1.bf16.msra.mxu0 0
  %331 = vmatprep.subr.bf16.mxu0 0
  %332 = vmatpush1.bf16.msra.mxu0 0
  %333 = vmatprep.subr.bf16.mxu0 0
  %334 = vmatpush1.bf16.msra.mxu0 0
  %335 = vmatprep.subr.bf16.mxu0 0
  %336 = vmatpush1.bf16.msra.mxu0 %v321
  %337 = vmatprep.subr.bf16.mxu0 0
  %338 = vmatpush1.bf16.msra.mxu0 %v311
  %339 = vmatprep.subr.bf16.mxu0 0
  %340 = vmatpush2.bf16.msra.mxu0 0
  %341 = vmatprep.subr.bf16.mxu0 0
  %342 = vmatpush2.bf16.msra.mxu0 0
  %343 = vmatprep.subr.bf16.mxu0 0
  %344 = vmatpush2.bf16.msra.mxu0 0
  %345 = vmatprep.subr.bf16.mxu0 0
  %346 = vmatpush2.bf16.msra.mxu0 0
  %347 = vmatprep.subr.bf16.mxu0 0
  %348 = vmatpush2.bf16.msra.mxu0 0
  %349 = vmatprep.subr.bf16.mxu0 0
  %350 = vmatpush2.bf16.msra.mxu0 0
  %351 = vmatprep.subr.bf16.mxu0 0
  %352 = vmatpush2.bf16.msra.mxu0 0
  %353 = vmatprep.subr.bf16.mxu0 0
  %354 = vmatpush2.bf16.msra.mxu0 0
  %355 = vmatprep.mubr.bf16.mxu0 0
  %356 = vmatmul.mubr.bf16.gmra.mxu0 %v315
  %v357 = vpop.f32.mrf.mxu0
  %v358 = vadd.f32 %v278, %v357
  %v359 = vpop.f32.mrf.mxu0
  %v360 = vpop.f32.mrf.mxu0
  %v361 = vadd.f32 %v283, %v360
  %v362 = vpop.f32.mrf.mxu0
  %363 = vmatprep.mubr.bf16.mxu0 0
  %364 = vmatmul.mubr.bf16.gmra.mxu0 %v318
  %v365 = vpop.f32.mrf.mxu0
  %v366 = vadd.f32 %v288, %v365
  %v367 = vpop.f32.mrf.mxu0
  %v368 = vpop.f32.mrf.mxu0
  %v369 = vadd.f32 %v293, %v368
  %v370 = vpop.f32.mrf.mxu0
  %371 = vdwg.mxu0
  %vm372 = vcmp.ge.s32.totalorder %v139, 0
  %vm373 = vcmp.lt.s32.totalorder %v139, 8
  %vm374 = vmand %vm372, %vm373
  %376 = vset.pattern.permute.xlu0 0
  %377 = vperm.xlu0 %376, %v264
  %v378 = vpop.permute.xlu0 %377
  %381 = vset.pattern.permute.xlu0 0
  %382 = vperm.xlu0 %381, %v266
  %v383 = vpop.permute.xlu0 %382
  %v385 = vsel %vm374, %v378, 0.0
  %v386 = vsel %vm374, %v383, 0.0
  %vm387 = vcmp.ge.s32.totalorder %v139, 8
  %vm388 = vcmp.lt.s32.totalorder %v139, 16
  %vm389 = vmand %vm387, %vm388
  %390 = vset.pattern.permute.xlu0 1
  %391 = vperm.xlu0 %390, %v264
  %v392 = vpop.permute.xlu0 %391
  %394 = vset.pattern.permute.xlu0 1
  %395 = vperm.xlu0 %394, %v266
  %v396 = vpop.permute.xlu0 %395
  %v398 = vsel %vm389, %v392, %v385
  %v399 = vsel %vm389, %v396, %v386
  %v400 = vmul.f32 %v398, %v358
  %v401 = vmul.f32 %v399, %v361
  %v402 = vadd.f32 %v400, %v366
  %v403 = vadd.f32 %v401, %v369
  %v404 = vld [vmem:[%s2 + $0x20] sm:$0xf]
  %v405 = vld [vmem:[%s2 + $0x24] sm:$0xf]
  %v406 = vld [vmem:[%s1 + $0xb0] sm:$0xff]
  %v407 = vld [vmem:[%s1 + $0xb8] sm:$0xff]
  %v408 = vld [vmem:[%s1 + $0x90] sm:$0xff]
  %v409 = vld [vmem:[%s1 + $0x98] sm:$0xff]
  %v410 = vld [vmem:[%s1 + $0xa0] sm:$0xff]
  %v411 = vld [vmem:[%s1 + $0xa8] sm:$0xff]
  %413 = vset.pattern.permute.xlu0 0
  %414 = vperm.xlu0 %413, %v408
  %v415 = vpop.permute.xlu0 %414
  %418 = vset.pattern.permute.xlu0 0
  %419 = vperm.xlu0 %418, %v409
  %v420 = vpop.permute.xlu0 %419
  %v422 = vmul.f32 %v402, %v415
  %v423 = vmul.f32 %v403, %v420
  %425 = vset.pattern.permute.xlu0 0
  %426 = vperm.xlu0 %425, %v410
  %v427 = vpop.permute.xlu0 %426
  %430 = vset.pattern.permute.xlu0 0
  %431 = vperm.xlu0 %430, %v411
  %v432 = vpop.permute.xlu0 %431
  %v434 = vadd.f32 %v422, %v427
  %v435 = vadd.f32 %v423, %v432
  %v436 = vmax.f32 %v434, 0.0
  %v437 = vmax.f32 %v435, 0.0
  %v438 = vpack.c.bf16 %v437, %v436
  %440 = vset.pattern.permute.xlu0 0
  %441 = vperm.xlu0 %440, %v406
  %v442 = vpop.permute.xlu0 %441
  %445 = vset.pattern.permute.xlu0 0
  %446 = vperm.xlu0 %445, %v407
  %v447 = vpop.permute.xlu0 %446
  %v451 = vunpack.c.l.b16 %v404
  %v452 = vunpack.c.l.b16 %v405
  %v453 = vpack.c.b16 %v452, %v451
  %v455 = vsel %vm210, %v453, 0
  %457 = vmatprep.subr.bf16.mxu0 0
  %458 = vmatpush1.bf16.msra.mxu0 0
  %459 = vmatprep.subr.bf16.mxu0 0
  %460 = vmatpush1.bf16.msra.mxu0 0
  %461 = vmatprep.subr.bf16.mxu0 0
  %462 = vmatpush1.bf16.msra.mxu0 0
  %463 = vmatprep.subr.bf16.mxu0 0
  %464 = vmatpush1.bf16.msra.mxu0 0
  %465 = vmatprep.subr.bf16.mxu0 0
  %466 = vmatpush1.bf16.msra.mxu0 0
  %467 = vmatprep.subr.bf16.mxu0 0
  %468 = vmatpush1.bf16.msra.mxu0 0
  %469 = vmatprep.subr.bf16.mxu0 0
  %470 = vmatpush1.bf16.msra.mxu0 0
  %471 = vmatprep.subr.bf16.mxu0 0
  %472 = vmatpush1.bf16.msra.mxu0 %v438
  %473 = vmatprep.subr.bf16.mxu0 0
  %474 = vmatpush2.bf16.msra.mxu0 0
  %475 = vmatprep.subr.bf16.mxu0 0
  %476 = vmatpush2.bf16.msra.mxu0 0
  %477 = vmatprep.subr.bf16.mxu0 0
  %478 = vmatpush2.bf16.msra.mxu0 0
  %479 = vmatprep.subr.bf16.mxu0 0
  %480 = vmatpush2.bf16.msra.mxu0 0
  %481 = vmatprep.subr.bf16.mxu0 0
  %482 = vmatpush2.bf16.msra.mxu0 0
  %483 = vmatprep.subr.bf16.mxu0 0
  %484 = vmatpush2.bf16.msra.mxu0 0
  %485 = vmatprep.subr.bf16.mxu0 0
  %486 = vmatpush2.bf16.msra.mxu0 0
  %487 = vmatprep.subr.bf16.mxu0 0
  %488 = vmatpush2.bf16.msra.mxu0 0
  %489 = vmatprep.mubr.bf16.mxu0 0
  %490 = vmatmul.mubr.bf16.gmra.mxu0 %v455
  %v491 = vpop.f32.mrf.mxu0
  %v492 = vadd.f32 %v442, %v491
  %v493 = vpop.f32.mrf.mxu0
  %v494 = vpop.f32.mrf.mxu0
  %v495 = vadd.f32 %v447, %v494
  %v496 = vpop.f32.mrf.mxu0
  %497 = vdwg.mxu0
  %v498 = vld [vmem:[%s2 + $0x28] sm:$0xf]
  %v499 = vld [vmem:[%s2 + $0x2c] sm:$0xf]
  %v500 = vld [vmem:[%s1 + $0xe0] sm:$0xff]
  %v501 = vld [vmem:[%s1 + $0xe8] sm:$0xff]
  %v502 = vld [vmem:[%s1 + $0xc0] sm:$0xff]
  %v503 = vld [vmem:[%s1 + $0xc8] sm:$0xff]
  %v504 = vld [vmem:[%s1 + $0xd0] sm:$0xff]
  %v505 = vld [vmem:[%s1 + $0xd8] sm:$0xff]
  %507 = vset.pattern.permute.xlu0 0
  %508 = vperm.xlu0 %507, %v502
  %v509 = vpop.permute.xlu0 %508
  %512 = vset.pattern.permute.xlu0 0
  %513 = vperm.xlu0 %512, %v503
  %v514 = vpop.permute.xlu0 %513
  %v516 = vmul.f32 %v492, %v509
  %v517 = vmul.f32 %v495, %v514
  %519 = vset.pattern.permute.xlu0 0
  %520 = vperm.xlu0 %519, %v504
  %v521 = vpop.permute.xlu0 %520
  %524 = vset.pattern.permute.xlu0 0
  %525 = vperm.xlu0 %524, %v505
  %v526 = vpop.permute.xlu0 %525
  %v528 = vadd.f32 %v516, %v521
  %v529 = vadd.f32 %v517, %v526
  %v530 = vmax.f32 %v528, 0.0
  %v531 = vmax.f32 %v529, 0.0
  %v532 = vpack.c.bf16 %v531, %v530
  %534 = vset.pattern.permute.xlu0 0
  %535 = vperm.xlu0 %534, %v500
  %v536 = vpop.permute.xlu0 %535
  %539 = vset.pattern.permute.xlu0 0
  %540 = vperm.xlu0 %539, %v501
  %v541 = vpop.permute.xlu0 %540
  %v545 = vunpack.c.l.b16 %v498
  %v546 = vunpack.c.l.b16 %v499
  %v547 = vpack.c.b16 %v546, %v545
  %v549 = vsel %vm210, %v547, 0
  %551 = vmatprep.subr.bf16.mxu0 0
  %552 = vmatpush1.bf16.msra.mxu0 0
  %553 = vmatprep.subr.bf16.mxu0 0
  %554 = vmatpush1.bf16.msra.mxu0 0
  %555 = vmatprep.subr.bf16.mxu0 0
  %556 = vmatpush1.bf16.msra.mxu0 0
  %557 = vmatprep.subr.bf16.mxu0 0
  %558 = vmatpush1.bf16.msra.mxu0 0
  %559 = vmatprep.subr.bf16.mxu0 0
  %560 = vmatpush1.bf16.msra.mxu0 0
  %561 = vmatprep.subr.bf16.mxu0 0
  %562 = vmatpush1.bf16.msra.mxu0 0
  %563 = vmatprep.subr.bf16.mxu0 0
  %564 = vmatpush1.bf16.msra.mxu0 0
  %565 = vmatprep.subr.bf16.mxu0 0
  %566 = vmatpush1.bf16.msra.mxu0 %v532
  %567 = vmatprep.subr.bf16.mxu0 0
  %568 = vmatpush2.bf16.msra.mxu0 0
  %569 = vmatprep.subr.bf16.mxu0 0
  %570 = vmatpush2.bf16.msra.mxu0 0
  %571 = vmatprep.subr.bf16.mxu0 0
  %572 = vmatpush2.bf16.msra.mxu0 0
  %573 = vmatprep.subr.bf16.mxu0 0
  %574 = vmatpush2.bf16.msra.mxu0 0
  %575 = vmatprep.subr.bf16.mxu0 0
  %576 = vmatpush2.bf16.msra.mxu0 0
  %577 = vmatprep.subr.bf16.mxu0 0
  %578 = vmatpush2.bf16.msra.mxu0 0
  %579 = vmatprep.subr.bf16.mxu0 0
  %580 = vmatpush2.bf16.msra.mxu0 0
  %581 = vmatprep.subr.bf16.mxu0 0
  %582 = vmatpush2.bf16.msra.mxu0 0
  %583 = vmatprep.mubr.bf16.mxu0 0
  %584 = vmatmul.mubr.bf16.gmra.mxu0 %v549
  %v585 = vpop.f32.mrf.mxu0
  %v586 = vadd.f32 %v536, %v585
  %v587 = vpop.f32.mrf.mxu0
  %v588 = vpop.f32.mrf.mxu0
  %v589 = vadd.f32 %v541, %v588
  %v590 = vpop.f32.mrf.mxu0
  %591 = vdwg.mxu0
  %v592 = vld [vmem:[%s2 + $0x30] sm:$0xf]
  %v593 = vld [vmem:[%s2 + $0x34] sm:$0xf]
  %v594 = vld [vmem:[%s2 + $0x38] sm:$0xf]
  %v595 = vld [vmem:[%s2 + $0x3c] sm:$0xf]
  %v596 = vld [vmem:[%s1 + $0xf0] sm:$0x1]
  %v597 = vpack.c.bf16 %v589, %v586
  %v600 = vunpack.c.l.b16 %v592
  %v601 = vunpack.c.l.b16 %v593
  %v602 = vpack.c.b16 %v601, %v600
  %v604 = vsel %vm210, %v602, 0
  %606 = vmatprep.subr.bf16.mxu0 0
  %607 = vmatpush1.bf16.msra.mxu0 0
  %608 = vmatprep.subr.bf16.mxu0 0
  %609 = vmatpush1.bf16.msra.mxu0 0
  %610 = vmatprep.subr.bf16.mxu0 0
  %611 = vmatpush1.bf16.msra.mxu0 0
  %612 = vmatprep.subr.bf16.mxu0 0
  %613 = vmatpush1.bf16.msra.mxu0 0
  %614 = vmatprep.subr.bf16.mxu0 0
  %615 = vmatpush1.bf16.msra.mxu0 0
  %616 = vmatprep.subr.bf16.mxu0 0
  %617 = vmatpush1.bf16.msra.mxu0 0
  %618 = vmatprep.subr.bf16.mxu0 0
  %619 = vmatpush1.bf16.msra.mxu0 0
  %620 = vmatprep.subr.bf16.mxu0 0
  %621 = vmatpush1.bf16.msra.mxu0 %v597
  %622 = vmatprep.subr.bf16.mxu0 0
  %623 = vmatpush2.bf16.msra.mxu0 0
  %624 = vmatprep.subr.bf16.mxu0 0
  %625 = vmatpush2.bf16.msra.mxu0 0
  %626 = vmatprep.subr.bf16.mxu0 0
  %627 = vmatpush2.bf16.msra.mxu0 0
  %628 = vmatprep.subr.bf16.mxu0 0
  %629 = vmatpush2.bf16.msra.mxu0 0
  %630 = vmatprep.subr.bf16.mxu0 0
  %631 = vmatpush2.bf16.msra.mxu0 0
  %632 = vmatprep.subr.bf16.mxu0 0
  %633 = vmatpush2.bf16.msra.mxu0 0
  %634 = vmatprep.subr.bf16.mxu0 0
  %635 = vmatpush2.bf16.msra.mxu0 0
  %636 = vmatprep.subr.bf16.mxu0 0
  %637 = vmatpush2.bf16.msra.mxu0 0
  %638 = vmatprep.mubr.bf16.mxu0 0
  %639 = vmatmul.mubr.bf16.gmra.mxu0 %v604
  %v640 = vpop.f32.mrf.mxu0
  %v641 = vadd.f32 0.0, %v640
  %v642 = vpop.f32.mrf.mxu0
  %v643 = vpop.f32.mrf.mxu0
  %v644 = vadd.f32 0.0, %v643
  %v645 = vpop.f32.mrf.mxu0
  %646 = vdwg.mxu0
  %v649 = vunpack.c.l.b16 %v594
  %v650 = vunpack.c.l.b16 %v595
  %v651 = vpack.c.b16 %v650, %v649
  %v653 = vsel %vm210, %v651, 0
  %655 = vmatprep.subr.bf16.mxu0 0
  %656 = vmatpush1.bf16.msra.mxu0 0
  %657 = vmatprep.subr.bf16.mxu0 0
  %658 = vmatpush1.bf16.msra.mxu0 0
  %659 = vmatprep.subr.bf16.mxu0 0
  %660 = vmatpush1.bf16.msra.mxu0 0
  %661 = vmatprep.subr.bf16.mxu0 0
  %662 = vmatpush1.bf16.msra.mxu0 0
  %663 = vmatprep.subr.bf16.mxu0 0
  %664 = vmatpush1.bf16.msra.mxu0 0
  %665 = vmatprep.subr.bf16.mxu0 0
  %666 = vmatpush1.bf16.msra.mxu0 0
  %667 = vmatprep.subr.bf16.mxu0 0
  %668 = vmatpush1.bf16.msra.mxu0 0
  %669 = vmatprep.subr.bf16.mxu0 0
  %670 = vmatpush1.bf16.msra.mxu0 %v597
  %671 = vmatprep.subr.bf16.mxu0 0
  %672 = vmatpush2.bf16.msra.mxu0 0
  %673 = vmatprep.subr.bf16.mxu0 0
  %674 = vmatpush2.bf16.msra.mxu0 0
  %675 = vmatprep.subr.bf16.mxu0 0
  %676 = vmatpush2.bf16.msra.mxu0 0
  %677 = vmatprep.subr.bf16.mxu0 0
  %678 = vmatpush2.bf16.msra.mxu0 0
  %679 = vmatprep.subr.bf16.mxu0 0
  %680 = vmatpush2.bf16.msra.mxu0 0
  %681 = vmatprep.subr.bf16.mxu0 0
  %682 = vmatpush2.bf16.msra.mxu0 0
  %683 = vmatprep.subr.bf16.mxu0 0
  %684 = vmatpush2.bf16.msra.mxu0 0
  %685 = vmatprep.subr.bf16.mxu0 0
  %686 = vmatpush2.bf16.msra.mxu0 0
  %687 = vmatprep.mubr.bf16.mxu0 0
  %688 = vmatmul.mubr.bf16.gmra.mxu0 %v653
  %v689 = vpop.f32.mrf.mxu0
  %v690 = vadd.f32 0.0, %v689
  %v691 = vpop.f32.mrf.mxu0
  %v692 = vpop.f32.mrf.mxu0
  %v693 = vadd.f32 0.0, %v692
  %v694 = vpop.f32.mrf.mxu0
  %695 = vdwg.mxu0
  %v696 = vpack.c.bf16 %v644, %v641
  %697 = vxpose.xlu0.c.b16.start [1/8] %v597, 128
  %698 = vxpose.xlu0.c.b16.cont [2/8] 0, 128
  %699 = vxpose.xlu0.c.b16.cont [3/8] 0, 128
  %700 = vxpose.xlu0.c.b16.cont [4/8] 0, 128
  %701 = vxpose.xlu0.c.b16.cont [5/8] 0, 128
  %702 = vxpose.xlu0.c.b16.cont [6/8] 0, 128
  %703 = vxpose.xlu0.c.b16.cont [7/8] 0, 128
  %704 = vxpose.xlu0.c.b16.end [8/8] 0, 128
  %v705 = vpop.trf.xlu0
  %v706 = vpop.trf.xlu0
  %v707 = vpop.trf.xlu0
  %v708 = vpop.trf.xlu0
  %v709 = vpop.trf.xlu0
  %v710 = vpop.trf.xlu0
  %v711 = vpop.trf.xlu0
  %v712 = vpop.trf.xlu0
  %v714 = vsel %vm210, %v705, 0
  %716 = vmatprep.subr.bf16.mxu0 0
  %717 = vmatpush1.bf16.msra.mxu0 0
  %718 = vmatprep.subr.bf16.mxu0 0
  %719 = vmatpush1.bf16.msra.mxu0 0
  %720 = vmatprep.subr.bf16.mxu0 0
  %721 = vmatpush1.bf16.msra.mxu0 0
  %722 = vmatprep.subr.bf16.mxu0 0
  %723 = vmatpush1.bf16.msra.mxu0 0
  %724 = vmatprep.subr.bf16.mxu0 0
  %725 = vmatpush1.bf16.msra.mxu0 0
  %726 = vmatprep.subr.bf16.mxu0 0
  %727 = vmatpush1.bf16.msra.mxu0 0
  %728 = vmatprep.subr.bf16.mxu0 0
  %729 = vmatpush1.bf16.msra.mxu0 0
  %730 = vmatprep.subr.bf16.mxu0 0
  %731 = vmatpush1.bf16.msra.mxu0 %v696
  %732 = vmatprep.subr.bf16.mxu0 0
  %733 = vmatpush2.bf16.msra.mxu0 0
  %734 = vmatprep.subr.bf16.mxu0 0
  %735 = vmatpush2.bf16.msra.mxu0 0
  %736 = vmatprep.subr.bf16.mxu0 0
  %737 = vmatpush2.bf16.msra.mxu0 0
  %738 = vmatprep.subr.bf16.mxu0 0
  %739 = vmatpush2.bf16.msra.mxu0 0
  %740 = vmatprep.subr.bf16.mxu0 0
  %741 = vmatpush2.bf16.msra.mxu0 0
  %742 = vmatprep.subr.bf16.mxu0 0
  %743 = vmatpush2.bf16.msra.mxu0 0
  %744 = vmatprep.subr.bf16.mxu0 0
  %745 = vmatpush2.bf16.msra.mxu0 0
  %746 = vmatprep.subr.bf16.mxu0 0
  %747 = vmatpush2.bf16.msra.mxu0 0
  %748 = vmatprep.mubr.bf16.mxu0 0
  %749 = vmatmul.mubr.bf16.gmra.mxu0 %v714
  %v750 = vpop.f32.mrf.mxu0
  %v751 = vadd.f32 0.0, %v750
  %v752 = vpop.f32.mrf.mxu0
  %v753 = vpop.f32.mrf.mxu0
  %v754 = vpop.f32.mrf.mxu0
  %755 = vdwg.mxu0
  %v756 = vsel %vm140, %v751, -inf
  %v757 = vrot.slane %v756, 4
  %v758 = vmax.f32 %v756, %v757
  %v759 = vrot.slane %v758, 2
  %v760 = vmax.f32 %v758, %v759
  %v761 = vrot.slane %v760, 1
  %v762 = vmax.f32 %v760, %v761
  %v763 = vsub.f32 %v751, %v762
  %v764 = vmul.f32 %v763, 1.442695
  %v765 = vpow.pop %v764
  %v766 = vsel %vm140, %v765, 0.0
  %v767 = vrot.slane %v766, 4
  %v768 = vadd.f32 %v766, %v767
  %v769 = vrot.slane %v768, 2
  %v770 = vadd.f32 %v768, %v769
  %v771 = vrot.slane %v770, 1
  %v772 = vadd.f32 %v770, %v771
  %v773 = vrcp.pop %v772
  %v774 = vmul.f32 %v765, %v773
  %v775 = vpack.c.bf16 %v693, %v690
  %v776 = vpack.c.bf16 %v774, %v774
  %v778 = vsel %vm140, %v775, 0
  %vm780 = vcmask 1043456
  %v782 = vsel %vm780, %v776, 0
  %784 = vmatprep.subr.bf16.mxu0 0
  %785 = vmatpush1.bf16.msra.mxu0 0
  %786 = vmatprep.subr.bf16.mxu0 0
  %787 = vmatpush1.bf16.msra.mxu0 0
  %788 = vmatprep.subr.bf16.mxu0 0
  %789 = vmatpush1.bf16.msra.mxu0 0
  %790 = vmatprep.subr.bf16.mxu0 0
  %791 = vmatpush1.bf16.msra.mxu0 0
  %792 = vmatprep.subr.bf16.mxu0 0
  %793 = vmatpush1.bf16.msra.mxu0 0
  %794 = vmatprep.subr.bf16.mxu0 0
  %795 = vmatpush1.bf16.msra.mxu0 0
  %796 = vmatprep.subr.bf16.mxu0 0
  %797 = vmatpush1.bf16.msra.mxu0 0
  %798 = vmatprep.subr.bf16.mxu0 0
  %799 = vmatpush1.bf16.msra.mxu0 %v782
  %800 = vmatprep.subr.bf16.mxu0 0
  %801 = vmatpush2.bf16.msra.mxu0 0
  %802 = vmatprep.subr.bf16.mxu0 0
  %803 = vmatpush2.bf16.msra.mxu0 0
  %804 = vmatprep.subr.bf16.mxu0 0
  %805 = vmatpush2.bf16.msra.mxu0 0
  %806 = vmatprep.subr.bf16.mxu0 0
  %807 = vmatpush2.bf16.msra.mxu0 0
  %808 = vmatprep.subr.bf16.mxu0 0
  %809 = vmatpush2.bf16.msra.mxu0 0
  %810 = vmatprep.subr.bf16.mxu0 0
  %811 = vmatpush2.bf16.msra.mxu0 0
  %812 = vmatprep.subr.bf16.mxu0 0
  %813 = vmatpush2.bf16.msra.mxu0 0
  %814 = vmatprep.subr.bf16.mxu0 0
  %815 = vmatpush2.bf16.msra.mxu0 0
  %816 = vmatprep.mubr.bf16.mxu0 0
  %817 = vmatmul.mubr.bf16.gmra.mxu0 %v778
  %v818 = vpop.f32.mrf.mxu0
  %v819 = vadd.f32 0.0, %v818
  %v820 = vpop.f32.mrf.mxu0
  %v821 = vpop.f32.mrf.mxu0
  %v822 = vadd.f32 0.0, %v821
  %v823 = vpop.f32.mrf.mxu0
  %824 = vdwg.mxu0
  %s826 = vtos %v596
  %v827 = vstv %s826
  %v829 = vmul.f32 %v827, %v819
  %v830 = vmul.f32 %v827, %v822
  %v831 = vadd.f32 %v829, %v586
  %v832 = vadd.f32 %v830, %v589
  %v833 = vpack.c.bf16 %v832, %v831
  %v835 = vunpack.c.l.b16 %v833
  %v836 = vunpack.c.h.b16 %v833
  %v837 = vpack.c.b16 %v835, %v835
  %v838 = vpack.c.b16 %v836, %v836
  %vm841 = vcmask 60416
  %842 = vst.msk [vmem:[%s3] sm:$0xf] %vm841, %v837
  %843 = vst.msk [vmem:[%s3 + $0x4] sm:$0xf] %vm841, %v838
  %845 = vrot.lane.b32.xlu0 %v597, 120
  %v846 = vpop.permute.xlu0 %845
  %848 = vxpose.xlu0.c.b16.start [1/8] %v846, 128
  %849 = vxpose.xlu0.c.b16.cont [2/8] 0, 128
  %850 = vxpose.xlu0.c.b16.cont [3/8] 0, 128
  %851 = vxpose.xlu0.c.b16.cont [4/8] 0, 128
  %852 = vxpose.xlu0.c.b16.cont [5/8] 0, 128
  %853 = vxpose.xlu0.c.b16.cont [6/8] 0, 128
  %854 = vxpose.xlu0.c.b16.cont [7/8] 0, 128
  %855 = vxpose.xlu0.c.b16.end [8/8] 0, 128
  %v856 = vpop.trf.xlu0
  %v857 = vpop.trf.xlu0
  %v858 = vpop.trf.xlu0
  %v859 = vpop.trf.xlu0
  %v860 = vpop.trf.xlu0
  %v861 = vpop.trf.xlu0
  %v862 = vpop.trf.xlu0
  %v863 = vpop.trf.xlu0
  %865 = vrot.lane.b32.xlu0 %v696, 120
  %v866 = vpop.permute.xlu0 %865
  %v869 = vsel %vm210, %v856, 0
  %871 = vmatprep.subr.bf16.mxu0 0
  %872 = vmatpush1.bf16.msra.mxu0 0
  %873 = vmatprep.subr.bf16.mxu0 0
  %874 = vmatpush1.bf16.msra.mxu0 0
  %875 = vmatprep.subr.bf16.mxu0 0
  %876 = vmatpush1.bf16.msra.mxu0 0
  %877 = vmatprep.subr.bf16.mxu0 0
  %878 = vmatpush1.bf16.msra.mxu0 0
  %879 = vmatprep.subr.bf16.mxu0 0
  %880 = vmatpush1.bf16.msra.mxu0 0
  %881 = vmatprep.subr.bf16.mxu0 0
  %882 = vmatpush1.bf16.msra.mxu0 0
  %883 = vmatprep.subr.bf16.mxu0 0
  %884 = vmatpush1.bf16.msra.mxu0 0
  %885 = vmatprep.subr.bf16.mxu0 0
  %886 = vmatpush1.bf16.msra.mxu0 %v866
  %887 = vmatprep.subr.bf16.mxu0 0
  %888 = vmatpush2.bf16.msra.mxu0 0
  %889 = vmatprep.subr.bf16.mxu0 0
  %890 = vmatpush2.bf16.msra.mxu0 0
  %891 = vmatprep.subr.bf16.mxu0 0
  %892 = vmatpush2.bf16.msra.mxu0 0
  %893 = vmatprep.subr.bf16.mxu0 0
  %894 = vmatpush2.bf16.msra.mxu0 0
  %895 = vmatprep.subr.bf16.mxu0 0
  %896 = vmatpush2.bf16.msra.mxu0 0
  %897 = vmatprep.subr.bf16.mxu0 0
  %898 = vmatpush2.bf16.msra.mxu0 0
  %899 = vmatprep.subr.bf16.mxu0 0
  %900 = vmatpush2.bf16.msra.mxu0 0
  %901 = vmatprep.subr.bf16.mxu0 0
  %902 = vmatpush2.bf16.msra.mxu0 0
  %903 = vmatprep.mubr.bf16.mxu0 0
  %904 = vmatmul.mubr.bf16.gmra.mxu0 %v869
  %v905 = vpop.f32.mrf.mxu0
  %v906 = vadd.f32 0.0, %v905
  %v907 = vpop.f32.mrf.mxu0
  %v908 = vpop.f32.mrf.mxu0
  %v909 = vpop.f32.mrf.mxu0
  %910 = vdwg.mxu0
  %v911 = vsel %vm140, %v906, -inf
  %v912 = vrot.slane %v911, 4
  %v913 = vmax.f32 %v911, %v912
  %v914 = vrot.slane %v913, 2
  %v915 = vmax.f32 %v913, %v914
  %v916 = vrot.slane %v915, 1
  %v917 = vmax.f32 %v915, %v916
  %v918 = vsub.f32 %v906, %v917
  %v919 = vmul.f32 %v918, 1.442695
  %v920 = vpow.pop %v919
  %v921 = vsel %vm140, %v920, 0.0
  %v922 = vrot.slane %v921, 4
  %v923 = vadd.f32 %v921, %v922
  %v924 = vrot.slane %v923, 2
  %v925 = vadd.f32 %v923, %v924
  %v926 = vrot.slane %v925, 1
  %v927 = vadd.f32 %v925, %v926
  %v928 = vrcp.pop %v927
  %v929 = vmul.f32 %v920, %v928
  %v930 = vpack.c.bf16 %v929, %v929
  %932 = vrot.lane.b32.xlu0 %v775, 120
  %v933 = vpop.permute.xlu0 %932
  %v935 = vsel %vm140, %v933, 0
  %v938 = vsel %vm780, %v930, 0
  %940 = vmatprep.subr.bf16.mxu0 0
  %941 = vmatpush1.bf16.msra.mxu0 0
  %942 = vmatprep.subr.bf16.mxu0 0
  %943 = vmatpush1.bf16.msra.mxu0 0
  %944 = vmatprep.subr.bf16.mxu0 0
  %945 = vmatpush1.bf16.msra.mxu0 0
  %946 = vmatprep.subr.bf16.mxu0 0
  %947 = vmatpush1.bf16.msra.mxu0 0
  %948 = vmatprep.subr.bf16.mxu0 0
  %949 = vmatpush1.bf16.msra.mxu0 0
  %950 = vmatprep.subr.bf16.mxu0 0
  %951 = vmatpush1.bf16.msra.mxu0 0
  %952 = vmatprep.subr.bf16.mxu0 0
  %953 = vmatpush1.bf16.msra.mxu0 0
  %954 = vmatprep.subr.bf16.mxu0 0
  %955 = vmatpush1.bf16.msra.mxu0 %v938
  %956 = vmatprep.subr.bf16.mxu0 0
  %957 = vmatpush2.bf16.msra.mxu0 0
  %958 = vmatprep.subr.bf16.mxu0 0
  %959 = vmatpush2.bf16.msra.mxu0 0
  %960 = vmatprep.subr.bf16.mxu0 0
  %961 = vmatpush2.bf16.msra.mxu0 0
  %962 = vmatprep.subr.bf16.mxu0 0
  %963 = vmatpush2.bf16.msra.mxu0 0
  %964 = vmatprep.subr.bf16.mxu0 0
  %965 = vmatpush2.bf16.msra.mxu0 0
  %966 = vmatprep.subr.bf16.mxu0 0
  %967 = vmatpush2.bf16.msra.mxu0 0
  %968 = vmatprep.subr.bf16.mxu0 0
  %969 = vmatpush2.bf16.msra.mxu0 0
  %970 = vmatprep.subr.bf16.mxu0 0
  %971 = vmatpush2.bf16.msra.mxu0 0
  %972 = vmatprep.mubr.bf16.mxu0 0
  %973 = vmatmul.mubr.bf16.gmra.mxu0 %v935
  %v974 = vpop.f32.mrf.mxu0
  %v975 = vadd.f32 0.0, %v974
  %v976 = vpop.f32.mrf.mxu0
  %v977 = vpop.f32.mrf.mxu0
  %v978 = vadd.f32 0.0, %v977
  %v979 = vpop.f32.mrf.mxu0
  %980 = vdwg.mxu0
  %v981 = vmul.f32 %v827, %v975
  %v982 = vmul.f32 %v827, %v978
  %985 = vrot.lane.b32.xlu0 %v586, 120
  %v986 = vpop.permute.xlu0 %985
  %987 = vrot.lane.b32.xlu0 %v589, 120
  %v988 = vpop.permute.xlu0 %987
  %v991 = vadd.f32 %v981, %v986
  %v992 = vadd.f32 %v982, %v988
  %v993 = vpack.c.bf16 %v992, %v991
  %v995 = vunpack.c.l.b16 %v993
  %v996 = vunpack.c.h.b16 %v993
  %v997 = vpack.c.b16 %v995, %v995
  %v998 = vpack.c.b16 %v996, %v996
  %999 = vrot.lane.b32.xlu0 %v997, 8
  %v1000 = vpop.permute.xlu0 %999
  %1001 = vrot.lane.b32.xlu0 %v998, 8
  %v1002 = vpop.permute.xlu0 %1001
  %vm1005 = vcmask 126016
  %1006 = vst.msk [vmem:[%s3] sm:$0xf] %vm1005, %v1000
  %1007 = vst.msk [vmem:[%s3 + $0x4] sm:$0xf] %vm1005, %v1002
  // Predicated region
  $region14: #{forward.13} parent=0 // pred_check
    _
  $region15: #{forward.13} parent=0 // pred_check_branch
    %1009 = sbr.rel (0) target = $region17
  $region16: #{forward.13} parent=0 // pred_region
    _
  $region17: #{forward.13} parent=0 // pred_fallthru
    _
  // Predicated region
  $region18: #{forward.13} parent=0 // pred_check
    _
  $region19: #{forward.13} parent=0 // pred_check_branch
    %1011 = sbr.rel (0) target = $region21
  $region20: #{forward.13} parent=0 // pred_region
    _
  $region21: #{forward.13} parent=0 // pred_fallthru
    _

// kernel: forward.16
$region0: #{forward.16}
  #allocation0 [shape = 'u32[]', space=smem, size = 0x4, offset = 0x4, fixed_abs, tag = 'smem constant byte address 0x4 - core index']
  #allocation1 [shape = 'u32[144,128]{1,0:T(1,128)}', space=vmem, size = 0x12000, scoped, tag = 'internal scratch']
  %s0 = inlined_call_operand.vmem [shape: bf16[16,64], index: 0, kind: input, shape index: {}]
  %s1 = inlined_call_operand.vmem [shape: bf16[16,128], index: 1, kind: input, shape index: {}]
  %s2 = inlined_call_operand.vmem [shape: f32[224,1], index: 2, kind: input, shape index: {}]
  %s3 = inlined_call_operand.vmem [shape: bf16[144,128], index: 3, kind: input, shape index: {}]
  %s4 = inlined_call_operand.vmem [shape: bf16[16,128], index: 4, kind: output, shape index: {}]
  %s5 = sld [smem:[#allocation0]]
  $region26: #{forward.16} parent=0
    _
  %s7 = ssub.s32 1, %s5
  %s8 = scalar_select 0, %s7, %s5
  // Predicated region
  $region2: #{forward.16} parent=0 // pred_check
    _
  $region3: #{forward.16} parent=0 // pred_check_branch
    %10 = sbr.rel (0) target = $region5
  $region4: #{forward.16} parent=0 // pred_region
    _
  $region5: #{forward.16} parent=0 // pred_fallthru
    _
  // Predicated region
  $region6: #{forward.16} parent=0 // pred_check
    _
  $region7: #{forward.16} parent=0 // pred_check_branch
    %12 = sbr.rel (0) target = $region9
  $region8: #{forward.16} parent=0 // pred_region
    _
  $region9: #{forward.16} parent=0 // pred_fallthru
    _
  // Predicated region
  $region10: #{forward.16} parent=0 // pred_check
    _
  $region11: #{forward.16} parent=0 // pred_check_branch
    %14 = sbr.rel (0) target = $region13
  $region12: #{forward.16} parent=0 // pred_region
    _
  $region13: #{forward.16} parent=0 // pred_fallthru
    _
  // Predicated region
  $region14: #{forward.16} parent=0 // pred_check
    _
  $region15: #{forward.16} parent=0 // pred_check_branch
    %16 = sbr.rel (0) target = $region17
  $region16: #{forward.16} parent=0 // pred_region
    _
  $region17: #{forward.16} parent=0 // pred_fallthru
    _
  %v18 = vld [vmem:[%s0] sm:$0xf]
  %v19 = vld [vmem:[%s0 + $0x4] sm:$0xf]
  %v20 = vld [vmem:[%s1] sm:$0xf]
  %v21 = vld [vmem:[%s1 + $0x4] sm:$0xf]
  %v22 = vld [vmem:[%s3] sm:$0xf]
  %v23 = vld [vmem:[%s3 + $0x4] sm:$0xf]
  %v24 = vld [vmem:[%s2] sm:$0xff]
  %v25 = vld [vmem:[%s2 + $0x8] sm:$0xff]
  %27 = vset.pattern.permute.xlu0 0
  %28 = vperm.xlu0 %27, %v24
  %v29 = vpop.permute.xlu0 %28
  %32 = vset.pattern.permute.xlu0 0
  %33 = vperm.xlu0 %32, %v25
  %v34 = vpop.permute.xlu0 %33
  %v38 = vunpack.c.l.b16 %v22
  %v39 = vunpack.c.l.b16 %v23
  %v40 = vpack.c.b16 %v39, %v38
  %v43 = vunpack.c.l.b16 %v18
  %v44 = vunpack.c.l.b16 %v19
  %v45 = vpack.c.b16 %v44, %v43
  %vm47 = vcmask 130048
  %v49 = vsel %vm47, %v40, 0
  %51 = vmatprep.subr.bf16.mxu0 0
  %52 = vmatpush1.bf16.msra.mxu0 0
  %53 = vmatprep.subr.bf16.mxu0 0
  %54 = vmatpush1.bf16.msra.mxu0 0
  %55 = vmatprep.subr.bf16.mxu0 0
  %56 = vmatpush1.bf16.msra.mxu0 0
  %57 = vmatprep.subr.bf16.mxu0 0
  %58 = vmatpush1.bf16.msra.mxu0 0
  %59 = vmatprep.subr.bf16.mxu0 0
  %60 = vmatpush1.bf16.msra.mxu0 0
  %61 = vmatprep.subr.bf16.mxu0 0
  %62 = vmatpush1.bf16.msra.mxu0 0
  %63 = vmatprep.subr.bf16.mxu0 0
  %64 = vmatpush1.bf16.msra.mxu0 0
  %65 = vmatprep.subr.bf16.mxu0 0
  %66 = vmatpush1.bf16.msra.mxu0 %v45
  %67 = vmatprep.subr.bf16.mxu0 0
  %68 = vmatpush2.bf16.msra.mxu0 0
  %69 = vmatprep.subr.bf16.mxu0 0
  %70 = vmatpush2.bf16.msra.mxu0 0
  %71 = vmatprep.subr.bf16.mxu0 0
  %72 = vmatpush2.bf16.msra.mxu0 0
  %73 = vmatprep.subr.bf16.mxu0 0
  %74 = vmatpush2.bf16.msra.mxu0 0
  %75 = vmatprep.subr.bf16.mxu0 0
  %76 = vmatpush2.bf16.msra.mxu0 0
  %77 = vmatprep.subr.bf16.mxu0 0
  %78 = vmatpush2.bf16.msra.mxu0 0
  %79 = vmatprep.subr.bf16.mxu0 0
  %80 = vmatpush2.bf16.msra.mxu0 0
  %81 = vmatprep.subr.bf16.mxu0 0
  %82 = vmatpush2.bf16.msra.mxu0 0
  %83 = vmatprep.mubr.bf16.mxu0 0
  %84 = vmatmul.mubr.bf16.gmra.mxu0 %v49
  %v85 = vpop.f32.mrf.mxu0
  %v86 = vadd.f32 %v29, %v85
  %v87 = vpop.f32.mrf.mxu0
  %v88 = vpop.f32.mrf.mxu0
  %v89 = vadd.f32 %v34, %v88
  %v90 = vpop.f32.mrf.mxu0
  %91 = vdwg.mxu0
  %v92 = vlaneseq
  %v93 = vand.u32 %v92, 127
  %vm94 = vcmask 261120
  %v95 = vsel %vm94, %v86, -inf
  %96 = vmax.xlane.f32.xlu0 %v95
  %v97 = vpop.xlane.xlu0 %96
  %v98 = vsel %vm94, %v89, -inf
  %99 = vmax.xlane.f32.xlu0 %v98
  %v100 = vpop.xlane.xlu0 %99
  %vm101 = vcmp.eq.s32.totalorder %v93, 0
  %v102 = vsel %vm101, %v97, 0.0
  %v103 = vsel %vm101, %v100, 0.0
  %vm104 = vcmask 523520
  %v105 = vsel %vm104, %v86, -inf
  %106 = vmax.xlane.f32.xlu0 %v105
  %v107 = vpop.xlane.xlu0 %106
  %v108 = vsel %vm104, %v89, -inf
  %109 = vmax.xlane.f32.xlu0 %v108
  %v110 = vpop.xlane.xlu0 %109
  %vm111 = vcmp.eq.s32.totalorder %v93, 1
  %v112 = vsel %vm111, %v107, %v102
  %v113 = vsel %vm111, %v110, %v103
  %v114 = vld [vmem:[%s2 + $0x10] sm:$0xff]
  %v115 = vld [vmem:[%s2 + $0x18] sm:$0xff]
  %117 = vset.pattern.permute.xlu0 0
  %118 = vperm.xlu0 %117, %v114
  %v119 = vpop.permute.xlu0 %118
  %122 = vset.pattern.permute.xlu0 0
  %123 = vperm.xlu0 %122, %v115
  %v124 = vpop.permute.xlu0 %123
  %v126 = vmul.f32 %v112, %v119
  %v127 = vmul.f32 %v113, %v124
  %v128 = vld [vmem:[%s2 + $0x20] sm:$0xff]
  %v129 = vld [vmem:[%s2 + $0x28] sm:$0xff]
  %131 = vset.pattern.permute.xlu0 0
  %132 = vperm.xlu0 %131, %v128
  %v133 = vpop.permute.xlu0 %132
  %136 = vset.pattern.permute.xlu0 0
  %137 = vperm.xlu0 %136, %v129
  %v138 = vpop.permute.xlu0 %137
  %v140 = vadd.f32 %v126, %v133
  %v141 = vadd.f32 %v127, %v138
  %v142 = vmax.f32 %v140, 0.0
  %v143 = vmax.f32 %v141, 0.0
  %v144 = vunpack.c.l.bf16 %v20
  %v145 = vunpack.c.l.bf16 %v21
  %v146 = vld [vmem:[%s2 + $0x30] sm:$0xff]
  %v147 = vld [vmem:[%s2 + $0x38] sm:$0xff]
  %149 = vset.pattern.permute.xlu0 0
  %150 = vperm.xlu0 %149, %v146
  %v151 = vpop.permute.xlu0 %150
  %154 = vset.pattern.permute.xlu0 0
  %155 = vperm.xlu0 %154, %v147
  %v156 = vpop.permute.xlu0 %155
  %v158 = vmul.f32 %v144, %v151
  %v159 = vmul.f32 %v145, %v156
  %v160 = vld [vmem:[%s2 + $0x40] sm:$0xff]
  %v161 = vld [vmem:[%s2 + $0x48] sm:$0xff]
  %163 = vset.pattern.permute.xlu0 0
  %164 = vperm.xlu0 %163, %v160
  %v165 = vpop.permute.xlu0 %164
  %168 = vset.pattern.permute.xlu0 0
  %169 = vperm.xlu0 %168, %v161
  %v170 = vpop.permute.xlu0 %169
  %v172 = vadd.f32 %v158, %v165
  %v173 = vadd.f32 %v159, %v170
  %v174 = vmax.f32 %v172, 0.0
  %v175 = vmax.f32 %v173, 0.0
  %v176 = vld [vmem:[%s3 + $0x8] sm:$0xf]
  %v177 = vld [vmem:[%s3 + $0xc] sm:$0xf]
  %v178 = vld [vmem:[%s3 + $0x10] sm:$0xf]
  %v179 = vld [vmem:[%s3 + $0x14] sm:$0xf]
  %v180 = vpack.c.bf16 %v143, %v142
  %v181 = vld [vmem:[%s2 + $0x50] sm:$0xff]
  %v182 = vld [vmem:[%s2 + $0x58] sm:$0xff]
  %184 = vset.pattern.permute.xlu0 0
  %185 = vperm.xlu0 %184, %v181
  %v186 = vpop.permute.xlu0 %185
  %189 = vset.pattern.permute.xlu0 0
  %190 = vperm.xlu0 %189, %v182
  %v191 = vpop.permute.xlu0 %190
  %v195 = vunpack.c.l.b16 %v176
  %v196 = vunpack.c.l.b16 %v177
  %v197 = vpack.c.b16 %v196, %v195
  %v199 = vsel %vm47, %v197, 0
  %201 = vmatprep.subr.bf16.mxu0 0
  %202 = vmatpush1.bf16.msra.mxu0 0
  %203 = vmatprep.subr.bf16.mxu0 0
  %204 = vmatpush1.bf16.msra.mxu0 0
  %205 = vmatprep.subr.bf16.mxu0 0
  %206 = vmatpush1.bf16.msra.mxu0 0
  %207 = vmatprep.subr.bf16.mxu0 0
  %208 = vmatpush1.bf16.msra.mxu0 0
  %209 = vmatprep.subr.bf16.mxu0 0
  %210 = vmatpush1.bf16.msra.mxu0 0
  %211 = vmatprep.subr.bf16.mxu0 0
  %212 = vmatpush1.bf16.msra.mxu0 0
  %213 = vmatprep.subr.bf16.mxu0 0
  %214 = vmatpush1.bf16.msra.mxu0 0
  %215 = vmatprep.subr.bf16.mxu0 0
  %216 = vmatpush1.bf16.msra.mxu0 %v180
  %217 = vmatprep.subr.bf16.mxu0 0
  %218 = vmatpush2.bf16.msra.mxu0 0
  %219 = vmatprep.subr.bf16.mxu0 0
  %220 = vmatpush2.bf16.msra.mxu0 0
  %221 = vmatprep.subr.bf16.mxu0 0
  %222 = vmatpush2.bf16.msra.mxu0 0
  %223 = vmatprep.subr.bf16.mxu0 0
  %224 = vmatpush2.bf16.msra.mxu0 0
  %225 = vmatprep.subr.bf16.mxu0 0
  %226 = vmatpush2.bf16.msra.mxu0 0
  %227 = vmatprep.subr.bf16.mxu0 0
  %228 = vmatpush2.bf16.msra.mxu0 0
  %229 = vmatprep.subr.bf16.mxu0 0
  %230 = vmatpush2.bf16.msra.mxu0 0
  %231 = vmatprep.subr.bf16.mxu0 0
  %232 = vmatpush2.bf16.msra.mxu0 0
  %233 = vmatprep.mubr.bf16.mxu0 0
  %234 = vmatmul.mubr.bf16.gmra.mxu0 %v199
  %v235 = vpop.f32.mrf.mxu0
  %v236 = vadd.f32 %v186, %v235
  %v237 = vpop.f32.mrf.mxu0
  %v238 = vpop.f32.mrf.mxu0
  %v239 = vadd.f32 %v191, %v238
  %v240 = vpop.f32.mrf.mxu0
  %241 = vdwg.mxu0
  %v242 = vpack.c.bf16 %v175, %v174
  %v245 = vunpack.c.l.b16 %v178
  %v246 = vunpack.c.l.b16 %v179
  %v247 = vpack.c.b16 %v246, %v245
  %v249 = vsel %vm47, %v247, 0
  %251 = vmatprep.subr.bf16.mxu0 0
  %252 = vmatpush1.bf16.msra.mxu0 0
  %253 = vmatprep.subr.bf16.mxu0 0
  %254 = vmatpush1.bf16.msra.mxu0 0
  %255 = vmatprep.subr.bf16.mxu0 0
  %256 = vmatpush1.bf16.msra.mxu0 0
  %257 = vmatprep.subr.bf16.mxu0 0
  %258 = vmatpush1.bf16.msra.mxu0 0
  %259 = vmatprep.subr.bf16.mxu0 0
  %260 = vmatpush1.bf16.msra.mxu0 0
  %261 = vmatprep.subr.bf16.mxu0 0
  %262 = vmatpush1.bf16.msra.mxu0 0
  %263 = vmatprep.subr.bf16.mxu0 0
  %264 = vmatpush1.bf16.msra.mxu0 0
  %265 = vmatprep.subr.bf16.mxu0 0
  %266 = vmatpush1.bf16.msra.mxu0 %v242
  %267 = vmatprep.subr.bf16.mxu0 0
  %268 = vmatpush2.bf16.msra.mxu0 0
  %269 = vmatprep.subr.bf16.mxu0 0
  %270 = vmatpush2.bf16.msra.mxu0 0
  %271 = vmatprep.subr.bf16.mxu0 0
  %272 = vmatpush2.bf16.msra.mxu0 0
  %273 = vmatprep.subr.bf16.mxu0 0
  %274 = vmatpush2.bf16.msra.mxu0 0
  %275 = vmatprep.subr.bf16.mxu0 0
  %276 = vmatpush2.bf16.msra.mxu0 0
  %277 = vmatprep.subr.bf16.mxu0 0
  %278 = vmatpush2.bf16.msra.mxu0 0
  %279 = vmatprep.subr.bf16.mxu0 0
  %280 = vmatpush2.bf16.msra.mxu0 0
  %281 = vmatprep.subr.bf16.mxu0 0
  %282 = vmatpush2.bf16.msra.mxu0 0
  %283 = vmatprep.mubr.bf16.mxu0 0
  %284 = vmatmul.mubr.bf16.gmra.mxu0 %v249
  %v285 = vpop.f32.mrf.mxu0
  %v286 = vadd.f32 0.0, %v285
  %v287 = vpop.f32.mrf.mxu0
  %v288 = vpop.f32.mrf.mxu0
  %v289 = vadd.f32 0.0, %v288
  %v290 = vpop.f32.mrf.mxu0
  %291 = vdwg.mxu0
  %vm292 = vcmask 523264
  %v293 = vsel %vm292, %v286, -inf
  %294 = vmax.xlane.f32.xlu0 %v293
  %v295 = vpop.xlane.xlu0 %294
  %v296 = vsel %vm292, %v289, -inf
  %297 = vmax.xlane.f32.xlu0 %v296
  %v298 = vpop.xlane.xlu0 %297
  %v299 = vsel %vm101, %v295, 0.0
  %v300 = vsel %vm101, %v298, 0.0
  %vm301 = vcmask 1048064
  %v302 = vsel %vm301, %v286, -inf
  %303 = vmax.xlane.f32.xlu0 %v302
  %v304 = vpop.xlane.xlu0 %303
  %v305 = vsel %vm301, %v289, -inf
  %306 = vmax.xlane.f32.xlu0 %v305
  %v307 = vpop.xlane.xlu0 %306
  %v308 = vsel %vm111, %v304, %v299
  %v309 = vsel %vm111, %v307, %v300
  %v310 = vadd.f32 %v236, %v308
  %v311 = vadd.f32 %v239, %v309
  %v312 = vld [vmem:[%s3 + $0x18] sm:$0xf]
  %v313 = vld [vmem:[%s3 + $0x1c] sm:$0xf]
  %v314 = vld [vmem:[%s2 + $0x80] sm:$0xff]
  %v315 = vld [vmem:[%s2 + $0x88] sm:$0xff]
  %v316 = vld [vmem:[%s2 + $0x60] sm:$0xff]
  %v317 = vld [vmem:[%s2 + $0x68] sm:$0xff]
  %v318 = vld [vmem:[%s2 + $0x70] sm:$0xff]
  %v319 = vld [vmem:[%s2 + $0x78] sm:$0xff]
  %321 = vset.pattern.permute.xlu0 0
  %322 = vperm.xlu0 %321, %v316
  %v323 = vpop.permute.xlu0 %322
  %326 = vset.pattern.permute.xlu0 0
  %327 = vperm.xlu0 %326, %v317
  %v328 = vpop.permute.xlu0 %327
  %v330 = vmul.f32 %v310, %v323
  %v331 = vmul.f32 %v311, %v328
  %333 = vset.pattern.permute.xlu0 0
  %334 = vperm.xlu0 %333, %v318
  %v335 = vpop.permute.xlu0 %334
  %338 = vset.pattern.permute.xlu0 0
  %339 = vperm.xlu0 %338, %v319
  %v340 = vpop.permute.xlu0 %339
  %v342 = vadd.f32 %v330, %v335
  %v343 = vadd.f32 %v331, %v340
  %v344 = vmax.f32 %v342, 0.0
  %v345 = vmax.f32 %v343, 0.0
  %v346 = vpack.c.bf16 %v345, %v344
  %348 = vset.pattern.permute.xlu0 0
  %349 = vperm.xlu0 %348, %v314
  %v350 = vpop.permute.xlu0 %349
  %353 = vset.pattern.permute.xlu0 0
  %354 = vperm.xlu0 %353, %v315
  %v355 = vpop.permute.xlu0 %354
  %v359 = vunpack.c.l.b16 %v312
  %v360 = vunpack.c.l.b16 %v313
  %v361 = vpack.c.b16 %v360, %v359
  %v363 = vsel %vm47, %v361, 0
  %365 = vmatprep.subr.bf16.mxu0 0
  %366 = vmatpush1.bf16.msra.mxu0 0
  %367 = vmatprep.subr.bf16.mxu0 0
  %368 = vmatpush1.bf16.msra.mxu0 0
  %369 = vmatprep.subr.bf16.mxu0 0
  %370 = vmatpush1.bf16.msra.mxu0 0
  %371 = vmatprep.subr.bf16.mxu0 0
  %372 = vmatpush1.bf16.msra.mxu0 0
  %373 = vmatprep.subr.bf16.mxu0 0
  %374 = vmatpush1.bf16.msra.mxu0 0
  %375 = vmatprep.subr.bf16.mxu0 0
  %376 = vmatpush1.bf16.msra.mxu0 0
  %377 = vmatprep.subr.bf16.mxu0 0
  %378 = vmatpush1.bf16.msra.mxu0 0
  %379 = vmatprep.subr.bf16.mxu0 0
  %380 = vmatpush1.bf16.msra.mxu0 %v346
  %381 = vmatprep.subr.bf16.mxu0 0
  %382 = vmatpush2.bf16.msra.mxu0 0
  %383 = vmatprep.subr.bf16.mxu0 0
  %384 = vmatpush2.bf16.msra.mxu0 0
  %385 = vmatprep.subr.bf16.mxu0 0
  %386 = vmatpush2.bf16.msra.mxu0 0
  %387 = vmatprep.subr.bf16.mxu0 0
  %388 = vmatpush2.bf16.msra.mxu0 0
  %389 = vmatprep.subr.bf16.mxu0 0
  %390 = vmatpush2.bf16.msra.mxu0 0
  %391 = vmatprep.subr.bf16.mxu0 0
  %392 = vmatpush2.bf16.msra.mxu0 0
  %393 = vmatprep.subr.bf16.mxu0 0
  %394 = vmatpush2.bf16.msra.mxu0 0
  %395 = vmatprep.subr.bf16.mxu0 0
  %396 = vmatpush2.bf16.msra.mxu0 0
  %397 = vmatprep.mubr.bf16.mxu0 0
  %398 = vmatmul.mubr.bf16.gmra.mxu0 %v363
  %v399 = vpop.f32.mrf.mxu0
  %v400 = vadd.f32 %v350, %v399
  %v401 = vpop.f32.mrf.mxu0
  %v402 = vpop.f32.mrf.mxu0
  %v403 = vadd.f32 %v355, %v402
  %v404 = vpop.f32.mrf.mxu0
  %405 = vdwg.mxu0
  %v406 = vxor.u32 %v400, 2147483648
  %v407 = vxor.u32 %v403, 2147483648
  %v408 = vmul.f32 %v406, 1.442695
  %v409 = vpow.pop %v408
  %v410 = vmul.f32 %v407, 1.442695
  %v411 = vpow.pop %v410
  %v412 = vadd.f32 %v409, 1.0
  %v413 = vadd.f32 %v411, 1.0
  %v414 = vrcp.pop %v412
  %v415 = vmul.f32 1.0, %v414
  %v416 = vrcp.pop %v413
  %v417 = vmul.f32 1.0, %v416
  %v418 = vld [vmem:[%s3 + $0x20] sm:$0xf]
  %v419 = vld [vmem:[%s3 + $0x24] sm:$0xf]
  %v420 = vld [vmem:[%s3 + $0x28] sm:$0xf]
  %v421 = vld [vmem:[%s3 + $0x2c] sm:$0xf]
  %v422 = vld [vmem:[%s3 + $0x30] sm:$0xf]
  %v423 = vld [vmem:[%s3 + $0x34] sm:$0xf]
  %v424 = vld [vmem:[%s3 + $0x38] sm:$0xf]
  %v425 = vld [vmem:[%s3 + $0x3c] sm:$0xf]
  %v426 = vpack.c.bf16 %v113, %v112
  %v427 = vld [vmem:[%s2 + $0x90] sm:$0xff]
  %v428 = vld [vmem:[%s2 + $0x98] sm:$0xff]
  %v429 = vld [vmem:[%s2 + $0xa0] sm:$0xff]
  %v430 = vld [vmem:[%s2 + $0xa8] sm:$0xff]
  %432 = vset.pattern.permute.xlu0 0
  %433 = vperm.xlu0 %432, %v427
  %v434 = vpop.permute.xlu0 %433
  %437 = vset.pattern.permute.xlu0 0
  %438 = vperm.xlu0 %437, %v428
  %v439 = vpop.permute.xlu0 %438
  %442 = vset.pattern.permute.xlu0 0
  %443 = vperm.xlu0 %442, %v429
  %v444 = vpop.permute.xlu0 %443
  %447 = vset.pattern.permute.xlu0 0
  %448 = vperm.xlu0 %447, %v430
  %v449 = vpop.permute.xlu0 %448
  %v455 = vunpack.c.l.b16 %v418
  %v456 = vunpack.c.l.b16 %v419
  %v457 = vunpack.c.l.b16 %v420
  %v458 = vunpack.c.l.b16 %v421
  %v459 = vpack.c.b16 %v456, %v455
  %v460 = vpack.c.b16 %v458, %v457
  %v462 = vsel %vm47, %v459, 0
  %v465 = vsel %vm47, %v460, 0
  %467 = vmatprep.subr.bf16.mxu0 0
  %468 = vmatpush1.bf16.msra.mxu0 0
  %469 = vmatprep.subr.bf16.mxu0 0
  %470 = vmatpush1.bf16.msra.mxu0 0
  %471 = vmatprep.subr.bf16.mxu0 0
  %472 = vmatpush1.bf16.msra.mxu0 0
  %473 = vmatprep.subr.bf16.mxu0 0
  %474 = vmatpush1.bf16.msra.mxu0 0
  %475 = vmatprep.subr.bf16.mxu0 0
  %476 = vmatpush1.bf16.msra.mxu0 0
  %477 = vmatprep.subr.bf16.mxu0 0
  %478 = vmatpush1.bf16.msra.mxu0 0
  %479 = vmatprep.subr.bf16.mxu0 0
  %480 = vmatpush1.bf16.msra.mxu0 0
  %481 = vmatprep.subr.bf16.mxu0 0
  %482 = vmatpush1.bf16.msra.mxu0 %v426
  %483 = vmatprep.subr.bf16.mxu0 0
  %484 = vmatpush2.bf16.msra.mxu0 0
  %485 = vmatprep.subr.bf16.mxu0 0
  %486 = vmatpush2.bf16.msra.mxu0 0
  %487 = vmatprep.subr.bf16.mxu0 0
  %488 = vmatpush2.bf16.msra.mxu0 0
  %489 = vmatprep.subr.bf16.mxu0 0
  %490 = vmatpush2.bf16.msra.mxu0 0
  %491 = vmatprep.subr.bf16.mxu0 0
  %492 = vmatpush2.bf16.msra.mxu0 0
  %493 = vmatprep.subr.bf16.mxu0 0
  %494 = vmatpush2.bf16.msra.mxu0 0
  %495 = vmatprep.subr.bf16.mxu0 0
  %496 = vmatpush2.bf16.msra.mxu0 0
  %497 = vmatprep.subr.bf16.mxu0 0
  %498 = vmatpush2.bf16.msra.mxu0 0
  %499 = vmatprep.mubr.bf16.mxu0 0
  %500 = vmatmul.mubr.bf16.gmra.mxu0 %v462
  %v501 = vpop.f32.mrf.mxu0
  %v502 = vadd.f32 %v434, %v501
  %v503 = vpop.f32.mrf.mxu0
  %v504 = vpop.f32.mrf.mxu0
  %v505 = vadd.f32 %v439, %v504
  %v506 = vpop.f32.mrf.mxu0
  %507 = vmatprep.mubr.bf16.mxu0 0
  %508 = vmatmul.mubr.bf16.gmra.mxu0 %v465
  %v509 = vpop.f32.mrf.mxu0
  %v510 = vadd.f32 %v444, %v509
  %v511 = vpop.f32.mrf.mxu0
  %v512 = vpop.f32.mrf.mxu0
  %v513 = vadd.f32 %v449, %v512
  %v514 = vpop.f32.mrf.mxu0
  %515 = vdwg.mxu0
  %vm516 = vcmp.ge.s32.totalorder %v93, 0
  %vm517 = vcmp.lt.s32.totalorder %v93, 64
  %vm518 = vmand %vm516, %vm517
  %520 = vset.pattern.permute.xlu0 0
  %521 = vperm.xlu0 %520, %v502
  %v522 = vpop.permute.xlu0 %521
  %525 = vset.pattern.permute.xlu0 0
  %526 = vperm.xlu0 %525, %v505
  %v527 = vpop.permute.xlu0 %526
  %530 = vset.pattern.permute.xlu0 0
  %531 = vperm.xlu0 %530, %v510
  %v532 = vpop.permute.xlu0 %531
  %535 = vset.pattern.permute.xlu0 0
  %536 = vperm.xlu0 %535, %v513
  %v537 = vpop.permute.xlu0 %536
  %v539 = vsel %vm518, %v522, 0.0
  %v540 = vsel %vm518, %v527, 0.0
  %v541 = vsel %vm518, %v532, 0.0
  %v542 = vsel %vm518, %v537, 0.0
  %vm543 = vcmp.ge.s32.totalorder %v93, 64
  %vm544 = vcmp.lt.s32.totalorder %v93, 128
  %vm545 = vmand %vm543, %vm544
  %546 = vset.pattern.permute.xlu0 1
  %547 = vperm.xlu0 %546, %v502
  %v548 = vpop.permute.xlu0 %547
  %550 = vset.pattern.permute.xlu0 1
  %551 = vperm.xlu0 %550, %v505
  %v552 = vpop.permute.xlu0 %551
  %554 = vset.pattern.permute.xlu0 1
  %555 = vperm.xlu0 %554, %v510
  %v556 = vpop.permute.xlu0 %555
  %558 = vset.pattern.permute.xlu0 1
  %559 = vperm.xlu0 %558, %v513
  %v560 = vpop.permute.xlu0 %559
  %v562 = vsel %vm545, %v548, %v539
  %v563 = vsel %vm545, %v552, %v540
  %v564 = vsel %vm545, %v556, %v541
  %v565 = vsel %vm545, %v560, %v542
  %v570 = vunpack.c.l.b16 %v422
  %v571 = vunpack.c.l.b16 %v423
  %v572 = vunpack.c.l.b16 %v424
  %v573 = vunpack.c.l.b16 %v425
  %v574 = vpack.c.b16 %v571, %v570
  %v575 = vpack.c.b16 %v573, %v572
  %v578 = vunpack.c.l.b16 %v20
  %v579 = vunpack.c.l.b16 %v21
  %v580 = vpack.c.b16 %v579, %v578
  %v583 = vsel %vm47, %v574, 0
  %v586 = vsel %vm47, %v575, 0
  %588 = vmatprep.subr.bf16.mxu0 0
  %589 = vmatpush1.bf16.msra.mxu0 0
  %590 = vmatprep.subr.bf16.mxu0 0
  %591 = vmatpush1.bf16.msra.mxu0 0
  %592 = vmatprep.subr.bf16.mxu0 0
  %593 = vmatpush1.bf16.msra.mxu0 0
  %594 = vmatprep.subr.bf16.mxu0 0
  %595 = vmatpush1.bf16.msra.mxu0 0
  %596 = vmatprep.subr.bf16.mxu0 0
  %597 = vmatpush1.bf16.msra.mxu0 0
  %598 = vmatprep.subr.bf16.mxu0 0
  %599 = vmatpush1.bf16.msra.mxu0 0
  %600 = vmatprep.subr.bf16.mxu0 0
  %601 = vmatpush1.bf16.msra.mxu0 0
  %602 = vmatprep.subr.bf16.mxu0 0
  %603 = vmatpush1.bf16.msra.mxu0 %v580
  %604 = vmatprep.subr.bf16.mxu0 0
  %605 = vmatpush2.bf16.msra.mxu0 0
  %606 = vmatprep.subr.bf16.mxu0 0
  %607 = vmatpush2.bf16.msra.mxu0 0
  %608 = vmatprep.subr.bf16.mxu0 0
  %609 = vmatpush2.bf16.msra.mxu0 0
  %610 = vmatprep.subr.bf16.mxu0 0
  %611 = vmatpush2.bf16.msra.mxu0 0
  %612 = vmatprep.subr.bf16.mxu0 0
  %613 = vmatpush2.bf16.msra.mxu0 0
  %614 = vmatprep.subr.bf16.mxu0 0
  %615 = vmatpush2.bf16.msra.mxu0 0
  %616 = vmatprep.subr.bf16.mxu0 0
  %617 = vmatpush2.bf16.msra.mxu0 0
  %618 = vmatprep.subr.bf16.mxu0 0
  %619 = vmatpush2.bf16.msra.mxu0 0
  %620 = vmatprep.mubr.bf16.mxu0 0
  %621 = vmatmul.mubr.bf16.gmra.mxu0 %v583
  %v622 = vpop.f32.mrf.mxu0
  %v623 = vadd.f32 %v562, %v622
  %v624 = vpop.f32.mrf.mxu0
  %v625 = vpop.f32.mrf.mxu0
  %v626 = vadd.f32 %v563, %v625
  %v627 = vpop.f32.mrf.mxu0
  %628 = vmatprep.mubr.bf16.mxu0 0
  %629 = vmatmul.mubr.bf16.gmra.mxu0 %v586
  %v630 = vpop.f32.mrf.mxu0
  %v631 = vadd.f32 %v564, %v630
  %v632 = vpop.f32.mrf.mxu0
  %v633 = vpop.f32.mrf.mxu0
  %v634 = vadd.f32 %v565, %v633
  %v635 = vpop.f32.mrf.mxu0
  %636 = vdwg.mxu0
  %638 = vset.pattern.permute.xlu0 0
  %639 = vperm.xlu0 %638, %v415
  %v640 = vpop.permute.xlu0 %639
  %643 = vset.pattern.permute.xlu0 0
  %644 = vperm.xlu0 %643, %v417
  %v645 = vpop.permute.xlu0 %644
  %v647 = vsel %vm518, %v640, 0.0
  %v648 = vsel %vm518, %v645, 0.0
  %649 = vset.pattern.permute.xlu0 1
  %650 = vperm.xlu0 %649, %v415
  %v651 = vpop.permute.xlu0 %650
  %653 = vset.pattern.permute.xlu0 1
  %654 = vperm.xlu0 %653, %v417
  %v655 = vpop.permute.xlu0 %654
  %v657 = vsel %vm545, %v651, %v647
  %v658 = vsel %vm545, %v655, %v648
  %v659 = vmul.f32 %v657, %v623
  %v660 = vmul.f32 %v658, %v626
  %v661 = vadd.f32 %v659, %v631
  %v662 = vadd.f32 %v660, %v634
  %v663 = vld [vmem:[%s3 + $0x40] sm:$0xf]
  %v664 = vld [vmem:[%s3 + $0x44] sm:$0xf]
  %v665 = vld [vmem:[%s2 + $0xd0] sm:$0xff]
  %v666 = vld [vmem:[%s2 + $0xd8] sm:$0xff]
  %v667 = vld [vmem:[%s2 + $0xb0] sm:$0xff]
  %v668 = vld [vmem:[%s2 + $0xb8] sm:$0xff]
  %v669 = vld [vmem:[%s2 + $0xc0] sm:$0xff]
  %v670 = vld [vmem:[%s2 + $0xc8] sm:$0xff]
  %672 = vset.pattern.permute.xlu0 0
  %673 = vperm.xlu0 %672, %v667
  %v674 = vpop.permute.xlu0 %673
  %677 = vset.pattern.permute.xlu0 0
  %678 = vperm.xlu0 %677, %v668
  %v679 = vpop.permute.xlu0 %678
  %v681 = vmul.f32 %v661, %v674
  %v682 = vmul.f32 %v662, %v679
  %684 = vset.pattern.permute.xlu0 0
  %685 = vperm.xlu0 %684, %v669
  %v686 = vpop.permute.xlu0 %685
  %689 = vset.pattern.permute.xlu0 0
  %690 = vperm.xlu0 %689, %v670
  %v691 = vpop.permute.xlu0 %690
  %v693 = vadd.f32 %v681, %v686
  %v694 = vadd.f32 %v682, %v691
  %v695 = vmax.f32 %v693, 0.0
  %v696 = vmax.f32 %v694, 0.0
  %v697 = vpack.c.bf16 %v696, %v695
  %699 = vset.pattern.permute.xlu0 0
  %700 = vperm.xlu0 %699, %v665
  %v701 = vpop.permute.xlu0 %700
  %704 = vset.pattern.permute.xlu0 0
  %705 = vperm.xlu0 %704, %v666
  %v706 = vpop.permute.xlu0 %705
  %v710 = vunpack.c.l.b16 %v663
  %v711 = vunpack.c.l.b16 %v664
  %v712 = vpack.c.b16 %v711, %v710
  %v714 = vsel %vm47, %v712, 0
  %716 = vmatprep.subr.bf16.mxu0 0
  %717 = vmatpush1.bf16.msra.mxu0 0
  %718 = vmatprep.subr.bf16.mxu0 0
  %719 = vmatpush1.bf16.msra.mxu0 0
  %720 = vmatprep.subr.bf16.mxu0 0
  %721 = vmatpush1.bf16.msra.mxu0 0
  %722 = vmatprep.subr.bf16.mxu0 0
  %723 = vmatpush1.bf16.msra.mxu0 0
  %724 = vmatprep.subr.bf16.mxu0 0
  %725 = vmatpush1.bf16.msra.mxu0 0
  %726 = vmatprep.subr.bf16.mxu0 0
  %727 = vmatpush1.bf16.msra.mxu0 0
  %728 = vmatprep.subr.bf16.mxu0 0
  %729 = vmatpush1.bf16.msra.mxu0 0
  %730 = vmatprep.subr.bf16.mxu0 0
  %731 = vmatpush1.bf16.msra.mxu0 %v697
  %732 = vmatprep.subr.bf16.mxu0 0
  %733 = vmatpush2.bf16.msra.mxu0 0
  %734 = vmatprep.subr.bf16.mxu0 0
  %735 = vmatpush2.bf16.msra.mxu0 0
  %736 = vmatprep.subr.bf16.mxu0 0
  %737 = vmatpush2.bf16.msra.mxu0 0
  %738 = vmatprep.subr.bf16.mxu0 0
  %739 = vmatpush2.bf16.msra.mxu0 0
  %740 = vmatprep.subr.bf16.mxu0 0
  %741 = vmatpush2.bf16.msra.mxu0 0
  %742 = vmatprep.subr.bf16.mxu0 0
  %743 = vmatpush2.bf16.msra.mxu0 0
  %744 = vmatprep.subr.bf16.mxu0 0
  %745 = vmatpush2.bf16.msra.mxu0 0
  %746 = vmatprep.subr.bf16.mxu0 0
  %747 = vmatpush2.bf16.msra.mxu0 0
  %748 = vmatprep.mubr.bf16.mxu0 0
  %749 = vmatmul.mubr.bf16.gmra.mxu0 %v714
  %v750 = vpop.f32.mrf.mxu0
  %v751 = vadd.f32 %v701, %v750
  %v752 = vpop.f32.mrf.mxu0
  %v753 = vpop.f32.mrf.mxu0
  %v754 = vadd.f32 %v706, %v753
  %v755 = vpop.f32.mrf.mxu0
  %756 = vdwg.mxu0
  %v757 = vpack.c.bf16 %v754, %v751
  %v759 = vunpack.c.l.b16 %v757
  %v760 = vunpack.c.h.b16 %v757
  %v761 = vpack.c.b16 %v759, %v759
  %v762 = vpack.c.b16 %v760, %v760
  %765 = vst [vmem:[%s4] sm:$0xf] %v761
  %766 = vst [vmem:[%s4 + $0x4] sm:$0xf] %v762
  // Predicated region
  $region18: #{forward.16} parent=0 // pred_check
    _
  $region19: #{forward.16} parent=0 // pred_check_branch
    %768 = sbr.rel (0) target = $region21
  $region20: #{forward.16} parent=0 // pred_region
    _
  $region21: #{forward.16} parent=0 // pred_fallthru
    _
  // Predicated region
  $region22: #{forward.16} parent=0 // pred_check
    _
  $region23: #{forward.16} parent=0 // pred_check_branch
    %770 = sbr.rel (0) target = $region25
  $region24: #{forward.16} parent=0 // pred_region
    _
  $region25: #{forward.16} parent=0 // pred_fallthru
    _

// kernel: forward.17
$region0: #{forward.17}
  #allocation0 [shape = 'u32[]', space=smem, size = 0x4, offset = 0x4, fixed_abs, tag = 'smem constant byte address 0x4 - core index']
  #allocation1 [shape = 'u32[144,128]{1,0:T(1,128)}', space=vmem, size = 0x12000, scoped, tag = 'internal scratch']
  %s0 = inlined_call_operand.vmem [shape: bf16[16,128], index: 0, kind: input, shape index: {}]
  %s1 = inlined_call_operand.vmem [shape: bf16[8,256], index: 1, kind: input, shape index: {}]
  %s2 = inlined_call_operand.vmem [shape: f32[136,1], index: 2, kind: input, shape index: {}]
  %s3 = inlined_call_operand.vmem [shape: bf16[128,128], index: 3, kind: input, shape index: {}]
  %s4 = inlined_call_operand.hbm [shape: f32[2,256], index: 4, kind: output, shape index: {}]
  %s5 = sld [smem:[#allocation0]]
  $region26: #{forward.17} parent=0
    _
  %s7 = ssub.s32 1, %s5
  %s8 = scalar_select 0, %s7, %s5
  $region1: #{forward.17} parent=0
    #allocation2 [shape = 'u8[2048]{0}', space=vmem, size = 0x800, scoped, tag = 'output window, operand 0, single buffered']
    #allocation3 [shape = 's32[1]{0}', space=sflag, size = 0x4, scoped, tag = 'scoped memory for forward.17']
    %9 = vsyncpa [#allocation3], 0
    // Predicated region
    $region2: #{forward.17} parent=1 // pred_check
      _
    $region3: #{forward.17} parent=1 // pred_check_branch
      %11 = sbr.rel (0) target = $region5
    $region4: #{forward.17} parent=1 // pred_region
      _
    $region5: #{forward.17} parent=1 // pred_fallthru
      _
    // Predicated region
    $region6: #{forward.17} parent=1 // pred_check
      _
    $region7: #{forward.17} parent=1 // pred_check_branch
      %13 = sbr.rel (0) target = $region9
    $region8: #{forward.17} parent=1 // pred_region
      _
    $region9: #{forward.17} parent=1 // pred_fallthru
      _
    // Predicated region
    $region10: #{forward.17} parent=1 // pred_check
      _
    $region11: #{forward.17} parent=1 // pred_check_branch
      %15 = sbr.rel (0) target = $region13
    $region12: #{forward.17} parent=1 // pred_region
      _
    $region13: #{forward.17} parent=1 // pred_fallthru
      _
    // Predicated region
    $region14: #{forward.17} parent=1 // pred_check
      _
    $region15: #{forward.17} parent=1 // pred_check_branch
      %17 = sbr.rel (0) target = $region17
    $region16: #{forward.17} parent=1 // pred_region
      _
    $region17: #{forward.17} parent=1 // pred_fallthru
      _
    %v19 = vld [vmem:[%s0] sm:$0xf]
    %v20 = vld [vmem:[%s0 + $0x4] sm:$0xf]
    %v21 = vld [vmem:[%s1] sm:$0xff]
    %v22 = vld [vmem:[%s3] sm:$0xf]
    %v23 = vld [vmem:[%s2] sm:$0xff]
    %25 = vset.pattern.permute.xlu0 0
    %26 = vperm.xlu0 %25, %v23
    %v27 = vpop.permute.xlu0 %26
    %v31 = vunpack.c.l.b16 %v19
    %v32 = vunpack.c.l.b16 %v20
    %v33 = vpack.c.b16 %v32, %v31
    %vm35 = vcmask 130048
    %v37 = vsel %vm35, %v22, 0
    %39 = vmatprep.subr.bf16.mxu0 0
    %40 = vmatpush1.bf16.msra.mxu0 0
    %41 = vmatprep.subr.bf16.mxu0 0
    %42 = vmatpush1.bf16.msra.mxu0 0
    %43 = vmatprep.subr.bf16.mxu0 0
    %44 = vmatpush1.bf16.msra.mxu0 0
    %45 = vmatprep.subr.bf16.mxu0 0
    %46 = vmatpush1.bf16.msra.mxu0 0
    %47 = vmatprep.subr.bf16.mxu0 0
    %48 = vmatpush1.bf16.msra.mxu0 0
    %49 = vmatprep.subr.bf16.mxu0 0
    %50 = vmatpush1.bf16.msra.mxu0 0
    %51 = vmatprep.subr.bf16.mxu0 0
    %52 = vmatpush1.bf16.msra.mxu0 0
    %53 = vmatprep.subr.bf16.mxu0 0
    %54 = vmatpush1.bf16.msra.mxu0 %v33
    %55 = vmatprep.subr.bf16.mxu0 0
    %56 = vmatpush2.bf16.msra.mxu0 0
    %57 = vmatprep.subr.bf16.mxu0 0
    %58 = vmatpush2.bf16.msra.mxu0 0
    %59 = vmatprep.subr.bf16.mxu0 0
    %60 = vmatpush2.bf16.msra.mxu0 0
    %61 = vmatprep.subr.bf16.mxu0 0
    %62 = vmatpush2.bf16.msra.mxu0 0
    %63 = vmatprep.subr.bf16.mxu0 0
    %64 = vmatpush2.bf16.msra.mxu0 0
    %65 = vmatprep.subr.bf16.mxu0 0
    %66 = vmatpush2.bf16.msra.mxu0 0
    %67 = vmatprep.subr.bf16.mxu0 0
    %68 = vmatpush2.bf16.msra.mxu0 0
    %69 = vmatprep.subr.bf16.mxu0 0
    %70 = vmatpush2.bf16.msra.mxu0 0
    %71 = vmatprep.mubr.bf16.mxu0 0
    %72 = vmatmul.mubr.bf16.gmra.mxu0 %v37
    %v73 = vpop.f32.mrf.mxu0
    %v74 = vadd.f32 %v27, %v73
    %v75 = vpop.f32.mrf.mxu0
    %v76 = vpop.f32.mrf.mxu0
    %v77 = vpop.f32.mrf.mxu0
    %78 = vdwg.mxu0
    %v79 = vlaneseq
    %v80 = vand.u32 %v79, 127
    %vm81 = vcmask 523264
    %v82 = vsel %vm81, %v74, -inf
    %83 = vmax.xlane.f32.xlu0 %v82
    %v84 = vpop.xlane.xlu0 %83
    %vm85 = vcmp.eq.s32.totalorder %v80, 0
    %v86 = vsel %vm85, %v84, 0.0
    %vm87 = vcmask 1048064
    %v88 = vsel %vm87, %v74, -inf
    %89 = vmax.xlane.f32.xlu0 %v88
    %v90 = vpop.xlane.xlu0 %89
    %vm91 = vcmp.eq.s32.totalorder %v80, 1
    %v92 = vsel %vm91, %v90, %v86
    %v93 = vld [vmem:[%s2 + $0x8] sm:$0xff]
    %95 = vset.pattern.permute.xlu0 0
    %96 = vperm.xlu0 %95, %v93
    %v97 = vpop.permute.xlu0 %96
    %v99 = vmul.f32 %v92, %v97
    %v100 = vld [vmem:[%s2 + $0x10] sm:$0xff]
    %102 = vset.pattern.permute.xlu0 0
    %103 = vperm.xlu0 %102, %v100
    %v104 = vpop.permute.xlu0 %103
    %v106 = vadd.f32 %v99, %v104
    %v107 = vmax.f32 %v106, 0.0
    %v108 = vunpack.c.l.bf16 %v21
    %v109 = vunpack.c.h.bf16 %v21
    %v110 = vld [vmem:[%s2 + $0x18] sm:$0xff]
    %112 = vset.pattern.permute.xlu0 0
    %113 = vperm.xlu0 %112, %v110
    %v114 = vpop.permute.xlu0 %113
    %v116 = vmul.f32 %v108, %v114
    %v117 = vmul.f32 %v109, %v114
    %v118 = vld [vmem:[%s2 + $0x20] sm:$0xff]
    %120 = vset.pattern.permute.xlu0 0
    %121 = vperm.xlu0 %120, %v118
    %v122 = vpop.permute.xlu0 %121
    %v124 = vadd.f32 %v116, %v122
    %v125 = vadd.f32 %v117, %v122
    %v126 = vmax.f32 %v124, 0.0
    %v127 = vmax.f32 %v125, 0.0
    %v128 = vld [vmem:[%s3 + $0x8] sm:$0xf]
    %v129 = vld [vmem:[%s3 + $0x10] sm:$0xf]
    %v130 = vpack.c.bf16 %v107, %v107
    %v131 = vld [vmem:[%s2 + $0x28] sm:$0xff]
    %133 = vset.pattern.permute.xlu0 0
    %134 = vperm.xlu0 %133, %v131
    %v135 = vpop.permute.xlu0 %134
    %vm137 = vcmask 64512
    %v139 = vsel %vm137, %v128, 0
    %vm141 = vcmask 1043456
    %v143 = vsel %vm141, %v130, 0
    %145 = vmatprep.subr.bf16.mxu0 0
    %146 = vmatpush1.bf16.msra.mxu0 0
    %147 = vmatprep.subr.bf16.mxu0 0
    %148 = vmatpush1.bf16.msra.mxu0 0
    %149 = vmatprep.subr.bf16.mxu0 0
    %150 = vmatpush1.bf16.msra.mxu0 0
    %151 = vmatprep.subr.bf16.mxu0 0
    %152 = vmatpush1.bf16.msra.mxu0 0
    %153 = vmatprep.subr.bf16.mxu0 0
    %154 = vmatpush1.bf16.msra.mxu0 0
    %155 = vmatprep.subr.bf16.mxu0 0
    %156 = vmatpush1.bf16.msra.mxu0 0
    %157 = vmatprep.subr.bf16.mxu0 0
    %158 = vmatpush1.bf16.msra.mxu0 0
    %159 = vmatprep.subr.bf16.mxu0 0
    %160 = vmatpush1.bf16.msra.mxu0 %v143
    %161 = vmatprep.subr.bf16.mxu0 0
    %162 = vmatpush2.bf16.msra.mxu0 0
    %163 = vmatprep.subr.bf16.mxu0 0
    %164 = vmatpush2.bf16.msra.mxu0 0
    %165 = vmatprep.subr.bf16.mxu0 0
    %166 = vmatpush2.bf16.msra.mxu0 0
    %167 = vmatprep.subr.bf16.mxu0 0
    %168 = vmatpush2.bf16.msra.mxu0 0
    %169 = vmatprep.subr.bf16.mxu0 0
    %170 = vmatpush2.bf16.msra.mxu0 0
    %171 = vmatprep.subr.bf16.mxu0 0
    %172 = vmatpush2.bf16.msra.mxu0 0
    %173 = vmatprep.subr.bf16.mxu0 0
    %174 = vmatpush2.bf16.msra.mxu0 0
    %175 = vmatprep.subr.bf16.mxu0 0
    %176 = vmatpush2.bf16.msra.mxu0 0
    %177 = vmatprep.mubr.bf16.mxu0 0
    %178 = vmatmul.mubr.bf16.gmra.mxu0 %v139
    %v179 = vpop.f32.mrf.mxu0
    %v180 = vadd.f32 %v135, %v179
    %v181 = vpop.f32.mrf.mxu0
    %v182 = vpop.f32.mrf.mxu0
    %v183 = vpop.f32.mrf.mxu0
    %184 = vdwg.mxu0
    %v185 = vpack.c.bf16 %v126, %v126
    %v186 = vpack.c.bf16 %v127, %v127
    %v188 = vsel %vm137, %v129, 0
    %v191 = vsel %vm141, %v185, 0
    %v194 = vsel %vm141, %v186, 0
    %196 = vmatprep.subr.bf16.mxu0 0
    %197 = vmatpush1.bf16.msra.mxu0 0
    %198 = vmatprep.subr.bf16.mxu0 0
    %199 = vmatpush1.bf16.msra.mxu0 0
    %200 = vmatprep.subr.bf16.mxu0 0
    %201 = vmatpush1.bf16.msra.mxu0 0
    %202 = vmatprep.subr.bf16.mxu0 0
    %203 = vmatpush1.bf16.msra.mxu0 0
    %204 = vmatprep.subr.bf16.mxu0 0
    %205 = vmatpush1.bf16.msra.mxu0 0
    %206 = vmatprep.subr.bf16.mxu0 0
    %207 = vmatpush1.bf16.msra.mxu0 0
    %208 = vmatprep.subr.bf16.mxu0 0
    %209 = vmatpush1.bf16.msra.mxu0 0
    %210 = vmatprep.subr.bf16.mxu0 %v194
    %211 = vmatpush1.bf16.msra.mxu0 %v191
    %212 = vmatprep.subr.bf16.mxu0 0
    %213 = vmatpush2.bf16.msra.mxu0 0
    %214 = vmatprep.subr.bf16.mxu0 0
    %215 = vmatpush2.bf16.msra.mxu0 0
    %216 = vmatprep.subr.bf16.mxu0 0
    %217 = vmatpush2.bf16.msra.mxu0 0
    %218 = vmatprep.subr.bf16.mxu0 0
    %219 = vmatpush2.bf16.msra.mxu0 0
    %220 = vmatprep.subr.bf16.mxu0 0
    %221 = vmatpush2.bf16.msra.mxu0 0
    %222 = vmatprep.subr.bf16.mxu0 0
    %223 = vmatpush2.bf16.msra.mxu0 0
    %224 = vmatprep.subr.bf16.mxu0 0
    %225 = vmatpush2.bf16.msra.mxu0 0
    %226 = vmatprep.subr.bf16.mxu0 0
    %227 = vmatpush2.bf16.msra.mxu0 0
    %228 = vmatprep.mubr.bf16.mxu0 0
    %229 = vmatmul.mubr.bf16.gmra.mxu0 %v188
    %v230 = vpop.f32.mrf.mxu0
    %v231 = vadd.f32 0.0, %v230
    %v232 = vpop.f32.mrf.mxu0
    %v233 = vadd.f32 0.0, %v232
    %v234 = vpop.f32.mrf.mxu0
    %v235 = vpop.f32.mrf.mxu0
    %236 = vdwg.mxu0
    %237 = vmax.xlane.f32.xlu0 %v231
    %v238 = vpop.xlane.xlu0 %237
    %v239 = vsel %vm85, %v238, 0.0
    %240 = vmax.xlane.f32.xlu0 %v233
    %v241 = vpop.xlane.xlu0 %240
    %v242 = vsel %vm91, %v241, %v239
    %v243 = vadd.f32 %v180, %v242
    %v244 = vld [vmem:[%s3 + $0x18] sm:$0xf]
    %v245 = vld [vmem:[%s2 + $0x40] sm:$0xff]
    %v246 = vld [vmem:[%s2 + $0x30] sm:$0xff]
    %v247 = vld [vmem:[%s2 + $0x38] sm:$0xff]
    %249 = vset.pattern.permute.xlu0 0
    %250 = vperm.xlu0 %249, %v246
    %v251 = vpop.permute.xlu0 %250
    %v253 = vmul.f32 %v243, %v251
    %255 = vset.pattern.permute.xlu0 0
    %256 = vperm.xlu0 %255, %v247
    %v257 = vpop.permute.xlu0 %256
    %v259 = vadd.f32 %v253, %v257
    %v260 = vmax.f32 %v259, 0.0
    %v261 = vpack.c.bf16 %v260, %v260
    %263 = vset.pattern.permute.xlu0 0
    %264 = vperm.xlu0 %263, %v245
    %v265 = vpop.permute.xlu0 %264
    %v268 = vsel %vm137, %v244, 0
    %v271 = vsel %vm141, %v261, 0
    %273 = vmatprep.subr.bf16.mxu0 0
    %274 = vmatpush1.bf16.msra.mxu0 0
    %275 = vmatprep.subr.bf16.mxu0 0
    %276 = vmatpush1.bf16.msra.mxu0 0
    %277 = vmatprep.subr.bf16.mxu0 0
    %278 = vmatpush1.bf16.msra.mxu0 0
    %279 = vmatprep.subr.bf16.mxu0 0
    %280 = vmatpush1.bf16.msra.mxu0 0
    %281 = vmatprep.subr.bf16.mxu0 0
    %282 = vmatpush1.bf16.msra.mxu0 0
    %283 = vmatprep.subr.bf16.mxu0 0
    %284 = vmatpush1.bf16.msra.mxu0 0
    %285 = vmatprep.subr.bf16.mxu0 0
    %286 = vmatpush1.bf16.msra.mxu0 0
    %287 = vmatprep.subr.bf16.mxu0 0
    %288 = vmatpush1.bf16.msra.mxu0 %v271
    %289 = vmatprep.subr.bf16.mxu0 0
    %290 = vmatpush2.bf16.msra.mxu0 0
    %291 = vmatprep.subr.bf16.mxu0 0
    %292 = vmatpush2.bf16.msra.mxu0 0
    %293 = vmatprep.subr.bf16.mxu0 0
    %294 = vmatpush2.bf16.msra.mxu0 0
    %295 = vmatprep.subr.bf16.mxu0 0
    %296 = vmatpush2.bf16.msra.mxu0 0
    %297 = vmatprep.subr.bf16.mxu0 0
    %298 = vmatpush2.bf16.msra.mxu0 0
    %299 = vmatprep.subr.bf16.mxu0 0
    %300 = vmatpush2.bf16.msra.mxu0 0
    %301 = vmatprep.subr.bf16.mxu0 0
    %302 = vmatpush2.bf16.msra.mxu0 0
    %303 = vmatprep.subr.bf16.mxu0 0
    %304 = vmatpush2.bf16.msra.mxu0 0
    %305 = vmatprep.mubr.bf16.mxu0 0
    %306 = vmatmul.mubr.bf16.gmra.mxu0 %v268
    %v307 = vpop.f32.mrf.mxu0
    %v308 = vadd.f32 %v265, %v307
    %v309 = vpop.f32.mrf.mxu0
    %v310 = vpop.f32.mrf.mxu0
    %v311 = vpop.f32.mrf.mxu0
    %312 = vdwg.mxu0
    %v313 = vxor.u32 %v308, 2147483648
    %v314 = vmul.f32 %v313, 1.442695
    %v315 = vpow.pop %v314
    %v316 = vadd.f32 %v315, 1.0
    %v317 = vrcp.pop %v316
    %v318 = vmul.f32 1.0, %v317
    %v319 = vld [vmem:[%s3 + $0x20] sm:$0xf]
    %v320 = vld [vmem:[%s3 + $0x24] sm:$0xf]
    %v321 = vld [vmem:[%s3 + $0x28] sm:$0xf]
    %v322 = vld [vmem:[%s3 + $0x2c] sm:$0xf]
    %v323 = vpack.c.bf16 %v92, %v92
    %v324 = vld [vmem:[%s2 + $0x48] sm:$0xff]
    %v325 = vld [vmem:[%s2 + $0x50] sm:$0xff]
    %327 = vset.pattern.permute.xlu0 0
    %328 = vperm.xlu0 %327, %v324
    %v329 = vpop.permute.xlu0 %328
    %332 = vset.pattern.permute.xlu0 0
    %333 = vperm.xlu0 %332, %v325
    %v334 = vpop.permute.xlu0 %333
    %v338 = vunpack.c.l.b16 %v319
    %v339 = vunpack.c.l.b16 %v320
    %v340 = vpack.c.b16 %v339, %v338
    %v342 = vsel %vm137, %v340, 0
    %v345 = vsel %vm141, %v323, 0
    %347 = vmatprep.subr.bf16.mxu0 0
    %348 = vmatpush1.bf16.msra.mxu0 0
    %349 = vmatprep.subr.bf16.mxu0 0
    %350 = vmatpush1.bf16.msra.mxu0 0
    %351 = vmatprep.subr.bf16.mxu0 0
    %352 = vmatpush1.bf16.msra.mxu0 0
    %353 = vmatprep.subr.bf16.mxu0 0
    %354 = vmatpush1.bf16.msra.mxu0 0
    %355 = vmatprep.subr.bf16.mxu0 0
    %356 = vmatpush1.bf16.msra.mxu0 0
    %357 = vmatprep.subr.bf16.mxu0 0
    %358 = vmatpush1.bf16.msra.mxu0 0
    %359 = vmatprep.subr.bf16.mxu0 0
    %360 = vmatpush1.bf16.msra.mxu0 0
    %361 = vmatprep.subr.bf16.mxu0 0
    %362 = vmatpush1.bf16.msra.mxu0 %v345
    %363 = vmatprep.subr.bf16.mxu0 0
    %364 = vmatpush2.bf16.msra.mxu0 0
    %365 = vmatprep.subr.bf16.mxu0 0
    %366 = vmatpush2.bf16.msra.mxu0 0
    %367 = vmatprep.subr.bf16.mxu0 0
    %368 = vmatpush2.bf16.msra.mxu0 0
    %369 = vmatprep.subr.bf16.mxu0 0
    %370 = vmatpush2.bf16.msra.mxu0 0
    %371 = vmatprep.subr.bf16.mxu0 0
    %372 = vmatpush2.bf16.msra.mxu0 0
    %373 = vmatprep.subr.bf16.mxu0 0
    %374 = vmatpush2.bf16.msra.mxu0 0
    %375 = vmatprep.subr.bf16.mxu0 0
    %376 = vmatpush2.bf16.msra.mxu0 0
    %377 = vmatprep.subr.bf16.mxu0 0
    %378 = vmatpush2.bf16.msra.mxu0 0
    %379 = vmatprep.mubr.bf16.mxu0 0
    %380 = vmatmul.mubr.bf16.gmra.mxu0 %v342
    %v381 = vpop.f32.mrf.mxu0
    %v382 = vadd.f32 %v329, %v381
    %v383 = vpop.f32.mrf.mxu0
    %v384 = vpop.f32.mrf.mxu0
    %v385 = vadd.f32 %v334, %v384
    %v386 = vpop.f32.mrf.mxu0
    %387 = vdwg.mxu0
    %v388 = vadd.s32 %v80, 128
    %vm389 = vcmp.ge.s32.totalorder %v80, 0
    %vm390 = vcmp.ge.s32.totalorder %v388, 0
    %vm391 = vcmp.lt.s32.totalorder %v80, 128
    %vm392 = vcmp.lt.s32.totalorder %v388, 128
    %vm393 = vmand %vm389, %vm391
    %vm394 = vmand %vm390, %vm392
    %396 = vset.pattern.permute.xlu0 0
    %397 = vperm.xlu0 %396, %v382
    %v398 = vpop.permute.xlu0 %397
    %401 = vset.pattern.permute.xlu0 0
    %402 = vperm.xlu0 %401, %v385
    %v403 = vpop.permute.xlu0 %402
    %v405 = vsel %vm393, %v398, 0.0
    %v406 = vsel %vm394, %v398, 0.0
    %v407 = vsel %vm393, %v403, 0.0
    %v408 = vsel %vm394, %v403, 0.0
    %vm409 = vcmp.ge.s32.totalorder %v80, 128
    %vm410 = vcmp.ge.s32.totalorder %v388, 128
    %vm411 = vcmp.lt.s32.totalorder %v80, 256
    %vm412 = vcmp.lt.s32.totalorder %v388, 256
    %vm413 = vmand %vm409, %vm411
    %vm414 = vmand %vm410, %vm412
    %415 = vset.pattern.permute.xlu0 1
    %416 = vperm.xlu0 %415, %v382
    %v417 = vpop.permute.xlu0 %416
    %419 = vset.pattern.permute.xlu0 1
    %420 = vperm.xlu0 %419, %v385
    %v421 = vpop.permute.xlu0 %420
    %v423 = vsel %vm413, %v417, %v405
    %v424 = vsel %vm414, %v417, %v406
    %v425 = vsel %vm413, %v421, %v407
    %v426 = vsel %vm414, %v421, %v408
    %v429 = vunpack.c.l.b16 %v321
    %v430 = vunpack.c.l.b16 %v322
    %v431 = vpack.c.b16 %v430, %v429
    %v433 = vunpack.c.l.b16 %v21
    %v434 = vunpack.c.h.b16 %v21
    %v435 = vpack.c.b16 %v433, %v433
    %v436 = vpack.c.b16 %v434, %v434
    %v438 = vsel %vm137, %v431, 0
    %v441 = vsel %vm141, %v435, 0
    %v444 = vsel %vm141, %v436, 0
    %446 = vmatprep.subr.bf16.mxu0 0
    %447 = vmatpush1.bf16.msra.mxu0 0
    %448 = vmatprep.subr.bf16.mxu0 0
    %449 = vmatpush1.bf16.msra.mxu0 0
    %450 = vmatprep.subr.bf16.mxu0 0
    %451 = vmatpush1.bf16.msra.mxu0 0
    %452 = vmatprep.subr.bf16.mxu0 0
    %453 = vmatpush1.bf16.msra.mxu0 0
    %454 = vmatprep.subr.bf16.mxu0 0
    %455 = vmatpush1.bf16.msra.mxu0 0
    %456 = vmatprep.subr.bf16.mxu0 0
    %457 = vmatpush1.bf16.msra.mxu0 0
    %458 = vmatprep.subr.bf16.mxu0 0
    %459 = vmatpush1.bf16.msra.mxu0 0
    %460 = vmatprep.subr.bf16.mxu0 %v444
    %461 = vmatpush1.bf16.msra.mxu0 %v441
    %462 = vmatprep.subr.bf16.mxu0 0
    %463 = vmatpush2.bf16.msra.mxu0 0
    %464 = vmatprep.subr.bf16.mxu0 0
    %465 = vmatpush2.bf16.msra.mxu0 0
    %466 = vmatprep.subr.bf16.mxu0 0
    %467 = vmatpush2.bf16.msra.mxu0 0
    %468 = vmatprep.subr.bf16.mxu0 0
    %469 = vmatpush2.bf16.msra.mxu0 0
    %470 = vmatprep.subr.bf16.mxu0 0
    %471 = vmatpush2.bf16.msra.mxu0 0
    %472 = vmatprep.subr.bf16.mxu0 0
    %473 = vmatpush2.bf16.msra.mxu0 0
    %474 = vmatprep.subr.bf16.mxu0 0
    %475 = vmatpush2.bf16.msra.mxu0 0
    %476 = vmatprep.subr.bf16.mxu0 0
    %477 = vmatpush2.bf16.msra.mxu0 0
    %478 = vmatprep.mubr.bf16.mxu0 0
    %479 = vmatmul.mubr.bf16.gmra.mxu0 %v438
    %v480 = vpop.f32.mrf.mxu0
    %v481 = vadd.f32 %v423, %v480
    %v482 = vpop.f32.mrf.mxu0
    %v483 = vadd.f32 %v424, %v482
    %v484 = vpop.f32.mrf.mxu0
    %v485 = vadd.f32 %v425, %v484
    %v486 = vpop.f32.mrf.mxu0
    %v487 = vadd.f32 %v426, %v486
    %488 = vdwg.mxu0
    %490 = vset.pattern.permute.xlu0 0
    %491 = vperm.xlu0 %490, %v318
    %v492 = vpop.permute.xlu0 %491
    %v494 = vsel %vm393, %v492, 0.0
    %v495 = vsel %vm394, %v492, 0.0
    %496 = vset.pattern.permute.xlu0 1
    %497 = vperm.xlu0 %496, %v318
    %v498 = vpop.permute.xlu0 %497
    %v500 = vsel %vm413, %v498, %v494
    %v501 = vsel %vm414, %v498, %v495
    %v502 = vmul.f32 %v500, %v481
    %v503 = vmul.f32 %v501, %v483
    %v504 = vadd.f32 %v502, %v485
    %v505 = vadd.f32 %v503, %v487
    %v506 = vld [vmem:[%s3 + $0x30] sm:$0xf]
    %v507 = vld [vmem:[%s2 + $0x68] sm:$0xff]
    %v508 = vld [vmem:[%s2 + $0x58] sm:$0xff]
    %v509 = vld [vmem:[%s2 + $0x60] sm:$0xff]
    %511 = vset.pattern.permute.xlu0 0
    %512 = vperm.xlu0 %511, %v508
    %v513 = vpop.permute.xlu0 %512
    %v515 = vmul.f32 %v504, %v513
    %v516 = vmul.f32 %v505, %v513
    %518 = vset.pattern.permute.xlu0 0
    %519 = vperm.xlu0 %518, %v509
    %v520 = vpop.permute.xlu0 %519
    %v522 = vadd.f32 %v515, %v520
    %v523 = vadd.f32 %v516, %v520
    %v524 = vmax.f32 %v522, 0.0
    %v525 = vmax.f32 %v523, 0.0
    %v526 = vpack.c.bf16 %v524, %v524
    %v527 = vpack.c.bf16 %v525, %v525
    %529 = vset.pattern.permute.xlu0 0
    %530 = vperm.xlu0 %529, %v507
    %v531 = vpop.permute.xlu0 %530
    %v534 = vsel %vm137, %v506, 0
    %v537 = vsel %vm141, %v526, 0
    %v540 = vsel %vm141, %v527, 0
    %542 = vmatprep.subr.bf16.mxu0 0
    %543 = vmatpush1.bf16.msra.mxu0 0
    %544 = vmatprep.subr.bf16.mxu0 0
    %545 = vmatpush1.bf16.msra.mxu0 0
    %546 = vmatprep.subr.bf16.mxu0 0
    %547 = vmatpush1.bf16.msra.mxu0 0
    %548 = vmatprep.subr.bf16.mxu0 0
    %549 = vmatpush1.bf16.msra.mxu0 0
    %550 = vmatprep.subr.bf16.mxu0 0
    %551 = vmatpush1.bf16.msra.mxu0 0
    %552 = vmatprep.subr.bf16.mxu0 0
    %553 = vmatpush1.bf16.msra.mxu0 0
    %554 = vmatprep.subr.bf16.mxu0 0
    %555 = vmatpush1.bf16.msra.mxu0 0
    %556 = vmatprep.subr.bf16.mxu0 %v540
    %557 = vmatpush1.bf16.msra.mxu0 %v537
    %558 = vmatprep.subr.bf16.mxu0 0
    %559 = vmatpush2.bf16.msra.mxu0 0
    %560 = vmatprep.subr.bf16.mxu0 0
    %561 = vmatpush2.bf16.msra.mxu0 0
    %562 = vmatprep.subr.bf16.mxu0 0
    %563 = vmatpush2.bf16.msra.mxu0 0
    %564 = vmatprep.subr.bf16.mxu0 0
    %565 = vmatpush2.bf16.msra.mxu0 0
    %566 = vmatprep.subr.bf16.mxu0 0
    %567 = vmatpush2.bf16.msra.mxu0 0
    %568 = vmatprep.subr.bf16.mxu0 0
    %569 = vmatpush2.bf16.msra.mxu0 0
    %570 = vmatprep.subr.bf16.mxu0 0
    %571 = vmatpush2.bf16.msra.mxu0 0
    %572 = vmatprep.subr.bf16.mxu0 0
    %573 = vmatpush2.bf16.msra.mxu0 0
    %574 = vmatprep.mubr.bf16.mxu0 0
    %575 = vmatmul.mubr.bf16.gmra.mxu0 %v534
    %v576 = vpop.f32.mrf.mxu0
    %v577 = vadd.f32 %v531, %v576
    %v578 = vpop.f32.mrf.mxu0
    %v579 = vadd.f32 %v531, %v578
    %v580 = vpop.f32.mrf.mxu0
    %v581 = vpop.f32.mrf.mxu0
    %582 = vdwg.mxu0
    %v583 = vld [vmem:[%s3 + $0x38] sm:$0x1]
    %v584 = vld [vmem:[%s2 + $0x80] sm:$0x3]
    %v585 = vld [vmem:[%s2 + $0x70] sm:$0xff]
    %v586 = vld [vmem:[%s2 + $0x78] sm:$0xff]
    %588 = vset.pattern.permute.xlu0 0
    %589 = vperm.xlu0 %588, %v585
    %v590 = vpop.permute.xlu0 %589
    %v592 = vmul.f32 %v577, %v590
    %v593 = vmul.f32 %v579, %v590
    %595 = vset.pattern.permute.xlu0 0
    %596 = vperm.xlu0 %595, %v586
    %v597 = vpop.permute.xlu0 %596
    %v599 = vadd.f32 %v592, %v597
    %v600 = vadd.f32 %v593, %v597
    %v601 = vmax.f32 %v599, 0.0
    %v602 = vmax.f32 %v600, 0.0
    %v603 = vpack.c.bf16 %v601, %v601
    %v604 = vpack.c.bf16 %v602, %v602
    %606 = vset.pattern.permute.xlu0 0
    %607 = vperm.xlu0 %606, %v584
    %v608 = vpop.permute.xlu0 %607
    %v611 = vsel %vm137, %v583, 0
    %v614 = vsel %vm141, %v603, 0
    %v617 = vsel %vm141, %v604, 0
    %619 = vmatprep.subr.bf16.mxu0 0
    %620 = vmatpush1.bf16.msra.mxu0 0
    %621 = vmatprep.subr.bf16.mxu0 0
    %622 = vmatpush1.bf16.msra.mxu0 0
    %623 = vmatprep.subr.bf16.mxu0 0
    %624 = vmatpush1.bf16.msra.mxu0 0
    %625 = vmatprep.subr.bf16.mxu0 0
    %626 = vmatpush1.bf16.msra.mxu0 0
    %627 = vmatprep.subr.bf16.mxu0 0
    %628 = vmatpush1.bf16.msra.mxu0 0
    %629 = vmatprep.subr.bf16.mxu0 0
    %630 = vmatpush1.bf16.msra.mxu0 0
    %631 = vmatprep.subr.bf16.mxu0 0
    %632 = vmatpush1.bf16.msra.mxu0 0
    %633 = vmatprep.subr.bf16.mxu0 %v617
    %634 = vmatpush1.bf16.msra.mxu0 %v614
    %635 = vmatprep.subr.bf16.mxu0 0
    %636 = vmatpush2.bf16.msra.mxu0 0
    %637 = vmatprep.subr.bf16.mxu0 0
    %638 = vmatpush2.bf16.msra.mxu0 0
    %639 = vmatprep.subr.bf16.mxu0 0
    %640 = vmatpush2.bf16.msra.mxu0 0
    %641 = vmatprep.subr.bf16.mxu0 0
    %642 = vmatpush2.bf16.msra.mxu0 0
    %643 = vmatprep.subr.bf16.mxu0 0
    %644 = vmatpush2.bf16.msra.mxu0 0
    %645 = vmatprep.subr.bf16.mxu0 0
    %646 = vmatpush2.bf16.msra.mxu0 0
    %647 = vmatprep.subr.bf16.mxu0 0
    %648 = vmatpush2.bf16.msra.mxu0 0
    %649 = vmatprep.subr.bf16.mxu0 0
    %650 = vmatpush2.bf16.msra.mxu0 0
    %651 = vmatprep.mubr.bf16.mxu0 0
    %652 = vmatmul.mubr.bf16.gmra.mxu0 %v611
    %v653 = vpop.f32.mrf.mxu0
    %v654 = vadd.f32 %v608, %v653
    %v655 = vpop.f32.mrf.mxu0
    %v656 = vadd.f32 %v608, %v655
    %v657 = vpop.f32.mrf.mxu0
    %v658 = vpop.f32.mrf.mxu0
    %659 = vdwg.mxu0
    %v662 = vcombine.low %v654, %v656
    %v664 = vunpack.c.l.s4 1983009808
    %v665 = vunpack.c.0.s8 %v664
    %v666 = vlaneseq
    %v667 = vshrl.u32 %v666, 7
    %v668 = vsub.s32 %v665, %v667
    %v669 = vrot.slane %v662, %v668
    %671 = vst [vmem:[#allocation2] sm:$0xf] %v669
    // Predicated region
    $region18: #{forward.17} parent=1 // pred_check
      _
    $region19: #{forward.17} parent=1 // pred_check_branch
      %673 = sbr.rel (0) target = $region21
    $region20: #{forward.17} parent=1 // pred_region
      %s675 = ssub.s32 64, 64
      %676 = vsyncadd [#allocation3], %s675
      %s678 = sshll.u32 [#allocation2], 4
      %s679 = int_to_ptr.vmem [resolvable:$true] %s678
      %681 = dma.vmem_to_hbm [thread:$0]  %s679, 64, %s4, [#allocation3]
    $region21: #{forward.17} parent=1 // pred_fallthru
      _
    // Predicated region
    $region22: #{forward.17} parent=1 // pred_check
      _
    $region23: #{forward.17} parent=1 // pred_check_branch
      %683 = sbr.rel (0) target = $region25
    $region24: #{forward.17} parent=1 // pred_region
      %684 = dma.done [#allocation3], 64
    $region25: #{forward.17} parent=1 // pred_fallthru
      _
    %685 = vsyncpa [#allocation3], 1

</llo_original>
